<compile_context>
chip_gen: v6e
topology: v6e:2x2x1
jax: 0.10.0
libtpu: 0.0.40
codegen_flags: <defaults>
</compile_context>

<pallas_src>
import math

import jax
import jax.numpy as jnp
import numpy as np
from jax.experimental import pallas as pl
from jax.experimental.pallas import tpu as pltpu

EPS = 1e-5          # nn.BatchNorm2d default eps
NEG_SLOPE = 0.01    # nn.LeakyReLU default negative_slope


# ------------------------------ kernel helpers -------------------------------

def _bn_act(z, gamma, beta):
    """Training-mode BatchNorm (batch stats) folded to one FMA, then LeakyReLU.

    z: (M, C) f32 pre-activation; gamma/beta: (1, C) f32.
    The conv bias is omitted on purpose: a per-channel constant is exactly
    cancelled by the batch-mean subtraction below.
    """
    mean = jnp.mean(z, axis=0, keepdims=True)
    var = jnp.mean(jnp.square(z - mean), axis=0, keepdims=True)   # biased, like torch
    scale = gamma * jax.lax.rsqrt(var + EPS)
    shift = beta - scale * mean
    a = z * scale + shift
    return jnp.maximum(a, NEG_SLOPE * a)                          # LeakyReLU(0.01)


def _vmem_spec(shape):
    nd = len(shape)
    return pl.BlockSpec(shape, lambda: (0,) * nd,
                        memory_space=pltpu.MemorySpace.VMEM)


# ------------------------------- host helpers --------------------------------

def _im2col(x, k=3, stride=2, pad=1):
    """Raw-input im2col (layer 1 only): (N,C,H,W) -> (N*Ho*Wo, C*k*k).

    Column order is (ci, kh, kw), matching torch's Conv2d weight flatten order.
    """
    N, C, H, W = x.shape
    xp = jnp.pad(x, ((0, 0), (0, 0), (pad, pad), (pad, pad)))
    Ho = (H + 2 * pad - k) // stride + 1
    Wo = (W + 2 * pad - k) // stride + 1
    cols = []
    for i in range(k):
        for j in range(k):
            cols.append(xp[:, :, i:i + stride * Ho:stride, j:j + stride * Wo:stride])
    p = jnp.stack(cols, axis=2)            # (N, C, k*k, Ho, Wo)
    p = jnp.transpose(p, (0, 3, 4, 1, 2))  # (N, Ho, Wo, C, k*k)
    return p.reshape(N * Ho * Wo, C * k * k), Ho, Wo


def _gather_block(H, W, N, k=3, stride=2, pad=1):
    """Batched per-tap 0/1 gather matrix for a kxk / stride / pad conv (numpy).

    Returns G of shape (k*k*Mp, N*H*W) with Mp = round_up(N*Ho*Wo, 8).  Row
    t*Mp + n*Ho*Wo + oh*Wo + ow has a 1 at column n*H*W + ih*W + iw with
    ih = oh*stride - pad + kh (same for iw); out-of-range taps and the Mp
    padding rows stay all-zero, which implements the zero padding.  The matrix
    is block-diagonal over the batch, so one matmul gathers the whole batch.
    """
    Ho = (H + 2 * pad - k) // stride + 1
    Wo = (W + 2 * pad - k) // stride + 1
    M = N * Ho * Wo
    Mp = -(-M // 8) * 8                       # sublane-align each tap block
    g = np.zeros((k * k * Mp, N * H * W), np.float32)
    for kh in range(k):
        for kw in range(k):
            t = kh * k + kw
            for n in range(N):
                for oh in range(Ho):
                    ih = oh * stride - pad + kh
                    if ih < 0 or ih >= H:
                        continue
                    for ow in range(Wo):
                        iw = ow * stride - pad + kw
                        if iw < 0 or iw >= W:
                            continue
                        g[t * Mp + n * Ho * Wo + oh * Wo + ow,
                          n * H * W + ih * W + iw] = 1.0
    return g, Ho, Wo, M, Mp


# --------------------------------- forward -----------------------------------

def encoder_forward(x, params):
    """Forward pass of the Encoder: returns (mu, log_var)."""
    N = x.shape[0]
    convs = params["convs"]

    # layer 1 operands: tiny one-time im2col of the raw input (never reused).
    p1, h, w = _im2col(x)                                         # (N*Ho*Wo, C*9)
    c1 = convs[0]["w"].shape[0]
    operands = [
        p1.astype(jnp.bfloat16),
        convs[0]["w"].reshape(c1, -1).T.astype(jnp.bfloat16),     # (C*9, c1)
        convs[0]["gamma"].reshape(1, c1).astype(jnp.float32),
        convs[0]["beta"].reshape(1, c1).astype(jnp.float32),
    ]

    # layers 2..5 operands: batched gather matrix + per-tap (t, Cin, Cout) weights.
    layer_meta = []                                               # (n_taps, M, Mp)
    for p in convs[1:]:
        c_out, c_in, k, _ = p["w"].shape
        g_np, ho, wo, m, mp = _gather_block(h, w, N, k)
        operands += [
            jnp.asarray(g_np, dtype=jnp.bfloat16),                # (9*Mp, N*h*w)
            jnp.transpose(p["w"], (2, 3, 1, 0))
               .reshape(k * k, c_in, c_out).astype(jnp.bfloat16),
            p["gamma"].reshape(1, c_out).astype(jnp.float32),
            p["beta"].reshape(1, c_out).astype(jnp.float32),
        ]
        layer_meta.append((k * k, m, mp))
        h, w = ho, wo
    assert h == 1 and w == 1, "spatial must reduce to 1x1 (e.g. 32x32 input)"
    n_rest = len(layer_meta)

    # fused linear heads: mu/log_var share one matmul on concatenated weights.
    wm, bm = params["linear_mean"]
    wv, bv = params["linear_var"]
    L = wm.shape[0]
    operands += [
        jnp.concatenate([wm.T, wv.T], axis=1).astype(jnp.bfloat16),   # (d_feat, 2L)
        jnp.concatenate([bm, bv]).reshape(1, 2 * L).astype(jnp.float32),
    ]

    def kernel(*refs):
        """Whole Encoder forward; every intermediate stays in VMEM/vregs."""
        p1_ref, w1_ref, g1m_ref, b1t_ref = refs[0:4]
        layer_refs = refs[4:4 + 4 * n_rest]
        wh_ref, bh_ref, mu_ref, lv_ref = refs[4 + 4 * n_rest:]

        # --- layer 1: conv as a single im2col matmul ----------------------------
        z = jnp.dot(p1_ref[...], w1_ref[...], preferred_element_type=jnp.float32)
        xa = _bn_act(z, g1m_ref[...], b1t_ref[...]).astype(jnp.bfloat16)

        # --- layers 2..5: stride-2 3x3 conv as 1 gather matmul + 9 tap matmuls --
        for l in range(n_rest):
            g_ref, w_ref, gm_ref, bt_ref = layer_refs[4 * l: 4 * (l + 1)]
            n_taps, m, mp = layer_meta[l]
            # One matmul gathers all taps for the whole batch; padding rows of
            # G_big are zero so padded taps contribute exact zeros.
            patches = jnp.dot(g_ref[...], xa,
                              preferred_element_type=jnp.float32
                              ).astype(jnp.bfloat16)               # (9*mp, c_in)
            zacc = jnp.dot(patches[0:m, :], w_ref[0],
                           preferred_element_type=jnp.float32)
            for t in range(1, n_taps):                             # static unroll
                zacc = zacc + jnp.dot(patches[t * mp:t * mp + m, :], w_ref[t],
                                      preferred_element_type=jnp.float32)
            xa = _bn_act(zacc, gm_ref[...], bt_ref[...]).astype(jnp.bfloat16)

        # --- heads: spatial is 1x1 so xa already equals Flatten(x); both Linear
        #     layers are fused into one matmul on the concatenated weights.
        head = jnp.dot(xa, wh_ref[...], preferred_element_type=jnp.float32) \
            + bh_ref[...]
        mu_ref[...] = head[:, :L]
        lv_ref[...] = head[:, L:]

    # TODO(synk): for much larger batch/resolution, replace the block-diagonal
    # gather (O(N^2) bytes) with a grid over the row axis + two-pass BatchNorm.
    out_shape = (jax.ShapeDtypeStruct((N, L), jnp.float32),
                 jax.ShapeDtypeStruct((N, L), jnp.float32))
    return pl.pallas_call(
        kernel,
        out_shape=out_shape,
        in_specs=[_vmem_spec(o.shape) for o in operands],
        out_specs=(_vmem_spec((N, L)), _vmem_spec((N, L))),
        compiler_params=pltpu.CompilerParams(vmem_limit_bytes=32 * 1024 * 1024),
    )(*operands)


# --------------------------- deterministic params ----------------------------

def init_params(key, in_channel=1, dim_feature=8, dim_latent=32):
    """PyTorch-default-style initialization of the Encoder parameters."""
    channels = [in_channel, dim_feature, dim_feature * 2, dim_feature * 4,
                dim_feature * 8, dim_feature * 16]
    convs = []
    for layer in range(5):
        key, k1, k2 = jax.random.split(key, 3)
        cin, cout = channels[layer], channels[layer + 1]
        bound = 1.0 / math.sqrt(cin * 9)          # Conv2d default init bound
        w = jax.random.uniform(k1, (cout, cin, 3, 3), jnp.float32, -bound, bound)
        b = jax.random.uniform(k2, (cout,), jnp.float32, -bound, bound)
        convs.append(dict(
            w=w,
            # Kept for parameter parity with the torch module but NOT fed to the
            # kernel: training-mode BatchNorm subtracts the per-channel batch mean,
            # which exactly cancels any per-channel constant (dead compute).
            b=b,
            gamma=jnp.ones((cout,), jnp.float32),   # BatchNorm2d default weight
            beta=jnp.zeros((cout,), jnp.float32),   # BatchNorm2d default bias
        ))
    d_feat = channels[-1]
    key, k1, k2, k3, k4 = jax.random.split(key, 5)
    bound = 1.0 / math.sqrt(d_feat)
    wm = jax.random.uniform(k1, (dim_latent, d_feat), jnp.float32, -bound, bound)
    bm = jax.random.uniform(k2, (dim_latent,), jnp.float32, -bound, bound)
    wv = jax.random.uniform(k3, (dim_latent, d_feat), jnp.float32, -bound, bound)
    bv = jax.random.uniform(k4, (dim_latent,), jnp.float32, -bound, bound)
    return dict(convs=convs, linear_mean=(wm, bm), linear_var=(wv, bv))

# TODO(synk): BatchNorm running_mean/running_var bookkeeping (training-time side
# effect) is not reproduced; only the forward (batch-statistics) output is.


if __name__ == "__main__":
    key = jax.random.PRNGKey(0)
    pkey, xkey = jax.random.split(key)
    # small config: in_channel=1, dim_feature=8, dim_latent=32; 32x32 input so the
    # 5 stride-2 convs reduce spatial to 1x1 (required by the Linear heads).
    params = init_params(pkey, in_channel=1, dim_feature=8, dim_latent=32)
    x = jax.random.normal(xkey, (2, 1, 32, 32), jnp.float32)

    mu, log_var = jax.jit(encoder_forward)(x, params)
    jax.block_until_ready((mu, log_var))
    assert mu.shape == (2, 32) and log_var.shape == (2, 32)
    assert bool(jnp.all(jnp.isfinite(mu))) and bool(jnp.all(jnp.isfinite(log_var)))
    print("KERNEL_OK")
</pallas_src>

<mosaic_0001>
module attributes {stable_mosaic.version = 11 : i64} {
  func.func @kernel(%arg0: memref<512x9xbf16, #tpu.memory_space<vmem>>, %arg1: memref<9x8xbf16, #tpu.memory_space<vmem>>, %arg2: memref<1x8xf32, #tpu.memory_space<vmem>>, %arg3: memref<1x8xf32, #tpu.memory_space<vmem>>, %arg4: memref<1152x512xbf16, #tpu.memory_space<vmem>>, %arg5: memref<9x8x16xbf16, #tpu.memory_space<vmem>>, %arg6: memref<1x16xf32, #tpu.memory_space<vmem>>, %arg7: memref<1x16xf32, #tpu.memory_space<vmem>>, %arg8: memref<288x128xbf16, #tpu.memory_space<vmem>>, %arg9: memref<9x16x32xbf16, #tpu.memory_space<vmem>>, %arg10: memref<1x32xf32, #tpu.memory_space<vmem>>, %arg11: memref<1x32xf32, #tpu.memory_space<vmem>>, %arg12: memref<72x32xbf16, #tpu.memory_space<vmem>>, %arg13: memref<9x32x64xbf16, #tpu.memory_space<vmem>>, %arg14: memref<1x64xf32, #tpu.memory_space<vmem>>, %arg15: memref<1x64xf32, #tpu.memory_space<vmem>>, %arg16: memref<72x8xbf16, #tpu.memory_space<vmem>>, %arg17: memref<9x64x128xbf16, #tpu.memory_space<vmem>>, %arg18: memref<1x128xf32, #tpu.memory_space<vmem>>, %arg19: memref<1x128xf32, #tpu.memory_space<vmem>>, %arg20: memref<128x64xbf16, #tpu.memory_space<vmem>>, %arg21: memref<1x64xf32, #tpu.memory_space<vmem>>, %arg22: memref<2x32xf32, #tpu.memory_space<vmem>>, %arg23: memref<2x32xf32, #tpu.memory_space<vmem>>) attributes {dimension_semantics = [], scalar_prefetch = 0 : i64, scratch_operands = 0 : i64, tpu.core_type = #tpu.core_type<tc>} {
    %c0 = arith.constant 0 : index
    %c0_0 = arith.constant 0 : index
    %0 = vector.load %arg0[%c0, %c0_0] : memref<512x9xbf16, #tpu.memory_space<vmem>>, vector<512x9xbf16>
    %c0_1 = arith.constant 0 : index
    %c0_2 = arith.constant 0 : index
    %1 = vector.load %arg1[%c0_1, %c0_2] : memref<9x8xbf16, #tpu.memory_space<vmem>>, vector<9x8xbf16>
    %cst = arith.constant dense<0.000000e+00> : vector<512x8xf32>
    %2 = tpu.matmul %0, %1, %cst {dimension_numbers = #tpu.dot_dimension_numbers<[1], [0], [0], [1], [0, 0, 1, 1], [], []>} : vector<512x9xbf16>, vector<9x8xbf16>, vector<512x8xf32> -> vector<512x8xf32>
    %c0_3 = arith.constant 0 : index
    %c0_4 = arith.constant 0 : index
    %3 = vector.load %arg2[%c0_3, %c0_4] : memref<1x8xf32, #tpu.memory_space<vmem>>, vector<1x8xf32>
    %c0_5 = arith.constant 0 : index
    %c0_6 = arith.constant 0 : index
    %4 = vector.load %arg3[%c0_5, %c0_6] : memref<1x8xf32, #tpu.memory_space<vmem>>, vector<1x8xf32>
    %cst_7 = arith.constant dense<0.000000e+00> : vector<8xf32>
    %5 = vector.multi_reduction <add>, %2, %cst_7 [0] : vector<512x8xf32> to vector<8xf32>
    %6 = vector.shape_cast %5 : vector<8xf32> to vector<1x8xf32>
    %cst_8 = arith.constant 5.120000e+02 : f32
    %7 = vector.broadcast %cst_8 : f32 to vector<1x8xf32>
    %8 = arith.divf %6, %7 : vector<1x8xf32>
    %9 = vector.broadcast %8 : vector<1x8xf32> to vector<512x8xf32>
    %10 = arith.subf %2, %9 : vector<512x8xf32>
    %11 = arith.mulf %10, %10 : vector<512x8xf32>
    %cst_9 = arith.constant dense<0.000000e+00> : vector<8xf32>
    %12 = vector.multi_reduction <add>, %11, %cst_9 [0] : vector<512x8xf32> to vector<8xf32>
    %13 = vector.shape_cast %12 : vector<8xf32> to vector<1x8xf32>
    %cst_10 = arith.constant 5.120000e+02 : f32
    %14 = vector.broadcast %cst_10 : f32 to vector<1x8xf32>
    %15 = arith.divf %13, %14 : vector<1x8xf32>
    %cst_11 = arith.constant 9.99999974E-6 : f32
    %16 = vector.broadcast %cst_11 : f32 to vector<1x8xf32>
    %17 = arith.addf %15, %16 : vector<1x8xf32>
    %18 = math.rsqrt %17 : vector<1x8xf32>
    %19 = arith.mulf %3, %18 : vector<1x8xf32>
    %20 = arith.mulf %19, %8 : vector<1x8xf32>
    %21 = arith.subf %4, %20 : vector<1x8xf32>
    %22 = vector.broadcast %19 : vector<1x8xf32> to vector<512x8xf32>
    %23 = arith.mulf %2, %22 : vector<512x8xf32>
    %24 = vector.broadcast %21 : vector<1x8xf32> to vector<512x8xf32>
    %25 = arith.addf %23, %24 : vector<512x8xf32>
    %cst_12 = arith.constant 0.00999999977 : f32
    %26 = vector.broadcast %cst_12 : f32 to vector<512x8xf32>
    %27 = arith.mulf %26, %25 : vector<512x8xf32>
    %28 = arith.maximumf %25, %27 : vector<512x8xf32>
    %29 = arith.truncf %28 : vector<512x8xf32> to vector<512x8xbf16>
    %c0_13 = arith.constant 0 : index
    %c0_14 = arith.constant 0 : index
    %30 = vector.load %arg4[%c0_13, %c0_14] : memref<1152x512xbf16, #tpu.memory_space<vmem>>, vector<1152x512xbf16>
    %cst_15 = arith.constant dense<0.000000e+00> : vector<1152x8xf32>
    %31 = tpu.matmul %30, %29, %cst_15 {dimension_numbers = #tpu.dot_dimension_numbers<[1], [0], [0], [1], [0, 0, 1, 1], [], []>} : vector<1152x512xbf16>, vector<512x8xbf16>, vector<1152x8xf32> -> vector<1152x8xf32>
    %32 = arith.truncf %31 : vector<1152x8xf32> to vector<1152x8xbf16>
    %33 = vector.extract_strided_slice %32 {offsets = [0, 0], sizes = [128, 8], strides = [1, 1]} : vector<1152x8xbf16> to vector<128x8xbf16>
    %c0_16 = arith.constant 0 : index
    %c0_17 = arith.constant 0 : index
    %c0_18 = arith.constant 0 : index
    %34 = vector.load %arg5[%c0_16, %c0_17, %c0_18] : memref<9x8x16xbf16, #tpu.memory_space<vmem>>, vector<1x8x16xbf16>
    %35 = vector.shape_cast %34 : vector<1x8x16xbf16> to vector<8x16xbf16>
    %cst_19 = arith.constant dense<0.000000e+00> : vector<128x16xf32>
    %36 = tpu.matmul %33, %35, %cst_19 {dimension_numbers = #tpu.dot_dimension_numbers<[1], [0], [0], [1], [0, 0, 1, 1], [], []>} : vector<128x8xbf16>, vector<8x16xbf16>, vector<128x16xf32> -> vector<128x16xf32>
    %37 = vector.extract_strided_slice %32 {offsets = [128, 0], sizes = [128, 8], strides = [1, 1]} : vector<1152x8xbf16> to vector<128x8xbf16>
    %c1 = arith.constant 1 : index
    %c0_20 = arith.constant 0 : index
    %c0_21 = arith.constant 0 : index
    %38 = vector.load %arg5[%c1, %c0_20, %c0_21] : memref<9x8x16xbf16, #tpu.memory_space<vmem>>, vector<1x8x16xbf16>
    %39 = vector.shape_cast %38 : vector<1x8x16xbf16> to vector<8x16xbf16>
    %cst_22 = arith.constant dense<0.000000e+00> : vector<128x16xf32>
    %40 = tpu.matmul %37, %39, %cst_22 {dimension_numbers = #tpu.dot_dimension_numbers<[1], [0], [0], [1], [0, 0, 1, 1], [], []>} : vector<128x8xbf16>, vector<8x16xbf16>, vector<128x16xf32> -> vector<128x16xf32>
    %41 = arith.addf %36, %40 : vector<128x16xf32>
    %42 = vector.extract_strided_slice %32 {offsets = [256, 0], sizes = [128, 8], strides = [1, 1]} : vector<1152x8xbf16> to vector<128x8xbf16>
    %c2 = arith.constant 2 : index
    %c0_23 = arith.constant 0 : index
    %c0_24 = arith.constant 0 : index
    %43 = vector.load %arg5[%c2, %c0_23, %c0_24] : memref<9x8x16xbf16, #tpu.memory_space<vmem>>, vector<1x8x16xbf16>
    %44 = vector.shape_cast %43 : vector<1x8x16xbf16> to vector<8x16xbf16>
    %cst_25 = arith.constant dense<0.000000e+00> : vector<128x16xf32>
    %45 = tpu.matmul %42, %44, %cst_25 {dimension_numbers = #tpu.dot_dimension_numbers<[1], [0], [0], [1], [0, 0, 1, 1], [], []>} : vector<128x8xbf16>, vector<8x16xbf16>, vector<128x16xf32> -> vector<128x16xf32>
    %46 = arith.addf %41, %45 : vector<128x16xf32>
    %47 = vector.extract_strided_slice %32 {offsets = [384, 0], sizes = [128, 8], strides = [1, 1]} : vector<1152x8xbf16> to vector<128x8xbf16>
    %c3 = arith.constant 3 : index
    %c0_26 = arith.constant 0 : index
    %c0_27 = arith.constant 0 : index
    %48 = vector.load %arg5[%c3, %c0_26, %c0_27] : memref<9x8x16xbf16, #tpu.memory_space<vmem>>, vector<1x8x16xbf16>
    %49 = vector.shape_cast %48 : vector<1x8x16xbf16> to vector<8x16xbf16>
    %cst_28 = arith.constant dense<0.000000e+00> : vector<128x16xf32>
    %50 = tpu.matmul %47, %49, %cst_28 {dimension_numbers = #tpu.dot_dimension_numbers<[1], [0], [0], [1], [0, 0, 1, 1], [], []>} : vector<128x8xbf16>, vector<8x16xbf16>, vector<128x16xf32> -> vector<128x16xf32>
    %51 = arith.addf %46, %50 : vector<128x16xf32>
    %52 = vector.extract_strided_slice %32 {offsets = [512, 0], sizes = [128, 8], strides = [1, 1]} : vector<1152x8xbf16> to vector<128x8xbf16>
    %c4 = arith.constant 4 : index
    %c0_29 = arith.constant 0 : index
    %c0_30 = arith.constant 0 : index
    %53 = vector.load %arg5[%c4, %c0_29, %c0_30] : memref<9x8x16xbf16, #tpu.memory_space<vmem>>, vector<1x8x16xbf16>
    %54 = vector.shape_cast %53 : vector<1x8x16xbf16> to vector<8x16xbf16>
    %cst_31 = arith.constant dense<0.000000e+00> : vector<128x16xf32>
    %55 = tpu.matmul %52, %54, %cst_31 {dimension_numbers = #tpu.dot_dimension_numbers<[1], [0], [0], [1], [0, 0, 1, 1], [], []>} : vector<128x8xbf16>, vector<8x16xbf16>, vector<128x16xf32> -> vector<128x16xf32>
    %56 = arith.addf %51, %55 : vector<128x16xf32>
    %57 = vector.extract_strided_slice %32 {offsets = [640, 0], sizes = [128, 8], strides = [1, 1]} : vector<1152x8xbf16> to vector<128x8xbf16>
    %c5 = arith.constant 5 : index
    %c0_32 = arith.constant 0 : index
    %c0_33 = arith.constant 0 : index
    %58 = vector.load %arg5[%c5, %c0_32, %c0_33] : memref<9x8x16xbf16, #tpu.memory_space<vmem>>, vector<1x8x16xbf16>
    %59 = vector.shape_cast %58 : vector<1x8x16xbf16> to vector<8x16xbf16>
    %cst_34 = arith.constant dense<0.000000e+00> : vector<128x16xf32>
    %60 = tpu.matmul %57, %59, %cst_34 {dimension_numbers = #tpu.dot_dimension_numbers<[1], [0], [0], [1], [0, 0, 1, 1], [], []>} : vector<128x8xbf16>, vector<8x16xbf16>, vector<128x16xf32> -> vector<128x16xf32>
    %61 = arith.addf %56, %60 : vector<128x16xf32>
    %62 = vector.extract_strided_slice %32 {offsets = [768, 0], sizes = [128, 8], strides = [1, 1]} : vector<1152x8xbf16> to vector<128x8xbf16>
    %c6 = arith.constant 6 : index
    %c0_35 = arith.constant 0 : index
    %c0_36 = arith.constant 0 : index
    %63 = vector.load %arg5[%c6, %c0_35, %c0_36] : memref<9x8x16xbf16, #tpu.memory_space<vmem>>, vector<1x8x16xbf16>
    %64 = vector.shape_cast %63 : vector<1x8x16xbf16> to vector<8x16xbf16>
    %cst_37 = arith.constant dense<0.000000e+00> : vector<128x16xf32>
    %65 = tpu.matmul %62, %64, %cst_37 {dimension_numbers = #tpu.dot_dimension_numbers<[1], [0], [0], [1], [0, 0, 1, 1], [], []>} : vector<128x8xbf16>, vector<8x16xbf16>, vector<128x16xf32> -> vector<128x16xf32>
    %66 = arith.addf %61, %65 : vector<128x16xf32>
    %67 = vector.extract_strided_slice %32 {offsets = [896, 0], sizes = [128, 8], strides = [1, 1]} : vector<1152x8xbf16> to vector<128x8xbf16>
    %c7 = arith.constant 7 : index
    %c0_38 = arith.constant 0 : index
    %c0_39 = arith.constant 0 : index
    %68 = vector.load %arg5[%c7, %c0_38, %c0_39] : memref<9x8x16xbf16, #tpu.memory_space<vmem>>, vector<1x8x16xbf16>
    %69 = vector.shape_cast %68 : vector<1x8x16xbf16> to vector<8x16xbf16>
    %cst_40 = arith.constant dense<0.000000e+00> : vector<128x16xf32>
    %70 = tpu.matmul %67, %69, %cst_40 {dimension_numbers = #tpu.dot_dimension_numbers<[1], [0], [0], [1], [0, 0, 1, 1], [], []>} : vector<128x8xbf16>, vector<8x16xbf16>, vector<128x16xf32> -> vector<128x16xf32>
    %71 = arith.addf %66, %70 : vector<128x16xf32>
    %72 = vector.extract_strided_slice %32 {offsets = [1024, 0], sizes = [128, 8], strides = [1, 1]} : vector<1152x8xbf16> to vector<128x8xbf16>
    %c8 = arith.constant 8 : index
    %c0_41 = arith.constant 0 : index
    %c0_42 = arith.constant 0 : index
    %73 = vector.load %arg5[%c8, %c0_41, %c0_42] : memref<9x8x16xbf16, #tpu.memory_space<vmem>>, vector<1x8x16xbf16>
    %74 = vector.shape_cast %73 : vector<1x8x16xbf16> to vector<8x16xbf16>
    %cst_43 = arith.constant dense<0.000000e+00> : vector<128x16xf32>
    %75 = tpu.matmul %72, %74, %cst_43 {dimension_numbers = #tpu.dot_dimension_numbers<[1], [0], [0], [1], [0, 0, 1, 1], [], []>} : vector<128x8xbf16>, vector<8x16xbf16>, vector<128x16xf32> -> vector<128x16xf32>
    %76 = arith.addf %71, %75 : vector<128x16xf32>
    %c0_44 = arith.constant 0 : index
    %c0_45 = arith.constant 0 : index
    %77 = vector.load %arg6[%c0_44, %c0_45] : memref<1x16xf32, #tpu.memory_space<vmem>>, vector<1x16xf32>
    %c0_46 = arith.constant 0 : index
    %c0_47 = arith.constant 0 : index
    %78 = vector.load %arg7[%c0_46, %c0_47] : memref<1x16xf32, #tpu.memory_space<vmem>>, vector<1x16xf32>
    %cst_48 = arith.constant dense<0.000000e+00> : vector<16xf32>
    %79 = vector.multi_reduction <add>, %76, %cst_48 [0] : vector<128x16xf32> to vector<16xf32>
    %80 = vector.shape_cast %79 : vector<16xf32> to vector<1x16xf32>
    %cst_49 = arith.constant 1.280000e+02 : f32
    %81 = vector.broadcast %cst_49 : f32 to vector<1x16xf32>
    %82 = arith.divf %80, %81 : vector<1x16xf32>
    %83 = vector.broadcast %82 : vector<1x16xf32> to vector<128x16xf32>
    %84 = arith.subf %76, %83 : vector<128x16xf32>
    %85 = arith.mulf %84, %84 : vector<128x16xf32>
    %cst_50 = arith.constant dense<0.000000e+00> : vector<16xf32>
    %86 = vector.multi_reduction <add>, %85, %cst_50 [0] : vector<128x16xf32> to vector<16xf32>
    %87 = vector.shape_cast %86 : vector<16xf32> to vector<1x16xf32>
    %cst_51 = arith.constant 1.280000e+02 : f32
    %88 = vector.broadcast %cst_51 : f32 to vector<1x16xf32>
    %89 = arith.divf %87, %88 : vector<1x16xf32>
    %cst_52 = arith.constant 9.99999974E-6 : f32
    %90 = vector.broadcast %cst_52 : f32 to vector<1x16xf32>
    %91 = arith.addf %89, %90 : vector<1x16xf32>
    %92 = math.rsqrt %91 : vector<1x16xf32>
    %93 = arith.mulf %77, %92 : vector<1x16xf32>
    %94 = arith.mulf %93, %82 : vector<1x16xf32>
    %95 = arith.subf %78, %94 : vector<1x16xf32>
    %96 = vector.broadcast %93 : vector<1x16xf32> to vector<128x16xf32>
    %97 = arith.mulf %76, %96 : vector<128x16xf32>
    %98 = vector.broadcast %95 : vector<1x16xf32> to vector<128x16xf32>
    %99 = arith.addf %97, %98 : vector<128x16xf32>
    %cst_53 = arith.constant 0.00999999977 : f32
    %100 = vector.broadcast %cst_53 : f32 to vector<128x16xf32>
    %101 = arith.mulf %100, %99 : vector<128x16xf32>
    %102 = arith.maximumf %99, %101 : vector<128x16xf32>
    %103 = arith.truncf %102 : vector<128x16xf32> to vector<128x16xbf16>
    %c0_54 = arith.constant 0 : index
    %c0_55 = arith.constant 0 : index
    %104 = vector.load %arg8[%c0_54, %c0_55] : memref<288x128xbf16, #tpu.memory_space<vmem>>, vector<288x128xbf16>
    %cst_56 = arith.constant dense<0.000000e+00> : vector<288x16xf32>
    %105 = tpu.matmul %104, %103, %cst_56 {dimension_numbers = #tpu.dot_dimension_numbers<[1], [0], [0], [1], [0, 0, 1, 1], [], []>} : vector<288x128xbf16>, vector<128x16xbf16>, vector<288x16xf32> -> vector<288x16xf32>
    %106 = arith.truncf %105 : vector<288x16xf32> to vector<288x16xbf16>
    %107 = vector.extract_strided_slice %106 {offsets = [0, 0], sizes = [32, 16], strides = [1, 1]} : vector<288x16xbf16> to vector<32x16xbf16>
    %c0_57 = arith.constant 0 : index
    %c0_58 = arith.constant 0 : index
    %c0_59 = arith.constant 0 : index
    %108 = vector.load %arg9[%c0_57, %c0_58, %c0_59] : memref<9x16x32xbf16, #tpu.memory_space<vmem>>, vector<1x16x32xbf16>
    %109 = vector.shape_cast %108 : vector<1x16x32xbf16> to vector<16x32xbf16>
    %cst_60 = arith.constant dense<0.000000e+00> : vector<32x32xf32>
    %110 = tpu.matmul %107, %109, %cst_60 {dimension_numbers = #tpu.dot_dimension_numbers<[1], [0], [0], [1], [0, 0, 1, 1], [], []>} : vector<32x16xbf16>, vector<16x32xbf16>, vector<32x32xf32> -> vector<32x32xf32>
    %111 = vector.extract_strided_slice %106 {offsets = [32, 0], sizes = [32, 16], strides = [1, 1]} : vector<288x16xbf16> to vector<32x16xbf16>
    %c1_61 = arith.constant 1 : index
    %c0_62 = arith.constant 0 : index
    %c0_63 = arith.constant 0 : index
    %112 = vector.load %arg9[%c1_61, %c0_62, %c0_63] : memref<9x16x32xbf16, #tpu.memory_space<vmem>>, vector<1x16x32xbf16>
    %113 = vector.shape_cast %112 : vector<1x16x32xbf16> to vector<16x32xbf16>
    %cst_64 = arith.constant dense<0.000000e+00> : vector<32x32xf32>
    %114 = tpu.matmul %111, %113, %cst_64 {dimension_numbers = #tpu.dot_dimension_numbers<[1], [0], [0], [1], [0, 0, 1, 1], [], []>} : vector<32x16xbf16>, vector<16x32xbf16>, vector<32x32xf32> -> vector<32x32xf32>
    %115 = arith.addf %110, %114 : vector<32x32xf32>
    %116 = vector.extract_strided_slice %106 {offsets = [64, 0], sizes = [32, 16], strides = [1, 1]} : vector<288x16xbf16> to vector<32x16xbf16>
    %c2_65 = arith.constant 2 : index
    %c0_66 = arith.constant 0 : index
    %c0_67 = arith.constant 0 : index
    %117 = vector.load %arg9[%c2_65, %c0_66, %c0_67] : memref<9x16x32xbf16, #tpu.memory_space<vmem>>, vector<1x16x32xbf16>
    %118 = vector.shape_cast %117 : vector<1x16x32xbf16> to vector<16x32xbf16>
    %cst_68 = arith.constant dense<0.000000e+00> : vector<32x32xf32>
    %119 = tpu.matmul %116, %118, %cst_68 {dimension_numbers = #tpu.dot_dimension_numbers<[1], [0], [0], [1], [0, 0, 1, 1], [], []>} : vector<32x16xbf16>, vector<16x32xbf16>, vector<32x32xf32> -> vector<32x32xf32>
    %120 = arith.addf %115, %119 : vector<32x32xf32>
    %121 = vector.extract_strided_slice %106 {offsets = [96, 0], sizes = [32, 16], strides = [1, 1]} : vector<288x16xbf16> to vector<32x16xbf16>
    %c3_69 = arith.constant 3 : index
    %c0_70 = arith.constant 0 : index
    %c0_71 = arith.constant 0 : index
    %122 = vector.load %arg9[%c3_69, %c0_70, %c0_71] : memref<9x16x32xbf16, #tpu.memory_space<vmem>>, vector<1x16x32xbf16>
    %123 = vector.shape_cast %122 : vector<1x16x32xbf16> to vector<16x32xbf16>
    %cst_72 = arith.constant dense<0.000000e+00> : vector<32x32xf32>
    %124 = tpu.matmul %121, %123, %cst_72 {dimension_numbers = #tpu.dot_dimension_numbers<[1], [0], [0], [1], [0, 0, 1, 1], [], []>} : vector<32x16xbf16>, vector<16x32xbf16>, vector<32x32xf32> -> vector<32x32xf32>
    %125 = arith.addf %120, %124 : vector<32x32xf32>
    %126 = vector.extract_strided_slice %106 {offsets = [128, 0], sizes = [32, 16], strides = [1, 1]} : vector<288x16xbf16> to vector<32x16xbf16>
    %c4_73 = arith.constant 4 : index
    %c0_74 = arith.constant 0 : index
    %c0_75 = arith.constant 0 : index
    %127 = vector.load %arg9[%c4_73, %c0_74, %c0_75] : memref<9x16x32xbf16, #tpu.memory_space<vmem>>, vector<1x16x32xbf16>
    %128 = vector.shape_cast %127 : vector<1x16x32xbf16> to vector<16x32xbf16>
    %cst_76 = arith.constant dense<0.000000e+00> : vector<32x32xf32>
    %129 = tpu.matmul %126, %128, %cst_76 {dimension_numbers = #tpu.dot_dimension_numbers<[1], [0], [0], [1], [0, 0, 1, 1], [], []>} : vector<32x16xbf16>, vector<16x32xbf16>, vector<32x32xf32> -> vector<32x32xf32>
    %130 = arith.addf %125, %129 : vector<32x32xf32>
    %131 = vector.extract_strided_slice %106 {offsets = [160, 0], sizes = [32, 16], strides = [1, 1]} : vector<288x16xbf16> to vector<32x16xbf16>
    %c5_77 = arith.constant 5 : index
    %c0_78 = arith.constant 0 : index
    %c0_79 = arith.constant 0 : index
    %132 = vector.load %arg9[%c5_77, %c0_78, %c0_79] : memref<9x16x32xbf16, #tpu.memory_space<vmem>>, vector<1x16x32xbf16>
    %133 = vector.shape_cast %132 : vector<1x16x32xbf16> to vector<16x32xbf16>
    %cst_80 = arith.constant dense<0.000000e+00> : vector<32x32xf32>
    %134 = tpu.matmul %131, %133, %cst_80 {dimension_numbers = #tpu.dot_dimension_numbers<[1], [0], [0], [1], [0, 0, 1, 1], [], []>} : vector<32x16xbf16>, vector<16x32xbf16>, vector<32x32xf32> -> vector<32x32xf32>
    %135 = arith.addf %130, %134 : vector<32x32xf32>
    %136 = vector.extract_strided_slice %106 {offsets = [192, 0], sizes = [32, 16], strides = [1, 1]} : vector<288x16xbf16> to vector<32x16xbf16>
    %c6_81 = arith.constant 6 : index
    %c0_82 = arith.constant 0 : index
    %c0_83 = arith.constant 0 : index
    %137 = vector.load %arg9[%c6_81, %c0_82, %c0_83] : memref<9x16x32xbf16, #tpu.memory_space<vmem>>, vector<1x16x32xbf16>
    %138 = vector.shape_cast %137 : vector<1x16x32xbf16> to vector<16x32xbf16>
    %cst_84 = arith.constant dense<0.000000e+00> : vector<32x32xf32>
    %139 = tpu.matmul %136, %138, %cst_84 {dimension_numbers = #tpu.dot_dimension_numbers<[1], [0], [0], [1], [0, 0, 1, 1], [], []>} : vector<32x16xbf16>, vector<16x32xbf16>, vector<32x32xf32> -> vector<32x32xf32>
    %140 = arith.addf %135, %139 : vector<32x32xf32>
    %141 = vector.extract_strided_slice %106 {offsets = [224, 0], sizes = [32, 16], strides = [1, 1]} : vector<288x16xbf16> to vector<32x16xbf16>
    %c7_85 = arith.constant 7 : index
    %c0_86 = arith.constant 0 : index
    %c0_87 = arith.constant 0 : index
    %142 = vector.load %arg9[%c7_85, %c0_86, %c0_87] : memref<9x16x32xbf16, #tpu.memory_space<vmem>>, vector<1x16x32xbf16>
    %143 = vector.shape_cast %142 : vector<1x16x32xbf16> to vector<16x32xbf16>
    %cst_88 = arith.constant dense<0.000000e+00> : vector<32x32xf32>
    %144 = tpu.matmul %141, %143, %cst_88 {dimension_numbers = #tpu.dot_dimension_numbers<[1], [0], [0], [1], [0, 0, 1, 1], [], []>} : vector<32x16xbf16>, vector<16x32xbf16>, vector<32x32xf32> -> vector<32x32xf32>
    %145 = arith.addf %140, %144 : vector<32x32xf32>
    %146 = vector.extract_strided_slice %106 {offsets = [256, 0], sizes = [32, 16], strides = [1, 1]} : vector<288x16xbf16> to vector<32x16xbf16>
    %c8_89 = arith.constant 8 : index
    %c0_90 = arith.constant 0 : index
    %c0_91 = arith.constant 0 : index
    %147 = vector.load %arg9[%c8_89, %c0_90, %c0_91] : memref<9x16x32xbf16, #tpu.memory_space<vmem>>, vector<1x16x32xbf16>
    %148 = vector.shape_cast %147 : vector<1x16x32xbf16> to vector<16x32xbf16>
    %cst_92 = arith.constant dense<0.000000e+00> : vector<32x32xf32>
    %149 = tpu.matmul %146, %148, %cst_92 {dimension_numbers = #tpu.dot_dimension_numbers<[1], [0], [0], [1], [0, 0, 1, 1], [], []>} : vector<32x16xbf16>, vector<16x32xbf16>, vector<32x32xf32> -> vector<32x32xf32>
    %150 = arith.addf %145, %149 : vector<32x32xf32>
    %c0_93 = arith.constant 0 : index
    %c0_94 = arith.constant 0 : index
    %151 = vector.load %arg10[%c0_93, %c0_94] : memref<1x32xf32, #tpu.memory_space<vmem>>, vector<1x32xf32>
    %c0_95 = arith.constant 0 : index
    %c0_96 = arith.constant 0 : index
    %152 = vector.load %arg11[%c0_95, %c0_96] : memref<1x32xf32, #tpu.memory_space<vmem>>, vector<1x32xf32>
    %cst_97 = arith.constant dense<0.000000e+00> : vector<32xf32>
    %153 = vector.multi_reduction <add>, %150, %cst_97 [0] : vector<32x32xf32> to vector<32xf32>
    %154 = vector.shape_cast %153 : vector<32xf32> to vector<1x32xf32>
    %cst_98 = arith.constant 3.200000e+01 : f32
    %155 = vector.broadcast %cst_98 : f32 to vector<1x32xf32>
    %156 = arith.divf %154, %155 : vector<1x32xf32>
    %157 = vector.broadcast %156 : vector<1x32xf32> to vector<32x32xf32>
    %158 = arith.subf %150, %157 : vector<32x32xf32>
    %159 = arith.mulf %158, %158 : vector<32x32xf32>
    %cst_99 = arith.constant dense<0.000000e+00> : vector<32xf32>
    %160 = vector.multi_reduction <add>, %159, %cst_99 [0] : vector<32x32xf32> to vector<32xf32>
    %161 = vector.shape_cast %160 : vector<32xf32> to vector<1x32xf32>
    %cst_100 = arith.constant 3.200000e+01 : f32
    %162 = vector.broadcast %cst_100 : f32 to vector<1x32xf32>
    %163 = arith.divf %161, %162 : vector<1x32xf32>
    %cst_101 = arith.constant 9.99999974E-6 : f32
    %164 = vector.broadcast %cst_101 : f32 to vector<1x32xf32>
    %165 = arith.addf %163, %164 : vector<1x32xf32>
    %166 = math.rsqrt %165 : vector<1x32xf32>
    %167 = arith.mulf %151, %166 : vector<1x32xf32>
    %168 = arith.mulf %167, %156 : vector<1x32xf32>
    %169 = arith.subf %152, %168 : vector<1x32xf32>
    %170 = vector.broadcast %167 : vector<1x32xf32> to vector<32x32xf32>
    %171 = arith.mulf %150, %170 : vector<32x32xf32>
    %172 = vector.broadcast %169 : vector<1x32xf32> to vector<32x32xf32>
    %173 = arith.addf %171, %172 : vector<32x32xf32>
    %cst_102 = arith.constant 0.00999999977 : f32
    %174 = vector.broadcast %cst_102 : f32 to vector<32x32xf32>
    %175 = arith.mulf %174, %173 : vector<32x32xf32>
    %176 = arith.maximumf %173, %175 : vector<32x32xf32>
    %177 = arith.truncf %176 : vector<32x32xf32> to vector<32x32xbf16>
    %c0_103 = arith.constant 0 : index
    %c0_104 = arith.constant 0 : index
    %178 = vector.load %arg12[%c0_103, %c0_104] : memref<72x32xbf16, #tpu.memory_space<vmem>>, vector<72x32xbf16>
    %cst_105 = arith.constant dense<0.000000e+00> : vector<72x32xf32>
    %179 = tpu.matmul %178, %177, %cst_105 {dimension_numbers = #tpu.dot_dimension_numbers<[1], [0], [0], [1], [0, 0, 1, 1], [], []>} : vector<72x32xbf16>, vector<32x32xbf16>, vector<72x32xf32> -> vector<72x32xf32>
    %180 = arith.truncf %179 : vector<72x32xf32> to vector<72x32xbf16>
    %181 = vector.extract_strided_slice %180 {offsets = [0, 0], sizes = [8, 32], strides = [1, 1]} : vector<72x32xbf16> to vector<8x32xbf16>
    %c0_106 = arith.constant 0 : index
    %c0_107 = arith.constant 0 : index
    %c0_108 = arith.constant 0 : index
    %182 = vector.load %arg13[%c0_106, %c0_107, %c0_108] : memref<9x32x64xbf16, #tpu.memory_space<vmem>>, vector<1x32x64xbf16>
    %183 = vector.shape_cast %182 : vector<1x32x64xbf16> to vector<32x64xbf16>
    %cst_109 = arith.constant dense<0.000000e+00> : vector<8x64xf32>
    %184 = tpu.matmul %181, %183, %cst_109 {dimension_numbers = #tpu.dot_dimension_numbers<[1], [0], [0], [1], [0, 0, 1, 1], [], []>} : vector<8x32xbf16>, vector<32x64xbf16>, vector<8x64xf32> -> vector<8x64xf32>
    %185 = vector.extract_strided_slice %180 {offsets = [8, 0], sizes = [8, 32], strides = [1, 1]} : vector<72x32xbf16> to vector<8x32xbf16>
    %c1_110 = arith.constant 1 : index
    %c0_111 = arith.constant 0 : index
    %c0_112 = arith.constant 0 : index
    %186 = vector.load %arg13[%c1_110, %c0_111, %c0_112] : memref<9x32x64xbf16, #tpu.memory_space<vmem>>, vector<1x32x64xbf16>
    %187 = vector.shape_cast %186 : vector<1x32x64xbf16> to vector<32x64xbf16>
    %cst_113 = arith.constant dense<0.000000e+00> : vector<8x64xf32>
    %188 = tpu.matmul %185, %187, %cst_113 {dimension_numbers = #tpu.dot_dimension_numbers<[1], [0], [0], [1], [0, 0, 1, 1], [], []>} : vector<8x32xbf16>, vector<32x64xbf16>, vector<8x64xf32> -> vector<8x64xf32>
    %189 = arith.addf %184, %188 : vector<8x64xf32>
    %190 = vector.extract_strided_slice %180 {offsets = [16, 0], sizes = [8, 32], strides = [1, 1]} : vector<72x32xbf16> to vector<8x32xbf16>
    %c2_114 = arith.constant 2 : index
    %c0_115 = arith.constant 0 : index
    %c0_116 = arith.constant 0 : index
    %191 = vector.load %arg13[%c2_114, %c0_115, %c0_116] : memref<9x32x64xbf16, #tpu.memory_space<vmem>>, vector<1x32x64xbf16>
    %192 = vector.shape_cast %191 : vector<1x32x64xbf16> to vector<32x64xbf16>
    %cst_117 = arith.constant dense<0.000000e+00> : vector<8x64xf32>
    %193 = tpu.matmul %190, %192, %cst_117 {dimension_numbers = #tpu.dot_dimension_numbers<[1], [0], [0], [1], [0, 0, 1, 1], [], []>} : vector<8x32xbf16>, vector<32x64xbf16>, vector<8x64xf32> -> vector<8x64xf32>
    %194 = arith.addf %189, %193 : vector<8x64xf32>
    %195 = vector.extract_strided_slice %180 {offsets = [24, 0], sizes = [8, 32], strides = [1, 1]} : vector<72x32xbf16> to vector<8x32xbf16>
    %c3_118 = arith.constant 3 : index
    %c0_119 = arith.constant 0 : index
    %c0_120 = arith.constant 0 : index
    %196 = vector.load %arg13[%c3_118, %c0_119, %c0_120] : memref<9x32x64xbf16, #tpu.memory_space<vmem>>, vector<1x32x64xbf16>
    %197 = vector.shape_cast %196 : vector<1x32x64xbf16> to vector<32x64xbf16>
    %cst_121 = arith.constant dense<0.000000e+00> : vector<8x64xf32>
    %198 = tpu.matmul %195, %197, %cst_121 {dimension_numbers = #tpu.dot_dimension_numbers<[1], [0], [0], [1], [0, 0, 1, 1], [], []>} : vector<8x32xbf16>, vector<32x64xbf16>, vector<8x64xf32> -> vector<8x64xf32>
    %199 = arith.addf %194, %198 : vector<8x64xf32>
    %200 = vector.extract_strided_slice %180 {offsets = [32, 0], sizes = [8, 32], strides = [1, 1]} : vector<72x32xbf16> to vector<8x32xbf16>
    %c4_122 = arith.constant 4 : index
    %c0_123 = arith.constant 0 : index
    %c0_124 = arith.constant 0 : index
    %201 = vector.load %arg13[%c4_122, %c0_123, %c0_124] : memref<9x32x64xbf16, #tpu.memory_space<vmem>>, vector<1x32x64xbf16>
    %202 = vector.shape_cast %201 : vector<1x32x64xbf16> to vector<32x64xbf16>
    %cst_125 = arith.constant dense<0.000000e+00> : vector<8x64xf32>
    %203 = tpu.matmul %200, %202, %cst_125 {dimension_numbers = #tpu.dot_dimension_numbers<[1], [0], [0], [1], [0, 0, 1, 1], [], []>} : vector<8x32xbf16>, vector<32x64xbf16>, vector<8x64xf32> -> vector<8x64xf32>
    %204 = arith.addf %199, %203 : vector<8x64xf32>
    %205 = vector.extract_strided_slice %180 {offsets = [40, 0], sizes = [8, 32], strides = [1, 1]} : vector<72x32xbf16> to vector<8x32xbf16>
    %c5_126 = arith.constant 5 : index
    %c0_127 = arith.constant 0 : index
    %c0_128 = arith.constant 0 : index
    %206 = vector.load %arg13[%c5_126, %c0_127, %c0_128] : memref<9x32x64xbf16, #tpu.memory_space<vmem>>, vector<1x32x64xbf16>
    %207 = vector.shape_cast %206 : vector<1x32x64xbf16> to vector<32x64xbf16>
    %cst_129 = arith.constant dense<0.000000e+00> : vector<8x64xf32>
    %208 = tpu.matmul %205, %207, %cst_129 {dimension_numbers = #tpu.dot_dimension_numbers<[1], [0], [0], [1], [0, 0, 1, 1], [], []>} : vector<8x32xbf16>, vector<32x64xbf16>, vector<8x64xf32> -> vector<8x64xf32>
    %209 = arith.addf %204, %208 : vector<8x64xf32>
    %210 = vector.extract_strided_slice %180 {offsets = [48, 0], sizes = [8, 32], strides = [1, 1]} : vector<72x32xbf16> to vector<8x32xbf16>
    %c6_130 = arith.constant 6 : index
    %c0_131 = arith.constant 0 : index
    %c0_132 = arith.constant 0 : index
    %211 = vector.load %arg13[%c6_130, %c0_131, %c0_132] : memref<9x32x64xbf16, #tpu.memory_space<vmem>>, vector<1x32x64xbf16>
    %212 = vector.shape_cast %211 : vector<1x32x64xbf16> to vector<32x64xbf16>
    %cst_133 = arith.constant dense<0.000000e+00> : vector<8x64xf32>
    %213 = tpu.matmul %210, %212, %cst_133 {dimension_numbers = #tpu.dot_dimension_numbers<[1], [0], [0], [1], [0, 0, 1, 1], [], []>} : vector<8x32xbf16>, vector<32x64xbf16>, vector<8x64xf32> -> vector<8x64xf32>
    %214 = arith.addf %209, %213 : vector<8x64xf32>
    %215 = vector.extract_strided_slice %180 {offsets = [56, 0], sizes = [8, 32], strides = [1, 1]} : vector<72x32xbf16> to vector<8x32xbf16>
    %c7_134 = arith.constant 7 : index
    %c0_135 = arith.constant 0 : index
    %c0_136 = arith.constant 0 : index
    %216 = vector.load %arg13[%c7_134, %c0_135, %c0_136] : memref<9x32x64xbf16, #tpu.memory_space<vmem>>, vector<1x32x64xbf16>
    %217 = vector.shape_cast %216 : vector<1x32x64xbf16> to vector<32x64xbf16>
    %cst_137 = arith.constant dense<0.000000e+00> : vector<8x64xf32>
    %218 = tpu.matmul %215, %217, %cst_137 {dimension_numbers = #tpu.dot_dimension_numbers<[1], [0], [0], [1], [0, 0, 1, 1], [], []>} : vector<8x32xbf16>, vector<32x64xbf16>, vector<8x64xf32> -> vector<8x64xf32>
    %219 = arith.addf %214, %218 : vector<8x64xf32>
    %220 = vector.extract_strided_slice %180 {offsets = [64, 0], sizes = [8, 32], strides = [1, 1]} : vector<72x32xbf16> to vector<8x32xbf16>
    %c8_138 = arith.constant 8 : index
    %c0_139 = arith.constant 0 : index
    %c0_140 = arith.constant 0 : index
    %221 = vector.load %arg13[%c8_138, %c0_139, %c0_140] : memref<9x32x64xbf16, #tpu.memory_space<vmem>>, vector<1x32x64xbf16>
    %222 = vector.shape_cast %221 : vector<1x32x64xbf16> to vector<32x64xbf16>
    %cst_141 = arith.constant dense<0.000000e+00> : vector<8x64xf32>
    %223 = tpu.matmul %220, %222, %cst_141 {dimension_numbers = #tpu.dot_dimension_numbers<[1], [0], [0], [1], [0, 0, 1, 1], [], []>} : vector<8x32xbf16>, vector<32x64xbf16>, vector<8x64xf32> -> vector<8x64xf32>
    %224 = arith.addf %219, %223 : vector<8x64xf32>
    %c0_142 = arith.constant 0 : index
    %c0_143 = arith.constant 0 : index
    %225 = vector.load %arg14[%c0_142, %c0_143] : memref<1x64xf32, #tpu.memory_space<vmem>>, vector<1x64xf32>
    %c0_144 = arith.constant 0 : index
    %c0_145 = arith.constant 0 : index
    %226 = vector.load %arg15[%c0_144, %c0_145] : memref<1x64xf32, #tpu.memory_space<vmem>>, vector<1x64xf32>
    %cst_146 = arith.constant dense<0.000000e+00> : vector<64xf32>
    %227 = vector.multi_reduction <add>, %224, %cst_146 [0] : vector<8x64xf32> to vector<64xf32>
    %228 = vector.shape_cast %227 : vector<64xf32> to vector<1x64xf32>
    %cst_147 = arith.constant 8.000000e+00 : f32
    %229 = vector.broadcast %cst_147 : f32 to vector<1x64xf32>
    %230 = arith.divf %228, %229 : vector<1x64xf32>
    %231 = vector.broadcast %230 : vector<1x64xf32> to vector<8x64xf32>
    %232 = arith.subf %224, %231 : vector<8x64xf32>
    %233 = arith.mulf %232, %232 : vector<8x64xf32>
    %cst_148 = arith.constant dense<0.000000e+00> : vector<64xf32>
    %234 = vector.multi_reduction <add>, %233, %cst_148 [0] : vector<8x64xf32> to vector<64xf32>
    %235 = vector.shape_cast %234 : vector<64xf32> to vector<1x64xf32>
    %cst_149 = arith.constant 8.000000e+00 : f32
    %236 = vector.broadcast %cst_149 : f32 to vector<1x64xf32>
    %237 = arith.divf %235, %236 : vector<1x64xf32>
    %cst_150 = arith.constant 9.99999974E-6 : f32
    %238 = vector.broadcast %cst_150 : f32 to vector<1x64xf32>
    %239 = arith.addf %237, %238 : vector<1x64xf32>
    %240 = math.rsqrt %239 : vector<1x64xf32>
    %241 = arith.mulf %225, %240 : vector<1x64xf32>
    %242 = arith.mulf %241, %230 : vector<1x64xf32>
    %243 = arith.subf %226, %242 : vector<1x64xf32>
    %244 = vector.broadcast %241 : vector<1x64xf32> to vector<8x64xf32>
    %245 = arith.mulf %224, %244 : vector<8x64xf32>
    %246 = vector.broadcast %243 : vector<1x64xf32> to vector<8x64xf32>
    %247 = arith.addf %245, %246 : vector<8x64xf32>
    %cst_151 = arith.constant 0.00999999977 : f32
    %248 = vector.broadcast %cst_151 : f32 to vector<8x64xf32>
    %249 = arith.mulf %248, %247 : vector<8x64xf32>
    %250 = arith.maximumf %247, %249 : vector<8x64xf32>
    %251 = arith.truncf %250 : vector<8x64xf32> to vector<8x64xbf16>
    %c0_152 = arith.constant 0 : index
    %c0_153 = arith.constant 0 : index
    %252 = vector.load %arg16[%c0_152, %c0_153] : memref<72x8xbf16, #tpu.memory_space<vmem>>, vector<72x8xbf16>
    %cst_154 = arith.constant dense<0.000000e+00> : vector<72x64xf32>
    %253 = tpu.matmul %252, %251, %cst_154 {dimension_numbers = #tpu.dot_dimension_numbers<[1], [0], [0], [1], [0, 0, 1, 1], [], []>} : vector<72x8xbf16>, vector<8x64xbf16>, vector<72x64xf32> -> vector<72x64xf32>
    %254 = arith.truncf %253 : vector<72x64xf32> to vector<72x64xbf16>
    %255 = vector.extract_strided_slice %254 {offsets = [0, 0], sizes = [2, 64], strides = [1, 1]} : vector<72x64xbf16> to vector<2x64xbf16>
    %c0_155 = arith.constant 0 : index
    %c0_156 = arith.constant 0 : index
    %c0_157 = arith.constant 0 : index
    %256 = vector.load %arg17[%c0_155, %c0_156, %c0_157] : memref<9x64x128xbf16, #tpu.memory_space<vmem>>, vector<1x64x128xbf16>
    %257 = vector.shape_cast %256 : vector<1x64x128xbf16> to vector<64x128xbf16>
    %cst_158 = arith.constant dense<0.000000e+00> : vector<2x128xf32>
    %258 = tpu.matmul %255, %257, %cst_158 {dimension_numbers = #tpu.dot_dimension_numbers<[1], [0], [0], [1], [0, 0, 1, 1], [], []>} : vector<2x64xbf16>, vector<64x128xbf16>, vector<2x128xf32> -> vector<2x128xf32>
    %259 = vector.extract_strided_slice %254 {offsets = [8, 0], sizes = [2, 64], strides = [1, 1]} : vector<72x64xbf16> to vector<2x64xbf16>
    %c1_159 = arith.constant 1 : index
    %c0_160 = arith.constant 0 : index
    %c0_161 = arith.constant 0 : index
    %260 = vector.load %arg17[%c1_159, %c0_160, %c0_161] : memref<9x64x128xbf16, #tpu.memory_space<vmem>>, vector<1x64x128xbf16>
    %261 = vector.shape_cast %260 : vector<1x64x128xbf16> to vector<64x128xbf16>
    %cst_162 = arith.constant dense<0.000000e+00> : vector<2x128xf32>
    %262 = tpu.matmul %259, %261, %cst_162 {dimension_numbers = #tpu.dot_dimension_numbers<[1], [0], [0], [1], [0, 0, 1, 1], [], []>} : vector<2x64xbf16>, vector<64x128xbf16>, vector<2x128xf32> -> vector<2x128xf32>
    %263 = arith.addf %258, %262 : vector<2x128xf32>
    %264 = vector.extract_strided_slice %254 {offsets = [16, 0], sizes = [2, 64], strides = [1, 1]} : vector<72x64xbf16> to vector<2x64xbf16>
    %c2_163 = arith.constant 2 : index
    %c0_164 = arith.constant 0 : index
    %c0_165 = arith.constant 0 : index
    %265 = vector.load %arg17[%c2_163, %c0_164, %c0_165] : memref<9x64x128xbf16, #tpu.memory_space<vmem>>, vector<1x64x128xbf16>
    %266 = vector.shape_cast %265 : vector<1x64x128xbf16> to vector<64x128xbf16>
    %cst_166 = arith.constant dense<0.000000e+00> : vector<2x128xf32>
    %267 = tpu.matmul %264, %266, %cst_166 {dimension_numbers = #tpu.dot_dimension_numbers<[1], [0], [0], [1], [0, 0, 1, 1], [], []>} : vector<2x64xbf16>, vector<64x128xbf16>, vector<2x128xf32> -> vector<2x128xf32>
    %268 = arith.addf %263, %267 : vector<2x128xf32>
    %269 = vector.extract_strided_slice %254 {offsets = [24, 0], sizes = [2, 64], strides = [1, 1]} : vector<72x64xbf16> to vector<2x64xbf16>
    %c3_167 = arith.constant 3 : index
    %c0_168 = arith.constant 0 : index
    %c0_169 = arith.constant 0 : index
    %270 = vector.load %arg17[%c3_167, %c0_168, %c0_169] : memref<9x64x128xbf16, #tpu.memory_space<vmem>>, vector<1x64x128xbf16>
    %271 = vector.shape_cast %270 : vector<1x64x128xbf16> to vector<64x128xbf16>
    %cst_170 = arith.constant dense<0.000000e+00> : vector<2x128xf32>
    %272 = tpu.matmul %269, %271, %cst_170 {dimension_numbers = #tpu.dot_dimension_numbers<[1], [0], [0], [1], [0, 0, 1, 1], [], []>} : vector<2x64xbf16>, vector<64x128xbf16>, vector<2x128xf32> -> vector<2x128xf32>
    %273 = arith.addf %268, %272 : vector<2x128xf32>
    %274 = vector.extract_strided_slice %254 {offsets = [32, 0], sizes = [2, 64], strides = [1, 1]} : vector<72x64xbf16> to vector<2x64xbf16>
    %c4_171 = arith.constant 4 : index
    %c0_172 = arith.constant 0 : index
    %c0_173 = arith.constant 0 : index
    %275 = vector.load %arg17[%c4_171, %c0_172, %c0_173] : memref<9x64x128xbf16, #tpu.memory_space<vmem>>, vector<1x64x128xbf16>
    %276 = vector.shape_cast %275 : vector<1x64x128xbf16> to vector<64x128xbf16>
    %cst_174 = arith.constant dense<0.000000e+00> : vector<2x128xf32>
    %277 = tpu.matmul %274, %276, %cst_174 {dimension_numbers = #tpu.dot_dimension_numbers<[1], [0], [0], [1], [0, 0, 1, 1], [], []>} : vector<2x64xbf16>, vector<64x128xbf16>, vector<2x128xf32> -> vector<2x128xf32>
    %278 = arith.addf %273, %277 : vector<2x128xf32>
    %279 = vector.extract_strided_slice %254 {offsets = [40, 0], sizes = [2, 64], strides = [1, 1]} : vector<72x64xbf16> to vector<2x64xbf16>
    %c5_175 = arith.constant 5 : index
    %c0_176 = arith.constant 0 : index
    %c0_177 = arith.constant 0 : index
    %280 = vector.load %arg17[%c5_175, %c0_176, %c0_177] : memref<9x64x128xbf16, #tpu.memory_space<vmem>>, vector<1x64x128xbf16>
    %281 = vector.shape_cast %280 : vector<1x64x128xbf16> to vector<64x128xbf16>
    %cst_178 = arith.constant dense<0.000000e+00> : vector<2x128xf32>
    %282 = tpu.matmul %279, %281, %cst_178 {dimension_numbers = #tpu.dot_dimension_numbers<[1], [0], [0], [1], [0, 0, 1, 1], [], []>} : vector<2x64xbf16>, vector<64x128xbf16>, vector<2x128xf32> -> vector<2x128xf32>
    %283 = arith.addf %278, %282 : vector<2x128xf32>
    %284 = vector.extract_strided_slice %254 {offsets = [48, 0], sizes = [2, 64], strides = [1, 1]} : vector<72x64xbf16> to vector<2x64xbf16>
    %c6_179 = arith.constant 6 : index
    %c0_180 = arith.constant 0 : index
    %c0_181 = arith.constant 0 : index
    %285 = vector.load %arg17[%c6_179, %c0_180, %c0_181] : memref<9x64x128xbf16, #tpu.memory_space<vmem>>, vector<1x64x128xbf16>
    %286 = vector.shape_cast %285 : vector<1x64x128xbf16> to vector<64x128xbf16>
    %cst_182 = arith.constant dense<0.000000e+00> : vector<2x128xf32>
    %287 = tpu.matmul %284, %286, %cst_182 {dimension_numbers = #tpu.dot_dimension_numbers<[1], [0], [0], [1], [0, 0, 1, 1], [], []>} : vector<2x64xbf16>, vector<64x128xbf16>, vector<2x128xf32> -> vector<2x128xf32>
    %288 = arith.addf %283, %287 : vector<2x128xf32>
    %289 = vector.extract_strided_slice %254 {offsets = [56, 0], sizes = [2, 64], strides = [1, 1]} : vector<72x64xbf16> to vector<2x64xbf16>
    %c7_183 = arith.constant 7 : index
    %c0_184 = arith.constant 0 : index
    %c0_185 = arith.constant 0 : index
    %290 = vector.load %arg17[%c7_183, %c0_184, %c0_185] : memref<9x64x128xbf16, #tpu.memory_space<vmem>>, vector<1x64x128xbf16>
    %291 = vector.shape_cast %290 : vector<1x64x128xbf16> to vector<64x128xbf16>
    %cst_186 = arith.constant dense<0.000000e+00> : vector<2x128xf32>
    %292 = tpu.matmul %289, %291, %cst_186 {dimension_numbers = #tpu.dot_dimension_numbers<[1], [0], [0], [1], [0, 0, 1, 1], [], []>} : vector<2x64xbf16>, vector<64x128xbf16>, vector<2x128xf32> -> vector<2x128xf32>
    %293 = arith.addf %288, %292 : vector<2x128xf32>
    %294 = vector.extract_strided_slice %254 {offsets = [64, 0], sizes = [2, 64], strides = [1, 1]} : vector<72x64xbf16> to vector<2x64xbf16>
    %c8_187 = arith.constant 8 : index
    %c0_188 = arith.constant 0 : index
    %c0_189 = arith.constant 0 : index
    %295 = vector.load %arg17[%c8_187, %c0_188, %c0_189] : memref<9x64x128xbf16, #tpu.memory_space<vmem>>, vector<1x64x128xbf16>
    %296 = vector.shape_cast %295 : vector<1x64x128xbf16> to vector<64x128xbf16>
    %cst_190 = arith.constant dense<0.000000e+00> : vector<2x128xf32>
    %297 = tpu.matmul %294, %296, %cst_190 {dimension_numbers = #tpu.dot_dimension_numbers<[1], [0], [0], [1], [0, 0, 1, 1], [], []>} : vector<2x64xbf16>, vector<64x128xbf16>, vector<2x128xf32> -> vector<2x128xf32>
    %298 = arith.addf %293, %297 : vector<2x128xf32>
    %c0_191 = arith.constant 0 : index
    %c0_192 = arith.constant 0 : index
    %299 = vector.load %arg18[%c0_191, %c0_192] : memref<1x128xf32, #tpu.memory_space<vmem>>, vector<1x128xf32>
    %c0_193 = arith.constant 0 : index
    %c0_194 = arith.constant 0 : index
    %300 = vector.load %arg19[%c0_193, %c0_194] : memref<1x128xf32, #tpu.memory_space<vmem>>, vector<1x128xf32>
    %cst_195 = arith.constant dense<0.000000e+00> : vector<128xf32>
    %301 = vector.multi_reduction <add>, %298, %cst_195 [0] : vector<2x128xf32> to vector<128xf32>
    %302 = vector.shape_cast %301 : vector<128xf32> to vector<1x128xf32>
    %cst_196 = arith.constant 2.000000e+00 : f32
    %303 = vector.broadcast %cst_196 : f32 to vector<1x128xf32>
    %304 = arith.divf %302, %303 : vector<1x128xf32>
    %305 = vector.broadcast %304 : vector<1x128xf32> to vector<2x128xf32>
    %306 = arith.subf %298, %305 : vector<2x128xf32>
    %307 = arith.mulf %306, %306 : vector<2x128xf32>
    %cst_197 = arith.constant dense<0.000000e+00> : vector<128xf32>
    %308 = vector.multi_reduction <add>, %307, %cst_197 [0] : vector<2x128xf32> to vector<128xf32>
    %309 = vector.shape_cast %308 : vector<128xf32> to vector<1x128xf32>
    %cst_198 = arith.constant 2.000000e+00 : f32
    %310 = vector.broadcast %cst_198 : f32 to vector<1x128xf32>
    %311 = arith.divf %309, %310 : vector<1x128xf32>
    %cst_199 = arith.constant 9.99999974E-6 : f32
    %312 = vector.broadcast %cst_199 : f32 to vector<1x128xf32>
    %313 = arith.addf %311, %312 : vector<1x128xf32>
    %314 = math.rsqrt %313 : vector<1x128xf32>
    %315 = arith.mulf %299, %314 : vector<1x128xf32>
    %316 = arith.mulf %315, %304 : vector<1x128xf32>
    %317 = arith.subf %300, %316 : vector<1x128xf32>
    %318 = vector.broadcast %315 : vector<1x128xf32> to vector<2x128xf32>
    %319 = arith.mulf %298, %318 : vector<2x128xf32>
    %320 = vector.broadcast %317 : vector<1x128xf32> to vector<2x128xf32>
    %321 = arith.addf %319, %320 : vector<2x128xf32>
    %cst_200 = arith.constant 0.00999999977 : f32
    %322 = vector.broadcast %cst_200 : f32 to vector<2x128xf32>
    %323 = arith.mulf %322, %321 : vector<2x128xf32>
    %324 = arith.maximumf %321, %323 : vector<2x128xf32>
    %325 = arith.truncf %324 : vector<2x128xf32> to vector<2x128xbf16>
    %c0_201 = arith.constant 0 : index
    %c0_202 = arith.constant 0 : index
    %326 = vector.load %arg20[%c0_201, %c0_202] : memref<128x64xbf16, #tpu.memory_space<vmem>>, vector<128x64xbf16>
    %cst_203 = arith.constant dense<0.000000e+00> : vector<2x64xf32>
    %327 = tpu.matmul %325, %326, %cst_203 {dimension_numbers = #tpu.dot_dimension_numbers<[1], [0], [0], [1], [0, 0, 1, 1], [], []>} : vector<2x128xbf16>, vector<128x64xbf16>, vector<2x64xf32> -> vector<2x64xf32>
    %c0_204 = arith.constant 0 : index
    %c0_205 = arith.constant 0 : index
    %328 = vector.load %arg21[%c0_204, %c0_205] : memref<1x64xf32, #tpu.memory_space<vmem>>, vector<1x64xf32>
    %329 = vector.broadcast %328 : vector<1x64xf32> to vector<2x64xf32>
    %330 = arith.addf %327, %329 : vector<2x64xf32>
    %331 = vector.extract_strided_slice %330 {offsets = [0, 0], sizes = [2, 32], strides = [1, 1]} : vector<2x64xf32> to vector<2x32xf32>
    %c0_206 = arith.constant 0 : index
    %c0_207 = arith.constant 0 : index
    %332 = vector.load %arg22[%c0_206, %c0_207] : memref<2x32xf32, #tpu.memory_space<vmem>>, vector<2x32xf32>
    tpu.vector_store %arg22[%c0_206, %c0_207], %331 {strides = array<i32>} : memref<2x32xf32, #tpu.memory_space<vmem>>, vector<2x32xf32>,
    %333 = vector.extract_strided_slice %330 {offsets = [0, 32], sizes = [2, 32], strides = [1, 1]} : vector<2x64xf32> to vector<2x32xf32>
    %c0_208 = arith.constant 0 : index
    %c0_209 = arith.constant 0 : index
    %334 = vector.load %arg23[%c0_208, %c0_209] : memref<2x32xf32, #tpu.memory_space<vmem>>, vector<2x32xf32>
    tpu.vector_store %arg23[%c0_208, %c0_209], %333 {strides = array<i32>} : memref<2x32xf32, #tpu.memory_space<vmem>>, vector<2x32xf32>,
    return
  }
}

</mosaic_0001>

<llo_original>
// kernel: encoder_forward.1
$region0: #{encoder_forward.1}
  #allocation0 [shape = 'u32[]', space=smem, size = 0x4, offset = 0x4, fixed_abs, tag = 'smem constant byte address 0x4 - core index']
  #allocation1 [shape = 'u32[144,128]{1,0:T(1,128)}', space=vmem, size = 0x12000, scoped, tag = 'internal scratch']
  %s0 = inlined_call_operand.vmem [shape: bf16[512,9], index: 0, kind: input, shape index: {}]
  %s1 = inlined_call_operand.vmem [shape: bf16[9,8], index: 1, kind: input, shape index: {}]
  %s2 = inlined_call_operand.vmem [shape: f32[1,8], index: 2, kind: input, shape index: {}]
  %s3 = inlined_call_operand.vmem [shape: f32[1,8], index: 3, kind: input, shape index: {}]
  %s4 = inlined_call_operand.vmem [shape: bf16[1152,512], index: 4, kind: input, shape index: {}]
  %s5 = inlined_call_operand.vmem [shape: bf16[9,8,16], index: 5, kind: input, shape index: {}]
  %s6 = inlined_call_operand.vmem [shape: f32[1,16], index: 6, kind: input, shape index: {}]
  %s7 = inlined_call_operand.vmem [shape: f32[1,16], index: 7, kind: input, shape index: {}]
  %s8 = inlined_call_operand.vmem [shape: bf16[288,128], index: 8, kind: input, shape index: {}]
  %s9 = inlined_call_operand.vmem [shape: bf16[9,16,32], index: 9, kind: input, shape index: {}]
  %s10 = inlined_call_operand.vmem [shape: f32[1,32], index: 10, kind: input, shape index: {}]
  %s11 = inlined_call_operand.vmem [shape: f32[1,32], index: 11, kind: input, shape index: {}]
  %s12 = inlined_call_operand.vmem [shape: bf16[72,32], index: 12, kind: input, shape index: {}]
  %s13 = inlined_call_operand.vmem [shape: bf16[9,32,64], index: 13, kind: input, shape index: {}]
  %s14 = inlined_call_operand.vmem [shape: f32[1,64], index: 14, kind: input, shape index: {}]
  %s15 = inlined_call_operand.vmem [shape: f32[1,64], index: 15, kind: input, shape index: {}]
  %s16 = inlined_call_operand.vmem [shape: bf16[72,8], index: 16, kind: input, shape index: {}]
  %s17 = inlined_call_operand.vmem [shape: bf16[9,64,128], index: 17, kind: input, shape index: {}]
  %s18 = inlined_call_operand.vmem [shape: f32[1,128], index: 18, kind: input, shape index: {}]
  %s19 = inlined_call_operand.vmem [shape: f32[1,128], index: 19, kind: input, shape index: {}]
  %s20 = inlined_call_operand.vmem [shape: bf16[128,64], index: 20, kind: input, shape index: {}]
  %s21 = inlined_call_operand.vmem [shape: f32[1,64], index: 21, kind: input, shape index: {}]
  %s22 = inlined_call_operand.hbm [shape: f32[2,32], index: 22, kind: output, shape index: {0}]
  %s23 = inlined_call_operand.hbm [shape: f32[2,32], index: 23, kind: output, shape index: {1}]
  %24 = xla_tuple %s22, %s23
  %s25 = sld [smem:[#allocation0]]
  $region106: #{encoder_forward.1} parent=0
    _
  %s27 = ssub.s32 1, %s25
  %s28 = scalar_select 0, %s27, %s25
  $region1: #{encoder_forward.1} parent=0
    #allocation2 [shape = 'u8[1024]{0}', space=vmem, size = 0x400, scoped, tag = 'output window, operand 0, single buffered']
    #allocation3 [shape = 's32[1]{0}', space=sflag, size = 0x4, scoped, tag = 'scoped memory for encoder_forward.1']
    #allocation4 [shape = 'u8[1024]{0}', space=vmem, size = 0x400, scoped, tag = 'output window, operand 1, single buffered']
    #allocation5 [shape = 's32[1]{0}', space=sflag, size = 0x4, scoped, tag = 'scoped memory for encoder_forward.1']
    %29 = vsyncpa [#allocation3], 0
    %30 = vsyncpa [#allocation5], 0
    // Predicated region
    $region2: #{encoder_forward.1} parent=1 // pred_check
      _
    $region3: #{encoder_forward.1} parent=1 // pred_check_branch
      %32 = sbr.rel (0) target = $region5
    $region4: #{encoder_forward.1} parent=1 // pred_region
      _
    $region5: #{encoder_forward.1} parent=1 // pred_fallthru
      _
    // Predicated region
    $region6: #{encoder_forward.1} parent=1 // pred_check
      _
    $region7: #{encoder_forward.1} parent=1 // pred_check_branch
      %34 = sbr.rel (0) target = $region9
    $region8: #{encoder_forward.1} parent=1 // pred_region
      _
    $region9: #{encoder_forward.1} parent=1 // pred_fallthru
      _
    // Predicated region
    $region10: #{encoder_forward.1} parent=1 // pred_check
      _
    $region11: #{encoder_forward.1} parent=1 // pred_check_branch
      %36 = sbr.rel (0) target = $region13
    $region12: #{encoder_forward.1} parent=1 // pred_region
      _
    $region13: #{encoder_forward.1} parent=1 // pred_fallthru
      _
    // Predicated region
    $region14: #{encoder_forward.1} parent=1 // pred_check
      _
    $region15: #{encoder_forward.1} parent=1 // pred_check_branch
      %38 = sbr.rel (0) target = $region17
    $region16: #{encoder_forward.1} parent=1 // pred_region
      _
    $region17: #{encoder_forward.1} parent=1 // pred_fallthru
      _
    // Predicated region
    $region18: #{encoder_forward.1} parent=1 // pred_check
      _
    $region19: #{encoder_forward.1} parent=1 // pred_check_branch
      %40 = sbr.rel (0) target = $region21
    $region20: #{encoder_forward.1} parent=1 // pred_region
      _
    $region21: #{encoder_forward.1} parent=1 // pred_fallthru
      _
    // Predicated region
    $region22: #{encoder_forward.1} parent=1 // pred_check
      _
    $region23: #{encoder_forward.1} parent=1 // pred_check_branch
      %42 = sbr.rel (0) target = $region25
    $region24: #{encoder_forward.1} parent=1 // pred_region
      _
    $region25: #{encoder_forward.1} parent=1 // pred_fallthru
      _
    // Predicated region
    $region26: #{encoder_forward.1} parent=1 // pred_check
      _
    $region27: #{encoder_forward.1} parent=1 // pred_check_branch
      %44 = sbr.rel (0) target = $region29
    $region28: #{encoder_forward.1} parent=1 // pred_region
      _
    $region29: #{encoder_forward.1} parent=1 // pred_fallthru
      _
    // Predicated region
    $region30: #{encoder_forward.1} parent=1 // pred_check
      _
    $region31: #{encoder_forward.1} parent=1 // pred_check_branch
      %46 = sbr.rel (0) target = $region33
    $region32: #{encoder_forward.1} parent=1 // pred_region
      _
    $region33: #{encoder_forward.1} parent=1 // pred_fallthru
      _
    // Predicated region
    $region34: #{encoder_forward.1} parent=1 // pred_check
      _
    $region35: #{encoder_forward.1} parent=1 // pred_check_branch
      %48 = sbr.rel (0) target = $region37
    $region36: #{encoder_forward.1} parent=1 // pred_region
      _
    $region37: #{encoder_forward.1} parent=1 // pred_fallthru
      _
    // Predicated region
    $region38: #{encoder_forward.1} parent=1 // pred_check
      _
    $region39: #{encoder_forward.1} parent=1 // pred_check_branch
      %50 = sbr.rel (0) target = $region41
    $region40: #{encoder_forward.1} parent=1 // pred_region
      _
    $region41: #{encoder_forward.1} parent=1 // pred_fallthru
      _
    // Predicated region
    $region42: #{encoder_forward.1} parent=1 // pred_check
      _
    $region43: #{encoder_forward.1} parent=1 // pred_check_branch
      %52 = sbr.rel (0) target = $region45
    $region44: #{encoder_forward.1} parent=1 // pred_region
      _
    $region45: #{encoder_forward.1} parent=1 // pred_fallthru
      _
    // Predicated region
    $region46: #{encoder_forward.1} parent=1 // pred_check
      _
    $region47: #{encoder_forward.1} parent=1 // pred_check_branch
      %54 = sbr.rel (0) target = $region49
    $region48: #{encoder_forward.1} parent=1 // pred_region
      _
    $region49: #{encoder_forward.1} parent=1 // pred_fallthru
      _
    // Predicated region
    $region50: #{encoder_forward.1} parent=1 // pred_check
      _
    $region51: #{encoder_forward.1} parent=1 // pred_check_branch
      %56 = sbr.rel (0) target = $region53
    $region52: #{encoder_forward.1} parent=1 // pred_region
      _
    $region53: #{encoder_forward.1} parent=1 // pred_fallthru
      _
    // Predicated region
    $region54: #{encoder_forward.1} parent=1 // pred_check
      _
    $region55: #{encoder_forward.1} parent=1 // pred_check_branch
      %58 = sbr.rel (0) target = $region57
    $region56: #{encoder_forward.1} parent=1 // pred_region
      _
    $region57: #{encoder_forward.1} parent=1 // pred_fallthru
      _
    // Predicated region
    $region58: #{encoder_forward.1} parent=1 // pred_check
      _
    $region59: #{encoder_forward.1} parent=1 // pred_check_branch
      %60 = sbr.rel (0) target = $region61
    $region60: #{encoder_forward.1} parent=1 // pred_region
      _
    $region61: #{encoder_forward.1} parent=1 // pred_fallthru
      _
    // Predicated region
    $region62: #{encoder_forward.1} parent=1 // pred_check
      _
    $region63: #{encoder_forward.1} parent=1 // pred_check_branch
      %62 = sbr.rel (0) target = $region65
    $region64: #{encoder_forward.1} parent=1 // pred_region
      _
    $region65: #{encoder_forward.1} parent=1 // pred_fallthru
      _
    // Predicated region
    $region66: #{encoder_forward.1} parent=1 // pred_check
      _
    $region67: #{encoder_forward.1} parent=1 // pred_check_branch
      %64 = sbr.rel (0) target = $region69
    $region68: #{encoder_forward.1} parent=1 // pred_region
      _
    $region69: #{encoder_forward.1} parent=1 // pred_fallthru
      _
    // Predicated region
    $region70: #{encoder_forward.1} parent=1 // pred_check
      _
    $region71: #{encoder_forward.1} parent=1 // pred_check_branch
      %66 = sbr.rel (0) target = $region73
    $region72: #{encoder_forward.1} parent=1 // pred_region
      _
    $region73: #{encoder_forward.1} parent=1 // pred_fallthru
      _
    // Predicated region
    $region74: #{encoder_forward.1} parent=1 // pred_check
      _
    $region75: #{encoder_forward.1} parent=1 // pred_check_branch
      %68 = sbr.rel (0) target = $region77
    $region76: #{encoder_forward.1} parent=1 // pred_region
      _
    $region77: #{encoder_forward.1} parent=1 // pred_fallthru
      _
    // Predicated region
    $region78: #{encoder_forward.1} parent=1 // pred_check
      _
    $region79: #{encoder_forward.1} parent=1 // pred_check_branch
      %70 = sbr.rel (0) target = $region81
    $region80: #{encoder_forward.1} parent=1 // pred_region
      _
    $region81: #{encoder_forward.1} parent=1 // pred_fallthru
      _
    // Predicated region
    $region82: #{encoder_forward.1} parent=1 // pred_check
      _
    $region83: #{encoder_forward.1} parent=1 // pred_check_branch
      %72 = sbr.rel (0) target = $region85
    $region84: #{encoder_forward.1} parent=1 // pred_region
      _
    $region85: #{encoder_forward.1} parent=1 // pred_fallthru
      _
    // Predicated region
    $region86: #{encoder_forward.1} parent=1 // pred_check
      _
    $region87: #{encoder_forward.1} parent=1 // pred_check_branch
      %74 = sbr.rel (0) target = $region89
    $region88: #{encoder_forward.1} parent=1 // pred_region
      _
    $region89: #{encoder_forward.1} parent=1 // pred_fallthru
      _
    %v76 = vld [vmem:[%s0] sm:$0xf]
    %v77 = vld [vmem:[%s0 + $0x4] sm:$0xf]
    %v78 = vld [vmem:[%s0 + $0x8] sm:$0xf]
    %v79 = vld [vmem:[%s0 + $0xc] sm:$0xf]
    %v80 = vld [vmem:[%s0 + $0x10] sm:$0xf]
    %v81 = vld [vmem:[%s0 + $0x14] sm:$0xf]
    %v82 = vld [vmem:[%s0 + $0x18] sm:$0xf]
    %v83 = vld [vmem:[%s0 + $0x1c] sm:$0xf]
    %v84 = vld [vmem:[%s0 + $0x20] sm:$0xf]
    %v85 = vld [vmem:[%s0 + $0x24] sm:$0xf]
    %v86 = vld [vmem:[%s0 + $0x28] sm:$0xf]
    %v87 = vld [vmem:[%s0 + $0x2c] sm:$0xf]
    %v88 = vld [vmem:[%s0 + $0x30] sm:$0xf]
    %v89 = vld [vmem:[%s0 + $0x34] sm:$0xf]
    %v90 = vld [vmem:[%s0 + $0x38] sm:$0xf]
    %v91 = vld [vmem:[%s0 + $0x3c] sm:$0xf]
    %v92 = vld [vmem:[%s0 + $0x40] sm:$0xf]
    %v93 = vld [vmem:[%s0 + $0x44] sm:$0xf]
    %v94 = vld [vmem:[%s0 + $0x48] sm:$0xf]
    %v95 = vld [vmem:[%s0 + $0x4c] sm:$0xf]
    %v96 = vld [vmem:[%s0 + $0x50] sm:$0xf]
    %v97 = vld [vmem:[%s0 + $0x54] sm:$0xf]
    %v98 = vld [vmem:[%s0 + $0x58] sm:$0xf]
    %v99 = vld [vmem:[%s0 + $0x5c] sm:$0xf]
    %v100 = vld [vmem:[%s0 + $0x60] sm:$0xf]
    %v101 = vld [vmem:[%s0 + $0x64] sm:$0xf]
    %v102 = vld [vmem:[%s0 + $0x68] sm:$0xf]
    %v103 = vld [vmem:[%s0 + $0x6c] sm:$0xf]
    %v104 = vld [vmem:[%s0 + $0x70] sm:$0xf]
    %v105 = vld [vmem:[%s0 + $0x74] sm:$0xf]
    %v106 = vld [vmem:[%s0 + $0x78] sm:$0xf]
    %v107 = vld [vmem:[%s0 + $0x7c] sm:$0xf]
    %v108 = vld [vmem:[%s0 + $0x80] sm:$0xf]
    %v109 = vld [vmem:[%s0 + $0x84] sm:$0xf]
    %v110 = vld [vmem:[%s0 + $0x88] sm:$0xf]
    %v111 = vld [vmem:[%s0 + $0x8c] sm:$0xf]
    %v112 = vld [vmem:[%s0 + $0x90] sm:$0xf]
    %v113 = vld [vmem:[%s0 + $0x94] sm:$0xf]
    %v114 = vld [vmem:[%s0 + $0x98] sm:$0xf]
    %v115 = vld [vmem:[%s0 + $0x9c] sm:$0xf]
    %v116 = vld [vmem:[%s0 + $0xa0] sm:$0xf]
    %v117 = vld [vmem:[%s0 + $0xa4] sm:$0xf]
    %v118 = vld [vmem:[%s0 + $0xa8] sm:$0xf]
    %v119 = vld [vmem:[%s0 + $0xac] sm:$0xf]
    %v120 = vld [vmem:[%s0 + $0xb0] sm:$0xf]
    %v121 = vld [vmem:[%s0 + $0xb4] sm:$0xf]
    %v122 = vld [vmem:[%s0 + $0xb8] sm:$0xf]
    %v123 = vld [vmem:[%s0 + $0xbc] sm:$0xf]
    %v124 = vld [vmem:[%s0 + $0xc0] sm:$0xf]
    %v125 = vld [vmem:[%s0 + $0xc4] sm:$0xf]
    %v126 = vld [vmem:[%s0 + $0xc8] sm:$0xf]
    %v127 = vld [vmem:[%s0 + $0xcc] sm:$0xf]
    %v128 = vld [vmem:[%s0 + $0xd0] sm:$0xf]
    %v129 = vld [vmem:[%s0 + $0xd4] sm:$0xf]
    %v130 = vld [vmem:[%s0 + $0xd8] sm:$0xf]
    %v131 = vld [vmem:[%s0 + $0xdc] sm:$0xf]
    %v132 = vld [vmem:[%s0 + $0xe0] sm:$0xf]
    %v133 = vld [vmem:[%s0 + $0xe4] sm:$0xf]
    %v134 = vld [vmem:[%s0 + $0xe8] sm:$0xf]
    %v135 = vld [vmem:[%s0 + $0xec] sm:$0xf]
    %v136 = vld [vmem:[%s0 + $0xf0] sm:$0xf]
    %v137 = vld [vmem:[%s0 + $0xf4] sm:$0xf]
    %v138 = vld [vmem:[%s0 + $0xf8] sm:$0xf]
    %v139 = vld [vmem:[%s0 + $0xfc] sm:$0xf]
    %v140 = vld [vmem:[%s1] sm:$0xf]
    %v141 = vld [vmem:[%s1 + $0x4] sm:$0x1]
    %v206 = vunpack.c.l.b16 %v76
    %v207 = vunpack.c.l.b16 %v77
    %v208 = vunpack.c.l.b16 %v78
    %v209 = vunpack.c.l.b16 %v79
    %v210 = vunpack.c.l.b16 %v80
    %v211 = vunpack.c.l.b16 %v81
    %v212 = vunpack.c.l.b16 %v82
    %v213 = vunpack.c.l.b16 %v83
    %v214 = vunpack.c.l.b16 %v84
    %v215 = vunpack.c.l.b16 %v85
    %v216 = vunpack.c.l.b16 %v86
    %v217 = vunpack.c.l.b16 %v87
    %v218 = vunpack.c.l.b16 %v88
    %v219 = vunpack.c.l.b16 %v89
    %v220 = vunpack.c.l.b16 %v90
    %v221 = vunpack.c.l.b16 %v91
    %v222 = vunpack.c.l.b16 %v92
    %v223 = vunpack.c.l.b16 %v93
    %v224 = vunpack.c.l.b16 %v94
    %v225 = vunpack.c.l.b16 %v95
    %v226 = vunpack.c.l.b16 %v96
    %v227 = vunpack.c.l.b16 %v97
    %v228 = vunpack.c.l.b16 %v98
    %v229 = vunpack.c.l.b16 %v99
    %v230 = vunpack.c.l.b16 %v100
    %v231 = vunpack.c.l.b16 %v101
    %v232 = vunpack.c.l.b16 %v102
    %v233 = vunpack.c.l.b16 %v103
    %v234 = vunpack.c.l.b16 %v104
    %v235 = vunpack.c.l.b16 %v105
    %v236 = vunpack.c.l.b16 %v106
    %v237 = vunpack.c.l.b16 %v107
    %v238 = vunpack.c.l.b16 %v108
    %v239 = vunpack.c.l.b16 %v109
    %v240 = vunpack.c.l.b16 %v110
    %v241 = vunpack.c.l.b16 %v111
    %v242 = vunpack.c.l.b16 %v112
    %v243 = vunpack.c.l.b16 %v113
    %v244 = vunpack.c.l.b16 %v114
    %v245 = vunpack.c.l.b16 %v115
    %v246 = vunpack.c.l.b16 %v116
    %v247 = vunpack.c.l.b16 %v117
    %v248 = vunpack.c.l.b16 %v118
    %v249 = vunpack.c.l.b16 %v119
    %v250 = vunpack.c.l.b16 %v120
    %v251 = vunpack.c.l.b16 %v121
    %v252 = vunpack.c.l.b16 %v122
    %v253 = vunpack.c.l.b16 %v123
    %v254 = vunpack.c.l.b16 %v124
    %v255 = vunpack.c.l.b16 %v125
    %v256 = vunpack.c.l.b16 %v126
    %v257 = vunpack.c.l.b16 %v127
    %v258 = vunpack.c.l.b16 %v128
    %v259 = vunpack.c.l.b16 %v129
    %v260 = vunpack.c.l.b16 %v130
    %v261 = vunpack.c.l.b16 %v131
    %v262 = vunpack.c.l.b16 %v132
    %v263 = vunpack.c.l.b16 %v133
    %v264 = vunpack.c.l.b16 %v134
    %v265 = vunpack.c.l.b16 %v135
    %v266 = vunpack.c.l.b16 %v136
    %v267 = vunpack.c.l.b16 %v137
    %v268 = vunpack.c.l.b16 %v138
    %v269 = vunpack.c.l.b16 %v139
    %v270 = vpack.c.b16 %v207, %v206
    %v271 = vpack.c.b16 %v209, %v208
    %v272 = vpack.c.b16 %v211, %v210
    %v273 = vpack.c.b16 %v213, %v212
    %v274 = vpack.c.b16 %v215, %v214
    %v275 = vpack.c.b16 %v217, %v216
    %v276 = vpack.c.b16 %v219, %v218
    %v277 = vpack.c.b16 %v221, %v220
    %v278 = vpack.c.b16 %v223, %v222
    %v279 = vpack.c.b16 %v225, %v224
    %v280 = vpack.c.b16 %v227, %v226
    %v281 = vpack.c.b16 %v229, %v228
    %v282 = vpack.c.b16 %v231, %v230
    %v283 = vpack.c.b16 %v233, %v232
    %v284 = vpack.c.b16 %v235, %v234
    %v285 = vpack.c.b16 %v237, %v236
    %v286 = vpack.c.b16 %v239, %v238
    %v287 = vpack.c.b16 %v241, %v240
    %v288 = vpack.c.b16 %v243, %v242
    %v289 = vpack.c.b16 %v245, %v244
    %v290 = vpack.c.b16 %v247, %v246
    %v291 = vpack.c.b16 %v249, %v248
    %v292 = vpack.c.b16 %v251, %v250
    %v293 = vpack.c.b16 %v253, %v252
    %v294 = vpack.c.b16 %v255, %v254
    %v295 = vpack.c.b16 %v257, %v256
    %v296 = vpack.c.b16 %v259, %v258
    %v297 = vpack.c.b16 %v261, %v260
    %v298 = vpack.c.b16 %v263, %v262
    %v299 = vpack.c.b16 %v265, %v264
    %v300 = vpack.c.b16 %v267, %v266
    %v301 = vpack.c.b16 %v269, %v268
    %v304 = vunpack.c.l.b16 %v140
    %v305 = vunpack.c.l.b16 %v141
    %v306 = vpack.c.b16 %v305, %v304
    %vm307 = vcmask 72704
    %v309 = vsel %vm307, %v270, 0
    %v312 = vsel %vm307, %v271, 0
    %v315 = vsel %vm307, %v272, 0
    %v318 = vsel %vm307, %v273, 0
    %v321 = vsel %vm307, %v274, 0
    %v324 = vsel %vm307, %v275, 0
    %v327 = vsel %vm307, %v276, 0
    %v330 = vsel %vm307, %v277, 0
    %v333 = vsel %vm307, %v278, 0
    %v336 = vsel %vm307, %v279, 0
    %v339 = vsel %vm307, %v280, 0
    %v342 = vsel %vm307, %v281, 0
    %v345 = vsel %vm307, %v282, 0
    %v348 = vsel %vm307, %v283, 0
    %v351 = vsel %vm307, %v284, 0
    %v354 = vsel %vm307, %v285, 0
    %v357 = vsel %vm307, %v286, 0
    %v360 = vsel %vm307, %v287, 0
    %v363 = vsel %vm307, %v288, 0
    %v366 = vsel %vm307, %v289, 0
    %v369 = vsel %vm307, %v290, 0
    %v372 = vsel %vm307, %v291, 0
    %v375 = vsel %vm307, %v292, 0
    %v378 = vsel %vm307, %v293, 0
    %v381 = vsel %vm307, %v294, 0
    %v384 = vsel %vm307, %v295, 0
    %v387 = vsel %vm307, %v296, 0
    %v390 = vsel %vm307, %v297, 0
    %v393 = vsel %vm307, %v298, 0
    %v396 = vsel %vm307, %v299, 0
    %v399 = vsel %vm307, %v300, 0
    %v402 = vsel %vm307, %v301, 0
    %vm404 = vcmask 1043456
    %vm405 = vcmask 1044480
    %v406 = vsel %vm404, 4294967295, 65535
    %v407 = vsel %vm405, %v406, 0
    %v409 = vand.u32 %v306, %v407
    %411 = vmatprep.subr.bf16.mxu0 0
    %412 = vmatpush1.bf16.msra.mxu0 0
    %413 = vmatprep.subr.bf16.mxu0 0
    %414 = vmatpush1.bf16.msra.mxu0 0
    %415 = vmatprep.subr.bf16.mxu0 0
    %416 = vmatpush1.bf16.msra.mxu0 0
    %417 = vmatprep.subr.bf16.mxu0 0
    %418 = vmatpush1.bf16.msra.mxu0 0
    %419 = vmatprep.subr.bf16.mxu0 0
    %420 = vmatpush1.bf16.msra.mxu0 0
    %421 = vmatprep.subr.bf16.mxu0 0
    %422 = vmatpush1.bf16.msra.mxu0 0
    %423 = vmatprep.subr.bf16.mxu0 0
    %424 = vmatpush1.bf16.msra.mxu0 0
    %425 = vmatprep.subr.bf16.mxu0 0
    %426 = vmatpush1.bf16.msra.mxu0 %v409
    %427 = vmatprep.subr.bf16.mxu0 0
    %428 = vmatpush2.bf16.msra.mxu0 0
    %429 = vmatprep.subr.bf16.mxu0 0
    %430 = vmatpush2.bf16.msra.mxu0 0
    %431 = vmatprep.subr.bf16.mxu0 0
    %432 = vmatpush2.bf16.msra.mxu0 0
    %433 = vmatprep.subr.bf16.mxu0 0
    %434 = vmatpush2.bf16.msra.mxu0 0
    %435 = vmatprep.subr.bf16.mxu0 0
    %436 = vmatpush2.bf16.msra.mxu0 0
    %437 = vmatprep.subr.bf16.mxu0 0
    %438 = vmatpush2.bf16.msra.mxu0 0
    %439 = vmatprep.subr.bf16.mxu0 0
    %440 = vmatpush2.bf16.msra.mxu0 0
    %441 = vmatprep.subr.bf16.mxu0 0
    %442 = vmatpush2.bf16.msra.mxu0 0
    %443 = vmatprep.mubr.bf16.mxu0 0
    %444 = vmatmul.mubr.bf16.gmra.mxu0 %v309
    %v445 = vpop.f32.mrf.mxu0
    %v446 = vadd.f32 0.0, %v445
    %v447 = vpop.f32.mrf.mxu0
    %v448 = vpop.f32.mrf.mxu0
    %v449 = vadd.f32 0.0, %v448
    %v450 = vpop.f32.mrf.mxu0
    %451 = vmatprep.mubr.bf16.mxu0 0
    %452 = vmatmul.mubr.bf16.gmra.mxu0 %v312
    %v453 = vpop.f32.mrf.mxu0
    %v454 = vadd.f32 0.0, %v453
    %v455 = vpop.f32.mrf.mxu0
    %v456 = vpop.f32.mrf.mxu0
    %v457 = vadd.f32 0.0, %v456
    %v458 = vpop.f32.mrf.mxu0
    %459 = vmatprep.mubr.bf16.mxu0 0
    %460 = vmatmul.mubr.bf16.gmra.mxu0 %v315
    %v461 = vpop.f32.mrf.mxu0
    %v462 = vadd.f32 0.0, %v461
    %v463 = vpop.f32.mrf.mxu0
    %v464 = vpop.f32.mrf.mxu0
    %v465 = vadd.f32 0.0, %v464
    %v466 = vpop.f32.mrf.mxu0
    %467 = vmatprep.mubr.bf16.mxu0 0
    %468 = vmatmul.mubr.bf16.gmra.mxu0 %v318
    %v469 = vpop.f32.mrf.mxu0
    %v470 = vadd.f32 0.0, %v469
    %v471 = vpop.f32.mrf.mxu0
    %v472 = vpop.f32.mrf.mxu0
    %v473 = vadd.f32 0.0, %v472
    %v474 = vpop.f32.mrf.mxu0
    %475 = vmatprep.mubr.bf16.mxu0 0
    %476 = vmatmul.mubr.bf16.gmra.mxu0 %v321
    %v477 = vpop.f32.mrf.mxu0
    %v478 = vadd.f32 0.0, %v477
    %v479 = vpop.f32.mrf.mxu0
    %v480 = vpop.f32.mrf.mxu0
    %v481 = vadd.f32 0.0, %v480
    %v482 = vpop.f32.mrf.mxu0
    %483 = vmatprep.mubr.bf16.mxu0 0
    %484 = vmatmul.mubr.bf16.gmra.mxu0 %v324
    %v485 = vpop.f32.mrf.mxu0
    %v486 = vadd.f32 0.0, %v485
    %v487 = vpop.f32.mrf.mxu0
    %v488 = vpop.f32.mrf.mxu0
    %v489 = vadd.f32 0.0, %v488
    %v490 = vpop.f32.mrf.mxu0
    %491 = vmatprep.mubr.bf16.mxu0 0
    %492 = vmatmul.mubr.bf16.gmra.mxu0 %v327
    %v493 = vpop.f32.mrf.mxu0
    %v494 = vadd.f32 0.0, %v493
    %v495 = vpop.f32.mrf.mxu0
    %v496 = vpop.f32.mrf.mxu0
    %v497 = vadd.f32 0.0, %v496
    %v498 = vpop.f32.mrf.mxu0
    %499 = vmatprep.mubr.bf16.mxu0 0
    %500 = vmatmul.mubr.bf16.gmra.mxu0 %v330
    %v501 = vpop.f32.mrf.mxu0
    %v502 = vadd.f32 0.0, %v501
    %v503 = vpop.f32.mrf.mxu0
    %v504 = vpop.f32.mrf.mxu0
    %v505 = vadd.f32 0.0, %v504
    %v506 = vpop.f32.mrf.mxu0
    %507 = vmatprep.mubr.bf16.mxu0 0
    %508 = vmatmul.mubr.bf16.gmra.mxu0 %v333
    %v509 = vpop.f32.mrf.mxu0
    %v510 = vadd.f32 0.0, %v509
    %v511 = vpop.f32.mrf.mxu0
    %v512 = vpop.f32.mrf.mxu0
    %v513 = vadd.f32 0.0, %v512
    %v514 = vpop.f32.mrf.mxu0
    %515 = vmatprep.mubr.bf16.mxu0 0
    %516 = vmatmul.mubr.bf16.gmra.mxu0 %v336
    %v517 = vpop.f32.mrf.mxu0
    %v518 = vadd.f32 0.0, %v517
    %v519 = vpop.f32.mrf.mxu0
    %v520 = vpop.f32.mrf.mxu0
    %v521 = vadd.f32 0.0, %v520
    %v522 = vpop.f32.mrf.mxu0
    %523 = vmatprep.mubr.bf16.mxu0 0
    %524 = vmatmul.mubr.bf16.gmra.mxu0 %v339
    %v525 = vpop.f32.mrf.mxu0
    %v526 = vadd.f32 0.0, %v525
    %v527 = vpop.f32.mrf.mxu0
    %v528 = vpop.f32.mrf.mxu0
    %v529 = vadd.f32 0.0, %v528
    %v530 = vpop.f32.mrf.mxu0
    %531 = vmatprep.mubr.bf16.mxu0 0
    %532 = vmatmul.mubr.bf16.gmra.mxu0 %v342
    %v533 = vpop.f32.mrf.mxu0
    %v534 = vadd.f32 0.0, %v533
    %v535 = vpop.f32.mrf.mxu0
    %v536 = vpop.f32.mrf.mxu0
    %v537 = vadd.f32 0.0, %v536
    %v538 = vpop.f32.mrf.mxu0
    %539 = vmatprep.mubr.bf16.mxu0 0
    %540 = vmatmul.mubr.bf16.gmra.mxu0 %v345
    %v541 = vpop.f32.mrf.mxu0
    %v542 = vadd.f32 0.0, %v541
    %v543 = vpop.f32.mrf.mxu0
    %v544 = vpop.f32.mrf.mxu0
    %v545 = vadd.f32 0.0, %v544
    %v546 = vpop.f32.mrf.mxu0
    %547 = vmatprep.mubr.bf16.mxu0 0
    %548 = vmatmul.mubr.bf16.gmra.mxu0 %v348
    %v549 = vpop.f32.mrf.mxu0
    %v550 = vadd.f32 0.0, %v549
    %v551 = vpop.f32.mrf.mxu0
    %v552 = vpop.f32.mrf.mxu0
    %v553 = vadd.f32 0.0, %v552
    %v554 = vpop.f32.mrf.mxu0
    %555 = vmatprep.mubr.bf16.mxu0 0
    %556 = vmatmul.mubr.bf16.gmra.mxu0 %v351
    %v557 = vpop.f32.mrf.mxu0
    %v558 = vadd.f32 0.0, %v557
    %v559 = vpop.f32.mrf.mxu0
    %v560 = vpop.f32.mrf.mxu0
    %v561 = vadd.f32 0.0, %v560
    %v562 = vpop.f32.mrf.mxu0
    %563 = vmatprep.mubr.bf16.mxu0 0
    %564 = vmatmul.mubr.bf16.gmra.mxu0 %v354
    %v565 = vpop.f32.mrf.mxu0
    %v566 = vadd.f32 0.0, %v565
    %v567 = vpop.f32.mrf.mxu0
    %v568 = vpop.f32.mrf.mxu0
    %v569 = vadd.f32 0.0, %v568
    %v570 = vpop.f32.mrf.mxu0
    %571 = vmatprep.mubr.bf16.mxu0 0
    %572 = vmatmul.mubr.bf16.gmra.mxu0 %v357
    %v573 = vpop.f32.mrf.mxu0
    %v574 = vadd.f32 0.0, %v573
    %v575 = vpop.f32.mrf.mxu0
    %v576 = vpop.f32.mrf.mxu0
    %v577 = vadd.f32 0.0, %v576
    %v578 = vpop.f32.mrf.mxu0
    %579 = vmatprep.mubr.bf16.mxu0 0
    %580 = vmatmul.mubr.bf16.gmra.mxu0 %v360
    %v581 = vpop.f32.mrf.mxu0
    %v582 = vadd.f32 0.0, %v581
    %v583 = vpop.f32.mrf.mxu0
    %v584 = vpop.f32.mrf.mxu0
    %v585 = vadd.f32 0.0, %v584
    %v586 = vpop.f32.mrf.mxu0
    %587 = vmatprep.mubr.bf16.mxu0 0
    %588 = vmatmul.mubr.bf16.gmra.mxu0 %v363
    %v589 = vpop.f32.mrf.mxu0
    %v590 = vadd.f32 0.0, %v589
    %v591 = vpop.f32.mrf.mxu0
    %v592 = vpop.f32.mrf.mxu0
    %v593 = vadd.f32 0.0, %v592
    %v594 = vpop.f32.mrf.mxu0
    %595 = vmatprep.mubr.bf16.mxu0 0
    %596 = vmatmul.mubr.bf16.gmra.mxu0 %v366
    %v597 = vpop.f32.mrf.mxu0
    %v598 = vadd.f32 0.0, %v597
    %v599 = vpop.f32.mrf.mxu0
    %v600 = vpop.f32.mrf.mxu0
    %v601 = vadd.f32 0.0, %v600
    %v602 = vpop.f32.mrf.mxu0
    %603 = vmatprep.mubr.bf16.mxu0 0
    %604 = vmatmul.mubr.bf16.gmra.mxu0 %v369
    %v605 = vpop.f32.mrf.mxu0
    %v606 = vadd.f32 0.0, %v605
    %v607 = vpop.f32.mrf.mxu0
    %v608 = vpop.f32.mrf.mxu0
    %v609 = vadd.f32 0.0, %v608
    %v610 = vpop.f32.mrf.mxu0
    %611 = vmatprep.mubr.bf16.mxu0 0
    %612 = vmatmul.mubr.bf16.gmra.mxu0 %v372
    %v613 = vpop.f32.mrf.mxu0
    %v614 = vadd.f32 0.0, %v613
    %v615 = vpop.f32.mrf.mxu0
    %v616 = vpop.f32.mrf.mxu0
    %v617 = vadd.f32 0.0, %v616
    %v618 = vpop.f32.mrf.mxu0
    %619 = vmatprep.mubr.bf16.mxu0 0
    %620 = vmatmul.mubr.bf16.gmra.mxu0 %v375
    %v621 = vpop.f32.mrf.mxu0
    %v622 = vadd.f32 0.0, %v621
    %v623 = vpop.f32.mrf.mxu0
    %v624 = vpop.f32.mrf.mxu0
    %v625 = vadd.f32 0.0, %v624
    %v626 = vpop.f32.mrf.mxu0
    %627 = vmatprep.mubr.bf16.mxu0 0
    %628 = vmatmul.mubr.bf16.gmra.mxu0 %v378
    %v629 = vpop.f32.mrf.mxu0
    %v630 = vadd.f32 0.0, %v629
    %v631 = vpop.f32.mrf.mxu0
    %v632 = vpop.f32.mrf.mxu0
    %v633 = vadd.f32 0.0, %v632
    %v634 = vpop.f32.mrf.mxu0
    %635 = vmatprep.mubr.bf16.mxu0 0
    %636 = vmatmul.mubr.bf16.gmra.mxu0 %v381
    %v637 = vpop.f32.mrf.mxu0
    %v638 = vadd.f32 0.0, %v637
    %v639 = vpop.f32.mrf.mxu0
    %v640 = vpop.f32.mrf.mxu0
    %v641 = vadd.f32 0.0, %v640
    %v642 = vpop.f32.mrf.mxu0
    %643 = vmatprep.mubr.bf16.mxu0 0
    %644 = vmatmul.mubr.bf16.gmra.mxu0 %v384
    %v645 = vpop.f32.mrf.mxu0
    %v646 = vadd.f32 0.0, %v645
    %v647 = vpop.f32.mrf.mxu0
    %v648 = vpop.f32.mrf.mxu0
    %v649 = vadd.f32 0.0, %v648
    %v650 = vpop.f32.mrf.mxu0
    %651 = vmatprep.mubr.bf16.mxu0 0
    %652 = vmatmul.mubr.bf16.gmra.mxu0 %v387
    %v653 = vpop.f32.mrf.mxu0
    %v654 = vadd.f32 0.0, %v653
    %v655 = vpop.f32.mrf.mxu0
    %v656 = vpop.f32.mrf.mxu0
    %v657 = vadd.f32 0.0, %v656
    %v658 = vpop.f32.mrf.mxu0
    %659 = vmatprep.mubr.bf16.mxu0 0
    %660 = vmatmul.mubr.bf16.gmra.mxu0 %v390
    %v661 = vpop.f32.mrf.mxu0
    %v662 = vadd.f32 0.0, %v661
    %v663 = vpop.f32.mrf.mxu0
    %v664 = vpop.f32.mrf.mxu0
    %v665 = vadd.f32 0.0, %v664
    %v666 = vpop.f32.mrf.mxu0
    %667 = vmatprep.mubr.bf16.mxu0 0
    %668 = vmatmul.mubr.bf16.gmra.mxu0 %v393
    %v669 = vpop.f32.mrf.mxu0
    %v670 = vadd.f32 0.0, %v669
    %v671 = vpop.f32.mrf.mxu0
    %v672 = vpop.f32.mrf.mxu0
    %v673 = vadd.f32 0.0, %v672
    %v674 = vpop.f32.mrf.mxu0
    %675 = vmatprep.mubr.bf16.mxu0 0
    %676 = vmatmul.mubr.bf16.gmra.mxu0 %v396
    %v677 = vpop.f32.mrf.mxu0
    %v678 = vadd.f32 0.0, %v677
    %v679 = vpop.f32.mrf.mxu0
    %v680 = vpop.f32.mrf.mxu0
    %v681 = vadd.f32 0.0, %v680
    %v682 = vpop.f32.mrf.mxu0
    %683 = vmatprep.mubr.bf16.mxu0 0
    %684 = vmatmul.mubr.bf16.gmra.mxu0 %v399
    %v685 = vpop.f32.mrf.mxu0
    %v686 = vadd.f32 0.0, %v685
    %v687 = vpop.f32.mrf.mxu0
    %v688 = vpop.f32.mrf.mxu0
    %v689 = vadd.f32 0.0, %v688
    %v690 = vpop.f32.mrf.mxu0
    %691 = vmatprep.mubr.bf16.mxu0 0
    %692 = vmatmul.mubr.bf16.gmra.mxu0 %v402
    %v693 = vpop.f32.mrf.mxu0
    %v694 = vadd.f32 0.0, %v693
    %v695 = vpop.f32.mrf.mxu0
    %v696 = vpop.f32.mrf.mxu0
    %v697 = vadd.f32 0.0, %v696
    %v698 = vpop.f32.mrf.mxu0
    %699 = vdwg.mxu0
    %v700 = vld [vmem:[%s2] sm:$0x1]
    %v701 = vld [vmem:[%s3] sm:$0x1]
    %vm702 = vcmask 64512
    %v703 = vsel %vm702, %v446, 0.0
    %v704 = vsel %vm702, %v449, 0.0
    %v705 = vadd.f32 %v703, %v704
    %v706 = vsel %vm702, %v454, 0.0
    %v707 = vadd.f32 %v705, %v706
    %v708 = vsel %vm702, %v457, 0.0
    %v709 = vadd.f32 %v707, %v708
    %v710 = vsel %vm702, %v462, 0.0
    %v711 = vadd.f32 %v709, %v710
    %v712 = vsel %vm702, %v465, 0.0
    %v713 = vadd.f32 %v711, %v712
    %v714 = vsel %vm702, %v470, 0.0
    %v715 = vadd.f32 %v713, %v714
    %v716 = vsel %vm702, %v473, 0.0
    %v717 = vadd.f32 %v715, %v716
    %v718 = vsel %vm702, %v478, 0.0
    %v719 = vadd.f32 %v717, %v718
    %v720 = vsel %vm702, %v481, 0.0
    %v721 = vadd.f32 %v719, %v720
    %v722 = vsel %vm702, %v486, 0.0
    %v723 = vadd.f32 %v721, %v722
    %v724 = vsel %vm702, %v489, 0.0
    %v725 = vadd.f32 %v723, %v724
    %v726 = vsel %vm702, %v494, 0.0
    %v727 = vadd.f32 %v725, %v726
    %v728 = vsel %vm702, %v497, 0.0
    %v729 = vadd.f32 %v727, %v728
    %v730 = vsel %vm702, %v502, 0.0
    %v731 = vadd.f32 %v729, %v730
    %v732 = vsel %vm702, %v505, 0.0
    %v733 = vadd.f32 %v731, %v732
    %v734 = vsel %vm702, %v510, 0.0
    %v735 = vadd.f32 %v733, %v734
    %v736 = vsel %vm702, %v513, 0.0
    %v737 = vadd.f32 %v735, %v736
    %v738 = vsel %vm702, %v518, 0.0
    %v739 = vadd.f32 %v737, %v738
    %v740 = vsel %vm702, %v521, 0.0
    %v741 = vadd.f32 %v739, %v740
    %v742 = vsel %vm702, %v526, 0.0
    %v743 = vadd.f32 %v741, %v742
    %v744 = vsel %vm702, %v529, 0.0
    %v745 = vadd.f32 %v743, %v744
    %v746 = vsel %vm702, %v534, 0.0
    %v747 = vadd.f32 %v745, %v746
    %v748 = vsel %vm702, %v537, 0.0
    %v749 = vadd.f32 %v747, %v748
    %v750 = vsel %vm702, %v542, 0.0
    %v751 = vadd.f32 %v749, %v750
    %v752 = vsel %vm702, %v545, 0.0
    %v753 = vadd.f32 %v751, %v752
    %v754 = vsel %vm702, %v550, 0.0
    %v755 = vadd.f32 %v753, %v754
    %v756 = vsel %vm702, %v553, 0.0
    %v757 = vadd.f32 %v755, %v756
    %v758 = vsel %vm702, %v558, 0.0
    %v759 = vadd.f32 %v757, %v758
    %v760 = vsel %vm702, %v561, 0.0
    %v761 = vadd.f32 %v759, %v760
    %v762 = vsel %vm702, %v566, 0.0
    %v763 = vadd.f32 %v761, %v762
    %v764 = vsel %vm702, %v569, 0.0
    %v765 = vadd.f32 %v763, %v764
    %v766 = vsel %vm702, %v574, 0.0
    %v767 = vadd.f32 %v765, %v766
    %v768 = vsel %vm702, %v577, 0.0
    %v769 = vadd.f32 %v767, %v768
    %v770 = vsel %vm702, %v582, 0.0
    %v771 = vadd.f32 %v769, %v770
    %v772 = vsel %vm702, %v585, 0.0
    %v773 = vadd.f32 %v771, %v772
    %v774 = vsel %vm702, %v590, 0.0
    %v775 = vadd.f32 %v773, %v774
    %v776 = vsel %vm702, %v593, 0.0
    %v777 = vadd.f32 %v775, %v776
    %v778 = vsel %vm702, %v598, 0.0
    %v779 = vadd.f32 %v777, %v778
    %v780 = vsel %vm702, %v601, 0.0
    %v781 = vadd.f32 %v779, %v780
    %v782 = vsel %vm702, %v606, 0.0
    %v783 = vadd.f32 %v781, %v782
    %v784 = vsel %vm702, %v609, 0.0
    %v785 = vadd.f32 %v783, %v784
    %v786 = vsel %vm702, %v614, 0.0
    %v787 = vadd.f32 %v785, %v786
    %v788 = vsel %vm702, %v617, 0.0
    %v789 = vadd.f32 %v787, %v788
    %v790 = vsel %vm702, %v622, 0.0
    %v791 = vadd.f32 %v789, %v790
    %v792 = vsel %vm702, %v625, 0.0
    %v793 = vadd.f32 %v791, %v792
    %v794 = vsel %vm702, %v630, 0.0
    %v795 = vadd.f32 %v793, %v794
    %v796 = vsel %vm702, %v633, 0.0
    %v797 = vadd.f32 %v795, %v796
    %v798 = vsel %vm702, %v638, 0.0
    %v799 = vadd.f32 %v797, %v798
    %v800 = vsel %vm702, %v641, 0.0
    %v801 = vadd.f32 %v799, %v800
    %v802 = vsel %vm702, %v646, 0.0
    %v803 = vadd.f32 %v801, %v802
    %v804 = vsel %vm702, %v649, 0.0
    %v805 = vadd.f32 %v803, %v804
    %v806 = vsel %vm702, %v654, 0.0
    %v807 = vadd.f32 %v805, %v806
    %v808 = vsel %vm702, %v657, 0.0
    %v809 = vadd.f32 %v807, %v808
    %v810 = vsel %vm702, %v662, 0.0
    %v811 = vadd.f32 %v809, %v810
    %v812 = vsel %vm702, %v665, 0.0
    %v813 = vadd.f32 %v811, %v812
    %v814 = vsel %vm702, %v670, 0.0
    %v815 = vadd.f32 %v813, %v814
    %v816 = vsel %vm702, %v673, 0.0
    %v817 = vadd.f32 %v815, %v816
    %v818 = vsel %vm702, %v678, 0.0
    %v819 = vadd.f32 %v817, %v818
    %v820 = vsel %vm702, %v681, 0.0
    %v821 = vadd.f32 %v819, %v820
    %v822 = vsel %vm702, %v686, 0.0
    %v823 = vadd.f32 %v821, %v822
    %v824 = vsel %vm702, %v689, 0.0
    %v825 = vadd.f32 %v823, %v824
    %v826 = vsel %vm702, %v694, 0.0
    %v827 = vadd.f32 %v825, %v826
    %v828 = vsel %vm702, %v697, 0.0
    %v829 = vadd.f32 %v827, %v828
    %v830 = vrot.slane %v829, 4
    %v831 = vadd.f32 %v829, %v830
    %v832 = vrot.slane %v831, 2
    %v833 = vadd.f32 %v831, %v832
    %v834 = vrot.slane %v833, 1
    %v835 = vadd.f32 %v833, %v834
    %v836 = vrcp.pop 512.0
    %v837 = vmul.f32 %v835, %v836
    %v838 = vsub.f32 %v446, %v837
    %v839 = vsub.f32 %v449, %v837
    %v840 = vsub.f32 %v454, %v837
    %v841 = vsub.f32 %v457, %v837
    %v842 = vsub.f32 %v462, %v837
    %v843 = vsub.f32 %v465, %v837
    %v844 = vsub.f32 %v470, %v837
    %v845 = vsub.f32 %v473, %v837
    %v846 = vsub.f32 %v478, %v837
    %v847 = vsub.f32 %v481, %v837
    %v848 = vsub.f32 %v486, %v837
    %v849 = vsub.f32 %v489, %v837
    %v850 = vsub.f32 %v494, %v837
    %v851 = vsub.f32 %v497, %v837
    %v852 = vsub.f32 %v502, %v837
    %v853 = vsub.f32 %v505, %v837
    %v854 = vsub.f32 %v510, %v837
    %v855 = vsub.f32 %v513, %v837
    %v856 = vsub.f32 %v518, %v837
    %v857 = vsub.f32 %v521, %v837
    %v858 = vsub.f32 %v526, %v837
    %v859 = vsub.f32 %v529, %v837
    %v860 = vsub.f32 %v534, %v837
    %v861 = vsub.f32 %v537, %v837
    %v862 = vsub.f32 %v542, %v837
    %v863 = vsub.f32 %v545, %v837
    %v864 = vsub.f32 %v550, %v837
    %v865 = vsub.f32 %v553, %v837
    %v866 = vsub.f32 %v558, %v837
    %v867 = vsub.f32 %v561, %v837
    %v868 = vsub.f32 %v566, %v837
    %v869 = vsub.f32 %v569, %v837
    %v870 = vsub.f32 %v574, %v837
    %v871 = vsub.f32 %v577, %v837
    %v872 = vsub.f32 %v582, %v837
    %v873 = vsub.f32 %v585, %v837
    %v874 = vsub.f32 %v590, %v837
    %v875 = vsub.f32 %v593, %v837
    %v876 = vsub.f32 %v598, %v837
    %v877 = vsub.f32 %v601, %v837
    %v878 = vsub.f32 %v606, %v837
    %v879 = vsub.f32 %v609, %v837
    %v880 = vsub.f32 %v614, %v837
    %v881 = vsub.f32 %v617, %v837
    %v882 = vsub.f32 %v622, %v837
    %v883 = vsub.f32 %v625, %v837
    %v884 = vsub.f32 %v630, %v837
    %v885 = vsub.f32 %v633, %v837
    %v886 = vsub.f32 %v638, %v837
    %v887 = vsub.f32 %v641, %v837
    %v888 = vsub.f32 %v646, %v837
    %v889 = vsub.f32 %v649, %v837
    %v890 = vsub.f32 %v654, %v837
    %v891 = vsub.f32 %v657, %v837
    %v892 = vsub.f32 %v662, %v837
    %v893 = vsub.f32 %v665, %v837
    %v894 = vsub.f32 %v670, %v837
    %v895 = vsub.f32 %v673, %v837
    %v896 = vsub.f32 %v678, %v837
    %v897 = vsub.f32 %v681, %v837
    %v898 = vsub.f32 %v686, %v837
    %v899 = vsub.f32 %v689, %v837
    %v900 = vsub.f32 %v694, %v837
    %v901 = vsub.f32 %v697, %v837
    %v902 = vmul.f32 %v838, %v838
    %v903 = vmul.f32 %v839, %v839
    %v904 = vmul.f32 %v840, %v840
    %v905 = vmul.f32 %v841, %v841
    %v906 = vmul.f32 %v842, %v842
    %v907 = vmul.f32 %v843, %v843
    %v908 = vmul.f32 %v844, %v844
    %v909 = vmul.f32 %v845, %v845
    %v910 = vmul.f32 %v846, %v846
    %v911 = vmul.f32 %v847, %v847
    %v912 = vmul.f32 %v848, %v848
    %v913 = vmul.f32 %v849, %v849
    %v914 = vmul.f32 %v850, %v850
    %v915 = vmul.f32 %v851, %v851
    %v916 = vmul.f32 %v852, %v852
    %v917 = vmul.f32 %v853, %v853
    %v918 = vmul.f32 %v854, %v854
    %v919 = vmul.f32 %v855, %v855
    %v920 = vmul.f32 %v856, %v856
    %v921 = vmul.f32 %v857, %v857
    %v922 = vmul.f32 %v858, %v858
    %v923 = vmul.f32 %v859, %v859
    %v924 = vmul.f32 %v860, %v860
    %v925 = vmul.f32 %v861, %v861
    %v926 = vmul.f32 %v862, %v862
    %v927 = vmul.f32 %v863, %v863
    %v928 = vmul.f32 %v864, %v864
    %v929 = vmul.f32 %v865, %v865
    %v930 = vmul.f32 %v866, %v866
    %v931 = vmul.f32 %v867, %v867
    %v932 = vmul.f32 %v868, %v868
    %v933 = vmul.f32 %v869, %v869
    %v934 = vmul.f32 %v870, %v870
    %v935 = vmul.f32 %v871, %v871
    %v936 = vmul.f32 %v872, %v872
    %v937 = vmul.f32 %v873, %v873
    %v938 = vmul.f32 %v874, %v874
    %v939 = vmul.f32 %v875, %v875
    %v940 = vmul.f32 %v876, %v876
    %v941 = vmul.f32 %v877, %v877
    %v942 = vmul.f32 %v878, %v878
    %v943 = vmul.f32 %v879, %v879
    %v944 = vmul.f32 %v880, %v880
    %v945 = vmul.f32 %v881, %v881
    %v946 = vmul.f32 %v882, %v882
    %v947 = vmul.f32 %v883, %v883
    %v948 = vmul.f32 %v884, %v884
    %v949 = vmul.f32 %v885, %v885
    %v950 = vmul.f32 %v886, %v886
    %v951 = vmul.f32 %v887, %v887
    %v952 = vmul.f32 %v888, %v888
    %v953 = vmul.f32 %v889, %v889
    %v954 = vmul.f32 %v890, %v890
    %v955 = vmul.f32 %v891, %v891
    %v956 = vmul.f32 %v892, %v892
    %v957 = vmul.f32 %v893, %v893
    %v958 = vmul.f32 %v894, %v894
    %v959 = vmul.f32 %v895, %v895
    %v960 = vmul.f32 %v896, %v896
    %v961 = vmul.f32 %v897, %v897
    %v962 = vmul.f32 %v898, %v898
    %v963 = vmul.f32 %v899, %v899
    %v964 = vmul.f32 %v900, %v900
    %v965 = vmul.f32 %v901, %v901
    %v966 = vsel %vm702, %v902, 0.0
    %v967 = vsel %vm702, %v903, 0.0
    %v968 = vadd.f32 %v966, %v967
    %v969 = vsel %vm702, %v904, 0.0
    %v970 = vadd.f32 %v968, %v969
    %v971 = vsel %vm702, %v905, 0.0
    %v972 = vadd.f32 %v970, %v971
    %v973 = vsel %vm702, %v906, 0.0
    %v974 = vadd.f32 %v972, %v973
    %v975 = vsel %vm702, %v907, 0.0
    %v976 = vadd.f32 %v974, %v975
    %v977 = vsel %vm702, %v908, 0.0
    %v978 = vadd.f32 %v976, %v977
    %v979 = vsel %vm702, %v909, 0.0
    %v980 = vadd.f32 %v978, %v979
    %v981 = vsel %vm702, %v910, 0.0
    %v982 = vadd.f32 %v980, %v981
    %v983 = vsel %vm702, %v911, 0.0
    %v984 = vadd.f32 %v982, %v983
    %v985 = vsel %vm702, %v912, 0.0
    %v986 = vadd.f32 %v984, %v985
    %v987 = vsel %vm702, %v913, 0.0
    %v988 = vadd.f32 %v986, %v987
    %v989 = vsel %vm702, %v914, 0.0
    %v990 = vadd.f32 %v988, %v989
    %v991 = vsel %vm702, %v915, 0.0
    %v992 = vadd.f32 %v990, %v991
    %v993 = vsel %vm702, %v916, 0.0
    %v994 = vadd.f32 %v992, %v993
    %v995 = vsel %vm702, %v917, 0.0
    %v996 = vadd.f32 %v994, %v995
    %v997 = vsel %vm702, %v918, 0.0
    %v998 = vadd.f32 %v996, %v997
    %v999 = vsel %vm702, %v919, 0.0
    %v1000 = vadd.f32 %v998, %v999
    %v1001 = vsel %vm702, %v920, 0.0
    %v1002 = vadd.f32 %v1000, %v1001
    %v1003 = vsel %vm702, %v921, 0.0
    %v1004 = vadd.f32 %v1002, %v1003
    %v1005 = vsel %vm702, %v922, 0.0
    %v1006 = vadd.f32 %v1004, %v1005
    %v1007 = vsel %vm702, %v923, 0.0
    %v1008 = vadd.f32 %v1006, %v1007
    %v1009 = vsel %vm702, %v924, 0.0
    %v1010 = vadd.f32 %v1008, %v1009
    %v1011 = vsel %vm702, %v925, 0.0
    %v1012 = vadd.f32 %v1010, %v1011
    %v1013 = vsel %vm702, %v926, 0.0
    %v1014 = vadd.f32 %v1012, %v1013
    %v1015 = vsel %vm702, %v927, 0.0
    %v1016 = vadd.f32 %v1014, %v1015
    %v1017 = vsel %vm702, %v928, 0.0
    %v1018 = vadd.f32 %v1016, %v1017
    %v1019 = vsel %vm702, %v929, 0.0
    %v1020 = vadd.f32 %v1018, %v1019
    %v1021 = vsel %vm702, %v930, 0.0
    %v1022 = vadd.f32 %v1020, %v1021
    %v1023 = vsel %vm702, %v931, 0.0
    %v1024 = vadd.f32 %v1022, %v1023
    %v1025 = vsel %vm702, %v932, 0.0
    %v1026 = vadd.f32 %v1024, %v1025
    %v1027 = vsel %vm702, %v933, 0.0
    %v1028 = vadd.f32 %v1026, %v1027
    %v1029 = vsel %vm702, %v934, 0.0
    %v1030 = vadd.f32 %v1028, %v1029
    %v1031 = vsel %vm702, %v935, 0.0
    %v1032 = vadd.f32 %v1030, %v1031
    %v1033 = vsel %vm702, %v936, 0.0
    %v1034 = vadd.f32 %v1032, %v1033
    %v1035 = vsel %vm702, %v937, 0.0
    %v1036 = vadd.f32 %v1034, %v1035
    %v1037 = vsel %vm702, %v938, 0.0
    %v1038 = vadd.f32 %v1036, %v1037
    %v1039 = vsel %vm702, %v939, 0.0
    %v1040 = vadd.f32 %v1038, %v1039
    %v1041 = vsel %vm702, %v940, 0.0
    %v1042 = vadd.f32 %v1040, %v1041
    %v1043 = vsel %vm702, %v941, 0.0
    %v1044 = vadd.f32 %v1042, %v1043
    %v1045 = vsel %vm702, %v942, 0.0
    %v1046 = vadd.f32 %v1044, %v1045
    %v1047 = vsel %vm702, %v943, 0.0
    %v1048 = vadd.f32 %v1046, %v1047
    %v1049 = vsel %vm702, %v944, 0.0
    %v1050 = vadd.f32 %v1048, %v1049
    %v1051 = vsel %vm702, %v945, 0.0
    %v1052 = vadd.f32 %v1050, %v1051
    %v1053 = vsel %vm702, %v946, 0.0
    %v1054 = vadd.f32 %v1052, %v1053
    %v1055 = vsel %vm702, %v947, 0.0
    %v1056 = vadd.f32 %v1054, %v1055
    %v1057 = vsel %vm702, %v948, 0.0
    %v1058 = vadd.f32 %v1056, %v1057
    %v1059 = vsel %vm702, %v949, 0.0
    %v1060 = vadd.f32 %v1058, %v1059
    %v1061 = vsel %vm702, %v950, 0.0
    %v1062 = vadd.f32 %v1060, %v1061
    %v1063 = vsel %vm702, %v951, 0.0
    %v1064 = vadd.f32 %v1062, %v1063
    %v1065 = vsel %vm702, %v952, 0.0
    %v1066 = vadd.f32 %v1064, %v1065
    %v1067 = vsel %vm702, %v953, 0.0
    %v1068 = vadd.f32 %v1066, %v1067
    %v1069 = vsel %vm702, %v954, 0.0
    %v1070 = vadd.f32 %v1068, %v1069
    %v1071 = vsel %vm702, %v955, 0.0
    %v1072 = vadd.f32 %v1070, %v1071
    %v1073 = vsel %vm702, %v956, 0.0
    %v1074 = vadd.f32 %v1072, %v1073
    %v1075 = vsel %vm702, %v957, 0.0
    %v1076 = vadd.f32 %v1074, %v1075
    %v1077 = vsel %vm702, %v958, 0.0
    %v1078 = vadd.f32 %v1076, %v1077
    %v1079 = vsel %vm702, %v959, 0.0
    %v1080 = vadd.f32 %v1078, %v1079
    %v1081 = vsel %vm702, %v960, 0.0
    %v1082 = vadd.f32 %v1080, %v1081
    %v1083 = vsel %vm702, %v961, 0.0
    %v1084 = vadd.f32 %v1082, %v1083
    %v1085 = vsel %vm702, %v962, 0.0
    %v1086 = vadd.f32 %v1084, %v1085
    %v1087 = vsel %vm702, %v963, 0.0
    %v1088 = vadd.f32 %v1086, %v1087
    %v1089 = vsel %vm702, %v964, 0.0
    %v1090 = vadd.f32 %v1088, %v1089
    %v1091 = vsel %vm702, %v965, 0.0
    %v1092 = vadd.f32 %v1090, %v1091
    %v1093 = vrot.slane %v1092, 4
    %v1094 = vadd.f32 %v1092, %v1093
    %v1095 = vrot.slane %v1094, 2
    %v1096 = vadd.f32 %v1094, %v1095
    %v1097 = vrot.slane %v1096, 1
    %v1098 = vadd.f32 %v1096, %v1097
    %v1099 = vmul.f32 %v1098, %v836
    %v1100 = vadd.f32 %v1099, 1e-05
    %v1101 = vrsqrt.pop %v1100
    %v1102 = vmul.f32 %v700, %v1101
    %v1103 = vmul.f32 %v1102, %v837
    %v1104 = vsub.f32 %v701, %v1103
    %v1106 = vlaneseq
    %v1107 = vshrl.u32 %v1106, 7
    %v1108 = vsub.s32 0, %v1107
    %v1109 = vrot.slane %v1102, %v1108
    %v1111 = vmul.f32 %v446, %v1109
    %v1112 = vmul.f32 %v449, %v1109
    %v1113 = vmul.f32 %v454, %v1109
    %v1114 = vmul.f32 %v457, %v1109
    %v1115 = vmul.f32 %v462, %v1109
    %v1116 = vmul.f32 %v465, %v1109
    %v1117 = vmul.f32 %v470, %v1109
    %v1118 = vmul.f32 %v473, %v1109
    %v1119 = vmul.f32 %v478, %v1109
    %v1120 = vmul.f32 %v481, %v1109
    %v1121 = vmul.f32 %v486, %v1109
    %v1122 = vmul.f32 %v489, %v1109
    %v1123 = vmul.f32 %v494, %v1109
    %v1124 = vmul.f32 %v497, %v1109
    %v1125 = vmul.f32 %v502, %v1109
    %v1126 = vmul.f32 %v505, %v1109
    %v1127 = vmul.f32 %v510, %v1109
    %v1128 = vmul.f32 %v513, %v1109
    %v1129 = vmul.f32 %v518, %v1109
    %v1130 = vmul.f32 %v521, %v1109
    %v1131 = vmul.f32 %v526, %v1109
    %v1132 = vmul.f32 %v529, %v1109
    %v1133 = vmul.f32 %v534, %v1109
    %v1134 = vmul.f32 %v537, %v1109
    %v1135 = vmul.f32 %v542, %v1109
    %v1136 = vmul.f32 %v545, %v1109
    %v1137 = vmul.f32 %v550, %v1109
    %v1138 = vmul.f32 %v553, %v1109
    %v1139 = vmul.f32 %v558, %v1109
    %v1140 = vmul.f32 %v561, %v1109
    %v1141 = vmul.f32 %v566, %v1109
    %v1142 = vmul.f32 %v569, %v1109
    %v1143 = vmul.f32 %v574, %v1109
    %v1144 = vmul.f32 %v577, %v1109
    %v1145 = vmul.f32 %v582, %v1109
    %v1146 = vmul.f32 %v585, %v1109
    %v1147 = vmul.f32 %v590, %v1109
    %v1148 = vmul.f32 %v593, %v1109
    %v1149 = vmul.f32 %v598, %v1109
    %v1150 = vmul.f32 %v601, %v1109
    %v1151 = vmul.f32 %v606, %v1109
    %v1152 = vmul.f32 %v609, %v1109
    %v1153 = vmul.f32 %v614, %v1109
    %v1154 = vmul.f32 %v617, %v1109
    %v1155 = vmul.f32 %v622, %v1109
    %v1156 = vmul.f32 %v625, %v1109
    %v1157 = vmul.f32 %v630, %v1109
    %v1158 = vmul.f32 %v633, %v1109
    %v1159 = vmul.f32 %v638, %v1109
    %v1160 = vmul.f32 %v641, %v1109
    %v1161 = vmul.f32 %v646, %v1109
    %v1162 = vmul.f32 %v649, %v1109
    %v1163 = vmul.f32 %v654, %v1109
    %v1164 = vmul.f32 %v657, %v1109
    %v1165 = vmul.f32 %v662, %v1109
    %v1166 = vmul.f32 %v665, %v1109
    %v1167 = vmul.f32 %v670, %v1109
    %v1168 = vmul.f32 %v673, %v1109
    %v1169 = vmul.f32 %v678, %v1109
    %v1170 = vmul.f32 %v681, %v1109
    %v1171 = vmul.f32 %v686, %v1109
    %v1172 = vmul.f32 %v689, %v1109
    %v1173 = vmul.f32 %v694, %v1109
    %v1174 = vmul.f32 %v697, %v1109
    %v1176 = vlaneseq
    %v1177 = vshrl.u32 %v1176, 7
    %v1178 = vsub.s32 0, %v1177
    %v1179 = vrot.slane %v1104, %v1178
    %v1181 = vadd.f32 %v1111, %v1179
    %v1182 = vadd.f32 %v1112, %v1179
    %v1183 = vadd.f32 %v1113, %v1179
    %v1184 = vadd.f32 %v1114, %v1179
    %v1185 = vadd.f32 %v1115, %v1179
    %v1186 = vadd.f32 %v1116, %v1179
    %v1187 = vadd.f32 %v1117, %v1179
    %v1188 = vadd.f32 %v1118, %v1179
    %v1189 = vadd.f32 %v1119, %v1179
    %v1190 = vadd.f32 %v1120, %v1179
    %v1191 = vadd.f32 %v1121, %v1179
    %v1192 = vadd.f32 %v1122, %v1179
    %v1193 = vadd.f32 %v1123, %v1179
    %v1194 = vadd.f32 %v1124, %v1179
    %v1195 = vadd.f32 %v1125, %v1179
    %v1196 = vadd.f32 %v1126, %v1179
    %v1197 = vadd.f32 %v1127, %v1179
    %v1198 = vadd.f32 %v1128, %v1179
    %v1199 = vadd.f32 %v1129, %v1179
    %v1200 = vadd.f32 %v1130, %v1179
    %v1201 = vadd.f32 %v1131, %v1179
    %v1202 = vadd.f32 %v1132, %v1179
    %v1203 = vadd.f32 %v1133, %v1179
    %v1204 = vadd.f32 %v1134, %v1179
    %v1205 = vadd.f32 %v1135, %v1179
    %v1206 = vadd.f32 %v1136, %v1179
    %v1207 = vadd.f32 %v1137, %v1179
    %v1208 = vadd.f32 %v1138, %v1179
    %v1209 = vadd.f32 %v1139, %v1179
    %v1210 = vadd.f32 %v1140, %v1179
    %v1211 = vadd.f32 %v1141, %v1179
    %v1212 = vadd.f32 %v1142, %v1179
    %v1213 = vadd.f32 %v1143, %v1179
    %v1214 = vadd.f32 %v1144, %v1179
    %v1215 = vadd.f32 %v1145, %v1179
    %v1216 = vadd.f32 %v1146, %v1179
    %v1217 = vadd.f32 %v1147, %v1179
    %v1218 = vadd.f32 %v1148, %v1179
    %v1219 = vadd.f32 %v1149, %v1179
    %v1220 = vadd.f32 %v1150, %v1179
    %v1221 = vadd.f32 %v1151, %v1179
    %v1222 = vadd.f32 %v1152, %v1179
    %v1223 = vadd.f32 %v1153, %v1179
    %v1224 = vadd.f32 %v1154, %v1179
    %v1225 = vadd.f32 %v1155, %v1179
    %v1226 = vadd.f32 %v1156, %v1179
    %v1227 = vadd.f32 %v1157, %v1179
    %v1228 = vadd.f32 %v1158, %v1179
    %v1229 = vadd.f32 %v1159, %v1179
    %v1230 = vadd.f32 %v1160, %v1179
    %v1231 = vadd.f32 %v1161, %v1179
    %v1232 = vadd.f32 %v1162, %v1179
    %v1233 = vadd.f32 %v1163, %v1179
    %v1234 = vadd.f32 %v1164, %v1179
    %v1235 = vadd.f32 %v1165, %v1179
    %v1236 = vadd.f32 %v1166, %v1179
    %v1237 = vadd.f32 %v1167, %v1179
    %v1238 = vadd.f32 %v1168, %v1179
    %v1239 = vadd.f32 %v1169, %v1179
    %v1240 = vadd.f32 %v1170, %v1179
    %v1241 = vadd.f32 %v1171, %v1179
    %v1242 = vadd.f32 %v1172, %v1179
    %v1243 = vadd.f32 %v1173, %v1179
    %v1244 = vadd.f32 %v1174, %v1179
    %v1245 = vmul.f32 %v1181, 0.01
    %v1246 = vmul.f32 %v1182, 0.01
    %v1247 = vmul.f32 %v1183, 0.01
    %v1248 = vmul.f32 %v1184, 0.01
    %v1249 = vmul.f32 %v1185, 0.01
    %v1250 = vmul.f32 %v1186, 0.01
    %v1251 = vmul.f32 %v1187, 0.01
    %v1252 = vmul.f32 %v1188, 0.01
    %v1253 = vmul.f32 %v1189, 0.01
    %v1254 = vmul.f32 %v1190, 0.01
    %v1255 = vmul.f32 %v1191, 0.01
    %v1256 = vmul.f32 %v1192, 0.01
    %v1257 = vmul.f32 %v1193, 0.01
    %v1258 = vmul.f32 %v1194, 0.01
    %v1259 = vmul.f32 %v1195, 0.01
    %v1260 = vmul.f32 %v1196, 0.01
    %v1261 = vmul.f32 %v1197, 0.01
    %v1262 = vmul.f32 %v1198, 0.01
    %v1263 = vmul.f32 %v1199, 0.01
    %v1264 = vmul.f32 %v1200, 0.01
    %v1265 = vmul.f32 %v1201, 0.01
    %v1266 = vmul.f32 %v1202, 0.01
    %v1267 = vmul.f32 %v1203, 0.01
    %v1268 = vmul.f32 %v1204, 0.01
    %v1269 = vmul.f32 %v1205, 0.01
    %v1270 = vmul.f32 %v1206, 0.01
    %v1271 = vmul.f32 %v1207, 0.01
    %v1272 = vmul.f32 %v1208, 0.01
    %v1273 = vmul.f32 %v1209, 0.01
    %v1274 = vmul.f32 %v1210, 0.01
    %v1275 = vmul.f32 %v1211, 0.01
    %v1276 = vmul.f32 %v1212, 0.01
    %v1277 = vmul.f32 %v1213, 0.01
    %v1278 = vmul.f32 %v1214, 0.01
    %v1279 = vmul.f32 %v1215, 0.01
    %v1280 = vmul.f32 %v1216, 0.01
    %v1281 = vmul.f32 %v1217, 0.01
    %v1282 = vmul.f32 %v1218, 0.01
    %v1283 = vmul.f32 %v1219, 0.01
    %v1284 = vmul.f32 %v1220, 0.01
    %v1285 = vmul.f32 %v1221, 0.01
    %v1286 = vmul.f32 %v1222, 0.01
    %v1287 = vmul.f32 %v1223, 0.01
    %v1288 = vmul.f32 %v1224, 0.01
    %v1289 = vmul.f32 %v1225, 0.01
    %v1290 = vmul.f32 %v1226, 0.01
    %v1291 = vmul.f32 %v1227, 0.01
    %v1292 = vmul.f32 %v1228, 0.01
    %v1293 = vmul.f32 %v1229, 0.01
    %v1294 = vmul.f32 %v1230, 0.01
    %v1295 = vmul.f32 %v1231, 0.01
    %v1296 = vmul.f32 %v1232, 0.01
    %v1297 = vmul.f32 %v1233, 0.01
    %v1298 = vmul.f32 %v1234, 0.01
    %v1299 = vmul.f32 %v1235, 0.01
    %v1300 = vmul.f32 %v1236, 0.01
    %v1301 = vmul.f32 %v1237, 0.01
    %v1302 = vmul.f32 %v1238, 0.01
    %v1303 = vmul.f32 %v1239, 0.01
    %v1304 = vmul.f32 %v1240, 0.01
    %v1305 = vmul.f32 %v1241, 0.01
    %v1306 = vmul.f32 %v1242, 0.01
    %v1307 = vmul.f32 %v1243, 0.01
    %v1308 = vmul.f32 %v1244, 0.01
    %v1309 = vmax.f32 %v1181, %v1245
    %v1310 = vmax.f32 %v1182, %v1246
    %v1311 = vmax.f32 %v1183, %v1247
    %v1312 = vmax.f32 %v1184, %v1248
    %v1313 = vmax.f32 %v1185, %v1249
    %v1314 = vmax.f32 %v1186, %v1250
    %v1315 = vmax.f32 %v1187, %v1251
    %v1316 = vmax.f32 %v1188, %v1252
    %v1317 = vmax.f32 %v1189, %v1253
    %v1318 = vmax.f32 %v1190, %v1254
    %v1319 = vmax.f32 %v1191, %v1255
    %v1320 = vmax.f32 %v1192, %v1256
    %v1321 = vmax.f32 %v1193, %v1257
    %v1322 = vmax.f32 %v1194, %v1258
    %v1323 = vmax.f32 %v1195, %v1259
    %v1324 = vmax.f32 %v1196, %v1260
    %v1325 = vmax.f32 %v1197, %v1261
    %v1326 = vmax.f32 %v1198, %v1262
    %v1327 = vmax.f32 %v1199, %v1263
    %v1328 = vmax.f32 %v1200, %v1264
    %v1329 = vmax.f32 %v1201, %v1265
    %v1330 = vmax.f32 %v1202, %v1266
    %v1331 = vmax.f32 %v1203, %v1267
    %v1332 = vmax.f32 %v1204, %v1268
    %v1333 = vmax.f32 %v1205, %v1269
    %v1334 = vmax.f32 %v1206, %v1270
    %v1335 = vmax.f32 %v1207, %v1271
    %v1336 = vmax.f32 %v1208, %v1272
    %v1337 = vmax.f32 %v1209, %v1273
    %v1338 = vmax.f32 %v1210, %v1274
    %v1339 = vmax.f32 %v1211, %v1275
    %v1340 = vmax.f32 %v1212, %v1276
    %v1341 = vmax.f32 %v1213, %v1277
    %v1342 = vmax.f32 %v1214, %v1278
    %v1343 = vmax.f32 %v1215, %v1279
    %v1344 = vmax.f32 %v1216, %v1280
    %v1345 = vmax.f32 %v1217, %v1281
    %v1346 = vmax.f32 %v1218, %v1282
    %v1347 = vmax.f32 %v1219, %v1283
    %v1348 = vmax.f32 %v1220, %v1284
    %v1349 = vmax.f32 %v1221, %v1285
    %v1350 = vmax.f32 %v1222, %v1286
    %v1351 = vmax.f32 %v1223, %v1287
    %v1352 = vmax.f32 %v1224, %v1288
    %v1353 = vmax.f32 %v1225, %v1289
    %v1354 = vmax.f32 %v1226, %v1290
    %v1355 = vmax.f32 %v1227, %v1291
    %v1356 = vmax.f32 %v1228, %v1292
    %v1357 = vmax.f32 %v1229, %v1293
    %v1358 = vmax.f32 %v1230, %v1294
    %v1359 = vmax.f32 %v1231, %v1295
    %v1360 = vmax.f32 %v1232, %v1296
    %v1361 = vmax.f32 %v1233, %v1297
    %v1362 = vmax.f32 %v1234, %v1298
    %v1363 = vmax.f32 %v1235, %v1299
    %v1364 = vmax.f32 %v1236, %v1300
    %v1365 = vmax.f32 %v1237, %v1301
    %v1366 = vmax.f32 %v1238, %v1302
    %v1367 = vmax.f32 %v1239, %v1303
    %v1368 = vmax.f32 %v1240, %v1304
    %v1369 = vmax.f32 %v1241, %v1305
    %v1370 = vmax.f32 %v1242, %v1306
    %v1371 = vmax.f32 %v1243, %v1307
    %v1372 = vmax.f32 %v1244, %v1308
    %v1373 = vpack.c.bf16 %v1310, %v1309
    %v1374 = vpack.c.bf16 %v1312, %v1311
    %v1375 = vpack.c.bf16 %v1314, %v1313
    %v1376 = vpack.c.bf16 %v1316, %v1315
    %v1377 = vpack.c.bf16 %v1318, %v1317
    %v1378 = vpack.c.bf16 %v1320, %v1319
    %v1379 = vpack.c.bf16 %v1322, %v1321
    %v1380 = vpack.c.bf16 %v1324, %v1323
    %v1381 = vpack.c.bf16 %v1326, %v1325
    %v1382 = vpack.c.bf16 %v1328, %v1327
    %v1383 = vpack.c.bf16 %v1330, %v1329
    %v1384 = vpack.c.bf16 %v1332, %v1331
    %v1385 = vpack.c.bf16 %v1334, %v1333
    %v1386 = vpack.c.bf16 %v1336, %v1335
    %v1387 = vpack.c.bf16 %v1338, %v1337
    %v1388 = vpack.c.bf16 %v1340, %v1339
    %v1389 = vpack.c.bf16 %v1342, %v1341
    %v1390 = vpack.c.bf16 %v1344, %v1343
    %v1391 = vpack.c.bf16 %v1346, %v1345
    %v1392 = vpack.c.bf16 %v1348, %v1347
    %v1393 = vpack.c.bf16 %v1350, %v1349
    %v1394 = vpack.c.bf16 %v1352, %v1351
    %v1395 = vpack.c.bf16 %v1354, %v1353
    %v1396 = vpack.c.bf16 %v1356, %v1355
    %v1397 = vpack.c.bf16 %v1358, %v1357
    %v1398 = vpack.c.bf16 %v1360, %v1359
    %v1399 = vpack.c.bf16 %v1362, %v1361
    %v1400 = vpack.c.bf16 %v1364, %v1363
    %v1401 = vpack.c.bf16 %v1366, %v1365
    %v1402 = vpack.c.bf16 %v1368, %v1367
    %v1403 = vpack.c.bf16 %v1370, %v1369
    %v1404 = vpack.c.bf16 %v1372, %v1371
    %v1405 = vld [vmem:[%s4] sm:$0xff]
    %v1406 = vld [vmem:[%s4 + $0x8] sm:$0xff]
    %v1407 = vld [vmem:[%s4 + $0x10] sm:$0xff]
    %v1408 = vld [vmem:[%s4 + $0x18] sm:$0xff]
    %v1409 = vld [vmem:[%s4 + $0x20] sm:$0xff]
    %v1410 = vld [vmem:[%s4 + $0x28] sm:$0xff]
    %v1411 = vld [vmem:[%s4 + $0x30] sm:$0xff]
    %v1412 = vld [vmem:[%s4 + $0x38] sm:$0xff]
    %v1413 = vld [vmem:[%s4 + $0x40] sm:$0xff]
    %v1414 = vld [vmem:[%s4 + $0x48] sm:$0xff]
    %v1415 = vld [vmem:[%s4 + $0x50] sm:$0xff]
    %v1416 = vld [vmem:[%s4 + $0x58] sm:$0xff]
    %v1417 = vld [vmem:[%s4 + $0x60] sm:$0xff]
    %v1418 = vld [vmem:[%s4 + $0x68] sm:$0xff]
    %v1419 = vld [vmem:[%s4 + $0x70] sm:$0xff]
    %v1420 = vld [vmem:[%s4 + $0x78] sm:$0xff]
    %v1421 = vld [vmem:[%s4 + $0x80] sm:$0xff]
    %v1422 = vld [vmem:[%s4 + $0x88] sm:$0xff]
    %v1423 = vld [vmem:[%s4 + $0x90] sm:$0xff]
    %v1424 = vld [vmem:[%s4 + $0x98] sm:$0xff]
    %v1425 = vld [vmem:[%s4 + $0xa0] sm:$0xff]
    %v1426 = vld [vmem:[%s4 + $0xa8] sm:$0xff]
    %v1427 = vld [vmem:[%s4 + $0xb0] sm:$0xff]
    %v1428 = vld [vmem:[%s4 + $0xb8] sm:$0xff]
    %v1429 = vld [vmem:[%s4 + $0xc0] sm:$0xff]
    %v1430 = vld [vmem:[%s4 + $0xc8] sm:$0xff]
    %v1431 = vld [vmem:[%s4 + $0xd0] sm:$0xff]
    %v1432 = vld [vmem:[%s4 + $0xd8] sm:$0xff]
    %v1433 = vld [vmem:[%s4 + $0xe0] sm:$0xff]
    %v1434 = vld [vmem:[%s4 + $0xe8] sm:$0xff]
    %v1435 = vld [vmem:[%s4 + $0xf0] sm:$0xff]
    %v1436 = vld [vmem:[%s4 + $0xf8] sm:$0xff]
    %v1437 = vld [vmem:[%s4 + $0x100] sm:$0xff]
    %v1438 = vld [vmem:[%s4 + $0x108] sm:$0xff]
    %v1439 = vld [vmem:[%s4 + $0x110] sm:$0xff]
    %v1440 = vld [vmem:[%s4 + $0x118] sm:$0xff]
    %v1441 = vld [vmem:[%s4 + $0x120] sm:$0xff]
    %v1442 = vld [vmem:[%s4 + $0x128] sm:$0xff]
    %v1443 = vld [vmem:[%s4 + $0x130] sm:$0xff]
    %v1444 = vld [vmem:[%s4 + $0x138] sm:$0xff]
    %v1445 = vld [vmem:[%s4 + $0x140] sm:$0xff]
    %v1446 = vld [vmem:[%s4 + $0x148] sm:$0xff]
    %v1447 = vld [vmem:[%s4 + $0x150] sm:$0xff]
    %v1448 = vld [vmem:[%s4 + $0x158] sm:$0xff]
    %v1449 = vld [vmem:[%s4 + $0x160] sm:$0xff]
    %v1450 = vld [vmem:[%s4 + $0x168] sm:$0xff]
    %v1451 = vld [vmem:[%s4 + $0x170] sm:$0xff]
    %v1452 = vld [vmem:[%s4 + $0x178] sm:$0xff]
    %v1453 = vld [vmem:[%s4 + $0x180] sm:$0xff]
    %v1454 = vld [vmem:[%s4 + $0x188] sm:$0xff]
    %v1455 = vld [vmem:[%s4 + $0x190] sm:$0xff]
    %v1456 = vld [vmem:[%s4 + $0x198] sm:$0xff]
    %v1457 = vld [vmem:[%s4 + $0x1a0] sm:$0xff]
    %v1458 = vld [vmem:[%s4 + $0x1a8] sm:$0xff]
    %v1459 = vld [vmem:[%s4 + $0x1b0] sm:$0xff]
    %v1460 = vld [vmem:[%s4 + $0x1b8] sm:$0xff]
    %v1461 = vld [vmem:[%s4 + $0x1c0] sm:$0xff]
    %v1462 = vld [vmem:[%s4 + $0x1c8] sm:$0xff]
    %v1463 = vld [vmem:[%s4 + $0x1d0] sm:$0xff]
    %v1464 = vld [vmem:[%s4 + $0x1d8] sm:$0xff]
    %v1465 = vld [vmem:[%s4 + $0x1e0] sm:$0xff]
    %v1466 = vld [vmem:[%s4 + $0x1e8] sm:$0xff]
    %v1467 = vld [vmem:[%s4 + $0x1f0] sm:$0xff]
    %v1468 = vld [vmem:[%s4 + $0x1f8] sm:$0xff]
    %v1469 = vld [vmem:[%s4 + $0x200] sm:$0xff]
    %v1470 = vld [vmem:[%s4 + $0x208] sm:$0xff]
    %v1471 = vld [vmem:[%s4 + $0x210] sm:$0xff]
    %v1472 = vld [vmem:[%s4 + $0x218] sm:$0xff]
    %v1473 = vld [vmem:[%s4 + $0x220] sm:$0xff]
    %v1474 = vld [vmem:[%s4 + $0x228] sm:$0xff]
    %v1475 = vld [vmem:[%s4 + $0x230] sm:$0xff]
    %v1476 = vld [vmem:[%s4 + $0x238] sm:$0xff]
    %v1477 = vld [vmem:[%s4 + $0x240] sm:$0xff]
    %v1478 = vld [vmem:[%s4 + $0x248] sm:$0xff]
    %v1479 = vld [vmem:[%s4 + $0x250] sm:$0xff]
    %v1480 = vld [vmem:[%s4 + $0x258] sm:$0xff]
    %v1481 = vld [vmem:[%s4 + $0x260] sm:$0xff]
    %v1482 = vld [vmem:[%s4 + $0x268] sm:$0xff]
    %v1483 = vld [vmem:[%s4 + $0x270] sm:$0xff]
    %v1484 = vld [vmem:[%s4 + $0x278] sm:$0xff]
    %v1485 = vld [vmem:[%s4 + $0x280] sm:$0xff]
    %v1486 = vld [vmem:[%s4 + $0x288] sm:$0xff]
    %v1487 = vld [vmem:[%s4 + $0x290] sm:$0xff]
    %v1488 = vld [vmem:[%s4 + $0x298] sm:$0xff]
    %v1489 = vld [vmem:[%s4 + $0x2a0] sm:$0xff]
    %v1490 = vld [vmem:[%s4 + $0x2a8] sm:$0xff]
    %v1491 = vld [vmem:[%s4 + $0x2b0] sm:$0xff]
    %v1492 = vld [vmem:[%s4 + $0x2b8] sm:$0xff]
    %v1493 = vld [vmem:[%s4 + $0x2c0] sm:$0xff]
    %v1494 = vld [vmem:[%s4 + $0x2c8] sm:$0xff]
    %v1495 = vld [vmem:[%s4 + $0x2d0] sm:$0xff]
    %v1496 = vld [vmem:[%s4 + $0x2d8] sm:$0xff]
    %v1497 = vld [vmem:[%s4 + $0x2e0] sm:$0xff]
    %v1498 = vld [vmem:[%s4 + $0x2e8] sm:$0xff]
    %v1499 = vld [vmem:[%s4 + $0x2f0] sm:$0xff]
    %v1500 = vld [vmem:[%s4 + $0x2f8] sm:$0xff]
    %v1501 = vld [vmem:[%s4 + $0x300] sm:$0xff]
    %v1502 = vld [vmem:[%s4 + $0x308] sm:$0xff]
    %v1503 = vld [vmem:[%s4 + $0x310] sm:$0xff]
    %v1504 = vld [vmem:[%s4 + $0x318] sm:$0xff]
    %v1505 = vld [vmem:[%s4 + $0x320] sm:$0xff]
    %v1506 = vld [vmem:[%s4 + $0x328] sm:$0xff]
    %v1507 = vld [vmem:[%s4 + $0x330] sm:$0xff]
    %v1508 = vld [vmem:[%s4 + $0x338] sm:$0xff]
    %v1509 = vld [vmem:[%s4 + $0x340] sm:$0xff]
    %v1510 = vld [vmem:[%s4 + $0x348] sm:$0xff]
    %v1511 = vld [vmem:[%s4 + $0x350] sm:$0xff]
    %v1512 = vld [vmem:[%s4 + $0x358] sm:$0xff]
    %v1513 = vld [vmem:[%s4 + $0x360] sm:$0xff]
    %v1514 = vld [vmem:[%s4 + $0x368] sm:$0xff]
    %v1515 = vld [vmem:[%s4 + $0x370] sm:$0xff]
    %v1516 = vld [vmem:[%s4 + $0x378] sm:$0xff]
    %v1517 = vld [vmem:[%s4 + $0x380] sm:$0xff]
    %v1518 = vld [vmem:[%s4 + $0x388] sm:$0xff]
    %v1519 = vld [vmem:[%s4 + $0x390] sm:$0xff]
    %v1520 = vld [vmem:[%s4 + $0x398] sm:$0xff]
    %v1521 = vld [vmem:[%s4 + $0x3a0] sm:$0xff]
    %v1522 = vld [vmem:[%s4 + $0x3a8] sm:$0xff]
    %v1523 = vld [vmem:[%s4 + $0x3b0] sm:$0xff]
    %v1524 = vld [vmem:[%s4 + $0x3b8] sm:$0xff]
    %v1525 = vld [vmem:[%s4 + $0x3c0] sm:$0xff]
    %v1526 = vld [vmem:[%s4 + $0x3c8] sm:$0xff]
    %v1527 = vld [vmem:[%s4 + $0x3d0] sm:$0xff]
    %v1528 = vld [vmem:[%s4 + $0x3d8] sm:$0xff]
    %v1529 = vld [vmem:[%s4 + $0x3e0] sm:$0xff]
    %v1530 = vld [vmem:[%s4 + $0x3e8] sm:$0xff]
    %v1531 = vld [vmem:[%s4 + $0x3f0] sm:$0xff]
    %v1532 = vld [vmem:[%s4 + $0x3f8] sm:$0xff]
    %v1533 = vld [vmem:[%s4 + $0x400] sm:$0xff]
    %v1534 = vld [vmem:[%s4 + $0x408] sm:$0xff]
    %v1535 = vld [vmem:[%s4 + $0x410] sm:$0xff]
    %v1536 = vld [vmem:[%s4 + $0x418] sm:$0xff]
    %v1537 = vld [vmem:[%s4 + $0x420] sm:$0xff]
    %v1538 = vld [vmem:[%s4 + $0x428] sm:$0xff]
    %v1539 = vld [vmem:[%s4 + $0x430] sm:$0xff]
    %v1540 = vld [vmem:[%s4 + $0x438] sm:$0xff]
    %v1541 = vld [vmem:[%s4 + $0x440] sm:$0xff]
    %v1542 = vld [vmem:[%s4 + $0x448] sm:$0xff]
    %v1543 = vld [vmem:[%s4 + $0x450] sm:$0xff]
    %v1544 = vld [vmem:[%s4 + $0x458] sm:$0xff]
    %v1545 = vld [vmem:[%s4 + $0x460] sm:$0xff]
    %v1546 = vld [vmem:[%s4 + $0x468] sm:$0xff]
    %v1547 = vld [vmem:[%s4 + $0x470] sm:$0xff]
    %v1548 = vld [vmem:[%s4 + $0x478] sm:$0xff]
    %v1549 = vld [vmem:[%s4 + $0x480] sm:$0xff]
    %v1550 = vld [vmem:[%s4 + $0x488] sm:$0xff]
    %v1551 = vld [vmem:[%s4 + $0x490] sm:$0xff]
    %v1552 = vld [vmem:[%s4 + $0x498] sm:$0xff]
    %v1553 = vld [vmem:[%s4 + $0x4a0] sm:$0xff]
    %v1554 = vld [vmem:[%s4 + $0x4a8] sm:$0xff]
    %v1555 = vld [vmem:[%s4 + $0x4b0] sm:$0xff]
    %v1556 = vld [vmem:[%s4 + $0x4b8] sm:$0xff]
    %v1557 = vld [vmem:[%s4 + $0x4c0] sm:$0xff]
    %v1558 = vld [vmem:[%s4 + $0x4c8] sm:$0xff]
    %v1559 = vld [vmem:[%s4 + $0x4d0] sm:$0xff]
    %v1560 = vld [vmem:[%s4 + $0x4d8] sm:$0xff]
    %v1561 = vld [vmem:[%s4 + $0x4e0] sm:$0xff]
    %v1562 = vld [vmem:[%s4 + $0x4e8] sm:$0xff]
    %v1563 = vld [vmem:[%s4 + $0x4f0] sm:$0xff]
    %v1564 = vld [vmem:[%s4 + $0x4f8] sm:$0xff]
    %v1565 = vld [vmem:[%s4 + $0x500] sm:$0xff]
    %v1566 = vld [vmem:[%s4 + $0x508] sm:$0xff]
    %v1567 = vld [vmem:[%s4 + $0x510] sm:$0xff]
    %v1568 = vld [vmem:[%s4 + $0x518] sm:$0xff]
    %v1569 = vld [vmem:[%s4 + $0x520] sm:$0xff]
    %v1570 = vld [vmem:[%s4 + $0x528] sm:$0xff]
    %v1571 = vld [vmem:[%s4 + $0x530] sm:$0xff]
    %v1572 = vld [vmem:[%s4 + $0x538] sm:$0xff]
    %v1573 = vld [vmem:[%s4 + $0x540] sm:$0xff]
    %v1574 = vld [vmem:[%s4 + $0x548] sm:$0xff]
    %v1575 = vld [vmem:[%s4 + $0x550] sm:$0xff]
    %v1576 = vld [vmem:[%s4 + $0x558] sm:$0xff]
    %v1577 = vld [vmem:[%s4 + $0x560] sm:$0xff]
    %v1578 = vld [vmem:[%s4 + $0x568] sm:$0xff]
    %v1579 = vld [vmem:[%s4 + $0x570] sm:$0xff]
    %v1580 = vld [vmem:[%s4 + $0x578] sm:$0xff]
    %v1581 = vld [vmem:[%s4 + $0x580] sm:$0xff]
    %v1582 = vld [vmem:[%s4 + $0x588] sm:$0xff]
    %v1583 = vld [vmem:[%s4 + $0x590] sm:$0xff]
    %v1584 = vld [vmem:[%s4 + $0x598] sm:$0xff]
    %v1585 = vld [vmem:[%s4 + $0x5a0] sm:$0xff]
    %v1586 = vld [vmem:[%s4 + $0x5a8] sm:$0xff]
    %v1587 = vld [vmem:[%s4 + $0x5b0] sm:$0xff]
    %v1588 = vld [vmem:[%s4 + $0x5b8] sm:$0xff]
    %v1589 = vld [vmem:[%s4 + $0x5c0] sm:$0xff]
    %v1590 = vld [vmem:[%s4 + $0x5c8] sm:$0xff]
    %v1591 = vld [vmem:[%s4 + $0x5d0] sm:$0xff]
    %v1592 = vld [vmem:[%s4 + $0x5d8] sm:$0xff]
    %v1593 = vld [vmem:[%s4 + $0x5e0] sm:$0xff]
    %v1594 = vld [vmem:[%s4 + $0x5e8] sm:$0xff]
    %v1595 = vld [vmem:[%s4 + $0x5f0] sm:$0xff]
    %v1596 = vld [vmem:[%s4 + $0x5f8] sm:$0xff]
    %v1597 = vld [vmem:[%s4 + $0x600] sm:$0xff]
    %v1598 = vld [vmem:[%s4 + $0x608] sm:$0xff]
    %v1599 = vld [vmem:[%s4 + $0x610] sm:$0xff]
    %v1600 = vld [vmem:[%s4 + $0x618] sm:$0xff]
    %v1601 = vld [vmem:[%s4 + $0x620] sm:$0xff]
    %v1602 = vld [vmem:[%s4 + $0x628] sm:$0xff]
    %v1603 = vld [vmem:[%s4 + $0x630] sm:$0xff]
    %v1604 = vld [vmem:[%s4 + $0x638] sm:$0xff]
    %v1605 = vld [vmem:[%s4 + $0x640] sm:$0xff]
    %v1606 = vld [vmem:[%s4 + $0x648] sm:$0xff]
    %v1607 = vld [vmem:[%s4 + $0x650] sm:$0xff]
    %v1608 = vld [vmem:[%s4 + $0x658] sm:$0xff]
    %v1609 = vld [vmem:[%s4 + $0x660] sm:$0xff]
    %v1610 = vld [vmem:[%s4 + $0x668] sm:$0xff]
    %v1611 = vld [vmem:[%s4 + $0x670] sm:$0xff]
    %v1612 = vld [vmem:[%s4 + $0x678] sm:$0xff]
    %v1613 = vld [vmem:[%s4 + $0x680] sm:$0xff]
    %v1614 = vld [vmem:[%s4 + $0x688] sm:$0xff]
    %v1615 = vld [vmem:[%s4 + $0x690] sm:$0xff]
    %v1616 = vld [vmem:[%s4 + $0x698] sm:$0xff]
    %v1617 = vld [vmem:[%s4 + $0x6a0] sm:$0xff]
    %v1618 = vld [vmem:[%s4 + $0x6a8] sm:$0xff]
    %v1619 = vld [vmem:[%s4 + $0x6b0] sm:$0xff]
    %v1620 = vld [vmem:[%s4 + $0x6b8] sm:$0xff]
    %v1621 = vld [vmem:[%s4 + $0x6c0] sm:$0xff]
    %v1622 = vld [vmem:[%s4 + $0x6c8] sm:$0xff]
    %v1623 = vld [vmem:[%s4 + $0x6d0] sm:$0xff]
    %v1624 = vld [vmem:[%s4 + $0x6d8] sm:$0xff]
    %v1625 = vld [vmem:[%s4 + $0x6e0] sm:$0xff]
    %v1626 = vld [vmem:[%s4 + $0x6e8] sm:$0xff]
    %v1627 = vld [vmem:[%s4 + $0x6f0] sm:$0xff]
    %v1628 = vld [vmem:[%s4 + $0x6f8] sm:$0xff]
    %v1629 = vld [vmem:[%s4 + $0x700] sm:$0xff]
    %v1630 = vld [vmem:[%s4 + $0x708] sm:$0xff]
    %v1631 = vld [vmem:[%s4 + $0x710] sm:$0xff]
    %v1632 = vld [vmem:[%s4 + $0x718] sm:$0xff]
    %v1633 = vld [vmem:[%s4 + $0x720] sm:$0xff]
    %v1634 = vld [vmem:[%s4 + $0x728] sm:$0xff]
    %v1635 = vld [vmem:[%s4 + $0x730] sm:$0xff]
    %v1636 = vld [vmem:[%s4 + $0x738] sm:$0xff]
    %v1637 = vld [vmem:[%s4 + $0x740] sm:$0xff]
    %v1638 = vld [vmem:[%s4 + $0x748] sm:$0xff]
    %v1639 = vld [vmem:[%s4 + $0x750] sm:$0xff]
    %v1640 = vld [vmem:[%s4 + $0x758] sm:$0xff]
    %v1641 = vld [vmem:[%s4 + $0x760] sm:$0xff]
    %v1642 = vld [vmem:[%s4 + $0x768] sm:$0xff]
    %v1643 = vld [vmem:[%s4 + $0x770] sm:$0xff]
    %v1644 = vld [vmem:[%s4 + $0x778] sm:$0xff]
    %v1645 = vld [vmem:[%s4 + $0x780] sm:$0xff]
    %v1646 = vld [vmem:[%s4 + $0x788] sm:$0xff]
    %v1647 = vld [vmem:[%s4 + $0x790] sm:$0xff]
    %v1648 = vld [vmem:[%s4 + $0x798] sm:$0xff]
    %v1649 = vld [vmem:[%s4 + $0x7a0] sm:$0xff]
    %v1650 = vld [vmem:[%s4 + $0x7a8] sm:$0xff]
    %v1651 = vld [vmem:[%s4 + $0x7b0] sm:$0xff]
    %v1652 = vld [vmem:[%s4 + $0x7b8] sm:$0xff]
    %v1653 = vld [vmem:[%s4 + $0x7c0] sm:$0xff]
    %v1654 = vld [vmem:[%s4 + $0x7c8] sm:$0xff]
    %v1655 = vld [vmem:[%s4 + $0x7d0] sm:$0xff]
    %v1656 = vld [vmem:[%s4 + $0x7d8] sm:$0xff]
    %v1657 = vld [vmem:[%s4 + $0x7e0] sm:$0xff]
    %v1658 = vld [vmem:[%s4 + $0x7e8] sm:$0xff]
    %v1659 = vld [vmem:[%s4 + $0x7f0] sm:$0xff]
    %v1660 = vld [vmem:[%s4 + $0x7f8] sm:$0xff]
    %v1661 = vld [vmem:[%s4 + $0x800] sm:$0xff]
    %v1662 = vld [vmem:[%s4 + $0x808] sm:$0xff]
    %v1663 = vld [vmem:[%s4 + $0x810] sm:$0xff]
    %v1664 = vld [vmem:[%s4 + $0x818] sm:$0xff]
    %v1665 = vld [vmem:[%s4 + $0x820] sm:$0xff]
    %v1666 = vld [vmem:[%s4 + $0x828] sm:$0xff]
    %v1667 = vld [vmem:[%s4 + $0x830] sm:$0xff]
    %v1668 = vld [vmem:[%s4 + $0x838] sm:$0xff]
    %v1669 = vld [vmem:[%s4 + $0x840] sm:$0xff]
    %v1670 = vld [vmem:[%s4 + $0x848] sm:$0xff]
    %v1671 = vld [vmem:[%s4 + $0x850] sm:$0xff]
    %v1672 = vld [vmem:[%s4 + $0x858] sm:$0xff]
    %v1673 = vld [vmem:[%s4 + $0x860] sm:$0xff]
    %v1674 = vld [vmem:[%s4 + $0x868] sm:$0xff]
    %v1675 = vld [vmem:[%s4 + $0x870] sm:$0xff]
    %v1676 = vld [vmem:[%s4 + $0x878] sm:$0xff]
    %v1677 = vld [vmem:[%s4 + $0x880] sm:$0xff]
    %v1678 = vld [vmem:[%s4 + $0x888] sm:$0xff]
    %v1679 = vld [vmem:[%s4 + $0x890] sm:$0xff]
    %v1680 = vld [vmem:[%s4 + $0x898] sm:$0xff]
    %v1681 = vld [vmem:[%s4 + $0x8a0] sm:$0xff]
    %v1682 = vld [vmem:[%s4 + $0x8a8] sm:$0xff]
    %v1683 = vld [vmem:[%s4 + $0x8b0] sm:$0xff]
    %v1684 = vld [vmem:[%s4 + $0x8b8] sm:$0xff]
    %v1685 = vld [vmem:[%s4 + $0x8c0] sm:$0xff]
    %v1686 = vld [vmem:[%s4 + $0x8c8] sm:$0xff]
    %v1687 = vld [vmem:[%s4 + $0x8d0] sm:$0xff]
    %v1688 = vld [vmem:[%s4 + $0x8d8] sm:$0xff]
    %v1689 = vld [vmem:[%s4 + $0x8e0] sm:$0xff]
    %v1690 = vld [vmem:[%s4 + $0x8e8] sm:$0xff]
    %v1691 = vld [vmem:[%s4 + $0x8f0] sm:$0xff]
    %v1692 = vld [vmem:[%s4 + $0x8f8] sm:$0xff]
    %v1981 = vunpack.c.l.b16 %v1405
    %v1982 = vunpack.c.h.b16 %v1405
    %v1983 = vunpack.c.l.b16 %v1406
    %v1984 = vunpack.c.h.b16 %v1406
    %v1985 = vunpack.c.l.b16 %v1407
    %v1986 = vunpack.c.h.b16 %v1407
    %v1987 = vunpack.c.l.b16 %v1408
    %v1988 = vunpack.c.h.b16 %v1408
    %v1989 = vunpack.c.l.b16 %v1409
    %v1990 = vunpack.c.h.b16 %v1409
    %v1991 = vunpack.c.l.b16 %v1410
    %v1992 = vunpack.c.h.b16 %v1410
    %v1993 = vunpack.c.l.b16 %v1411
    %v1994 = vunpack.c.h.b16 %v1411
    %v1995 = vunpack.c.l.b16 %v1412
    %v1996 = vunpack.c.h.b16 %v1412
    %v1997 = vunpack.c.l.b16 %v1413
    %v1998 = vunpack.c.h.b16 %v1413
    %v1999 = vunpack.c.l.b16 %v1414
    %v2000 = vunpack.c.h.b16 %v1414
    %v2001 = vunpack.c.l.b16 %v1415
    %v2002 = vunpack.c.h.b16 %v1415
    %v2003 = vunpack.c.l.b16 %v1416
    %v2004 = vunpack.c.h.b16 %v1416
    %v2005 = vunpack.c.l.b16 %v1417
    %v2006 = vunpack.c.h.b16 %v1417
    %v2007 = vunpack.c.l.b16 %v1418
    %v2008 = vunpack.c.h.b16 %v1418
    %v2009 = vunpack.c.l.b16 %v1419
    %v2010 = vunpack.c.h.b16 %v1419
    %v2011 = vunpack.c.l.b16 %v1420
    %v2012 = vunpack.c.h.b16 %v1420
    %v2013 = vunpack.c.l.b16 %v1421
    %v2014 = vunpack.c.h.b16 %v1421
    %v2015 = vunpack.c.l.b16 %v1422
    %v2016 = vunpack.c.h.b16 %v1422
    %v2017 = vunpack.c.l.b16 %v1423
    %v2018 = vunpack.c.h.b16 %v1423
    %v2019 = vunpack.c.l.b16 %v1424
    %v2020 = vunpack.c.h.b16 %v1424
    %v2021 = vunpack.c.l.b16 %v1425
    %v2022 = vunpack.c.h.b16 %v1425
    %v2023 = vunpack.c.l.b16 %v1426
    %v2024 = vunpack.c.h.b16 %v1426
    %v2025 = vunpack.c.l.b16 %v1427
    %v2026 = vunpack.c.h.b16 %v1427
    %v2027 = vunpack.c.l.b16 %v1428
    %v2028 = vunpack.c.h.b16 %v1428
    %v2029 = vunpack.c.l.b16 %v1429
    %v2030 = vunpack.c.h.b16 %v1429
    %v2031 = vunpack.c.l.b16 %v1430
    %v2032 = vunpack.c.h.b16 %v1430
    %v2033 = vunpack.c.l.b16 %v1431
    %v2034 = vunpack.c.h.b16 %v1431
    %v2035 = vunpack.c.l.b16 %v1432
    %v2036 = vunpack.c.h.b16 %v1432
    %v2037 = vunpack.c.l.b16 %v1433
    %v2038 = vunpack.c.h.b16 %v1433
    %v2039 = vunpack.c.l.b16 %v1434
    %v2040 = vunpack.c.h.b16 %v1434
    %v2041 = vunpack.c.l.b16 %v1435
    %v2042 = vunpack.c.h.b16 %v1435
    %v2043 = vunpack.c.l.b16 %v1436
    %v2044 = vunpack.c.h.b16 %v1436
    %v2045 = vunpack.c.l.b16 %v1437
    %v2046 = vunpack.c.h.b16 %v1437
    %v2047 = vunpack.c.l.b16 %v1438
    %v2048 = vunpack.c.h.b16 %v1438
    %v2049 = vunpack.c.l.b16 %v1439
    %v2050 = vunpack.c.h.b16 %v1439
    %v2051 = vunpack.c.l.b16 %v1440
    %v2052 = vunpack.c.h.b16 %v1440
    %v2053 = vunpack.c.l.b16 %v1441
    %v2054 = vunpack.c.h.b16 %v1441
    %v2055 = vunpack.c.l.b16 %v1442
    %v2056 = vunpack.c.h.b16 %v1442
    %v2057 = vunpack.c.l.b16 %v1443
    %v2058 = vunpack.c.h.b16 %v1443
    %v2059 = vunpack.c.l.b16 %v1444
    %v2060 = vunpack.c.h.b16 %v1444
    %v2061 = vunpack.c.l.b16 %v1445
    %v2062 = vunpack.c.h.b16 %v1445
    %v2063 = vunpack.c.l.b16 %v1446
    %v2064 = vunpack.c.h.b16 %v1446
    %v2065 = vunpack.c.l.b16 %v1447
    %v2066 = vunpack.c.h.b16 %v1447
    %v2067 = vunpack.c.l.b16 %v1448
    %v2068 = vunpack.c.h.b16 %v1448
    %v2069 = vunpack.c.l.b16 %v1449
    %v2070 = vunpack.c.h.b16 %v1449
    %v2071 = vunpack.c.l.b16 %v1450
    %v2072 = vunpack.c.h.b16 %v1450
    %v2073 = vunpack.c.l.b16 %v1451
    %v2074 = vunpack.c.h.b16 %v1451
    %v2075 = vunpack.c.l.b16 %v1452
    %v2076 = vunpack.c.h.b16 %v1452
    %v2077 = vunpack.c.l.b16 %v1453
    %v2078 = vunpack.c.h.b16 %v1453
    %v2079 = vunpack.c.l.b16 %v1454
    %v2080 = vunpack.c.h.b16 %v1454
    %v2081 = vunpack.c.l.b16 %v1455
    %v2082 = vunpack.c.h.b16 %v1455
    %v2083 = vunpack.c.l.b16 %v1456
    %v2084 = vunpack.c.h.b16 %v1456
    %v2085 = vunpack.c.l.b16 %v1457
    %v2086 = vunpack.c.h.b16 %v1457
    %v2087 = vunpack.c.l.b16 %v1458
    %v2088 = vunpack.c.h.b16 %v1458
    %v2089 = vunpack.c.l.b16 %v1459
    %v2090 = vunpack.c.h.b16 %v1459
    %v2091 = vunpack.c.l.b16 %v1460
    %v2092 = vunpack.c.h.b16 %v1460
    %v2093 = vunpack.c.l.b16 %v1461
    %v2094 = vunpack.c.h.b16 %v1461
    %v2095 = vunpack.c.l.b16 %v1462
    %v2096 = vunpack.c.h.b16 %v1462
    %v2097 = vunpack.c.l.b16 %v1463
    %v2098 = vunpack.c.h.b16 %v1463
    %v2099 = vunpack.c.l.b16 %v1464
    %v2100 = vunpack.c.h.b16 %v1464
    %v2101 = vunpack.c.l.b16 %v1465
    %v2102 = vunpack.c.h.b16 %v1465
    %v2103 = vunpack.c.l.b16 %v1466
    %v2104 = vunpack.c.h.b16 %v1466
    %v2105 = vunpack.c.l.b16 %v1467
    %v2106 = vunpack.c.h.b16 %v1467
    %v2107 = vunpack.c.l.b16 %v1468
    %v2108 = vunpack.c.h.b16 %v1468
    %v2109 = vunpack.c.l.b16 %v1469
    %v2110 = vunpack.c.h.b16 %v1469
    %v2111 = vunpack.c.l.b16 %v1470
    %v2112 = vunpack.c.h.b16 %v1470
    %v2113 = vunpack.c.l.b16 %v1471
    %v2114 = vunpack.c.h.b16 %v1471
    %v2115 = vunpack.c.l.b16 %v1472
    %v2116 = vunpack.c.h.b16 %v1472
    %v2117 = vunpack.c.l.b16 %v1473
    %v2118 = vunpack.c.h.b16 %v1473
    %v2119 = vunpack.c.l.b16 %v1474
    %v2120 = vunpack.c.h.b16 %v1474
    %v2121 = vunpack.c.l.b16 %v1475
    %v2122 = vunpack.c.h.b16 %v1475
    %v2123 = vunpack.c.l.b16 %v1476
    %v2124 = vunpack.c.h.b16 %v1476
    %v2125 = vunpack.c.l.b16 %v1477
    %v2126 = vunpack.c.h.b16 %v1477
    %v2127 = vunpack.c.l.b16 %v1478
    %v2128 = vunpack.c.h.b16 %v1478
    %v2129 = vunpack.c.l.b16 %v1479
    %v2130 = vunpack.c.h.b16 %v1479
    %v2131 = vunpack.c.l.b16 %v1480
    %v2132 = vunpack.c.h.b16 %v1480
    %v2133 = vunpack.c.l.b16 %v1481
    %v2134 = vunpack.c.h.b16 %v1481
    %v2135 = vunpack.c.l.b16 %v1482
    %v2136 = vunpack.c.h.b16 %v1482
    %v2137 = vunpack.c.l.b16 %v1483
    %v2138 = vunpack.c.h.b16 %v1483
    %v2139 = vunpack.c.l.b16 %v1484
    %v2140 = vunpack.c.h.b16 %v1484
    %v2141 = vunpack.c.l.b16 %v1485
    %v2142 = vunpack.c.h.b16 %v1485
    %v2143 = vunpack.c.l.b16 %v1486
    %v2144 = vunpack.c.h.b16 %v1486
    %v2145 = vunpack.c.l.b16 %v1487
    %v2146 = vunpack.c.h.b16 %v1487
    %v2147 = vunpack.c.l.b16 %v1488
    %v2148 = vunpack.c.h.b16 %v1488
    %v2149 = vunpack.c.l.b16 %v1489
    %v2150 = vunpack.c.h.b16 %v1489
    %v2151 = vunpack.c.l.b16 %v1490
    %v2152 = vunpack.c.h.b16 %v1490
    %v2153 = vunpack.c.l.b16 %v1491
    %v2154 = vunpack.c.h.b16 %v1491
    %v2155 = vunpack.c.l.b16 %v1492
    %v2156 = vunpack.c.h.b16 %v1492
    %v2157 = vunpack.c.l.b16 %v1493
    %v2158 = vunpack.c.h.b16 %v1493
    %v2159 = vunpack.c.l.b16 %v1494
    %v2160 = vunpack.c.h.b16 %v1494
    %v2161 = vunpack.c.l.b16 %v1495
    %v2162 = vunpack.c.h.b16 %v1495
    %v2163 = vunpack.c.l.b16 %v1496
    %v2164 = vunpack.c.h.b16 %v1496
    %v2165 = vunpack.c.l.b16 %v1497
    %v2166 = vunpack.c.h.b16 %v1497
    %v2167 = vunpack.c.l.b16 %v1498
    %v2168 = vunpack.c.h.b16 %v1498
    %v2169 = vunpack.c.l.b16 %v1499
    %v2170 = vunpack.c.h.b16 %v1499
    %v2171 = vunpack.c.l.b16 %v1500
    %v2172 = vunpack.c.h.b16 %v1500
    %v2173 = vunpack.c.l.b16 %v1501
    %v2174 = vunpack.c.h.b16 %v1501
    %v2175 = vunpack.c.l.b16 %v1502
    %v2176 = vunpack.c.h.b16 %v1502
    %v2177 = vunpack.c.l.b16 %v1503
    %v2178 = vunpack.c.h.b16 %v1503
    %v2179 = vunpack.c.l.b16 %v1504
    %v2180 = vunpack.c.h.b16 %v1504
    %v2181 = vunpack.c.l.b16 %v1505
    %v2182 = vunpack.c.h.b16 %v1505
    %v2183 = vunpack.c.l.b16 %v1506
    %v2184 = vunpack.c.h.b16 %v1506
    %v2185 = vunpack.c.l.b16 %v1507
    %v2186 = vunpack.c.h.b16 %v1507
    %v2187 = vunpack.c.l.b16 %v1508
    %v2188 = vunpack.c.h.b16 %v1508
    %v2189 = vunpack.c.l.b16 %v1509
    %v2190 = vunpack.c.h.b16 %v1509
    %v2191 = vunpack.c.l.b16 %v1510
    %v2192 = vunpack.c.h.b16 %v1510
    %v2193 = vunpack.c.l.b16 %v1511
    %v2194 = vunpack.c.h.b16 %v1511
    %v2195 = vunpack.c.l.b16 %v1512
    %v2196 = vunpack.c.h.b16 %v1512
    %v2197 = vunpack.c.l.b16 %v1513
    %v2198 = vunpack.c.h.b16 %v1513
    %v2199 = vunpack.c.l.b16 %v1514
    %v2200 = vunpack.c.h.b16 %v1514
    %v2201 = vunpack.c.l.b16 %v1515
    %v2202 = vunpack.c.h.b16 %v1515
    %v2203 = vunpack.c.l.b16 %v1516
    %v2204 = vunpack.c.h.b16 %v1516
    %v2205 = vunpack.c.l.b16 %v1517
    %v2206 = vunpack.c.h.b16 %v1517
    %v2207 = vunpack.c.l.b16 %v1518
    %v2208 = vunpack.c.h.b16 %v1518
    %v2209 = vunpack.c.l.b16 %v1519
    %v2210 = vunpack.c.h.b16 %v1519
    %v2211 = vunpack.c.l.b16 %v1520
    %v2212 = vunpack.c.h.b16 %v1520
    %v2213 = vunpack.c.l.b16 %v1521
    %v2214 = vunpack.c.h.b16 %v1521
    %v2215 = vunpack.c.l.b16 %v1522
    %v2216 = vunpack.c.h.b16 %v1522
    %v2217 = vunpack.c.l.b16 %v1523
    %v2218 = vunpack.c.h.b16 %v1523
    %v2219 = vunpack.c.l.b16 %v1524
    %v2220 = vunpack.c.h.b16 %v1524
    %v2221 = vunpack.c.l.b16 %v1525
    %v2222 = vunpack.c.h.b16 %v1525
    %v2223 = vunpack.c.l.b16 %v1526
    %v2224 = vunpack.c.h.b16 %v1526
    %v2225 = vunpack.c.l.b16 %v1527
    %v2226 = vunpack.c.h.b16 %v1527
    %v2227 = vunpack.c.l.b16 %v1528
    %v2228 = vunpack.c.h.b16 %v1528
    %v2229 = vunpack.c.l.b16 %v1529
    %v2230 = vunpack.c.h.b16 %v1529
    %v2231 = vunpack.c.l.b16 %v1530
    %v2232 = vunpack.c.h.b16 %v1530
    %v2233 = vunpack.c.l.b16 %v1531
    %v2234 = vunpack.c.h.b16 %v1531
    %v2235 = vunpack.c.l.b16 %v1532
    %v2236 = vunpack.c.h.b16 %v1532
    %v2237 = vunpack.c.l.b16 %v1533
    %v2238 = vunpack.c.h.b16 %v1533
    %v2239 = vunpack.c.l.b16 %v1534
    %v2240 = vunpack.c.h.b16 %v1534
    %v2241 = vunpack.c.l.b16 %v1535
    %v2242 = vunpack.c.h.b16 %v1535
    %v2243 = vunpack.c.l.b16 %v1536
    %v2244 = vunpack.c.h.b16 %v1536
    %v2245 = vunpack.c.l.b16 %v1537
    %v2246 = vunpack.c.h.b16 %v1537
    %v2247 = vunpack.c.l.b16 %v1538
    %v2248 = vunpack.c.h.b16 %v1538
    %v2249 = vunpack.c.l.b16 %v1539
    %v2250 = vunpack.c.h.b16 %v1539
    %v2251 = vunpack.c.l.b16 %v1540
    %v2252 = vunpack.c.h.b16 %v1540
    %v2253 = vunpack.c.l.b16 %v1541
    %v2254 = vunpack.c.h.b16 %v1541
    %v2255 = vunpack.c.l.b16 %v1542
    %v2256 = vunpack.c.h.b16 %v1542
    %v2257 = vunpack.c.l.b16 %v1543
    %v2258 = vunpack.c.h.b16 %v1543
    %v2259 = vunpack.c.l.b16 %v1544
    %v2260 = vunpack.c.h.b16 %v1544
    %v2261 = vunpack.c.l.b16 %v1545
    %v2262 = vunpack.c.h.b16 %v1545
    %v2263 = vunpack.c.l.b16 %v1546
    %v2264 = vunpack.c.h.b16 %v1546
    %v2265 = vunpack.c.l.b16 %v1547
    %v2266 = vunpack.c.h.b16 %v1547
    %v2267 = vunpack.c.l.b16 %v1548
    %v2268 = vunpack.c.h.b16 %v1548
    %v2269 = vunpack.c.l.b16 %v1549
    %v2270 = vunpack.c.h.b16 %v1549
    %v2271 = vunpack.c.l.b16 %v1550
    %v2272 = vunpack.c.h.b16 %v1550
    %v2273 = vunpack.c.l.b16 %v1551
    %v2274 = vunpack.c.h.b16 %v1551
    %v2275 = vunpack.c.l.b16 %v1552
    %v2276 = vunpack.c.h.b16 %v1552
    %v2277 = vunpack.c.l.b16 %v1553
    %v2278 = vunpack.c.h.b16 %v1553
    %v2279 = vunpack.c.l.b16 %v1554
    %v2280 = vunpack.c.h.b16 %v1554
    %v2281 = vunpack.c.l.b16 %v1555
    %v2282 = vunpack.c.h.b16 %v1555
    %v2283 = vunpack.c.l.b16 %v1556
    %v2284 = vunpack.c.h.b16 %v1556
    %v2285 = vunpack.c.l.b16 %v1557
    %v2286 = vunpack.c.h.b16 %v1557
    %v2287 = vunpack.c.l.b16 %v1558
    %v2288 = vunpack.c.h.b16 %v1558
    %v2289 = vunpack.c.l.b16 %v1559
    %v2290 = vunpack.c.h.b16 %v1559
    %v2291 = vunpack.c.l.b16 %v1560
    %v2292 = vunpack.c.h.b16 %v1560
    %v2293 = vunpack.c.l.b16 %v1561
    %v2294 = vunpack.c.h.b16 %v1561
    %v2295 = vunpack.c.l.b16 %v1562
    %v2296 = vunpack.c.h.b16 %v1562
    %v2297 = vunpack.c.l.b16 %v1563
    %v2298 = vunpack.c.h.b16 %v1563
    %v2299 = vunpack.c.l.b16 %v1564
    %v2300 = vunpack.c.h.b16 %v1564
    %v2301 = vunpack.c.l.b16 %v1565
    %v2302 = vunpack.c.h.b16 %v1565
    %v2303 = vunpack.c.l.b16 %v1566
    %v2304 = vunpack.c.h.b16 %v1566
    %v2305 = vunpack.c.l.b16 %v1567
    %v2306 = vunpack.c.h.b16 %v1567
    %v2307 = vunpack.c.l.b16 %v1568
    %v2308 = vunpack.c.h.b16 %v1568
    %v2309 = vunpack.c.l.b16 %v1569
    %v2310 = vunpack.c.h.b16 %v1569
    %v2311 = vunpack.c.l.b16 %v1570
    %v2312 = vunpack.c.h.b16 %v1570
    %v2313 = vunpack.c.l.b16 %v1571
    %v2314 = vunpack.c.h.b16 %v1571
    %v2315 = vunpack.c.l.b16 %v1572
    %v2316 = vunpack.c.h.b16 %v1572
    %v2317 = vunpack.c.l.b16 %v1573
    %v2318 = vunpack.c.h.b16 %v1573
    %v2319 = vunpack.c.l.b16 %v1574
    %v2320 = vunpack.c.h.b16 %v1574
    %v2321 = vunpack.c.l.b16 %v1575
    %v2322 = vunpack.c.h.b16 %v1575
    %v2323 = vunpack.c.l.b16 %v1576
    %v2324 = vunpack.c.h.b16 %v1576
    %v2325 = vunpack.c.l.b16 %v1577
    %v2326 = vunpack.c.h.b16 %v1577
    %v2327 = vunpack.c.l.b16 %v1578
    %v2328 = vunpack.c.h.b16 %v1578
    %v2329 = vunpack.c.l.b16 %v1579
    %v2330 = vunpack.c.h.b16 %v1579
    %v2331 = vunpack.c.l.b16 %v1580
    %v2332 = vunpack.c.h.b16 %v1580
    %v2333 = vunpack.c.l.b16 %v1581
    %v2334 = vunpack.c.h.b16 %v1581
    %v2335 = vunpack.c.l.b16 %v1582
    %v2336 = vunpack.c.h.b16 %v1582
    %v2337 = vunpack.c.l.b16 %v1583
    %v2338 = vunpack.c.h.b16 %v1583
    %v2339 = vunpack.c.l.b16 %v1584
    %v2340 = vunpack.c.h.b16 %v1584
    %v2341 = vunpack.c.l.b16 %v1585
    %v2342 = vunpack.c.h.b16 %v1585
    %v2343 = vunpack.c.l.b16 %v1586
    %v2344 = vunpack.c.h.b16 %v1586
    %v2345 = vunpack.c.l.b16 %v1587
    %v2346 = vunpack.c.h.b16 %v1587
    %v2347 = vunpack.c.l.b16 %v1588
    %v2348 = vunpack.c.h.b16 %v1588
    %v2349 = vunpack.c.l.b16 %v1589
    %v2350 = vunpack.c.h.b16 %v1589
    %v2351 = vunpack.c.l.b16 %v1590
    %v2352 = vunpack.c.h.b16 %v1590
    %v2353 = vunpack.c.l.b16 %v1591
    %v2354 = vunpack.c.h.b16 %v1591
    %v2355 = vunpack.c.l.b16 %v1592
    %v2356 = vunpack.c.h.b16 %v1592
    %v2357 = vunpack.c.l.b16 %v1593
    %v2358 = vunpack.c.h.b16 %v1593
    %v2359 = vunpack.c.l.b16 %v1594
    %v2360 = vunpack.c.h.b16 %v1594
    %v2361 = vunpack.c.l.b16 %v1595
    %v2362 = vunpack.c.h.b16 %v1595
    %v2363 = vunpack.c.l.b16 %v1596
    %v2364 = vunpack.c.h.b16 %v1596
    %v2365 = vunpack.c.l.b16 %v1597
    %v2366 = vunpack.c.h.b16 %v1597
    %v2367 = vunpack.c.l.b16 %v1598
    %v2368 = vunpack.c.h.b16 %v1598
    %v2369 = vunpack.c.l.b16 %v1599
    %v2370 = vunpack.c.h.b16 %v1599
    %v2371 = vunpack.c.l.b16 %v1600
    %v2372 = vunpack.c.h.b16 %v1600
    %v2373 = vunpack.c.l.b16 %v1601
    %v2374 = vunpack.c.h.b16 %v1601
    %v2375 = vunpack.c.l.b16 %v1602
    %v2376 = vunpack.c.h.b16 %v1602
    %v2377 = vunpack.c.l.b16 %v1603
    %v2378 = vunpack.c.h.b16 %v1603
    %v2379 = vunpack.c.l.b16 %v1604
    %v2380 = vunpack.c.h.b16 %v1604
    %v2381 = vunpack.c.l.b16 %v1605
    %v2382 = vunpack.c.h.b16 %v1605
    %v2383 = vunpack.c.l.b16 %v1606
    %v2384 = vunpack.c.h.b16 %v1606
    %v2385 = vunpack.c.l.b16 %v1607
    %v2386 = vunpack.c.h.b16 %v1607
    %v2387 = vunpack.c.l.b16 %v1608
    %v2388 = vunpack.c.h.b16 %v1608
    %v2389 = vunpack.c.l.b16 %v1609
    %v2390 = vunpack.c.h.b16 %v1609
    %v2391 = vunpack.c.l.b16 %v1610
    %v2392 = vunpack.c.h.b16 %v1610
    %v2393 = vunpack.c.l.b16 %v1611
    %v2394 = vunpack.c.h.b16 %v1611
    %v2395 = vunpack.c.l.b16 %v1612
    %v2396 = vunpack.c.h.b16 %v1612
    %v2397 = vunpack.c.l.b16 %v1613
    %v2398 = vunpack.c.h.b16 %v1613
    %v2399 = vunpack.c.l.b16 %v1614
    %v2400 = vunpack.c.h.b16 %v1614
    %v2401 = vunpack.c.l.b16 %v1615
    %v2402 = vunpack.c.h.b16 %v1615
    %v2403 = vunpack.c.l.b16 %v1616
    %v2404 = vunpack.c.h.b16 %v1616
    %v2405 = vunpack.c.l.b16 %v1617
    %v2406 = vunpack.c.h.b16 %v1617
    %v2407 = vunpack.c.l.b16 %v1618
    %v2408 = vunpack.c.h.b16 %v1618
    %v2409 = vunpack.c.l.b16 %v1619
    %v2410 = vunpack.c.h.b16 %v1619
    %v2411 = vunpack.c.l.b16 %v1620
    %v2412 = vunpack.c.h.b16 %v1620
    %v2413 = vunpack.c.l.b16 %v1621
    %v2414 = vunpack.c.h.b16 %v1621
    %v2415 = vunpack.c.l.b16 %v1622
    %v2416 = vunpack.c.h.b16 %v1622
    %v2417 = vunpack.c.l.b16 %v1623
    %v2418 = vunpack.c.h.b16 %v1623
    %v2419 = vunpack.c.l.b16 %v1624
    %v2420 = vunpack.c.h.b16 %v1624
    %v2421 = vunpack.c.l.b16 %v1625
    %v2422 = vunpack.c.h.b16 %v1625
    %v2423 = vunpack.c.l.b16 %v1626
    %v2424 = vunpack.c.h.b16 %v1626
    %v2425 = vunpack.c.l.b16 %v1627
    %v2426 = vunpack.c.h.b16 %v1627
    %v2427 = vunpack.c.l.b16 %v1628
    %v2428 = vunpack.c.h.b16 %v1628
    %v2429 = vunpack.c.l.b16 %v1629
    %v2430 = vunpack.c.h.b16 %v1629
    %v2431 = vunpack.c.l.b16 %v1630
    %v2432 = vunpack.c.h.b16 %v1630
    %v2433 = vunpack.c.l.b16 %v1631
    %v2434 = vunpack.c.h.b16 %v1631
    %v2435 = vunpack.c.l.b16 %v1632
    %v2436 = vunpack.c.h.b16 %v1632
    %v2437 = vunpack.c.l.b16 %v1633
    %v2438 = vunpack.c.h.b16 %v1633
    %v2439 = vunpack.c.l.b16 %v1634
    %v2440 = vunpack.c.h.b16 %v1634
    %v2441 = vunpack.c.l.b16 %v1635
    %v2442 = vunpack.c.h.b16 %v1635
    %v2443 = vunpack.c.l.b16 %v1636
    %v2444 = vunpack.c.h.b16 %v1636
    %v2445 = vunpack.c.l.b16 %v1637
    %v2446 = vunpack.c.h.b16 %v1637
    %v2447 = vunpack.c.l.b16 %v1638
    %v2448 = vunpack.c.h.b16 %v1638
    %v2449 = vunpack.c.l.b16 %v1639
    %v2450 = vunpack.c.h.b16 %v1639
    %v2451 = vunpack.c.l.b16 %v1640
    %v2452 = vunpack.c.h.b16 %v1640
    %v2453 = vunpack.c.l.b16 %v1641
    %v2454 = vunpack.c.h.b16 %v1641
    %v2455 = vunpack.c.l.b16 %v1642
    %v2456 = vunpack.c.h.b16 %v1642
    %v2457 = vunpack.c.l.b16 %v1643
    %v2458 = vunpack.c.h.b16 %v1643
    %v2459 = vunpack.c.l.b16 %v1644
    %v2460 = vunpack.c.h.b16 %v1644
    %v2461 = vunpack.c.l.b16 %v1645
    %v2462 = vunpack.c.h.b16 %v1645
    %v2463 = vunpack.c.l.b16 %v1646
    %v2464 = vunpack.c.h.b16 %v1646
    %v2465 = vunpack.c.l.b16 %v1647
    %v2466 = vunpack.c.h.b16 %v1647
    %v2467 = vunpack.c.l.b16 %v1648
    %v2468 = vunpack.c.h.b16 %v1648
    %v2469 = vunpack.c.l.b16 %v1649
    %v2470 = vunpack.c.h.b16 %v1649
    %v2471 = vunpack.c.l.b16 %v1650
    %v2472 = vunpack.c.h.b16 %v1650
    %v2473 = vunpack.c.l.b16 %v1651
    %v2474 = vunpack.c.h.b16 %v1651
    %v2475 = vunpack.c.l.b16 %v1652
    %v2476 = vunpack.c.h.b16 %v1652
    %v2477 = vunpack.c.l.b16 %v1653
    %v2478 = vunpack.c.h.b16 %v1653
    %v2479 = vunpack.c.l.b16 %v1654
    %v2480 = vunpack.c.h.b16 %v1654
    %v2481 = vunpack.c.l.b16 %v1655
    %v2482 = vunpack.c.h.b16 %v1655
    %v2483 = vunpack.c.l.b16 %v1656
    %v2484 = vunpack.c.h.b16 %v1656
    %v2485 = vunpack.c.l.b16 %v1657
    %v2486 = vunpack.c.h.b16 %v1657
    %v2487 = vunpack.c.l.b16 %v1658
    %v2488 = vunpack.c.h.b16 %v1658
    %v2489 = vunpack.c.l.b16 %v1659
    %v2490 = vunpack.c.h.b16 %v1659
    %v2491 = vunpack.c.l.b16 %v1660
    %v2492 = vunpack.c.h.b16 %v1660
    %v2493 = vunpack.c.l.b16 %v1661
    %v2494 = vunpack.c.h.b16 %v1661
    %v2495 = vunpack.c.l.b16 %v1662
    %v2496 = vunpack.c.h.b16 %v1662
    %v2497 = vunpack.c.l.b16 %v1663
    %v2498 = vunpack.c.h.b16 %v1663
    %v2499 = vunpack.c.l.b16 %v1664
    %v2500 = vunpack.c.h.b16 %v1664
    %v2501 = vunpack.c.l.b16 %v1665
    %v2502 = vunpack.c.h.b16 %v1665
    %v2503 = vunpack.c.l.b16 %v1666
    %v2504 = vunpack.c.h.b16 %v1666
    %v2505 = vunpack.c.l.b16 %v1667
    %v2506 = vunpack.c.h.b16 %v1667
    %v2507 = vunpack.c.l.b16 %v1668
    %v2508 = vunpack.c.h.b16 %v1668
    %v2509 = vunpack.c.l.b16 %v1669
    %v2510 = vunpack.c.h.b16 %v1669
    %v2511 = vunpack.c.l.b16 %v1670
    %v2512 = vunpack.c.h.b16 %v1670
    %v2513 = vunpack.c.l.b16 %v1671
    %v2514 = vunpack.c.h.b16 %v1671
    %v2515 = vunpack.c.l.b16 %v1672
    %v2516 = vunpack.c.h.b16 %v1672
    %v2517 = vunpack.c.l.b16 %v1673
    %v2518 = vunpack.c.h.b16 %v1673
    %v2519 = vunpack.c.l.b16 %v1674
    %v2520 = vunpack.c.h.b16 %v1674
    %v2521 = vunpack.c.l.b16 %v1675
    %v2522 = vunpack.c.h.b16 %v1675
    %v2523 = vunpack.c.l.b16 %v1676
    %v2524 = vunpack.c.h.b16 %v1676
    %v2525 = vunpack.c.l.b16 %v1677
    %v2526 = vunpack.c.h.b16 %v1677
    %v2527 = vunpack.c.l.b16 %v1678
    %v2528 = vunpack.c.h.b16 %v1678
    %v2529 = vunpack.c.l.b16 %v1679
    %v2530 = vunpack.c.h.b16 %v1679
    %v2531 = vunpack.c.l.b16 %v1680
    %v2532 = vunpack.c.h.b16 %v1680
    %v2533 = vunpack.c.l.b16 %v1681
    %v2534 = vunpack.c.h.b16 %v1681
    %v2535 = vunpack.c.l.b16 %v1682
    %v2536 = vunpack.c.h.b16 %v1682
    %v2537 = vunpack.c.l.b16 %v1683
    %v2538 = vunpack.c.h.b16 %v1683
    %v2539 = vunpack.c.l.b16 %v1684
    %v2540 = vunpack.c.h.b16 %v1684
    %v2541 = vunpack.c.l.b16 %v1685
    %v2542 = vunpack.c.h.b16 %v1685
    %v2543 = vunpack.c.l.b16 %v1686
    %v2544 = vunpack.c.h.b16 %v1686
    %v2545 = vunpack.c.l.b16 %v1687
    %v2546 = vunpack.c.h.b16 %v1687
    %v2547 = vunpack.c.l.b16 %v1688
    %v2548 = vunpack.c.h.b16 %v1688
    %v2549 = vunpack.c.l.b16 %v1689
    %v2550 = vunpack.c.h.b16 %v1689
    %v2551 = vunpack.c.l.b16 %v1690
    %v2552 = vunpack.c.h.b16 %v1690
    %v2553 = vunpack.c.l.b16 %v1691
    %v2554 = vunpack.c.h.b16 %v1691
    %v2555 = vunpack.c.l.b16 %v1692
    %v2556 = vunpack.c.h.b16 %v1692
    %v2557 = vpack.c.b16 %v1985, %v1981
    %v2558 = vpack.c.b16 %v1986, %v1982
    %v2559 = vpack.c.b16 %v1987, %v1983
    %v2560 = vpack.c.b16 %v1988, %v1984
    %v2561 = vpack.c.b16 %v1993, %v1989
    %v2562 = vpack.c.b16 %v1994, %v1990
    %v2563 = vpack.c.b16 %v1995, %v1991
    %v2564 = vpack.c.b16 %v1996, %v1992
    %v2565 = vpack.c.b16 %v2001, %v1997
    %v2566 = vpack.c.b16 %v2002, %v1998
    %v2567 = vpack.c.b16 %v2003, %v1999
    %v2568 = vpack.c.b16 %v2004, %v2000
    %v2569 = vpack.c.b16 %v2009, %v2005
    %v2570 = vpack.c.b16 %v2010, %v2006
    %v2571 = vpack.c.b16 %v2011, %v2007
    %v2572 = vpack.c.b16 %v2012, %v2008
    %v2573 = vpack.c.b16 %v2017, %v2013
    %v2574 = vpack.c.b16 %v2018, %v2014
    %v2575 = vpack.c.b16 %v2019, %v2015
    %v2576 = vpack.c.b16 %v2020, %v2016
    %v2577 = vpack.c.b16 %v2025, %v2021
    %v2578 = vpack.c.b16 %v2026, %v2022
    %v2579 = vpack.c.b16 %v2027, %v2023
    %v2580 = vpack.c.b16 %v2028, %v2024
    %v2581 = vpack.c.b16 %v2033, %v2029
    %v2582 = vpack.c.b16 %v2034, %v2030
    %v2583 = vpack.c.b16 %v2035, %v2031
    %v2584 = vpack.c.b16 %v2036, %v2032
    %v2585 = vpack.c.b16 %v2041, %v2037
    %v2586 = vpack.c.b16 %v2042, %v2038
    %v2587 = vpack.c.b16 %v2043, %v2039
    %v2588 = vpack.c.b16 %v2044, %v2040
    %v2589 = vpack.c.b16 %v2049, %v2045
    %v2590 = vpack.c.b16 %v2050, %v2046
    %v2591 = vpack.c.b16 %v2051, %v2047
    %v2592 = vpack.c.b16 %v2052, %v2048
    %v2593 = vpack.c.b16 %v2057, %v2053
    %v2594 = vpack.c.b16 %v2058, %v2054
    %v2595 = vpack.c.b16 %v2059, %v2055
    %v2596 = vpack.c.b16 %v2060, %v2056
    %v2597 = vpack.c.b16 %v2065, %v2061
    %v2598 = vpack.c.b16 %v2066, %v2062
    %v2599 = vpack.c.b16 %v2067, %v2063
    %v2600 = vpack.c.b16 %v2068, %v2064
    %v2601 = vpack.c.b16 %v2073, %v2069
    %v2602 = vpack.c.b16 %v2074, %v2070
    %v2603 = vpack.c.b16 %v2075, %v2071
    %v2604 = vpack.c.b16 %v2076, %v2072
    %v2605 = vpack.c.b16 %v2081, %v2077
    %v2606 = vpack.c.b16 %v2082, %v2078
    %v2607 = vpack.c.b16 %v2083, %v2079
    %v2608 = vpack.c.b16 %v2084, %v2080
    %v2609 = vpack.c.b16 %v2089, %v2085
    %v2610 = vpack.c.b16 %v2090, %v2086
    %v2611 = vpack.c.b16 %v2091, %v2087
    %v2612 = vpack.c.b16 %v2092, %v2088
    %v2613 = vpack.c.b16 %v2097, %v2093
    %v2614 = vpack.c.b16 %v2098, %v2094
    %v2615 = vpack.c.b16 %v2099, %v2095
    %v2616 = vpack.c.b16 %v2100, %v2096
    %v2617 = vpack.c.b16 %v2105, %v2101
    %v2618 = vpack.c.b16 %v2106, %v2102
    %v2619 = vpack.c.b16 %v2107, %v2103
    %v2620 = vpack.c.b16 %v2108, %v2104
    %v2621 = vpack.c.b16 %v2113, %v2109
    %v2622 = vpack.c.b16 %v2114, %v2110
    %v2623 = vpack.c.b16 %v2115, %v2111
    %v2624 = vpack.c.b16 %v2116, %v2112
    %v2625 = vpack.c.b16 %v2121, %v2117
    %v2626 = vpack.c.b16 %v2122, %v2118
    %v2627 = vpack.c.b16 %v2123, %v2119
    %v2628 = vpack.c.b16 %v2124, %v2120
    %v2629 = vpack.c.b16 %v2129, %v2125
    %v2630 = vpack.c.b16 %v2130, %v2126
    %v2631 = vpack.c.b16 %v2131, %v2127
    %v2632 = vpack.c.b16 %v2132, %v2128
    %v2633 = vpack.c.b16 %v2137, %v2133
    %v2634 = vpack.c.b16 %v2138, %v2134
    %v2635 = vpack.c.b16 %v2139, %v2135
    %v2636 = vpack.c.b16 %v2140, %v2136
    %v2637 = vpack.c.b16 %v2145, %v2141
    %v2638 = vpack.c.b16 %v2146, %v2142
    %v2639 = vpack.c.b16 %v2147, %v2143
    %v2640 = vpack.c.b16 %v2148, %v2144
    %v2641 = vpack.c.b16 %v2153, %v2149
    %v2642 = vpack.c.b16 %v2154, %v2150
    %v2643 = vpack.c.b16 %v2155, %v2151
    %v2644 = vpack.c.b16 %v2156, %v2152
    %v2645 = vpack.c.b16 %v2161, %v2157
    %v2646 = vpack.c.b16 %v2162, %v2158
    %v2647 = vpack.c.b16 %v2163, %v2159
    %v2648 = vpack.c.b16 %v2164, %v2160
    %v2649 = vpack.c.b16 %v2169, %v2165
    %v2650 = vpack.c.b16 %v2170, %v2166
    %v2651 = vpack.c.b16 %v2171, %v2167
    %v2652 = vpack.c.b16 %v2172, %v2168
    %v2653 = vpack.c.b16 %v2177, %v2173
    %v2654 = vpack.c.b16 %v2178, %v2174
    %v2655 = vpack.c.b16 %v2179, %v2175
    %v2656 = vpack.c.b16 %v2180, %v2176
    %v2657 = vpack.c.b16 %v2185, %v2181
    %v2658 = vpack.c.b16 %v2186, %v2182
    %v2659 = vpack.c.b16 %v2187, %v2183
    %v2660 = vpack.c.b16 %v2188, %v2184
    %v2661 = vpack.c.b16 %v2193, %v2189
    %v2662 = vpack.c.b16 %v2194, %v2190
    %v2663 = vpack.c.b16 %v2195, %v2191
    %v2664 = vpack.c.b16 %v2196, %v2192
    %v2665 = vpack.c.b16 %v2201, %v2197
    %v2666 = vpack.c.b16 %v2202, %v2198
    %v2667 = vpack.c.b16 %v2203, %v2199
    %v2668 = vpack.c.b16 %v2204, %v2200
    %v2669 = vpack.c.b16 %v2209, %v2205
    %v2670 = vpack.c.b16 %v2210, %v2206
    %v2671 = vpack.c.b16 %v2211, %v2207
    %v2672 = vpack.c.b16 %v2212, %v2208
    %v2673 = vpack.c.b16 %v2217, %v2213
    %v2674 = vpack.c.b16 %v2218, %v2214
    %v2675 = vpack.c.b16 %v2219, %v2215
    %v2676 = vpack.c.b16 %v2220, %v2216
    %v2677 = vpack.c.b16 %v2225, %v2221
    %v2678 = vpack.c.b16 %v2226, %v2222
    %v2679 = vpack.c.b16 %v2227, %v2223
    %v2680 = vpack.c.b16 %v2228, %v2224
    %v2681 = vpack.c.b16 %v2233, %v2229
    %v2682 = vpack.c.b16 %v2234, %v2230
    %v2683 = vpack.c.b16 %v2235, %v2231
    %v2684 = vpack.c.b16 %v2236, %v2232
    %v2685 = vpack.c.b16 %v2241, %v2237
    %v2686 = vpack.c.b16 %v2242, %v2238
    %v2687 = vpack.c.b16 %v2243, %v2239
    %v2688 = vpack.c.b16 %v2244, %v2240
    %v2689 = vpack.c.b16 %v2249, %v2245
    %v2690 = vpack.c.b16 %v2250, %v2246
    %v2691 = vpack.c.b16 %v2251, %v2247
    %v2692 = vpack.c.b16 %v2252, %v2248
    %v2693 = vpack.c.b16 %v2257, %v2253
    %v2694 = vpack.c.b16 %v2258, %v2254
    %v2695 = vpack.c.b16 %v2259, %v2255
    %v2696 = vpack.c.b16 %v2260, %v2256
    %v2697 = vpack.c.b16 %v2265, %v2261
    %v2698 = vpack.c.b16 %v2266, %v2262
    %v2699 = vpack.c.b16 %v2267, %v2263
    %v2700 = vpack.c.b16 %v2268, %v2264
    %v2701 = vpack.c.b16 %v2273, %v2269
    %v2702 = vpack.c.b16 %v2274, %v2270
    %v2703 = vpack.c.b16 %v2275, %v2271
    %v2704 = vpack.c.b16 %v2276, %v2272
    %v2705 = vpack.c.b16 %v2281, %v2277
    %v2706 = vpack.c.b16 %v2282, %v2278
    %v2707 = vpack.c.b16 %v2283, %v2279
    %v2708 = vpack.c.b16 %v2284, %v2280
    %v2709 = vpack.c.b16 %v2289, %v2285
    %v2710 = vpack.c.b16 %v2290, %v2286
    %v2711 = vpack.c.b16 %v2291, %v2287
    %v2712 = vpack.c.b16 %v2292, %v2288
    %v2713 = vpack.c.b16 %v2297, %v2293
    %v2714 = vpack.c.b16 %v2298, %v2294
    %v2715 = vpack.c.b16 %v2299, %v2295
    %v2716 = vpack.c.b16 %v2300, %v2296
    %v2717 = vpack.c.b16 %v2305, %v2301
    %v2718 = vpack.c.b16 %v2306, %v2302
    %v2719 = vpack.c.b16 %v2307, %v2303
    %v2720 = vpack.c.b16 %v2308, %v2304
    %v2721 = vpack.c.b16 %v2313, %v2309
    %v2722 = vpack.c.b16 %v2314, %v2310
    %v2723 = vpack.c.b16 %v2315, %v2311
    %v2724 = vpack.c.b16 %v2316, %v2312
    %v2725 = vpack.c.b16 %v2321, %v2317
    %v2726 = vpack.c.b16 %v2322, %v2318
    %v2727 = vpack.c.b16 %v2323, %v2319
    %v2728 = vpack.c.b16 %v2324, %v2320
    %v2729 = vpack.c.b16 %v2329, %v2325
    %v2730 = vpack.c.b16 %v2330, %v2326
    %v2731 = vpack.c.b16 %v2331, %v2327
    %v2732 = vpack.c.b16 %v2332, %v2328
    %v2733 = vpack.c.b16 %v2337, %v2333
    %v2734 = vpack.c.b16 %v2338, %v2334
    %v2735 = vpack.c.b16 %v2339, %v2335
    %v2736 = vpack.c.b16 %v2340, %v2336
    %v2737 = vpack.c.b16 %v2345, %v2341
    %v2738 = vpack.c.b16 %v2346, %v2342
    %v2739 = vpack.c.b16 %v2347, %v2343
    %v2740 = vpack.c.b16 %v2348, %v2344
    %v2741 = vpack.c.b16 %v2353, %v2349
    %v2742 = vpack.c.b16 %v2354, %v2350
    %v2743 = vpack.c.b16 %v2355, %v2351
    %v2744 = vpack.c.b16 %v2356, %v2352
    %v2745 = vpack.c.b16 %v2361, %v2357
    %v2746 = vpack.c.b16 %v2362, %v2358
    %v2747 = vpack.c.b16 %v2363, %v2359
    %v2748 = vpack.c.b16 %v2364, %v2360
    %v2749 = vpack.c.b16 %v2369, %v2365
    %v2750 = vpack.c.b16 %v2370, %v2366
    %v2751 = vpack.c.b16 %v2371, %v2367
    %v2752 = vpack.c.b16 %v2372, %v2368
    %v2753 = vpack.c.b16 %v2377, %v2373
    %v2754 = vpack.c.b16 %v2378, %v2374
    %v2755 = vpack.c.b16 %v2379, %v2375
    %v2756 = vpack.c.b16 %v2380, %v2376
    %v2757 = vpack.c.b16 %v2385, %v2381
    %v2758 = vpack.c.b16 %v2386, %v2382
    %v2759 = vpack.c.b16 %v2387, %v2383
    %v2760 = vpack.c.b16 %v2388, %v2384
    %v2761 = vpack.c.b16 %v2393, %v2389
    %v2762 = vpack.c.b16 %v2394, %v2390
    %v2763 = vpack.c.b16 %v2395, %v2391
    %v2764 = vpack.c.b16 %v2396, %v2392
    %v2765 = vpack.c.b16 %v2401, %v2397
    %v2766 = vpack.c.b16 %v2402, %v2398
    %v2767 = vpack.c.b16 %v2403, %v2399
    %v2768 = vpack.c.b16 %v2404, %v2400
    %v2769 = vpack.c.b16 %v2409, %v2405
    %v2770 = vpack.c.b16 %v2410, %v2406
    %v2771 = vpack.c.b16 %v2411, %v2407
    %v2772 = vpack.c.b16 %v2412, %v2408
    %v2773 = vpack.c.b16 %v2417, %v2413
    %v2774 = vpack.c.b16 %v2418, %v2414
    %v2775 = vpack.c.b16 %v2419, %v2415
    %v2776 = vpack.c.b16 %v2420, %v2416
    %v2777 = vpack.c.b16 %v2425, %v2421
    %v2778 = vpack.c.b16 %v2426, %v2422
    %v2779 = vpack.c.b16 %v2427, %v2423
    %v2780 = vpack.c.b16 %v2428, %v2424
    %v2781 = vpack.c.b16 %v2433, %v2429
    %v2782 = vpack.c.b16 %v2434, %v2430
    %v2783 = vpack.c.b16 %v2435, %v2431
    %v2784 = vpack.c.b16 %v2436, %v2432
    %v2785 = vpack.c.b16 %v2441, %v2437
    %v2786 = vpack.c.b16 %v2442, %v2438
    %v2787 = vpack.c.b16 %v2443, %v2439
    %v2788 = vpack.c.b16 %v2444, %v2440
    %v2789 = vpack.c.b16 %v2449, %v2445
    %v2790 = vpack.c.b16 %v2450, %v2446
    %v2791 = vpack.c.b16 %v2451, %v2447
    %v2792 = vpack.c.b16 %v2452, %v2448
    %v2793 = vpack.c.b16 %v2457, %v2453
    %v2794 = vpack.c.b16 %v2458, %v2454
    %v2795 = vpack.c.b16 %v2459, %v2455
    %v2796 = vpack.c.b16 %v2460, %v2456
    %v2797 = vpack.c.b16 %v2465, %v2461
    %v2798 = vpack.c.b16 %v2466, %v2462
    %v2799 = vpack.c.b16 %v2467, %v2463
    %v2800 = vpack.c.b16 %v2468, %v2464
    %v2801 = vpack.c.b16 %v2473, %v2469
    %v2802 = vpack.c.b16 %v2474, %v2470
    %v2803 = vpack.c.b16 %v2475, %v2471
    %v2804 = vpack.c.b16 %v2476, %v2472
    %v2805 = vpack.c.b16 %v2481, %v2477
    %v2806 = vpack.c.b16 %v2482, %v2478
    %v2807 = vpack.c.b16 %v2483, %v2479
    %v2808 = vpack.c.b16 %v2484, %v2480
    %v2809 = vpack.c.b16 %v2489, %v2485
    %v2810 = vpack.c.b16 %v2490, %v2486
    %v2811 = vpack.c.b16 %v2491, %v2487
    %v2812 = vpack.c.b16 %v2492, %v2488
    %v2813 = vpack.c.b16 %v2497, %v2493
    %v2814 = vpack.c.b16 %v2498, %v2494
    %v2815 = vpack.c.b16 %v2499, %v2495
    %v2816 = vpack.c.b16 %v2500, %v2496
    %v2817 = vpack.c.b16 %v2505, %v2501
    %v2818 = vpack.c.b16 %v2506, %v2502
    %v2819 = vpack.c.b16 %v2507, %v2503
    %v2820 = vpack.c.b16 %v2508, %v2504
    %v2821 = vpack.c.b16 %v2513, %v2509
    %v2822 = vpack.c.b16 %v2514, %v2510
    %v2823 = vpack.c.b16 %v2515, %v2511
    %v2824 = vpack.c.b16 %v2516, %v2512
    %v2825 = vpack.c.b16 %v2521, %v2517
    %v2826 = vpack.c.b16 %v2522, %v2518
    %v2827 = vpack.c.b16 %v2523, %v2519
    %v2828 = vpack.c.b16 %v2524, %v2520
    %v2829 = vpack.c.b16 %v2529, %v2525
    %v2830 = vpack.c.b16 %v2530, %v2526
    %v2831 = vpack.c.b16 %v2531, %v2527
    %v2832 = vpack.c.b16 %v2532, %v2528
    %v2833 = vpack.c.b16 %v2537, %v2533
    %v2834 = vpack.c.b16 %v2538, %v2534
    %v2835 = vpack.c.b16 %v2539, %v2535
    %v2836 = vpack.c.b16 %v2540, %v2536
    %v2837 = vpack.c.b16 %v2545, %v2541
    %v2838 = vpack.c.b16 %v2546, %v2542
    %v2839 = vpack.c.b16 %v2547, %v2543
    %v2840 = vpack.c.b16 %v2548, %v2544
    %v2841 = vpack.c.b16 %v2553, %v2549
    %v2842 = vpack.c.b16 %v2554, %v2550
    %v2843 = vpack.c.b16 %v2555, %v2551
    %v2844 = vpack.c.b16 %v2556, %v2552
    %3133 = vmatprep.subr.bf16.mxu0 0
    %3134 = vmatpush1.bf16.msra.mxu0 %v1380
    %3135 = vmatprep.subr.bf16.mxu0 0
    %3136 = vmatpush1.bf16.msra.mxu0 %v1379
    %3137 = vmatprep.subr.bf16.mxu0 0
    %3138 = vmatpush1.bf16.msra.mxu0 %v1378
    %3139 = vmatprep.subr.bf16.mxu0 0
    %3140 = vmatpush1.bf16.msra.mxu0 %v1377
    %3141 = vmatprep.subr.bf16.mxu0 0
    %3142 = vmatpush1.bf16.msra.mxu0 %v1376
    %3143 = vmatprep.subr.bf16.mxu0 0
    %3144 = vmatpush1.bf16.msra.mxu0 %v1375
    %3145 = vmatprep.subr.bf16.mxu0 0
    %3146 = vmatpush1.bf16.msra.mxu0 %v1374
    %3147 = vmatprep.subr.bf16.mxu0 0
    %3148 = vmatpush1.bf16.msra.mxu0 %v1373
    %3149 = vmatprep.subr.bf16.mxu0 0
    %3150 = vmatpush2.bf16.msra.mxu0 %v1388
    %3151 = vmatprep.subr.bf16.mxu0 0
    %3152 = vmatpush2.bf16.msra.mxu0 %v1387
    %3153 = vmatprep.subr.bf16.mxu0 0
    %3154 = vmatpush2.bf16.msra.mxu0 %v1386
    %3155 = vmatprep.subr.bf16.mxu0 0
    %3156 = vmatpush2.bf16.msra.mxu0 %v1385
    %3157 = vmatprep.subr.bf16.mxu0 0
    %3158 = vmatpush2.bf16.msra.mxu0 %v1384
    %3159 = vmatprep.subr.bf16.mxu0 0
    %3160 = vmatpush2.bf16.msra.mxu0 %v1383
    %3161 = vmatprep.subr.bf16.mxu0 0
    %3162 = vmatpush2.bf16.msra.mxu0 %v1382
    %3163 = vmatprep.subr.bf16.mxu0 0
    %3164 = vmatpush2.bf16.msra.mxu0 %v1381
    %3165 = vmatprep.mubr.bf16.mxu0 %v2558
    %3166 = vmatmul.mubr.bf16.gmra.mxu0 %v2557
    %v3167 = vpop.f32.mrf.mxu0
    %v3168 = vadd.f32 0.0, %v3167
    %v3169 = vpop.f32.mrf.mxu0
    %v3170 = vpop.f32.mrf.mxu0
    %v3171 = vadd.f32 0.0, %v3170
    %v3172 = vpop.f32.mrf.mxu0
    %3173 = vmatprep.mubr.bf16.mxu0 %v2562
    %3174 = vmatmul.mubr.bf16.gmra.mxu0 %v2561
    %v3175 = vpop.f32.mrf.mxu0
    %v3176 = vadd.f32 0.0, %v3175
    %v3177 = vpop.f32.mrf.mxu0
    %v3178 = vpop.f32.mrf.mxu0
    %v3179 = vadd.f32 0.0, %v3178
    %v3180 = vpop.f32.mrf.mxu0
    %3181 = vmatprep.mubr.bf16.mxu0 %v2566
    %3182 = vmatmul.mubr.bf16.gmra.mxu0 %v2565
    %v3183 = vpop.f32.mrf.mxu0
    %v3184 = vadd.f32 0.0, %v3183
    %v3185 = vpop.f32.mrf.mxu0
    %v3186 = vpop.f32.mrf.mxu0
    %v3187 = vadd.f32 0.0, %v3186
    %v3188 = vpop.f32.mrf.mxu0
    %3189 = vmatprep.mubr.bf16.mxu0 %v2570
    %3190 = vmatmul.mubr.bf16.gmra.mxu0 %v2569
    %v3191 = vpop.f32.mrf.mxu0
    %v3192 = vadd.f32 0.0, %v3191
    %v3193 = vpop.f32.mrf.mxu0
    %v3194 = vpop.f32.mrf.mxu0
    %v3195 = vadd.f32 0.0, %v3194
    %v3196 = vpop.f32.mrf.mxu0
    %3197 = vmatprep.mubr.bf16.mxu0 %v2574
    %3198 = vmatmul.mubr.bf16.gmra.mxu0 %v2573
    %v3199 = vpop.f32.mrf.mxu0
    %v3200 = vadd.f32 0.0, %v3199
    %v3201 = vpop.f32.mrf.mxu0
    %v3202 = vpop.f32.mrf.mxu0
    %v3203 = vadd.f32 0.0, %v3202
    %v3204 = vpop.f32.mrf.mxu0
    %3205 = vmatprep.mubr.bf16.mxu0 %v2578
    %3206 = vmatmul.mubr.bf16.gmra.mxu0 %v2577
    %v3207 = vpop.f32.mrf.mxu0
    %v3208 = vadd.f32 0.0, %v3207
    %v3209 = vpop.f32.mrf.mxu0
    %v3210 = vpop.f32.mrf.mxu0
    %v3211 = vadd.f32 0.0, %v3210
    %v3212 = vpop.f32.mrf.mxu0
    %3213 = vmatprep.mubr.bf16.mxu0 %v2582
    %3214 = vmatmul.mubr.bf16.gmra.mxu0 %v2581
    %v3215 = vpop.f32.mrf.mxu0
    %v3216 = vadd.f32 0.0, %v3215
    %v3217 = vpop.f32.mrf.mxu0
    %v3218 = vpop.f32.mrf.mxu0
    %v3219 = vadd.f32 0.0, %v3218
    %v3220 = vpop.f32.mrf.mxu0
    %3221 = vmatprep.mubr.bf16.mxu0 %v2586
    %3222 = vmatmul.mubr.bf16.gmra.mxu0 %v2585
    %v3223 = vpop.f32.mrf.mxu0
    %v3224 = vadd.f32 0.0, %v3223
    %v3225 = vpop.f32.mrf.mxu0
    %v3226 = vpop.f32.mrf.mxu0
    %v3227 = vadd.f32 0.0, %v3226
    %v3228 = vpop.f32.mrf.mxu0
    %3229 = vmatprep.mubr.bf16.mxu0 %v2590
    %3230 = vmatmul.mubr.bf16.gmra.mxu0 %v2589
    %v3231 = vpop.f32.mrf.mxu0
    %v3232 = vadd.f32 0.0, %v3231
    %v3233 = vpop.f32.mrf.mxu0
    %v3234 = vpop.f32.mrf.mxu0
    %v3235 = vadd.f32 0.0, %v3234
    %v3236 = vpop.f32.mrf.mxu0
    %3237 = vmatprep.mubr.bf16.mxu0 %v2594
    %3238 = vmatmul.mubr.bf16.gmra.mxu0 %v2593
    %v3239 = vpop.f32.mrf.mxu0
    %v3240 = vadd.f32 0.0, %v3239
    %v3241 = vpop.f32.mrf.mxu0
    %v3242 = vpop.f32.mrf.mxu0
    %v3243 = vadd.f32 0.0, %v3242
    %v3244 = vpop.f32.mrf.mxu0
    %3245 = vmatprep.mubr.bf16.mxu0 %v2598
    %3246 = vmatmul.mubr.bf16.gmra.mxu0 %v2597
    %v3247 = vpop.f32.mrf.mxu0
    %v3248 = vadd.f32 0.0, %v3247
    %v3249 = vpop.f32.mrf.mxu0
    %v3250 = vpop.f32.mrf.mxu0
    %v3251 = vadd.f32 0.0, %v3250
    %v3252 = vpop.f32.mrf.mxu0
    %3253 = vmatprep.mubr.bf16.mxu0 %v2602
    %3254 = vmatmul.mubr.bf16.gmra.mxu0 %v2601
    %v3255 = vpop.f32.mrf.mxu0
    %v3256 = vadd.f32 0.0, %v3255
    %v3257 = vpop.f32.mrf.mxu0
    %v3258 = vpop.f32.mrf.mxu0
    %v3259 = vadd.f32 0.0, %v3258
    %v3260 = vpop.f32.mrf.mxu0
    %3261 = vmatprep.mubr.bf16.mxu0 %v2606
    %3262 = vmatmul.mubr.bf16.gmra.mxu0 %v2605
    %v3263 = vpop.f32.mrf.mxu0
    %v3264 = vadd.f32 0.0, %v3263
    %v3265 = vpop.f32.mrf.mxu0
    %v3266 = vpop.f32.mrf.mxu0
    %v3267 = vadd.f32 0.0, %v3266
    %v3268 = vpop.f32.mrf.mxu0
    %3269 = vmatprep.mubr.bf16.mxu0 %v2610
    %3270 = vmatmul.mubr.bf16.gmra.mxu0 %v2609
    %v3271 = vpop.f32.mrf.mxu0
    %v3272 = vadd.f32 0.0, %v3271
    %v3273 = vpop.f32.mrf.mxu0
    %v3274 = vpop.f32.mrf.mxu0
    %v3275 = vadd.f32 0.0, %v3274
    %v3276 = vpop.f32.mrf.mxu0
    %3277 = vmatprep.mubr.bf16.mxu0 %v2614
    %3278 = vmatmul.mubr.bf16.gmra.mxu0 %v2613
    %v3279 = vpop.f32.mrf.mxu0
    %v3280 = vadd.f32 0.0, %v3279
    %v3281 = vpop.f32.mrf.mxu0
    %v3282 = vpop.f32.mrf.mxu0
    %v3283 = vadd.f32 0.0, %v3282
    %v3284 = vpop.f32.mrf.mxu0
    %3285 = vmatprep.mubr.bf16.mxu0 %v2618
    %3286 = vmatmul.mubr.bf16.gmra.mxu0 %v2617
    %v3287 = vpop.f32.mrf.mxu0
    %v3288 = vadd.f32 0.0, %v3287
    %v3289 = vpop.f32.mrf.mxu0
    %v3290 = vpop.f32.mrf.mxu0
    %v3291 = vadd.f32 0.0, %v3290
    %v3292 = vpop.f32.mrf.mxu0
    %3293 = vmatprep.mubr.bf16.mxu0 %v2622
    %3294 = vmatmul.mubr.bf16.gmra.mxu0 %v2621
    %v3295 = vpop.f32.mrf.mxu0
    %v3296 = vadd.f32 0.0, %v3295
    %v3297 = vpop.f32.mrf.mxu0
    %v3298 = vpop.f32.mrf.mxu0
    %v3299 = vadd.f32 0.0, %v3298
    %v3300 = vpop.f32.mrf.mxu0
    %3301 = vmatprep.mubr.bf16.mxu0 %v2626
    %3302 = vmatmul.mubr.bf16.gmra.mxu0 %v2625
    %v3303 = vpop.f32.mrf.mxu0
    %v3304 = vadd.f32 0.0, %v3303
    %v3305 = vpop.f32.mrf.mxu0
    %v3306 = vpop.f32.mrf.mxu0
    %v3307 = vadd.f32 0.0, %v3306
    %v3308 = vpop.f32.mrf.mxu0
    %3309 = vmatprep.mubr.bf16.mxu0 %v2630
    %3310 = vmatmul.mubr.bf16.gmra.mxu0 %v2629
    %v3311 = vpop.f32.mrf.mxu0
    %v3312 = vadd.f32 0.0, %v3311
    %v3313 = vpop.f32.mrf.mxu0
    %v3314 = vpop.f32.mrf.mxu0
    %v3315 = vadd.f32 0.0, %v3314
    %v3316 = vpop.f32.mrf.mxu0
    %3317 = vmatprep.mubr.bf16.mxu0 %v2634
    %3318 = vmatmul.mubr.bf16.gmra.mxu0 %v2633
    %v3319 = vpop.f32.mrf.mxu0
    %v3320 = vadd.f32 0.0, %v3319
    %v3321 = vpop.f32.mrf.mxu0
    %v3322 = vpop.f32.mrf.mxu0
    %v3323 = vadd.f32 0.0, %v3322
    %v3324 = vpop.f32.mrf.mxu0
    %3325 = vmatprep.mubr.bf16.mxu0 %v2638
    %3326 = vmatmul.mubr.bf16.gmra.mxu0 %v2637
    %v3327 = vpop.f32.mrf.mxu0
    %v3328 = vadd.f32 0.0, %v3327
    %v3329 = vpop.f32.mrf.mxu0
    %v3330 = vpop.f32.mrf.mxu0
    %v3331 = vadd.f32 0.0, %v3330
    %v3332 = vpop.f32.mrf.mxu0
    %3333 = vmatprep.mubr.bf16.mxu0 %v2642
    %3334 = vmatmul.mubr.bf16.gmra.mxu0 %v2641
    %v3335 = vpop.f32.mrf.mxu0
    %v3336 = vadd.f32 0.0, %v3335
    %v3337 = vpop.f32.mrf.mxu0
    %v3338 = vpop.f32.mrf.mxu0
    %v3339 = vadd.f32 0.0, %v3338
    %v3340 = vpop.f32.mrf.mxu0
    %3341 = vmatprep.mubr.bf16.mxu0 %v2646
    %3342 = vmatmul.mubr.bf16.gmra.mxu0 %v2645
    %v3343 = vpop.f32.mrf.mxu0
    %v3344 = vadd.f32 0.0, %v3343
    %v3345 = vpop.f32.mrf.mxu0
    %v3346 = vpop.f32.mrf.mxu0
    %v3347 = vadd.f32 0.0, %v3346
    %v3348 = vpop.f32.mrf.mxu0
    %3349 = vmatprep.mubr.bf16.mxu0 %v2650
    %3350 = vmatmul.mubr.bf16.gmra.mxu0 %v2649
    %v3351 = vpop.f32.mrf.mxu0
    %v3352 = vadd.f32 0.0, %v3351
    %v3353 = vpop.f32.mrf.mxu0
    %v3354 = vpop.f32.mrf.mxu0
    %v3355 = vadd.f32 0.0, %v3354
    %v3356 = vpop.f32.mrf.mxu0
    %3357 = vmatprep.mubr.bf16.mxu0 %v2654
    %3358 = vmatmul.mubr.bf16.gmra.mxu0 %v2653
    %v3359 = vpop.f32.mrf.mxu0
    %v3360 = vadd.f32 0.0, %v3359
    %v3361 = vpop.f32.mrf.mxu0
    %v3362 = vpop.f32.mrf.mxu0
    %v3363 = vadd.f32 0.0, %v3362
    %v3364 = vpop.f32.mrf.mxu0
    %3365 = vmatprep.mubr.bf16.mxu0 %v2658
    %3366 = vmatmul.mubr.bf16.gmra.mxu0 %v2657
    %v3367 = vpop.f32.mrf.mxu0
    %v3368 = vadd.f32 0.0, %v3367
    %v3369 = vpop.f32.mrf.mxu0
    %v3370 = vpop.f32.mrf.mxu0
    %v3371 = vadd.f32 0.0, %v3370
    %v3372 = vpop.f32.mrf.mxu0
    %3373 = vmatprep.mubr.bf16.mxu0 %v2662
    %3374 = vmatmul.mubr.bf16.gmra.mxu0 %v2661
    %v3375 = vpop.f32.mrf.mxu0
    %v3376 = vadd.f32 0.0, %v3375
    %v3377 = vpop.f32.mrf.mxu0
    %v3378 = vpop.f32.mrf.mxu0
    %v3379 = vadd.f32 0.0, %v3378
    %v3380 = vpop.f32.mrf.mxu0
    %3381 = vmatprep.mubr.bf16.mxu0 %v2666
    %3382 = vmatmul.mubr.bf16.gmra.mxu0 %v2665
    %v3383 = vpop.f32.mrf.mxu0
    %v3384 = vadd.f32 0.0, %v3383
    %v3385 = vpop.f32.mrf.mxu0
    %v3386 = vpop.f32.mrf.mxu0
    %v3387 = vadd.f32 0.0, %v3386
    %v3388 = vpop.f32.mrf.mxu0
    %3389 = vmatprep.mubr.bf16.mxu0 %v2670
    %3390 = vmatmul.mubr.bf16.gmra.mxu0 %v2669
    %v3391 = vpop.f32.mrf.mxu0
    %v3392 = vadd.f32 0.0, %v3391
    %v3393 = vpop.f32.mrf.mxu0
    %v3394 = vpop.f32.mrf.mxu0
    %v3395 = vadd.f32 0.0, %v3394
    %v3396 = vpop.f32.mrf.mxu0
    %3397 = vmatprep.mubr.bf16.mxu0 %v2674
    %3398 = vmatmul.mubr.bf16.gmra.mxu0 %v2673
    %v3399 = vpop.f32.mrf.mxu0
    %v3400 = vadd.f32 0.0, %v3399
    %v3401 = vpop.f32.mrf.mxu0
    %v3402 = vpop.f32.mrf.mxu0
    %v3403 = vadd.f32 0.0, %v3402
    %v3404 = vpop.f32.mrf.mxu0
    %3405 = vmatprep.mubr.bf16.mxu0 %v2678
    %3406 = vmatmul.mubr.bf16.gmra.mxu0 %v2677
    %v3407 = vpop.f32.mrf.mxu0
    %v3408 = vadd.f32 0.0, %v3407
    %v3409 = vpop.f32.mrf.mxu0
    %v3410 = vpop.f32.mrf.mxu0
    %v3411 = vadd.f32 0.0, %v3410
    %v3412 = vpop.f32.mrf.mxu0
    %3413 = vmatprep.mubr.bf16.mxu0 %v2682
    %3414 = vmatmul.mubr.bf16.gmra.mxu0 %v2681
    %v3415 = vpop.f32.mrf.mxu0
    %v3416 = vadd.f32 0.0, %v3415
    %v3417 = vpop.f32.mrf.mxu0
    %v3418 = vpop.f32.mrf.mxu0
    %v3419 = vadd.f32 0.0, %v3418
    %v3420 = vpop.f32.mrf.mxu0
    %3421 = vmatprep.mubr.bf16.mxu0 %v2686
    %3422 = vmatmul.mubr.bf16.gmra.mxu0 %v2685
    %v3423 = vpop.f32.mrf.mxu0
    %v3424 = vadd.f32 0.0, %v3423
    %v3425 = vpop.f32.mrf.mxu0
    %v3426 = vpop.f32.mrf.mxu0
    %v3427 = vadd.f32 0.0, %v3426
    %v3428 = vpop.f32.mrf.mxu0
    %3429 = vmatprep.mubr.bf16.mxu0 %v2690
    %3430 = vmatmul.mubr.bf16.gmra.mxu0 %v2689
    %v3431 = vpop.f32.mrf.mxu0
    %v3432 = vadd.f32 0.0, %v3431
    %v3433 = vpop.f32.mrf.mxu0
    %v3434 = vpop.f32.mrf.mxu0
    %v3435 = vadd.f32 0.0, %v3434
    %v3436 = vpop.f32.mrf.mxu0
    %3437 = vmatprep.mubr.bf16.mxu0 %v2694
    %3438 = vmatmul.mubr.bf16.gmra.mxu0 %v2693
    %v3439 = vpop.f32.mrf.mxu0
    %v3440 = vadd.f32 0.0, %v3439
    %v3441 = vpop.f32.mrf.mxu0
    %v3442 = vpop.f32.mrf.mxu0
    %v3443 = vadd.f32 0.0, %v3442
    %v3444 = vpop.f32.mrf.mxu0
    %3445 = vmatprep.mubr.bf16.mxu0 %v2698
    %3446 = vmatmul.mubr.bf16.gmra.mxu0 %v2697
    %v3447 = vpop.f32.mrf.mxu0
    %v3448 = vadd.f32 0.0, %v3447
    %v3449 = vpop.f32.mrf.mxu0
    %v3450 = vpop.f32.mrf.mxu0
    %v3451 = vadd.f32 0.0, %v3450
    %v3452 = vpop.f32.mrf.mxu0
    %3453 = vmatprep.mubr.bf16.mxu0 %v2702
    %3454 = vmatmul.mubr.bf16.gmra.mxu0 %v2701
    %v3455 = vpop.f32.mrf.mxu0
    %v3456 = vadd.f32 0.0, %v3455
    %v3457 = vpop.f32.mrf.mxu0
    %v3458 = vpop.f32.mrf.mxu0
    %v3459 = vadd.f32 0.0, %v3458
    %v3460 = vpop.f32.mrf.mxu0
    %3461 = vmatprep.mubr.bf16.mxu0 %v2706
    %3462 = vmatmul.mubr.bf16.gmra.mxu0 %v2705
    %v3463 = vpop.f32.mrf.mxu0
    %v3464 = vadd.f32 0.0, %v3463
    %v3465 = vpop.f32.mrf.mxu0
    %v3466 = vpop.f32.mrf.mxu0
    %v3467 = vadd.f32 0.0, %v3466
    %v3468 = vpop.f32.mrf.mxu0
    %3469 = vmatprep.mubr.bf16.mxu0 %v2710
    %3470 = vmatmul.mubr.bf16.gmra.mxu0 %v2709
    %v3471 = vpop.f32.mrf.mxu0
    %v3472 = vadd.f32 0.0, %v3471
    %v3473 = vpop.f32.mrf.mxu0
    %v3474 = vpop.f32.mrf.mxu0
    %v3475 = vadd.f32 0.0, %v3474
    %v3476 = vpop.f32.mrf.mxu0
    %3477 = vmatprep.mubr.bf16.mxu0 %v2714
    %3478 = vmatmul.mubr.bf16.gmra.mxu0 %v2713
    %v3479 = vpop.f32.mrf.mxu0
    %v3480 = vadd.f32 0.0, %v3479
    %v3481 = vpop.f32.mrf.mxu0
    %v3482 = vpop.f32.mrf.mxu0
    %v3483 = vadd.f32 0.0, %v3482
    %v3484 = vpop.f32.mrf.mxu0
    %3485 = vmatprep.mubr.bf16.mxu0 %v2718
    %3486 = vmatmul.mubr.bf16.gmra.mxu0 %v2717
    %v3487 = vpop.f32.mrf.mxu0
    %v3488 = vadd.f32 0.0, %v3487
    %v3489 = vpop.f32.mrf.mxu0
    %v3490 = vpop.f32.mrf.mxu0
    %v3491 = vadd.f32 0.0, %v3490
    %v3492 = vpop.f32.mrf.mxu0
    %3493 = vmatprep.mubr.bf16.mxu0 %v2722
    %3494 = vmatmul.mubr.bf16.gmra.mxu0 %v2721
    %v3495 = vpop.f32.mrf.mxu0
    %v3496 = vadd.f32 0.0, %v3495
    %v3497 = vpop.f32.mrf.mxu0
    %v3498 = vpop.f32.mrf.mxu0
    %v3499 = vadd.f32 0.0, %v3498
    %v3500 = vpop.f32.mrf.mxu0
    %3501 = vmatprep.mubr.bf16.mxu0 %v2726
    %3502 = vmatmul.mubr.bf16.gmra.mxu0 %v2725
    %v3503 = vpop.f32.mrf.mxu0
    %v3504 = vadd.f32 0.0, %v3503
    %v3505 = vpop.f32.mrf.mxu0
    %v3506 = vpop.f32.mrf.mxu0
    %v3507 = vadd.f32 0.0, %v3506
    %v3508 = vpop.f32.mrf.mxu0
    %3509 = vmatprep.mubr.bf16.mxu0 %v2730
    %3510 = vmatmul.mubr.bf16.gmra.mxu0 %v2729
    %v3511 = vpop.f32.mrf.mxu0
    %v3512 = vadd.f32 0.0, %v3511
    %v3513 = vpop.f32.mrf.mxu0
    %v3514 = vpop.f32.mrf.mxu0
    %v3515 = vadd.f32 0.0, %v3514
    %v3516 = vpop.f32.mrf.mxu0
    %3517 = vmatprep.mubr.bf16.mxu0 %v2734
    %3518 = vmatmul.mubr.bf16.gmra.mxu0 %v2733
    %v3519 = vpop.f32.mrf.mxu0
    %v3520 = vadd.f32 0.0, %v3519
    %v3521 = vpop.f32.mrf.mxu0
    %v3522 = vpop.f32.mrf.mxu0
    %v3523 = vadd.f32 0.0, %v3522
    %v3524 = vpop.f32.mrf.mxu0
    %3525 = vmatprep.mubr.bf16.mxu0 %v2738
    %3526 = vmatmul.mubr.bf16.gmra.mxu0 %v2737
    %v3527 = vpop.f32.mrf.mxu0
    %v3528 = vadd.f32 0.0, %v3527
    %v3529 = vpop.f32.mrf.mxu0
    %v3530 = vpop.f32.mrf.mxu0
    %v3531 = vadd.f32 0.0, %v3530
    %v3532 = vpop.f32.mrf.mxu0
    %3533 = vmatprep.mubr.bf16.mxu0 %v2742
    %3534 = vmatmul.mubr.bf16.gmra.mxu0 %v2741
    %v3535 = vpop.f32.mrf.mxu0
    %v3536 = vadd.f32 0.0, %v3535
    %v3537 = vpop.f32.mrf.mxu0
    %v3538 = vpop.f32.mrf.mxu0
    %v3539 = vadd.f32 0.0, %v3538
    %v3540 = vpop.f32.mrf.mxu0
    %3541 = vmatprep.mubr.bf16.mxu0 %v2746
    %3542 = vmatmul.mubr.bf16.gmra.mxu0 %v2745
    %v3543 = vpop.f32.mrf.mxu0
    %v3544 = vadd.f32 0.0, %v3543
    %v3545 = vpop.f32.mrf.mxu0
    %v3546 = vpop.f32.mrf.mxu0
    %v3547 = vadd.f32 0.0, %v3546
    %v3548 = vpop.f32.mrf.mxu0
    %3549 = vmatprep.mubr.bf16.mxu0 %v2750
    %3550 = vmatmul.mubr.bf16.gmra.mxu0 %v2749
    %v3551 = vpop.f32.mrf.mxu0
    %v3552 = vadd.f32 0.0, %v3551
    %v3553 = vpop.f32.mrf.mxu0
    %v3554 = vpop.f32.mrf.mxu0
    %v3555 = vadd.f32 0.0, %v3554
    %v3556 = vpop.f32.mrf.mxu0
    %3557 = vmatprep.mubr.bf16.mxu0 %v2754
    %3558 = vmatmul.mubr.bf16.gmra.mxu0 %v2753
    %v3559 = vpop.f32.mrf.mxu0
    %v3560 = vadd.f32 0.0, %v3559
    %v3561 = vpop.f32.mrf.mxu0
    %v3562 = vpop.f32.mrf.mxu0
    %v3563 = vadd.f32 0.0, %v3562
    %v3564 = vpop.f32.mrf.mxu0
    %3565 = vmatprep.mubr.bf16.mxu0 %v2758
    %3566 = vmatmul.mubr.bf16.gmra.mxu0 %v2757
    %v3567 = vpop.f32.mrf.mxu0
    %v3568 = vadd.f32 0.0, %v3567
    %v3569 = vpop.f32.mrf.mxu0
    %v3570 = vpop.f32.mrf.mxu0
    %v3571 = vadd.f32 0.0, %v3570
    %v3572 = vpop.f32.mrf.mxu0
    %3573 = vmatprep.mubr.bf16.mxu0 %v2762
    %3574 = vmatmul.mubr.bf16.gmra.mxu0 %v2761
    %v3575 = vpop.f32.mrf.mxu0
    %v3576 = vadd.f32 0.0, %v3575
    %v3577 = vpop.f32.mrf.mxu0
    %v3578 = vpop.f32.mrf.mxu0
    %v3579 = vadd.f32 0.0, %v3578
    %v3580 = vpop.f32.mrf.mxu0
    %3581 = vmatprep.mubr.bf16.mxu0 %v2766
    %3582 = vmatmul.mubr.bf16.gmra.mxu0 %v2765
    %v3583 = vpop.f32.mrf.mxu0
    %v3584 = vadd.f32 0.0, %v3583
    %v3585 = vpop.f32.mrf.mxu0
    %v3586 = vpop.f32.mrf.mxu0
    %v3587 = vadd.f32 0.0, %v3586
    %v3588 = vpop.f32.mrf.mxu0
    %3589 = vmatprep.mubr.bf16.mxu0 %v2770
    %3590 = vmatmul.mubr.bf16.gmra.mxu0 %v2769
    %v3591 = vpop.f32.mrf.mxu0
    %v3592 = vadd.f32 0.0, %v3591
    %v3593 = vpop.f32.mrf.mxu0
    %v3594 = vpop.f32.mrf.mxu0
    %v3595 = vadd.f32 0.0, %v3594
    %v3596 = vpop.f32.mrf.mxu0
    %3597 = vmatprep.mubr.bf16.mxu0 %v2774
    %3598 = vmatmul.mubr.bf16.gmra.mxu0 %v2773
    %v3599 = vpop.f32.mrf.mxu0
    %v3600 = vadd.f32 0.0, %v3599
    %v3601 = vpop.f32.mrf.mxu0
    %v3602 = vpop.f32.mrf.mxu0
    %v3603 = vadd.f32 0.0, %v3602
    %v3604 = vpop.f32.mrf.mxu0
    %3605 = vmatprep.mubr.bf16.mxu0 %v2778
    %3606 = vmatmul.mubr.bf16.gmra.mxu0 %v2777
    %v3607 = vpop.f32.mrf.mxu0
    %v3608 = vadd.f32 0.0, %v3607
    %v3609 = vpop.f32.mrf.mxu0
    %v3610 = vpop.f32.mrf.mxu0
    %v3611 = vadd.f32 0.0, %v3610
    %v3612 = vpop.f32.mrf.mxu0
    %3613 = vmatprep.mubr.bf16.mxu0 %v2782
    %3614 = vmatmul.mubr.bf16.gmra.mxu0 %v2781
    %v3615 = vpop.f32.mrf.mxu0
    %v3616 = vadd.f32 0.0, %v3615
    %v3617 = vpop.f32.mrf.mxu0
    %v3618 = vpop.f32.mrf.mxu0
    %v3619 = vadd.f32 0.0, %v3618
    %v3620 = vpop.f32.mrf.mxu0
    %3621 = vmatprep.mubr.bf16.mxu0 %v2786
    %3622 = vmatmul.mubr.bf16.gmra.mxu0 %v2785
    %v3623 = vpop.f32.mrf.mxu0
    %v3624 = vadd.f32 0.0, %v3623
    %v3625 = vpop.f32.mrf.mxu0
    %v3626 = vpop.f32.mrf.mxu0
    %v3627 = vadd.f32 0.0, %v3626
    %v3628 = vpop.f32.mrf.mxu0
    %3629 = vmatprep.mubr.bf16.mxu0 %v2790
    %3630 = vmatmul.mubr.bf16.gmra.mxu0 %v2789
    %v3631 = vpop.f32.mrf.mxu0
    %v3632 = vadd.f32 0.0, %v3631
    %v3633 = vpop.f32.mrf.mxu0
    %v3634 = vpop.f32.mrf.mxu0
    %v3635 = vadd.f32 0.0, %v3634
    %v3636 = vpop.f32.mrf.mxu0
    %3637 = vmatprep.mubr.bf16.mxu0 %v2794
    %3638 = vmatmul.mubr.bf16.gmra.mxu0 %v2793
    %v3639 = vpop.f32.mrf.mxu0
    %v3640 = vadd.f32 0.0, %v3639
    %v3641 = vpop.f32.mrf.mxu0
    %v3642 = vpop.f32.mrf.mxu0
    %v3643 = vadd.f32 0.0, %v3642
    %v3644 = vpop.f32.mrf.mxu0
    %3645 = vmatprep.mubr.bf16.mxu0 %v2798
    %3646 = vmatmul.mubr.bf16.gmra.mxu0 %v2797
    %v3647 = vpop.f32.mrf.mxu0
    %v3648 = vadd.f32 0.0, %v3647
    %v3649 = vpop.f32.mrf.mxu0
    %v3650 = vpop.f32.mrf.mxu0
    %v3651 = vadd.f32 0.0, %v3650
    %v3652 = vpop.f32.mrf.mxu0
    %3653 = vmatprep.mubr.bf16.mxu0 %v2802
    %3654 = vmatmul.mubr.bf16.gmra.mxu0 %v2801
    %v3655 = vpop.f32.mrf.mxu0
    %v3656 = vadd.f32 0.0, %v3655
    %v3657 = vpop.f32.mrf.mxu0
    %v3658 = vpop.f32.mrf.mxu0
    %v3659 = vadd.f32 0.0, %v3658
    %v3660 = vpop.f32.mrf.mxu0
    %3661 = vmatprep.mubr.bf16.mxu0 %v2806
    %3662 = vmatmul.mubr.bf16.gmra.mxu0 %v2805
    %v3663 = vpop.f32.mrf.mxu0
    %v3664 = vadd.f32 0.0, %v3663
    %v3665 = vpop.f32.mrf.mxu0
    %v3666 = vpop.f32.mrf.mxu0
    %v3667 = vadd.f32 0.0, %v3666
    %v3668 = vpop.f32.mrf.mxu0
    %3669 = vmatprep.mubr.bf16.mxu0 %v2810
    %3670 = vmatmul.mubr.bf16.gmra.mxu0 %v2809
    %v3671 = vpop.f32.mrf.mxu0
    %v3672 = vadd.f32 0.0, %v3671
    %v3673 = vpop.f32.mrf.mxu0
    %v3674 = vpop.f32.mrf.mxu0
    %v3675 = vadd.f32 0.0, %v3674
    %v3676 = vpop.f32.mrf.mxu0
    %3677 = vmatprep.mubr.bf16.mxu0 %v2814
    %3678 = vmatmul.mubr.bf16.gmra.mxu0 %v2813
    %v3679 = vpop.f32.mrf.mxu0
    %v3680 = vadd.f32 0.0, %v3679
    %v3681 = vpop.f32.mrf.mxu0
    %v3682 = vpop.f32.mrf.mxu0
    %v3683 = vadd.f32 0.0, %v3682
    %v3684 = vpop.f32.mrf.mxu0
    %3685 = vmatprep.mubr.bf16.mxu0 %v2818
    %3686 = vmatmul.mubr.bf16.gmra.mxu0 %v2817
    %v3687 = vpop.f32.mrf.mxu0
    %v3688 = vadd.f32 0.0, %v3687
    %v3689 = vpop.f32.mrf.mxu0
    %v3690 = vpop.f32.mrf.mxu0
    %v3691 = vadd.f32 0.0, %v3690
    %v3692 = vpop.f32.mrf.mxu0
    %3693 = vmatprep.mubr.bf16.mxu0 %v2822
    %3694 = vmatmul.mubr.bf16.gmra.mxu0 %v2821
    %v3695 = vpop.f32.mrf.mxu0
    %v3696 = vadd.f32 0.0, %v3695
    %v3697 = vpop.f32.mrf.mxu0
    %v3698 = vpop.f32.mrf.mxu0
    %v3699 = vadd.f32 0.0, %v3698
    %v3700 = vpop.f32.mrf.mxu0
    %3701 = vmatprep.mubr.bf16.mxu0 %v2826
    %3702 = vmatmul.mubr.bf16.gmra.mxu0 %v2825
    %v3703 = vpop.f32.mrf.mxu0
    %v3704 = vadd.f32 0.0, %v3703
    %v3705 = vpop.f32.mrf.mxu0
    %v3706 = vpop.f32.mrf.mxu0
    %v3707 = vadd.f32 0.0, %v3706
    %v3708 = vpop.f32.mrf.mxu0
    %3709 = vmatprep.mubr.bf16.mxu0 %v2830
    %3710 = vmatmul.mubr.bf16.gmra.mxu0 %v2829
    %v3711 = vpop.f32.mrf.mxu0
    %v3712 = vadd.f32 0.0, %v3711
    %v3713 = vpop.f32.mrf.mxu0
    %v3714 = vpop.f32.mrf.mxu0
    %v3715 = vadd.f32 0.0, %v3714
    %v3716 = vpop.f32.mrf.mxu0
    %3717 = vmatprep.mubr.bf16.mxu0 %v2834
    %3718 = vmatmul.mubr.bf16.gmra.mxu0 %v2833
    %v3719 = vpop.f32.mrf.mxu0
    %v3720 = vadd.f32 0.0, %v3719
    %v3721 = vpop.f32.mrf.mxu0
    %v3722 = vpop.f32.mrf.mxu0
    %v3723 = vadd.f32 0.0, %v3722
    %v3724 = vpop.f32.mrf.mxu0
    %3725 = vmatprep.mubr.bf16.mxu0 %v2838
    %3726 = vmatmul.mubr.bf16.gmra.mxu0 %v2837
    %v3727 = vpop.f32.mrf.mxu0
    %v3728 = vadd.f32 0.0, %v3727
    %v3729 = vpop.f32.mrf.mxu0
    %v3730 = vpop.f32.mrf.mxu0
    %v3731 = vadd.f32 0.0, %v3730
    %v3732 = vpop.f32.mrf.mxu0
    %3733 = vmatprep.mubr.bf16.mxu0 %v2842
    %3734 = vmatmul.mubr.bf16.gmra.mxu0 %v2841
    %v3735 = vpop.f32.mrf.mxu0
    %v3736 = vadd.f32 0.0, %v3735
    %v3737 = vpop.f32.mrf.mxu0
    %v3738 = vpop.f32.mrf.mxu0
    %v3739 = vadd.f32 0.0, %v3738
    %v3740 = vpop.f32.mrf.mxu0
    %3741 = vdwg.mxu0
    %3742 = vmatprep.subr.bf16.mxu0 0
    %3743 = vmatpush1.bf16.msra.mxu0 %v1396
    %3744 = vmatprep.subr.bf16.mxu0 0
    %3745 = vmatpush1.bf16.msra.mxu0 %v1395
    %3746 = vmatprep.subr.bf16.mxu0 0
    %3747 = vmatpush1.bf16.msra.mxu0 %v1394
    %3748 = vmatprep.subr.bf16.mxu0 0
    %3749 = vmatpush1.bf16.msra.mxu0 %v1393
    %3750 = vmatprep.subr.bf16.mxu0 0
    %3751 = vmatpush1.bf16.msra.mxu0 %v1392
    %3752 = vmatprep.subr.bf16.mxu0 0
    %3753 = vmatpush1.bf16.msra.mxu0 %v1391
    %3754 = vmatprep.subr.bf16.mxu0 0
    %3755 = vmatpush1.bf16.msra.mxu0 %v1390
    %3756 = vmatprep.subr.bf16.mxu0 0
    %3757 = vmatpush1.bf16.msra.mxu0 %v1389
    %3758 = vmatprep.subr.bf16.mxu0 0
    %3759 = vmatpush2.bf16.msra.mxu0 %v1404
    %3760 = vmatprep.subr.bf16.mxu0 0
    %3761 = vmatpush2.bf16.msra.mxu0 %v1403
    %3762 = vmatprep.subr.bf16.mxu0 0
    %3763 = vmatpush2.bf16.msra.mxu0 %v1402
    %3764 = vmatprep.subr.bf16.mxu0 0
    %3765 = vmatpush2.bf16.msra.mxu0 %v1401
    %3766 = vmatprep.subr.bf16.mxu0 0
    %3767 = vmatpush2.bf16.msra.mxu0 %v1400
    %3768 = vmatprep.subr.bf16.mxu0 0
    %3769 = vmatpush2.bf16.msra.mxu0 %v1399
    %3770 = vmatprep.subr.bf16.mxu0 0
    %3771 = vmatpush2.bf16.msra.mxu0 %v1398
    %3772 = vmatprep.subr.bf16.mxu0 0
    %3773 = vmatpush2.bf16.msra.mxu0 %v1397
    %3774 = vmatprep.mubr.bf16.mxu0 %v2560
    %3775 = vmatmul.mubr.bf16.gmra.mxu0 %v2559
    %v3776 = vpop.f32.mrf.mxu0
    %v3777 = vadd.f32 %v3168, %v3776
    %v3778 = vpop.f32.mrf.mxu0
    %v3779 = vpop.f32.mrf.mxu0
    %v3780 = vadd.f32 %v3171, %v3779
    %v3781 = vpop.f32.mrf.mxu0
    %3782 = vmatprep.mubr.bf16.mxu0 %v2564
    %3783 = vmatmul.mubr.bf16.gmra.mxu0 %v2563
    %v3784 = vpop.f32.mrf.mxu0
    %v3785 = vadd.f32 %v3176, %v3784
    %v3786 = vpop.f32.mrf.mxu0
    %v3787 = vpop.f32.mrf.mxu0
    %v3788 = vadd.f32 %v3179, %v3787
    %v3789 = vpop.f32.mrf.mxu0
    %3790 = vmatprep.mubr.bf16.mxu0 %v2568
    %3791 = vmatmul.mubr.bf16.gmra.mxu0 %v2567
    %v3792 = vpop.f32.mrf.mxu0
    %v3793 = vadd.f32 %v3184, %v3792
    %v3794 = vpop.f32.mrf.mxu0
    %v3795 = vpop.f32.mrf.mxu0
    %v3796 = vadd.f32 %v3187, %v3795
    %v3797 = vpop.f32.mrf.mxu0
    %3798 = vmatprep.mubr.bf16.mxu0 %v2572
    %3799 = vmatmul.mubr.bf16.gmra.mxu0 %v2571
    %v3800 = vpop.f32.mrf.mxu0
    %v3801 = vadd.f32 %v3192, %v3800
    %v3802 = vpop.f32.mrf.mxu0
    %v3803 = vpop.f32.mrf.mxu0
    %v3804 = vadd.f32 %v3195, %v3803
    %v3805 = vpop.f32.mrf.mxu0
    %3806 = vmatprep.mubr.bf16.mxu0 %v2576
    %3807 = vmatmul.mubr.bf16.gmra.mxu0 %v2575
    %v3808 = vpop.f32.mrf.mxu0
    %v3809 = vadd.f32 %v3200, %v3808
    %v3810 = vpop.f32.mrf.mxu0
    %v3811 = vpop.f32.mrf.mxu0
    %v3812 = vadd.f32 %v3203, %v3811
    %v3813 = vpop.f32.mrf.mxu0
    %3814 = vmatprep.mubr.bf16.mxu0 %v2580
    %3815 = vmatmul.mubr.bf16.gmra.mxu0 %v2579
    %v3816 = vpop.f32.mrf.mxu0
    %v3817 = vadd.f32 %v3208, %v3816
    %v3818 = vpop.f32.mrf.mxu0
    %v3819 = vpop.f32.mrf.mxu0
    %v3820 = vadd.f32 %v3211, %v3819
    %v3821 = vpop.f32.mrf.mxu0
    %3822 = vmatprep.mubr.bf16.mxu0 %v2584
    %3823 = vmatmul.mubr.bf16.gmra.mxu0 %v2583
    %v3824 = vpop.f32.mrf.mxu0
    %v3825 = vadd.f32 %v3216, %v3824
    %v3826 = vpop.f32.mrf.mxu0
    %v3827 = vpop.f32.mrf.mxu0
    %v3828 = vadd.f32 %v3219, %v3827
    %v3829 = vpop.f32.mrf.mxu0
    %3830 = vmatprep.mubr.bf16.mxu0 %v2588
    %3831 = vmatmul.mubr.bf16.gmra.mxu0 %v2587
    %v3832 = vpop.f32.mrf.mxu0
    %v3833 = vadd.f32 %v3224, %v3832
    %v3834 = vpop.f32.mrf.mxu0
    %v3835 = vpop.f32.mrf.mxu0
    %v3836 = vadd.f32 %v3227, %v3835
    %v3837 = vpop.f32.mrf.mxu0
    %3838 = vmatprep.mubr.bf16.mxu0 %v2592
    %3839 = vmatmul.mubr.bf16.gmra.mxu0 %v2591
    %v3840 = vpop.f32.mrf.mxu0
    %v3841 = vadd.f32 %v3232, %v3840
    %v3842 = vpop.f32.mrf.mxu0
    %v3843 = vpop.f32.mrf.mxu0
    %v3844 = vadd.f32 %v3235, %v3843
    %v3845 = vpop.f32.mrf.mxu0
    %3846 = vmatprep.mubr.bf16.mxu0 %v2596
    %3847 = vmatmul.mubr.bf16.gmra.mxu0 %v2595
    %v3848 = vpop.f32.mrf.mxu0
    %v3849 = vadd.f32 %v3240, %v3848
    %v3850 = vpop.f32.mrf.mxu0
    %v3851 = vpop.f32.mrf.mxu0
    %v3852 = vadd.f32 %v3243, %v3851
    %v3853 = vpop.f32.mrf.mxu0
    %3854 = vmatprep.mubr.bf16.mxu0 %v2600
    %3855 = vmatmul.mubr.bf16.gmra.mxu0 %v2599
    %v3856 = vpop.f32.mrf.mxu0
    %v3857 = vadd.f32 %v3248, %v3856
    %v3858 = vpop.f32.mrf.mxu0
    %v3859 = vpop.f32.mrf.mxu0
    %v3860 = vadd.f32 %v3251, %v3859
    %v3861 = vpop.f32.mrf.mxu0
    %3862 = vmatprep.mubr.bf16.mxu0 %v2604
    %3863 = vmatmul.mubr.bf16.gmra.mxu0 %v2603
    %v3864 = vpop.f32.mrf.mxu0
    %v3865 = vadd.f32 %v3256, %v3864
    %v3866 = vpop.f32.mrf.mxu0
    %v3867 = vpop.f32.mrf.mxu0
    %v3868 = vadd.f32 %v3259, %v3867
    %v3869 = vpop.f32.mrf.mxu0
    %3870 = vmatprep.mubr.bf16.mxu0 %v2608
    %3871 = vmatmul.mubr.bf16.gmra.mxu0 %v2607
    %v3872 = vpop.f32.mrf.mxu0
    %v3873 = vadd.f32 %v3264, %v3872
    %v3874 = vpop.f32.mrf.mxu0
    %v3875 = vpop.f32.mrf.mxu0
    %v3876 = vadd.f32 %v3267, %v3875
    %v3877 = vpop.f32.mrf.mxu0
    %3878 = vmatprep.mubr.bf16.mxu0 %v2612
    %3879 = vmatmul.mubr.bf16.gmra.mxu0 %v2611
    %v3880 = vpop.f32.mrf.mxu0
    %v3881 = vadd.f32 %v3272, %v3880
    %v3882 = vpop.f32.mrf.mxu0
    %v3883 = vpop.f32.mrf.mxu0
    %v3884 = vadd.f32 %v3275, %v3883
    %v3885 = vpop.f32.mrf.mxu0
    %3886 = vmatprep.mubr.bf16.mxu0 %v2616
    %3887 = vmatmul.mubr.bf16.gmra.mxu0 %v2615
    %v3888 = vpop.f32.mrf.mxu0
    %v3889 = vadd.f32 %v3280, %v3888
    %v3890 = vpop.f32.mrf.mxu0
    %v3891 = vpop.f32.mrf.mxu0
    %v3892 = vadd.f32 %v3283, %v3891
    %v3893 = vpop.f32.mrf.mxu0
    %3894 = vmatprep.mubr.bf16.mxu0 %v2620
    %3895 = vmatmul.mubr.bf16.gmra.mxu0 %v2619
    %v3896 = vpop.f32.mrf.mxu0
    %v3897 = vadd.f32 %v3288, %v3896
    %v3898 = vpop.f32.mrf.mxu0
    %v3899 = vpop.f32.mrf.mxu0
    %v3900 = vadd.f32 %v3291, %v3899
    %v3901 = vpop.f32.mrf.mxu0
    %3902 = vmatprep.mubr.bf16.mxu0 %v2624
    %3903 = vmatmul.mubr.bf16.gmra.mxu0 %v2623
    %v3904 = vpop.f32.mrf.mxu0
    %v3905 = vadd.f32 %v3296, %v3904
    %v3906 = vpop.f32.mrf.mxu0
    %v3907 = vpop.f32.mrf.mxu0
    %v3908 = vadd.f32 %v3299, %v3907
    %v3909 = vpop.f32.mrf.mxu0
    %3910 = vmatprep.mubr.bf16.mxu0 %v2628
    %3911 = vmatmul.mubr.bf16.gmra.mxu0 %v2627
    %v3912 = vpop.f32.mrf.mxu0
    %v3913 = vadd.f32 %v3304, %v3912
    %v3914 = vpop.f32.mrf.mxu0
    %v3915 = vpop.f32.mrf.mxu0
    %v3916 = vadd.f32 %v3307, %v3915
    %v3917 = vpop.f32.mrf.mxu0
    %3918 = vmatprep.mubr.bf16.mxu0 %v2632
    %3919 = vmatmul.mubr.bf16.gmra.mxu0 %v2631
    %v3920 = vpop.f32.mrf.mxu0
    %v3921 = vadd.f32 %v3312, %v3920
    %v3922 = vpop.f32.mrf.mxu0
    %v3923 = vpop.f32.mrf.mxu0
    %v3924 = vadd.f32 %v3315, %v3923
    %v3925 = vpop.f32.mrf.mxu0
    %3926 = vmatprep.mubr.bf16.mxu0 %v2636
    %3927 = vmatmul.mubr.bf16.gmra.mxu0 %v2635
    %v3928 = vpop.f32.mrf.mxu0
    %v3929 = vadd.f32 %v3320, %v3928
    %v3930 = vpop.f32.mrf.mxu0
    %v3931 = vpop.f32.mrf.mxu0
    %v3932 = vadd.f32 %v3323, %v3931
    %v3933 = vpop.f32.mrf.mxu0
    %3934 = vmatprep.mubr.bf16.mxu0 %v2640
    %3935 = vmatmul.mubr.bf16.gmra.mxu0 %v2639
    %v3936 = vpop.f32.mrf.mxu0
    %v3937 = vadd.f32 %v3328, %v3936
    %v3938 = vpop.f32.mrf.mxu0
    %v3939 = vpop.f32.mrf.mxu0
    %v3940 = vadd.f32 %v3331, %v3939
    %v3941 = vpop.f32.mrf.mxu0
    %3942 = vmatprep.mubr.bf16.mxu0 %v2644
    %3943 = vmatmul.mubr.bf16.gmra.mxu0 %v2643
    %v3944 = vpop.f32.mrf.mxu0
    %v3945 = vadd.f32 %v3336, %v3944
    %v3946 = vpop.f32.mrf.mxu0
    %v3947 = vpop.f32.mrf.mxu0
    %v3948 = vadd.f32 %v3339, %v3947
    %v3949 = vpop.f32.mrf.mxu0
    %3950 = vmatprep.mubr.bf16.mxu0 %v2648
    %3951 = vmatmul.mubr.bf16.gmra.mxu0 %v2647
    %v3952 = vpop.f32.mrf.mxu0
    %v3953 = vadd.f32 %v3344, %v3952
    %v3954 = vpop.f32.mrf.mxu0
    %v3955 = vpop.f32.mrf.mxu0
    %v3956 = vadd.f32 %v3347, %v3955
    %v3957 = vpop.f32.mrf.mxu0
    %3958 = vmatprep.mubr.bf16.mxu0 %v2652
    %3959 = vmatmul.mubr.bf16.gmra.mxu0 %v2651
    %v3960 = vpop.f32.mrf.mxu0
    %v3961 = vadd.f32 %v3352, %v3960
    %v3962 = vpop.f32.mrf.mxu0
    %v3963 = vpop.f32.mrf.mxu0
    %v3964 = vadd.f32 %v3355, %v3963
    %v3965 = vpop.f32.mrf.mxu0
    %3966 = vmatprep.mubr.bf16.mxu0 %v2656
    %3967 = vmatmul.mubr.bf16.gmra.mxu0 %v2655
    %v3968 = vpop.f32.mrf.mxu0
    %v3969 = vadd.f32 %v3360, %v3968
    %v3970 = vpop.f32.mrf.mxu0
    %v3971 = vpop.f32.mrf.mxu0
    %v3972 = vadd.f32 %v3363, %v3971
    %v3973 = vpop.f32.mrf.mxu0
    %3974 = vmatprep.mubr.bf16.mxu0 %v2660
    %3975 = vmatmul.mubr.bf16.gmra.mxu0 %v2659
    %v3976 = vpop.f32.mrf.mxu0
    %v3977 = vadd.f32 %v3368, %v3976
    %v3978 = vpop.f32.mrf.mxu0
    %v3979 = vpop.f32.mrf.mxu0
    %v3980 = vadd.f32 %v3371, %v3979
    %v3981 = vpop.f32.mrf.mxu0
    %3982 = vmatprep.mubr.bf16.mxu0 %v2664
    %3983 = vmatmul.mubr.bf16.gmra.mxu0 %v2663
    %v3984 = vpop.f32.mrf.mxu0
    %v3985 = vadd.f32 %v3376, %v3984
    %v3986 = vpop.f32.mrf.mxu0
    %v3987 = vpop.f32.mrf.mxu0
    %v3988 = vadd.f32 %v3379, %v3987
    %v3989 = vpop.f32.mrf.mxu0
    %3990 = vmatprep.mubr.bf16.mxu0 %v2668
    %3991 = vmatmul.mubr.bf16.gmra.mxu0 %v2667
    %v3992 = vpop.f32.mrf.mxu0
    %v3993 = vadd.f32 %v3384, %v3992
    %v3994 = vpop.f32.mrf.mxu0
    %v3995 = vpop.f32.mrf.mxu0
    %v3996 = vadd.f32 %v3387, %v3995
    %v3997 = vpop.f32.mrf.mxu0
    %3998 = vmatprep.mubr.bf16.mxu0 %v2672
    %3999 = vmatmul.mubr.bf16.gmra.mxu0 %v2671
    %v4000 = vpop.f32.mrf.mxu0
    %v4001 = vadd.f32 %v3392, %v4000
    %v4002 = vpop.f32.mrf.mxu0
    %v4003 = vpop.f32.mrf.mxu0
    %v4004 = vadd.f32 %v3395, %v4003
    %v4005 = vpop.f32.mrf.mxu0
    %4006 = vmatprep.mubr.bf16.mxu0 %v2676
    %4007 = vmatmul.mubr.bf16.gmra.mxu0 %v2675
    %v4008 = vpop.f32.mrf.mxu0
    %v4009 = vadd.f32 %v3400, %v4008
    %v4010 = vpop.f32.mrf.mxu0
    %v4011 = vpop.f32.mrf.mxu0
    %v4012 = vadd.f32 %v3403, %v4011
    %v4013 = vpop.f32.mrf.mxu0
    %4014 = vmatprep.mubr.bf16.mxu0 %v2680
    %4015 = vmatmul.mubr.bf16.gmra.mxu0 %v2679
    %v4016 = vpop.f32.mrf.mxu0
    %v4017 = vadd.f32 %v3408, %v4016
    %v4018 = vpop.f32.mrf.mxu0
    %v4019 = vpop.f32.mrf.mxu0
    %v4020 = vadd.f32 %v3411, %v4019
    %v4021 = vpop.f32.mrf.mxu0
    %4022 = vmatprep.mubr.bf16.mxu0 %v2684
    %4023 = vmatmul.mubr.bf16.gmra.mxu0 %v2683
    %v4024 = vpop.f32.mrf.mxu0
    %v4025 = vadd.f32 %v3416, %v4024
    %v4026 = vpop.f32.mrf.mxu0
    %v4027 = vpop.f32.mrf.mxu0
    %v4028 = vadd.f32 %v3419, %v4027
    %v4029 = vpop.f32.mrf.mxu0
    %4030 = vmatprep.mubr.bf16.mxu0 %v2688
    %4031 = vmatmul.mubr.bf16.gmra.mxu0 %v2687
    %v4032 = vpop.f32.mrf.mxu0
    %v4033 = vadd.f32 %v3424, %v4032
    %v4034 = vpop.f32.mrf.mxu0
    %v4035 = vpop.f32.mrf.mxu0
    %v4036 = vadd.f32 %v3427, %v4035
    %v4037 = vpop.f32.mrf.mxu0
    %4038 = vmatprep.mubr.bf16.mxu0 %v2692
    %4039 = vmatmul.mubr.bf16.gmra.mxu0 %v2691
    %v4040 = vpop.f32.mrf.mxu0
    %v4041 = vadd.f32 %v3432, %v4040
    %v4042 = vpop.f32.mrf.mxu0
    %v4043 = vpop.f32.mrf.mxu0
    %v4044 = vadd.f32 %v3435, %v4043
    %v4045 = vpop.f32.mrf.mxu0
    %4046 = vmatprep.mubr.bf16.mxu0 %v2696
    %4047 = vmatmul.mubr.bf16.gmra.mxu0 %v2695
    %v4048 = vpop.f32.mrf.mxu0
    %v4049 = vadd.f32 %v3440, %v4048
    %v4050 = vpop.f32.mrf.mxu0
    %v4051 = vpop.f32.mrf.mxu0
    %v4052 = vadd.f32 %v3443, %v4051
    %v4053 = vpop.f32.mrf.mxu0
    %4054 = vmatprep.mubr.bf16.mxu0 %v2700
    %4055 = vmatmul.mubr.bf16.gmra.mxu0 %v2699
    %v4056 = vpop.f32.mrf.mxu0
    %v4057 = vadd.f32 %v3448, %v4056
    %v4058 = vpop.f32.mrf.mxu0
    %v4059 = vpop.f32.mrf.mxu0
    %v4060 = vadd.f32 %v3451, %v4059
    %v4061 = vpop.f32.mrf.mxu0
    %4062 = vmatprep.mubr.bf16.mxu0 %v2704
    %4063 = vmatmul.mubr.bf16.gmra.mxu0 %v2703
    %v4064 = vpop.f32.mrf.mxu0
    %v4065 = vadd.f32 %v3456, %v4064
    %v4066 = vpop.f32.mrf.mxu0
    %v4067 = vpop.f32.mrf.mxu0
    %v4068 = vadd.f32 %v3459, %v4067
    %v4069 = vpop.f32.mrf.mxu0
    %4070 = vmatprep.mubr.bf16.mxu0 %v2708
    %4071 = vmatmul.mubr.bf16.gmra.mxu0 %v2707
    %v4072 = vpop.f32.mrf.mxu0
    %v4073 = vadd.f32 %v3464, %v4072
    %v4074 = vpop.f32.mrf.mxu0
    %v4075 = vpop.f32.mrf.mxu0
    %v4076 = vadd.f32 %v3467, %v4075
    %v4077 = vpop.f32.mrf.mxu0
    %4078 = vmatprep.mubr.bf16.mxu0 %v2712
    %4079 = vmatmul.mubr.bf16.gmra.mxu0 %v2711
    %v4080 = vpop.f32.mrf.mxu0
    %v4081 = vadd.f32 %v3472, %v4080
    %v4082 = vpop.f32.mrf.mxu0
    %v4083 = vpop.f32.mrf.mxu0
    %v4084 = vadd.f32 %v3475, %v4083
    %v4085 = vpop.f32.mrf.mxu0
    %4086 = vmatprep.mubr.bf16.mxu0 %v2716
    %4087 = vmatmul.mubr.bf16.gmra.mxu0 %v2715
    %v4088 = vpop.f32.mrf.mxu0
    %v4089 = vadd.f32 %v3480, %v4088
    %v4090 = vpop.f32.mrf.mxu0
    %v4091 = vpop.f32.mrf.mxu0
    %v4092 = vadd.f32 %v3483, %v4091
    %v4093 = vpop.f32.mrf.mxu0
    %4094 = vmatprep.mubr.bf16.mxu0 %v2720
    %4095 = vmatmul.mubr.bf16.gmra.mxu0 %v2719
    %v4096 = vpop.f32.mrf.mxu0
    %v4097 = vadd.f32 %v3488, %v4096
    %v4098 = vpop.f32.mrf.mxu0
    %v4099 = vpop.f32.mrf.mxu0
    %v4100 = vadd.f32 %v3491, %v4099
    %v4101 = vpop.f32.mrf.mxu0
    %4102 = vmatprep.mubr.bf16.mxu0 %v2724
    %4103 = vmatmul.mubr.bf16.gmra.mxu0 %v2723
    %v4104 = vpop.f32.mrf.mxu0
    %v4105 = vadd.f32 %v3496, %v4104
    %v4106 = vpop.f32.mrf.mxu0
    %v4107 = vpop.f32.mrf.mxu0
    %v4108 = vadd.f32 %v3499, %v4107
    %v4109 = vpop.f32.mrf.mxu0
    %4110 = vmatprep.mubr.bf16.mxu0 %v2728
    %4111 = vmatmul.mubr.bf16.gmra.mxu0 %v2727
    %v4112 = vpop.f32.mrf.mxu0
    %v4113 = vadd.f32 %v3504, %v4112
    %v4114 = vpop.f32.mrf.mxu0
    %v4115 = vpop.f32.mrf.mxu0
    %v4116 = vadd.f32 %v3507, %v4115
    %v4117 = vpop.f32.mrf.mxu0
    %4118 = vmatprep.mubr.bf16.mxu0 %v2732
    %4119 = vmatmul.mubr.bf16.gmra.mxu0 %v2731
    %v4120 = vpop.f32.mrf.mxu0
    %v4121 = vadd.f32 %v3512, %v4120
    %v4122 = vpop.f32.mrf.mxu0
    %v4123 = vpop.f32.mrf.mxu0
    %v4124 = vadd.f32 %v3515, %v4123
    %v4125 = vpop.f32.mrf.mxu0
    %4126 = vmatprep.mubr.bf16.mxu0 %v2736
    %4127 = vmatmul.mubr.bf16.gmra.mxu0 %v2735
    %v4128 = vpop.f32.mrf.mxu0
    %v4129 = vadd.f32 %v3520, %v4128
    %v4130 = vpop.f32.mrf.mxu0
    %v4131 = vpop.f32.mrf.mxu0
    %v4132 = vadd.f32 %v3523, %v4131
    %v4133 = vpop.f32.mrf.mxu0
    %4134 = vmatprep.mubr.bf16.mxu0 %v2740
    %4135 = vmatmul.mubr.bf16.gmra.mxu0 %v2739
    %v4136 = vpop.f32.mrf.mxu0
    %v4137 = vadd.f32 %v3528, %v4136
    %v4138 = vpop.f32.mrf.mxu0
    %v4139 = vpop.f32.mrf.mxu0
    %v4140 = vadd.f32 %v3531, %v4139
    %v4141 = vpop.f32.mrf.mxu0
    %4142 = vmatprep.mubr.bf16.mxu0 %v2744
    %4143 = vmatmul.mubr.bf16.gmra.mxu0 %v2743
    %v4144 = vpop.f32.mrf.mxu0
    %v4145 = vadd.f32 %v3536, %v4144
    %v4146 = vpop.f32.mrf.mxu0
    %v4147 = vpop.f32.mrf.mxu0
    %v4148 = vadd.f32 %v3539, %v4147
    %v4149 = vpop.f32.mrf.mxu0
    %4150 = vmatprep.mubr.bf16.mxu0 %v2748
    %4151 = vmatmul.mubr.bf16.gmra.mxu0 %v2747
    %v4152 = vpop.f32.mrf.mxu0
    %v4153 = vadd.f32 %v3544, %v4152
    %v4154 = vpop.f32.mrf.mxu0
    %v4155 = vpop.f32.mrf.mxu0
    %v4156 = vadd.f32 %v3547, %v4155
    %v4157 = vpop.f32.mrf.mxu0
    %4158 = vmatprep.mubr.bf16.mxu0 %v2752
    %4159 = vmatmul.mubr.bf16.gmra.mxu0 %v2751
    %v4160 = vpop.f32.mrf.mxu0
    %v4161 = vadd.f32 %v3552, %v4160
    %v4162 = vpop.f32.mrf.mxu0
    %v4163 = vpop.f32.mrf.mxu0
    %v4164 = vadd.f32 %v3555, %v4163
    %v4165 = vpop.f32.mrf.mxu0
    %4166 = vmatprep.mubr.bf16.mxu0 %v2756
    %4167 = vmatmul.mubr.bf16.gmra.mxu0 %v2755
    %v4168 = vpop.f32.mrf.mxu0
    %v4169 = vadd.f32 %v3560, %v4168
    %v4170 = vpop.f32.mrf.mxu0
    %v4171 = vpop.f32.mrf.mxu0
    %v4172 = vadd.f32 %v3563, %v4171
    %v4173 = vpop.f32.mrf.mxu0
    %4174 = vmatprep.mubr.bf16.mxu0 %v2760
    %4175 = vmatmul.mubr.bf16.gmra.mxu0 %v2759
    %v4176 = vpop.f32.mrf.mxu0
    %v4177 = vadd.f32 %v3568, %v4176
    %v4178 = vpop.f32.mrf.mxu0
    %v4179 = vpop.f32.mrf.mxu0
    %v4180 = vadd.f32 %v3571, %v4179
    %v4181 = vpop.f32.mrf.mxu0
    %4182 = vmatprep.mubr.bf16.mxu0 %v2764
    %4183 = vmatmul.mubr.bf16.gmra.mxu0 %v2763
    %v4184 = vpop.f32.mrf.mxu0
    %v4185 = vadd.f32 %v3576, %v4184
    %v4186 = vpop.f32.mrf.mxu0
    %v4187 = vpop.f32.mrf.mxu0
    %v4188 = vadd.f32 %v3579, %v4187
    %v4189 = vpop.f32.mrf.mxu0
    %4190 = vmatprep.mubr.bf16.mxu0 %v2768
    %4191 = vmatmul.mubr.bf16.gmra.mxu0 %v2767
    %v4192 = vpop.f32.mrf.mxu0
    %v4193 = vadd.f32 %v3584, %v4192
    %v4194 = vpop.f32.mrf.mxu0
    %v4195 = vpop.f32.mrf.mxu0
    %v4196 = vadd.f32 %v3587, %v4195
    %v4197 = vpop.f32.mrf.mxu0
    %4198 = vmatprep.mubr.bf16.mxu0 %v2772
    %4199 = vmatmul.mubr.bf16.gmra.mxu0 %v2771
    %v4200 = vpop.f32.mrf.mxu0
    %v4201 = vadd.f32 %v3592, %v4200
    %v4202 = vpop.f32.mrf.mxu0
    %v4203 = vpop.f32.mrf.mxu0
    %v4204 = vadd.f32 %v3595, %v4203
    %v4205 = vpop.f32.mrf.mxu0
    %4206 = vmatprep.mubr.bf16.mxu0 %v2776
    %4207 = vmatmul.mubr.bf16.gmra.mxu0 %v2775
    %v4208 = vpop.f32.mrf.mxu0
    %v4209 = vadd.f32 %v3600, %v4208
    %v4210 = vpop.f32.mrf.mxu0
    %v4211 = vpop.f32.mrf.mxu0
    %v4212 = vadd.f32 %v3603, %v4211
    %v4213 = vpop.f32.mrf.mxu0
    %4214 = vmatprep.mubr.bf16.mxu0 %v2780
    %4215 = vmatmul.mubr.bf16.gmra.mxu0 %v2779
    %v4216 = vpop.f32.mrf.mxu0
    %v4217 = vadd.f32 %v3608, %v4216
    %v4218 = vpop.f32.mrf.mxu0
    %v4219 = vpop.f32.mrf.mxu0
    %v4220 = vadd.f32 %v3611, %v4219
    %v4221 = vpop.f32.mrf.mxu0
    %4222 = vmatprep.mubr.bf16.mxu0 %v2784
    %4223 = vmatmul.mubr.bf16.gmra.mxu0 %v2783
    %v4224 = vpop.f32.mrf.mxu0
    %v4225 = vadd.f32 %v3616, %v4224
    %v4226 = vpop.f32.mrf.mxu0
    %v4227 = vpop.f32.mrf.mxu0
    %v4228 = vadd.f32 %v3619, %v4227
    %v4229 = vpop.f32.mrf.mxu0
    %4230 = vmatprep.mubr.bf16.mxu0 %v2788
    %4231 = vmatmul.mubr.bf16.gmra.mxu0 %v2787
    %v4232 = vpop.f32.mrf.mxu0
    %v4233 = vadd.f32 %v3624, %v4232
    %v4234 = vpop.f32.mrf.mxu0
    %v4235 = vpop.f32.mrf.mxu0
    %v4236 = vadd.f32 %v3627, %v4235
    %v4237 = vpop.f32.mrf.mxu0
    %4238 = vmatprep.mubr.bf16.mxu0 %v2792
    %4239 = vmatmul.mubr.bf16.gmra.mxu0 %v2791
    %v4240 = vpop.f32.mrf.mxu0
    %v4241 = vadd.f32 %v3632, %v4240
    %v4242 = vpop.f32.mrf.mxu0
    %v4243 = vpop.f32.mrf.mxu0
    %v4244 = vadd.f32 %v3635, %v4243
    %v4245 = vpop.f32.mrf.mxu0
    %4246 = vmatprep.mubr.bf16.mxu0 %v2796
    %4247 = vmatmul.mubr.bf16.gmra.mxu0 %v2795
    %v4248 = vpop.f32.mrf.mxu0
    %v4249 = vadd.f32 %v3640, %v4248
    %v4250 = vpop.f32.mrf.mxu0
    %v4251 = vpop.f32.mrf.mxu0
    %v4252 = vadd.f32 %v3643, %v4251
    %v4253 = vpop.f32.mrf.mxu0
    %4254 = vmatprep.mubr.bf16.mxu0 %v2800
    %4255 = vmatmul.mubr.bf16.gmra.mxu0 %v2799
    %v4256 = vpop.f32.mrf.mxu0
    %v4257 = vadd.f32 %v3648, %v4256
    %v4258 = vpop.f32.mrf.mxu0
    %v4259 = vpop.f32.mrf.mxu0
    %v4260 = vadd.f32 %v3651, %v4259
    %v4261 = vpop.f32.mrf.mxu0
    %4262 = vmatprep.mubr.bf16.mxu0 %v2804
    %4263 = vmatmul.mubr.bf16.gmra.mxu0 %v2803
    %v4264 = vpop.f32.mrf.mxu0
    %v4265 = vadd.f32 %v3656, %v4264
    %v4266 = vpop.f32.mrf.mxu0
    %v4267 = vpop.f32.mrf.mxu0
    %v4268 = vadd.f32 %v3659, %v4267
    %v4269 = vpop.f32.mrf.mxu0
    %4270 = vmatprep.mubr.bf16.mxu0 %v2808
    %4271 = vmatmul.mubr.bf16.gmra.mxu0 %v2807
    %v4272 = vpop.f32.mrf.mxu0
    %v4273 = vadd.f32 %v3664, %v4272
    %v4274 = vpop.f32.mrf.mxu0
    %v4275 = vpop.f32.mrf.mxu0
    %v4276 = vadd.f32 %v3667, %v4275
    %v4277 = vpop.f32.mrf.mxu0
    %4278 = vmatprep.mubr.bf16.mxu0 %v2812
    %4279 = vmatmul.mubr.bf16.gmra.mxu0 %v2811
    %v4280 = vpop.f32.mrf.mxu0
    %v4281 = vadd.f32 %v3672, %v4280
    %v4282 = vpop.f32.mrf.mxu0
    %v4283 = vpop.f32.mrf.mxu0
    %v4284 = vadd.f32 %v3675, %v4283
    %v4285 = vpop.f32.mrf.mxu0
    %4286 = vmatprep.mubr.bf16.mxu0 %v2816
    %4287 = vmatmul.mubr.bf16.gmra.mxu0 %v2815
    %v4288 = vpop.f32.mrf.mxu0
    %v4289 = vadd.f32 %v3680, %v4288
    %v4290 = vpop.f32.mrf.mxu0
    %v4291 = vpop.f32.mrf.mxu0
    %v4292 = vadd.f32 %v3683, %v4291
    %v4293 = vpop.f32.mrf.mxu0
    %4294 = vmatprep.mubr.bf16.mxu0 %v2820
    %4295 = vmatmul.mubr.bf16.gmra.mxu0 %v2819
    %v4296 = vpop.f32.mrf.mxu0
    %v4297 = vadd.f32 %v3688, %v4296
    %v4298 = vpop.f32.mrf.mxu0
    %v4299 = vpop.f32.mrf.mxu0
    %v4300 = vadd.f32 %v3691, %v4299
    %v4301 = vpop.f32.mrf.mxu0
    %4302 = vmatprep.mubr.bf16.mxu0 %v2824
    %4303 = vmatmul.mubr.bf16.gmra.mxu0 %v2823
    %v4304 = vpop.f32.mrf.mxu0
    %v4305 = vadd.f32 %v3696, %v4304
    %v4306 = vpop.f32.mrf.mxu0
    %v4307 = vpop.f32.mrf.mxu0
    %v4308 = vadd.f32 %v3699, %v4307
    %v4309 = vpop.f32.mrf.mxu0
    %4310 = vmatprep.mubr.bf16.mxu0 %v2828
    %4311 = vmatmul.mubr.bf16.gmra.mxu0 %v2827
    %v4312 = vpop.f32.mrf.mxu0
    %v4313 = vadd.f32 %v3704, %v4312
    %v4314 = vpop.f32.mrf.mxu0
    %v4315 = vpop.f32.mrf.mxu0
    %v4316 = vadd.f32 %v3707, %v4315
    %v4317 = vpop.f32.mrf.mxu0
    %4318 = vmatprep.mubr.bf16.mxu0 %v2832
    %4319 = vmatmul.mubr.bf16.gmra.mxu0 %v2831
    %v4320 = vpop.f32.mrf.mxu0
    %v4321 = vadd.f32 %v3712, %v4320
    %v4322 = vpop.f32.mrf.mxu0
    %v4323 = vpop.f32.mrf.mxu0
    %v4324 = vadd.f32 %v3715, %v4323
    %v4325 = vpop.f32.mrf.mxu0
    %4326 = vmatprep.mubr.bf16.mxu0 %v2836
    %4327 = vmatmul.mubr.bf16.gmra.mxu0 %v2835
    %v4328 = vpop.f32.mrf.mxu0
    %v4329 = vadd.f32 %v3720, %v4328
    %v4330 = vpop.f32.mrf.mxu0
    %v4331 = vpop.f32.mrf.mxu0
    %v4332 = vadd.f32 %v3723, %v4331
    %v4333 = vpop.f32.mrf.mxu0
    %4334 = vmatprep.mubr.bf16.mxu0 %v2840
    %4335 = vmatmul.mubr.bf16.gmra.mxu0 %v2839
    %v4336 = vpop.f32.mrf.mxu0
    %v4337 = vadd.f32 %v3728, %v4336
    %v4338 = vpop.f32.mrf.mxu0
    %v4339 = vpop.f32.mrf.mxu0
    %v4340 = vadd.f32 %v3731, %v4339
    %v4341 = vpop.f32.mrf.mxu0
    %4342 = vmatprep.mubr.bf16.mxu0 %v2844
    %4343 = vmatmul.mubr.bf16.gmra.mxu0 %v2843
    %v4344 = vpop.f32.mrf.mxu0
    %v4345 = vadd.f32 %v3736, %v4344
    %v4346 = vpop.f32.mrf.mxu0
    %v4347 = vpop.f32.mrf.mxu0
    %v4348 = vadd.f32 %v3739, %v4347
    %v4349 = vpop.f32.mrf.mxu0
    %4350 = vdwg.mxu0
    %v4351 = vpack.c.bf16 %v3780, %v3777
    %v4352 = vpack.c.bf16 %v3788, %v3785
    %v4353 = vpack.c.bf16 %v3796, %v3793
    %v4354 = vpack.c.bf16 %v3804, %v3801
    %v4355 = vpack.c.bf16 %v3812, %v3809
    %v4356 = vpack.c.bf16 %v3820, %v3817
    %v4357 = vpack.c.bf16 %v3828, %v3825
    %v4358 = vpack.c.bf16 %v3836, %v3833
    %v4359 = vpack.c.bf16 %v3844, %v3841
    %v4360 = vpack.c.bf16 %v3852, %v3849
    %v4361 = vpack.c.bf16 %v3860, %v3857
    %v4362 = vpack.c.bf16 %v3868, %v3865
    %v4363 = vpack.c.bf16 %v3876, %v3873
    %v4364 = vpack.c.bf16 %v3884, %v3881
    %v4365 = vpack.c.bf16 %v3892, %v3889
    %v4366 = vpack.c.bf16 %v3900, %v3897
    %v4367 = vpack.c.bf16 %v3908, %v3905
    %v4368 = vpack.c.bf16 %v3916, %v3913
    %v4369 = vpack.c.bf16 %v3924, %v3921
    %v4370 = vpack.c.bf16 %v3932, %v3929
    %v4371 = vpack.c.bf16 %v3940, %v3937
    %v4372 = vpack.c.bf16 %v3948, %v3945
    %v4373 = vpack.c.bf16 %v3956, %v3953
    %v4374 = vpack.c.bf16 %v3964, %v3961
    %v4375 = vpack.c.bf16 %v3972, %v3969
    %v4376 = vpack.c.bf16 %v3980, %v3977
    %v4377 = vpack.c.bf16 %v3988, %v3985
    %v4378 = vpack.c.bf16 %v3996, %v3993
    %v4379 = vpack.c.bf16 %v4004, %v4001
    %v4380 = vpack.c.bf16 %v4012, %v4009
    %v4381 = vpack.c.bf16 %v4020, %v4017
    %v4382 = vpack.c.bf16 %v4028, %v4025
    %v4383 = vpack.c.bf16 %v4036, %v4033
    %v4384 = vpack.c.bf16 %v4044, %v4041
    %v4385 = vpack.c.bf16 %v4052, %v4049
    %v4386 = vpack.c.bf16 %v4060, %v4057
    %v4387 = vpack.c.bf16 %v4068, %v4065
    %v4388 = vpack.c.bf16 %v4076, %v4073
    %v4389 = vpack.c.bf16 %v4084, %v4081
    %v4390 = vpack.c.bf16 %v4092, %v4089
    %v4391 = vpack.c.bf16 %v4100, %v4097
    %v4392 = vpack.c.bf16 %v4108, %v4105
    %v4393 = vpack.c.bf16 %v4116, %v4113
    %v4394 = vpack.c.bf16 %v4124, %v4121
    %v4395 = vpack.c.bf16 %v4132, %v4129
    %v4396 = vpack.c.bf16 %v4140, %v4137
    %v4397 = vpack.c.bf16 %v4148, %v4145
    %v4398 = vpack.c.bf16 %v4156, %v4153
    %v4399 = vpack.c.bf16 %v4164, %v4161
    %v4400 = vpack.c.bf16 %v4172, %v4169
    %v4401 = vpack.c.bf16 %v4180, %v4177
    %v4402 = vpack.c.bf16 %v4188, %v4185
    %v4403 = vpack.c.bf16 %v4196, %v4193
    %v4404 = vpack.c.bf16 %v4204, %v4201
    %v4405 = vpack.c.bf16 %v4212, %v4209
    %v4406 = vpack.c.bf16 %v4220, %v4217
    %v4407 = vpack.c.bf16 %v4228, %v4225
    %v4408 = vpack.c.bf16 %v4236, %v4233
    %v4409 = vpack.c.bf16 %v4244, %v4241
    %v4410 = vpack.c.bf16 %v4252, %v4249
    %v4411 = vpack.c.bf16 %v4260, %v4257
    %v4412 = vpack.c.bf16 %v4268, %v4265
    %v4413 = vpack.c.bf16 %v4276, %v4273
    %v4414 = vpack.c.bf16 %v4284, %v4281
    %v4415 = vpack.c.bf16 %v4292, %v4289
    %v4416 = vpack.c.bf16 %v4300, %v4297
    %v4417 = vpack.c.bf16 %v4308, %v4305
    %v4418 = vpack.c.bf16 %v4316, %v4313
    %v4419 = vpack.c.bf16 %v4324, %v4321
    %v4420 = vpack.c.bf16 %v4332, %v4329
    %v4421 = vpack.c.bf16 %v4340, %v4337
    %v4422 = vpack.c.bf16 %v4348, %v4345
    %v4423 = vld [vmem:[%s5] sm:$0xf]
    %s4424 = scalar_lea.vmem %s5, 4
    %v4425 = vld [vmem:[%s4424] sm:$0xf]
    %v4427 = vsel %vm702, %v4359, 0
    %v4430 = vsel %vm702, %v4360, 0
    %v4433 = vsel %vm702, %v4361, 0
    %v4436 = vsel %vm702, %v4362, 0
    %v4439 = vsel %vm702, %v4363, 0
    %v4442 = vsel %vm702, %v4364, 0
    %v4445 = vsel %vm702, %v4365, 0
    %v4448 = vsel %vm702, %v4366, 0
    %v4451 = vsel %vm404, %v4425, 0
    %4453 = vmatprep.subr.bf16.mxu0 0
    %4454 = vmatpush1.bf16.msra.mxu0 0
    %4455 = vmatprep.subr.bf16.mxu0 0
    %4456 = vmatpush1.bf16.msra.mxu0 0
    %4457 = vmatprep.subr.bf16.mxu0 0
    %4458 = vmatpush1.bf16.msra.mxu0 0
    %4459 = vmatprep.subr.bf16.mxu0 0
    %4460 = vmatpush1.bf16.msra.mxu0 0
    %4461 = vmatprep.subr.bf16.mxu0 0
    %4462 = vmatpush1.bf16.msra.mxu0 0
    %4463 = vmatprep.subr.bf16.mxu0 0
    %4464 = vmatpush1.bf16.msra.mxu0 0
    %4465 = vmatprep.subr.bf16.mxu0 0
    %4466 = vmatpush1.bf16.msra.mxu0 0
    %4467 = vmatprep.subr.bf16.mxu0 0
    %4468 = vmatpush1.bf16.msra.mxu0 %v4451
    %4469 = vmatprep.subr.bf16.mxu0 0
    %4470 = vmatpush2.bf16.msra.mxu0 0
    %4471 = vmatprep.subr.bf16.mxu0 0
    %4472 = vmatpush2.bf16.msra.mxu0 0
    %4473 = vmatprep.subr.bf16.mxu0 0
    %4474 = vmatpush2.bf16.msra.mxu0 0
    %4475 = vmatprep.subr.bf16.mxu0 0
    %4476 = vmatpush2.bf16.msra.mxu0 0
    %4477 = vmatprep.subr.bf16.mxu0 0
    %4478 = vmatpush2.bf16.msra.mxu0 0
    %4479 = vmatprep.subr.bf16.mxu0 0
    %4480 = vmatpush2.bf16.msra.mxu0 0
    %4481 = vmatprep.subr.bf16.mxu0 0
    %4482 = vmatpush2.bf16.msra.mxu0 0
    %4483 = vmatprep.subr.bf16.mxu0 0
    %4484 = vmatpush2.bf16.msra.mxu0 0
    %4485 = vmatprep.mubr.bf16.mxu0 0
    %4486 = vmatmul.mubr.bf16.gmra.mxu0 %v4427
    %v4487 = vpop.f32.mrf.mxu0
    %v4488 = vadd.f32 0.0, %v4487
    %v4489 = vpop.f32.mrf.mxu0
    %v4490 = vpop.f32.mrf.mxu0
    %v4491 = vadd.f32 0.0, %v4490
    %v4492 = vpop.f32.mrf.mxu0
    %4493 = vmatprep.mubr.bf16.mxu0 0
    %4494 = vmatmul.mubr.bf16.gmra.mxu0 %v4430
    %v4495 = vpop.f32.mrf.mxu0
    %v4496 = vadd.f32 0.0, %v4495
    %v4497 = vpop.f32.mrf.mxu0
    %v4498 = vpop.f32.mrf.mxu0
    %v4499 = vadd.f32 0.0, %v4498
    %v4500 = vpop.f32.mrf.mxu0
    %4501 = vmatprep.mubr.bf16.mxu0 0
    %4502 = vmatmul.mubr.bf16.gmra.mxu0 %v4433
    %v4503 = vpop.f32.mrf.mxu0
    %v4504 = vadd.f32 0.0, %v4503
    %v4505 = vpop.f32.mrf.mxu0
    %v4506 = vpop.f32.mrf.mxu0
    %v4507 = vadd.f32 0.0, %v4506
    %v4508 = vpop.f32.mrf.mxu0
    %4509 = vmatprep.mubr.bf16.mxu0 0
    %4510 = vmatmul.mubr.bf16.gmra.mxu0 %v4436
    %v4511 = vpop.f32.mrf.mxu0
    %v4512 = vadd.f32 0.0, %v4511
    %v4513 = vpop.f32.mrf.mxu0
    %v4514 = vpop.f32.mrf.mxu0
    %v4515 = vadd.f32 0.0, %v4514
    %v4516 = vpop.f32.mrf.mxu0
    %4517 = vmatprep.mubr.bf16.mxu0 0
    %4518 = vmatmul.mubr.bf16.gmra.mxu0 %v4439
    %v4519 = vpop.f32.mrf.mxu0
    %v4520 = vadd.f32 0.0, %v4519
    %v4521 = vpop.f32.mrf.mxu0
    %v4522 = vpop.f32.mrf.mxu0
    %v4523 = vadd.f32 0.0, %v4522
    %v4524 = vpop.f32.mrf.mxu0
    %4525 = vmatprep.mubr.bf16.mxu0 0
    %4526 = vmatmul.mubr.bf16.gmra.mxu0 %v4442
    %v4527 = vpop.f32.mrf.mxu0
    %v4528 = vadd.f32 0.0, %v4527
    %v4529 = vpop.f32.mrf.mxu0
    %v4530 = vpop.f32.mrf.mxu0
    %v4531 = vadd.f32 0.0, %v4530
    %v4532 = vpop.f32.mrf.mxu0
    %4533 = vmatprep.mubr.bf16.mxu0 0
    %4534 = vmatmul.mubr.bf16.gmra.mxu0 %v4445
    %v4535 = vpop.f32.mrf.mxu0
    %v4536 = vadd.f32 0.0, %v4535
    %v4537 = vpop.f32.mrf.mxu0
    %v4538 = vpop.f32.mrf.mxu0
    %v4539 = vadd.f32 0.0, %v4538
    %v4540 = vpop.f32.mrf.mxu0
    %4541 = vmatprep.mubr.bf16.mxu0 0
    %4542 = vmatmul.mubr.bf16.gmra.mxu0 %v4448
    %v4543 = vpop.f32.mrf.mxu0
    %v4544 = vadd.f32 0.0, %v4543
    %v4545 = vpop.f32.mrf.mxu0
    %v4546 = vpop.f32.mrf.mxu0
    %v4547 = vadd.f32 0.0, %v4546
    %v4548 = vpop.f32.mrf.mxu0
    %4549 = vdwg.mxu0
    %v4551 = vsel %vm702, %v4351, 0
    %v4554 = vsel %vm702, %v4352, 0
    %v4557 = vsel %vm702, %v4353, 0
    %v4560 = vsel %vm702, %v4354, 0
    %v4563 = vsel %vm702, %v4355, 0
    %v4566 = vsel %vm702, %v4356, 0
    %v4569 = vsel %vm702, %v4357, 0
    %v4572 = vsel %vm702, %v4358, 0
    %v4575 = vsel %vm404, %v4423, 0
    %4577 = vmatprep.subr.bf16.mxu0 0
    %4578 = vmatpush1.bf16.msra.mxu0 0
    %4579 = vmatprep.subr.bf16.mxu0 0
    %4580 = vmatpush1.bf16.msra.mxu0 0
    %4581 = vmatprep.subr.bf16.mxu0 0
    %4582 = vmatpush1.bf16.msra.mxu0 0
    %4583 = vmatprep.subr.bf16.mxu0 0
    %4584 = vmatpush1.bf16.msra.mxu0 0
    %4585 = vmatprep.subr.bf16.mxu0 0
    %4586 = vmatpush1.bf16.msra.mxu0 0
    %4587 = vmatprep.subr.bf16.mxu0 0
    %4588 = vmatpush1.bf16.msra.mxu0 0
    %4589 = vmatprep.subr.bf16.mxu0 0
    %4590 = vmatpush1.bf16.msra.mxu0 0
    %4591 = vmatprep.subr.bf16.mxu0 0
    %4592 = vmatpush1.bf16.msra.mxu0 %v4575
    %4593 = vmatprep.subr.bf16.mxu0 0
    %4594 = vmatpush2.bf16.msra.mxu0 0
    %4595 = vmatprep.subr.bf16.mxu0 0
    %4596 = vmatpush2.bf16.msra.mxu0 0
    %4597 = vmatprep.subr.bf16.mxu0 0
    %4598 = vmatpush2.bf16.msra.mxu0 0
    %4599 = vmatprep.subr.bf16.mxu0 0
    %4600 = vmatpush2.bf16.msra.mxu0 0
    %4601 = vmatprep.subr.bf16.mxu0 0
    %4602 = vmatpush2.bf16.msra.mxu0 0
    %4603 = vmatprep.subr.bf16.mxu0 0
    %4604 = vmatpush2.bf16.msra.mxu0 0
    %4605 = vmatprep.subr.bf16.mxu0 0
    %4606 = vmatpush2.bf16.msra.mxu0 0
    %4607 = vmatprep.subr.bf16.mxu0 0
    %4608 = vmatpush2.bf16.msra.mxu0 0
    %4609 = vmatprep.mubr.bf16.mxu0 0
    %4610 = vmatmul.mubr.bf16.gmra.mxu0 %v4551
    %v4611 = vpop.f32.mrf.mxu0
    %v4612 = vadd.f32 %v4488, %v4611
    %v4613 = vpop.f32.mrf.mxu0
    %v4614 = vpop.f32.mrf.mxu0
    %v4615 = vadd.f32 %v4491, %v4614
    %v4616 = vpop.f32.mrf.mxu0
    %4617 = vmatprep.mubr.bf16.mxu0 0
    %4618 = vmatmul.mubr.bf16.gmra.mxu0 %v4554
    %v4619 = vpop.f32.mrf.mxu0
    %v4620 = vadd.f32 %v4496, %v4619
    %v4621 = vpop.f32.mrf.mxu0
    %v4622 = vpop.f32.mrf.mxu0
    %v4623 = vadd.f32 %v4499, %v4622
    %v4624 = vpop.f32.mrf.mxu0
    %4625 = vmatprep.mubr.bf16.mxu0 0
    %4626 = vmatmul.mubr.bf16.gmra.mxu0 %v4557
    %v4627 = vpop.f32.mrf.mxu0
    %v4628 = vadd.f32 %v4504, %v4627
    %v4629 = vpop.f32.mrf.mxu0
    %v4630 = vpop.f32.mrf.mxu0
    %v4631 = vadd.f32 %v4507, %v4630
    %v4632 = vpop.f32.mrf.mxu0
    %4633 = vmatprep.mubr.bf16.mxu0 0
    %4634 = vmatmul.mubr.bf16.gmra.mxu0 %v4560
    %v4635 = vpop.f32.mrf.mxu0
    %v4636 = vadd.f32 %v4512, %v4635
    %v4637 = vpop.f32.mrf.mxu0
    %v4638 = vpop.f32.mrf.mxu0
    %v4639 = vadd.f32 %v4515, %v4638
    %v4640 = vpop.f32.mrf.mxu0
    %4641 = vmatprep.mubr.bf16.mxu0 0
    %4642 = vmatmul.mubr.bf16.gmra.mxu0 %v4563
    %v4643 = vpop.f32.mrf.mxu0
    %v4644 = vadd.f32 %v4520, %v4643
    %v4645 = vpop.f32.mrf.mxu0
    %v4646 = vpop.f32.mrf.mxu0
    %v4647 = vadd.f32 %v4523, %v4646
    %v4648 = vpop.f32.mrf.mxu0
    %4649 = vmatprep.mubr.bf16.mxu0 0
    %4650 = vmatmul.mubr.bf16.gmra.mxu0 %v4566
    %v4651 = vpop.f32.mrf.mxu0
    %v4652 = vadd.f32 %v4528, %v4651
    %v4653 = vpop.f32.mrf.mxu0
    %v4654 = vpop.f32.mrf.mxu0
    %v4655 = vadd.f32 %v4531, %v4654
    %v4656 = vpop.f32.mrf.mxu0
    %4657 = vmatprep.mubr.bf16.mxu0 0
    %4658 = vmatmul.mubr.bf16.gmra.mxu0 %v4569
    %v4659 = vpop.f32.mrf.mxu0
    %v4660 = vadd.f32 %v4536, %v4659
    %v4661 = vpop.f32.mrf.mxu0
    %v4662 = vpop.f32.mrf.mxu0
    %v4663 = vadd.f32 %v4539, %v4662
    %v4664 = vpop.f32.mrf.mxu0
    %4665 = vmatprep.mubr.bf16.mxu0 0
    %4666 = vmatmul.mubr.bf16.gmra.mxu0 %v4572
    %v4667 = vpop.f32.mrf.mxu0
    %v4668 = vadd.f32 %v4544, %v4667
    %v4669 = vpop.f32.mrf.mxu0
    %v4670 = vpop.f32.mrf.mxu0
    %v4671 = vadd.f32 %v4547, %v4670
    %v4672 = vpop.f32.mrf.mxu0
    %4673 = vdwg.mxu0
    %s4674 = scalar_lea.vmem %s5, 8
    %v4675 = vld [vmem:[%s4674] sm:$0xf]
    %v4677 = vsel %vm702, %v4367, 0
    %v4680 = vsel %vm702, %v4368, 0
    %v4683 = vsel %vm702, %v4369, 0
    %v4686 = vsel %vm702, %v4370, 0
    %v4689 = vsel %vm702, %v4371, 0
    %v4692 = vsel %vm702, %v4372, 0
    %v4695 = vsel %vm702, %v4373, 0
    %v4698 = vsel %vm702, %v4374, 0
    %v4701 = vsel %vm404, %v4675, 0
    %4703 = vmatprep.subr.bf16.mxu0 0
    %4704 = vmatpush1.bf16.msra.mxu0 0
    %4705 = vmatprep.subr.bf16.mxu0 0
    %4706 = vmatpush1.bf16.msra.mxu0 0
    %4707 = vmatprep.subr.bf16.mxu0 0
    %4708 = vmatpush1.bf16.msra.mxu0 0
    %4709 = vmatprep.subr.bf16.mxu0 0
    %4710 = vmatpush1.bf16.msra.mxu0 0
    %4711 = vmatprep.subr.bf16.mxu0 0
    %4712 = vmatpush1.bf16.msra.mxu0 0
    %4713 = vmatprep.subr.bf16.mxu0 0
    %4714 = vmatpush1.bf16.msra.mxu0 0
    %4715 = vmatprep.subr.bf16.mxu0 0
    %4716 = vmatpush1.bf16.msra.mxu0 0
    %4717 = vmatprep.subr.bf16.mxu0 0
    %4718 = vmatpush1.bf16.msra.mxu0 %v4701
    %4719 = vmatprep.subr.bf16.mxu0 0
    %4720 = vmatpush2.bf16.msra.mxu0 0
    %4721 = vmatprep.subr.bf16.mxu0 0
    %4722 = vmatpush2.bf16.msra.mxu0 0
    %4723 = vmatprep.subr.bf16.mxu0 0
    %4724 = vmatpush2.bf16.msra.mxu0 0
    %4725 = vmatprep.subr.bf16.mxu0 0
    %4726 = vmatpush2.bf16.msra.mxu0 0
    %4727 = vmatprep.subr.bf16.mxu0 0
    %4728 = vmatpush2.bf16.msra.mxu0 0
    %4729 = vmatprep.subr.bf16.mxu0 0
    %4730 = vmatpush2.bf16.msra.mxu0 0
    %4731 = vmatprep.subr.bf16.mxu0 0
    %4732 = vmatpush2.bf16.msra.mxu0 0
    %4733 = vmatprep.subr.bf16.mxu0 0
    %4734 = vmatpush2.bf16.msra.mxu0 0
    %4735 = vmatprep.mubr.bf16.mxu0 0
    %4736 = vmatmul.mubr.bf16.gmra.mxu0 %v4677
    %v4737 = vpop.f32.mrf.mxu0
    %v4738 = vadd.f32 0.0, %v4737
    %v4739 = vpop.f32.mrf.mxu0
    %v4740 = vpop.f32.mrf.mxu0
    %v4741 = vadd.f32 0.0, %v4740
    %v4742 = vpop.f32.mrf.mxu0
    %4743 = vmatprep.mubr.bf16.mxu0 0
    %4744 = vmatmul.mubr.bf16.gmra.mxu0 %v4680
    %v4745 = vpop.f32.mrf.mxu0
    %v4746 = vadd.f32 0.0, %v4745
    %v4747 = vpop.f32.mrf.mxu0
    %v4748 = vpop.f32.mrf.mxu0
    %v4749 = vadd.f32 0.0, %v4748
    %v4750 = vpop.f32.mrf.mxu0
    %4751 = vmatprep.mubr.bf16.mxu0 0
    %4752 = vmatmul.mubr.bf16.gmra.mxu0 %v4683
    %v4753 = vpop.f32.mrf.mxu0
    %v4754 = vadd.f32 0.0, %v4753
    %v4755 = vpop.f32.mrf.mxu0
    %v4756 = vpop.f32.mrf.mxu0
    %v4757 = vadd.f32 0.0, %v4756
    %v4758 = vpop.f32.mrf.mxu0
    %4759 = vmatprep.mubr.bf16.mxu0 0
    %4760 = vmatmul.mubr.bf16.gmra.mxu0 %v4686
    %v4761 = vpop.f32.mrf.mxu0
    %v4762 = vadd.f32 0.0, %v4761
    %v4763 = vpop.f32.mrf.mxu0
    %v4764 = vpop.f32.mrf.mxu0
    %v4765 = vadd.f32 0.0, %v4764
    %v4766 = vpop.f32.mrf.mxu0
    %4767 = vmatprep.mubr.bf16.mxu0 0
    %4768 = vmatmul.mubr.bf16.gmra.mxu0 %v4689
    %v4769 = vpop.f32.mrf.mxu0
    %v4770 = vadd.f32 0.0, %v4769
    %v4771 = vpop.f32.mrf.mxu0
    %v4772 = vpop.f32.mrf.mxu0
    %v4773 = vadd.f32 0.0, %v4772
    %v4774 = vpop.f32.mrf.mxu0
    %4775 = vmatprep.mubr.bf16.mxu0 0
    %4776 = vmatmul.mubr.bf16.gmra.mxu0 %v4692
    %v4777 = vpop.f32.mrf.mxu0
    %v4778 = vadd.f32 0.0, %v4777
    %v4779 = vpop.f32.mrf.mxu0
    %v4780 = vpop.f32.mrf.mxu0
    %v4781 = vadd.f32 0.0, %v4780
    %v4782 = vpop.f32.mrf.mxu0
    %4783 = vmatprep.mubr.bf16.mxu0 0
    %4784 = vmatmul.mubr.bf16.gmra.mxu0 %v4695
    %v4785 = vpop.f32.mrf.mxu0
    %v4786 = vadd.f32 0.0, %v4785
    %v4787 = vpop.f32.mrf.mxu0
    %v4788 = vpop.f32.mrf.mxu0
    %v4789 = vadd.f32 0.0, %v4788
    %v4790 = vpop.f32.mrf.mxu0
    %4791 = vmatprep.mubr.bf16.mxu0 0
    %4792 = vmatmul.mubr.bf16.gmra.mxu0 %v4698
    %v4793 = vpop.f32.mrf.mxu0
    %v4794 = vadd.f32 0.0, %v4793
    %v4795 = vpop.f32.mrf.mxu0
    %v4796 = vpop.f32.mrf.mxu0
    %v4797 = vadd.f32 0.0, %v4796
    %v4798 = vpop.f32.mrf.mxu0
    %4799 = vdwg.mxu0
    %v4800 = vadd.f32 %v4612, %v4738
    %v4801 = vadd.f32 %v4615, %v4741
    %v4802 = vadd.f32 %v4620, %v4746
    %v4803 = vadd.f32 %v4623, %v4749
    %v4804 = vadd.f32 %v4628, %v4754
    %v4805 = vadd.f32 %v4631, %v4757
    %v4806 = vadd.f32 %v4636, %v4762
    %v4807 = vadd.f32 %v4639, %v4765
    %v4808 = vadd.f32 %v4644, %v4770
    %v4809 = vadd.f32 %v4647, %v4773
    %v4810 = vadd.f32 %v4652, %v4778
    %v4811 = vadd.f32 %v4655, %v4781
    %v4812 = vadd.f32 %v4660, %v4786
    %v4813 = vadd.f32 %v4663, %v4789
    %v4814 = vadd.f32 %v4668, %v4794
    %v4815 = vadd.f32 %v4671, %v4797
    %s4816 = scalar_lea.vmem %s5, 12
    %v4817 = vld [vmem:[%s4816] sm:$0xf]
    %v4819 = vsel %vm702, %v4375, 0
    %v4822 = vsel %vm702, %v4376, 0
    %v4825 = vsel %vm702, %v4377, 0
    %v4828 = vsel %vm702, %v4378, 0
    %v4831 = vsel %vm702, %v4379, 0
    %v4834 = vsel %vm702, %v4380, 0
    %v4837 = vsel %vm702, %v4381, 0
    %v4840 = vsel %vm702, %v4382, 0
    %v4843 = vsel %vm404, %v4817, 0
    %4845 = vmatprep.subr.bf16.mxu0 0
    %4846 = vmatpush1.bf16.msra.mxu0 0
    %4847 = vmatprep.subr.bf16.mxu0 0
    %4848 = vmatpush1.bf16.msra.mxu0 0
    %4849 = vmatprep.subr.bf16.mxu0 0
    %4850 = vmatpush1.bf16.msra.mxu0 0
    %4851 = vmatprep.subr.bf16.mxu0 0
    %4852 = vmatpush1.bf16.msra.mxu0 0
    %4853 = vmatprep.subr.bf16.mxu0 0
    %4854 = vmatpush1.bf16.msra.mxu0 0
    %4855 = vmatprep.subr.bf16.mxu0 0
    %4856 = vmatpush1.bf16.msra.mxu0 0
    %4857 = vmatprep.subr.bf16.mxu0 0
    %4858 = vmatpush1.bf16.msra.mxu0 0
    %4859 = vmatprep.subr.bf16.mxu0 0
    %4860 = vmatpush1.bf16.msra.mxu0 %v4843
    %4861 = vmatprep.subr.bf16.mxu0 0
    %4862 = vmatpush2.bf16.msra.mxu0 0
    %4863 = vmatprep.subr.bf16.mxu0 0
    %4864 = vmatpush2.bf16.msra.mxu0 0
    %4865 = vmatprep.subr.bf16.mxu0 0
    %4866 = vmatpush2.bf16.msra.mxu0 0
    %4867 = vmatprep.subr.bf16.mxu0 0
    %4868 = vmatpush2.bf16.msra.mxu0 0
    %4869 = vmatprep.subr.bf16.mxu0 0
    %4870 = vmatpush2.bf16.msra.mxu0 0
    %4871 = vmatprep.subr.bf16.mxu0 0
    %4872 = vmatpush2.bf16.msra.mxu0 0
    %4873 = vmatprep.subr.bf16.mxu0 0
    %4874 = vmatpush2.bf16.msra.mxu0 0
    %4875 = vmatprep.subr.bf16.mxu0 0
    %4876 = vmatpush2.bf16.msra.mxu0 0
    %4877 = vmatprep.mubr.bf16.mxu0 0
    %4878 = vmatmul.mubr.bf16.gmra.mxu0 %v4819
    %v4879 = vpop.f32.mrf.mxu0
    %v4880 = vadd.f32 0.0, %v4879
    %v4881 = vpop.f32.mrf.mxu0
    %v4882 = vpop.f32.mrf.mxu0
    %v4883 = vadd.f32 0.0, %v4882
    %v4884 = vpop.f32.mrf.mxu0
    %4885 = vmatprep.mubr.bf16.mxu0 0
    %4886 = vmatmul.mubr.bf16.gmra.mxu0 %v4822
    %v4887 = vpop.f32.mrf.mxu0
    %v4888 = vadd.f32 0.0, %v4887
    %v4889 = vpop.f32.mrf.mxu0
    %v4890 = vpop.f32.mrf.mxu0
    %v4891 = vadd.f32 0.0, %v4890
    %v4892 = vpop.f32.mrf.mxu0
    %4893 = vmatprep.mubr.bf16.mxu0 0
    %4894 = vmatmul.mubr.bf16.gmra.mxu0 %v4825
    %v4895 = vpop.f32.mrf.mxu0
    %v4896 = vadd.f32 0.0, %v4895
    %v4897 = vpop.f32.mrf.mxu0
    %v4898 = vpop.f32.mrf.mxu0
    %v4899 = vadd.f32 0.0, %v4898
    %v4900 = vpop.f32.mrf.mxu0
    %4901 = vmatprep.mubr.bf16.mxu0 0
    %4902 = vmatmul.mubr.bf16.gmra.mxu0 %v4828
    %v4903 = vpop.f32.mrf.mxu0
    %v4904 = vadd.f32 0.0, %v4903
    %v4905 = vpop.f32.mrf.mxu0
    %v4906 = vpop.f32.mrf.mxu0
    %v4907 = vadd.f32 0.0, %v4906
    %v4908 = vpop.f32.mrf.mxu0
    %4909 = vmatprep.mubr.bf16.mxu0 0
    %4910 = vmatmul.mubr.bf16.gmra.mxu0 %v4831
    %v4911 = vpop.f32.mrf.mxu0
    %v4912 = vadd.f32 0.0, %v4911
    %v4913 = vpop.f32.mrf.mxu0
    %v4914 = vpop.f32.mrf.mxu0
    %v4915 = vadd.f32 0.0, %v4914
    %v4916 = vpop.f32.mrf.mxu0
    %4917 = vmatprep.mubr.bf16.mxu0 0
    %4918 = vmatmul.mubr.bf16.gmra.mxu0 %v4834
    %v4919 = vpop.f32.mrf.mxu0
    %v4920 = vadd.f32 0.0, %v4919
    %v4921 = vpop.f32.mrf.mxu0
    %v4922 = vpop.f32.mrf.mxu0
    %v4923 = vadd.f32 0.0, %v4922
    %v4924 = vpop.f32.mrf.mxu0
    %4925 = vmatprep.mubr.bf16.mxu0 0
    %4926 = vmatmul.mubr.bf16.gmra.mxu0 %v4837
    %v4927 = vpop.f32.mrf.mxu0
    %v4928 = vadd.f32 0.0, %v4927
    %v4929 = vpop.f32.mrf.mxu0
    %v4930 = vpop.f32.mrf.mxu0
    %v4931 = vadd.f32 0.0, %v4930
    %v4932 = vpop.f32.mrf.mxu0
    %4933 = vmatprep.mubr.bf16.mxu0 0
    %4934 = vmatmul.mubr.bf16.gmra.mxu0 %v4840
    %v4935 = vpop.f32.mrf.mxu0
    %v4936 = vadd.f32 0.0, %v4935
    %v4937 = vpop.f32.mrf.mxu0
    %v4938 = vpop.f32.mrf.mxu0
    %v4939 = vadd.f32 0.0, %v4938
    %v4940 = vpop.f32.mrf.mxu0
    %4941 = vdwg.mxu0
    %v4942 = vadd.f32 %v4800, %v4880
    %v4943 = vadd.f32 %v4801, %v4883
    %v4944 = vadd.f32 %v4802, %v4888
    %v4945 = vadd.f32 %v4803, %v4891
    %v4946 = vadd.f32 %v4804, %v4896
    %v4947 = vadd.f32 %v4805, %v4899
    %v4948 = vadd.f32 %v4806, %v4904
    %v4949 = vadd.f32 %v4807, %v4907
    %v4950 = vadd.f32 %v4808, %v4912
    %v4951 = vadd.f32 %v4809, %v4915
    %v4952 = vadd.f32 %v4810, %v4920
    %v4953 = vadd.f32 %v4811, %v4923
    %v4954 = vadd.f32 %v4812, %v4928
    %v4955 = vadd.f32 %v4813, %v4931
    %v4956 = vadd.f32 %v4814, %v4936
    %v4957 = vadd.f32 %v4815, %v4939
    %s4958 = scalar_lea.vmem %s5, 16
    %v4959 = vld [vmem:[%s4958] sm:$0xf]
    %v4961 = vsel %vm702, %v4383, 0
    %v4964 = vsel %vm702, %v4384, 0
    %v4967 = vsel %vm702, %v4385, 0
    %v4970 = vsel %vm702, %v4386, 0
    %v4973 = vsel %vm702, %v4387, 0
    %v4976 = vsel %vm702, %v4388, 0
    %v4979 = vsel %vm702, %v4389, 0
    %v4982 = vsel %vm702, %v4390, 0
    %v4985 = vsel %vm404, %v4959, 0
    %4987 = vmatprep.subr.bf16.mxu0 0
    %4988 = vmatpush1.bf16.msra.mxu0 0
    %4989 = vmatprep.subr.bf16.mxu0 0
    %4990 = vmatpush1.bf16.msra.mxu0 0
    %4991 = vmatprep.subr.bf16.mxu0 0
    %4992 = vmatpush1.bf16.msra.mxu0 0
    %4993 = vmatprep.subr.bf16.mxu0 0
    %4994 = vmatpush1.bf16.msra.mxu0 0
    %4995 = vmatprep.subr.bf16.mxu0 0
    %4996 = vmatpush1.bf16.msra.mxu0 0
    %4997 = vmatprep.subr.bf16.mxu0 0
    %4998 = vmatpush1.bf16.msra.mxu0 0
    %4999 = vmatprep.subr.bf16.mxu0 0
    %5000 = vmatpush1.bf16.msra.mxu0 0
    %5001 = vmatprep.subr.bf16.mxu0 0
    %5002 = vmatpush1.bf16.msra.mxu0 %v4985
    %5003 = vmatprep.subr.bf16.mxu0 0
    %5004 = vmatpush2.bf16.msra.mxu0 0
    %5005 = vmatprep.subr.bf16.mxu0 0
    %5006 = vmatpush2.bf16.msra.mxu0 0
    %5007 = vmatprep.subr.bf16.mxu0 0
    %5008 = vmatpush2.bf16.msra.mxu0 0
    %5009 = vmatprep.subr.bf16.mxu0 0
    %5010 = vmatpush2.bf16.msra.mxu0 0
    %5011 = vmatprep.subr.bf16.mxu0 0
    %5012 = vmatpush2.bf16.msra.mxu0 0
    %5013 = vmatprep.subr.bf16.mxu0 0
    %5014 = vmatpush2.bf16.msra.mxu0 0
    %5015 = vmatprep.subr.bf16.mxu0 0
    %5016 = vmatpush2.bf16.msra.mxu0 0
    %5017 = vmatprep.subr.bf16.mxu0 0
    %5018 = vmatpush2.bf16.msra.mxu0 0
    %5019 = vmatprep.mubr.bf16.mxu0 0
    %5020 = vmatmul.mubr.bf16.gmra.mxu0 %v4961
    %v5021 = vpop.f32.mrf.mxu0
    %v5022 = vadd.f32 0.0, %v5021
    %v5023 = vpop.f32.mrf.mxu0
    %v5024 = vpop.f32.mrf.mxu0
    %v5025 = vadd.f32 0.0, %v5024
    %v5026 = vpop.f32.mrf.mxu0
    %5027 = vmatprep.mubr.bf16.mxu0 0
    %5028 = vmatmul.mubr.bf16.gmra.mxu0 %v4964
    %v5029 = vpop.f32.mrf.mxu0
    %v5030 = vadd.f32 0.0, %v5029
    %v5031 = vpop.f32.mrf.mxu0
    %v5032 = vpop.f32.mrf.mxu0
    %v5033 = vadd.f32 0.0, %v5032
    %v5034 = vpop.f32.mrf.mxu0
    %5035 = vmatprep.mubr.bf16.mxu0 0
    %5036 = vmatmul.mubr.bf16.gmra.mxu0 %v4967
    %v5037 = vpop.f32.mrf.mxu0
    %v5038 = vadd.f32 0.0, %v5037
    %v5039 = vpop.f32.mrf.mxu0
    %v5040 = vpop.f32.mrf.mxu0
    %v5041 = vadd.f32 0.0, %v5040
    %v5042 = vpop.f32.mrf.mxu0
    %5043 = vmatprep.mubr.bf16.mxu0 0
    %5044 = vmatmul.mubr.bf16.gmra.mxu0 %v4970
    %v5045 = vpop.f32.mrf.mxu0
    %v5046 = vadd.f32 0.0, %v5045
    %v5047 = vpop.f32.mrf.mxu0
    %v5048 = vpop.f32.mrf.mxu0
    %v5049 = vadd.f32 0.0, %v5048
    %v5050 = vpop.f32.mrf.mxu0
    %5051 = vmatprep.mubr.bf16.mxu0 0
    %5052 = vmatmul.mubr.bf16.gmra.mxu0 %v4973
    %v5053 = vpop.f32.mrf.mxu0
    %v5054 = vadd.f32 0.0, %v5053
    %v5055 = vpop.f32.mrf.mxu0
    %v5056 = vpop.f32.mrf.mxu0
    %v5057 = vadd.f32 0.0, %v5056
    %v5058 = vpop.f32.mrf.mxu0
    %5059 = vmatprep.mubr.bf16.mxu0 0
    %5060 = vmatmul.mubr.bf16.gmra.mxu0 %v4976
    %v5061 = vpop.f32.mrf.mxu0
    %v5062 = vadd.f32 0.0, %v5061
    %v5063 = vpop.f32.mrf.mxu0
    %v5064 = vpop.f32.mrf.mxu0
    %v5065 = vadd.f32 0.0, %v5064
    %v5066 = vpop.f32.mrf.mxu0
    %5067 = vmatprep.mubr.bf16.mxu0 0
    %5068 = vmatmul.mubr.bf16.gmra.mxu0 %v4979
    %v5069 = vpop.f32.mrf.mxu0
    %v5070 = vadd.f32 0.0, %v5069
    %v5071 = vpop.f32.mrf.mxu0
    %v5072 = vpop.f32.mrf.mxu0
    %v5073 = vadd.f32 0.0, %v5072
    %v5074 = vpop.f32.mrf.mxu0
    %5075 = vmatprep.mubr.bf16.mxu0 0
    %5076 = vmatmul.mubr.bf16.gmra.mxu0 %v4982
    %v5077 = vpop.f32.mrf.mxu0
    %v5078 = vadd.f32 0.0, %v5077
    %v5079 = vpop.f32.mrf.mxu0
    %v5080 = vpop.f32.mrf.mxu0
    %v5081 = vadd.f32 0.0, %v5080
    %v5082 = vpop.f32.mrf.mxu0
    %5083 = vdwg.mxu0
    %v5084 = vadd.f32 %v4942, %v5022
    %v5085 = vadd.f32 %v4943, %v5025
    %v5086 = vadd.f32 %v4944, %v5030
    %v5087 = vadd.f32 %v4945, %v5033
    %v5088 = vadd.f32 %v4946, %v5038
    %v5089 = vadd.f32 %v4947, %v5041
    %v5090 = vadd.f32 %v4948, %v5046
    %v5091 = vadd.f32 %v4949, %v5049
    %v5092 = vadd.f32 %v4950, %v5054
    %v5093 = vadd.f32 %v4951, %v5057
    %v5094 = vadd.f32 %v4952, %v5062
    %v5095 = vadd.f32 %v4953, %v5065
    %v5096 = vadd.f32 %v4954, %v5070
    %v5097 = vadd.f32 %v4955, %v5073
    %v5098 = vadd.f32 %v4956, %v5078
    %v5099 = vadd.f32 %v4957, %v5081
    %s5100 = scalar_lea.vmem %s5, 20
    %v5101 = vld [vmem:[%s5100] sm:$0xf]
    %v5103 = vsel %vm702, %v4391, 0
    %v5106 = vsel %vm702, %v4392, 0
    %v5109 = vsel %vm702, %v4393, 0
    %v5112 = vsel %vm702, %v4394, 0
    %v5115 = vsel %vm702, %v4395, 0
    %v5118 = vsel %vm702, %v4396, 0
    %v5121 = vsel %vm702, %v4397, 0
    %v5124 = vsel %vm702, %v4398, 0
    %v5127 = vsel %vm404, %v5101, 0
    %5129 = vmatprep.subr.bf16.mxu0 0
    %5130 = vmatpush1.bf16.msra.mxu0 0
    %5131 = vmatprep.subr.bf16.mxu0 0
    %5132 = vmatpush1.bf16.msra.mxu0 0
    %5133 = vmatprep.subr.bf16.mxu0 0
    %5134 = vmatpush1.bf16.msra.mxu0 0
    %5135 = vmatprep.subr.bf16.mxu0 0
    %5136 = vmatpush1.bf16.msra.mxu0 0
    %5137 = vmatprep.subr.bf16.mxu0 0
    %5138 = vmatpush1.bf16.msra.mxu0 0
    %5139 = vmatprep.subr.bf16.mxu0 0
    %5140 = vmatpush1.bf16.msra.mxu0 0
    %5141 = vmatprep.subr.bf16.mxu0 0
    %5142 = vmatpush1.bf16.msra.mxu0 0
    %5143 = vmatprep.subr.bf16.mxu0 0
    %5144 = vmatpush1.bf16.msra.mxu0 %v5127
    %5145 = vmatprep.subr.bf16.mxu0 0
    %5146 = vmatpush2.bf16.msra.mxu0 0
    %5147 = vmatprep.subr.bf16.mxu0 0
    %5148 = vmatpush2.bf16.msra.mxu0 0
    %5149 = vmatprep.subr.bf16.mxu0 0
    %5150 = vmatpush2.bf16.msra.mxu0 0
    %5151 = vmatprep.subr.bf16.mxu0 0
    %5152 = vmatpush2.bf16.msra.mxu0 0
    %5153 = vmatprep.subr.bf16.mxu0 0
    %5154 = vmatpush2.bf16.msra.mxu0 0
    %5155 = vmatprep.subr.bf16.mxu0 0
    %5156 = vmatpush2.bf16.msra.mxu0 0
    %5157 = vmatprep.subr.bf16.mxu0 0
    %5158 = vmatpush2.bf16.msra.mxu0 0
    %5159 = vmatprep.subr.bf16.mxu0 0
    %5160 = vmatpush2.bf16.msra.mxu0 0
    %5161 = vmatprep.mubr.bf16.mxu0 0
    %5162 = vmatmul.mubr.bf16.gmra.mxu0 %v5103
    %v5163 = vpop.f32.mrf.mxu0
    %v5164 = vadd.f32 0.0, %v5163
    %v5165 = vpop.f32.mrf.mxu0
    %v5166 = vpop.f32.mrf.mxu0
    %v5167 = vadd.f32 0.0, %v5166
    %v5168 = vpop.f32.mrf.mxu0
    %5169 = vmatprep.mubr.bf16.mxu0 0
    %5170 = vmatmul.mubr.bf16.gmra.mxu0 %v5106
    %v5171 = vpop.f32.mrf.mxu0
    %v5172 = vadd.f32 0.0, %v5171
    %v5173 = vpop.f32.mrf.mxu0
    %v5174 = vpop.f32.mrf.mxu0
    %v5175 = vadd.f32 0.0, %v5174
    %v5176 = vpop.f32.mrf.mxu0
    %5177 = vmatprep.mubr.bf16.mxu0 0
    %5178 = vmatmul.mubr.bf16.gmra.mxu0 %v5109
    %v5179 = vpop.f32.mrf.mxu0
    %v5180 = vadd.f32 0.0, %v5179
    %v5181 = vpop.f32.mrf.mxu0
    %v5182 = vpop.f32.mrf.mxu0
    %v5183 = vadd.f32 0.0, %v5182
    %v5184 = vpop.f32.mrf.mxu0
    %5185 = vmatprep.mubr.bf16.mxu0 0
    %5186 = vmatmul.mubr.bf16.gmra.mxu0 %v5112
    %v5187 = vpop.f32.mrf.mxu0
    %v5188 = vadd.f32 0.0, %v5187
    %v5189 = vpop.f32.mrf.mxu0
    %v5190 = vpop.f32.mrf.mxu0
    %v5191 = vadd.f32 0.0, %v5190
    %v5192 = vpop.f32.mrf.mxu0
    %5193 = vmatprep.mubr.bf16.mxu0 0
    %5194 = vmatmul.mubr.bf16.gmra.mxu0 %v5115
    %v5195 = vpop.f32.mrf.mxu0
    %v5196 = vadd.f32 0.0, %v5195
    %v5197 = vpop.f32.mrf.mxu0
    %v5198 = vpop.f32.mrf.mxu0
    %v5199 = vadd.f32 0.0, %v5198
    %v5200 = vpop.f32.mrf.mxu0
    %5201 = vmatprep.mubr.bf16.mxu0 0
    %5202 = vmatmul.mubr.bf16.gmra.mxu0 %v5118
    %v5203 = vpop.f32.mrf.mxu0
    %v5204 = vadd.f32 0.0, %v5203
    %v5205 = vpop.f32.mrf.mxu0
    %v5206 = vpop.f32.mrf.mxu0
    %v5207 = vadd.f32 0.0, %v5206
    %v5208 = vpop.f32.mrf.mxu0
    %5209 = vmatprep.mubr.bf16.mxu0 0
    %5210 = vmatmul.mubr.bf16.gmra.mxu0 %v5121
    %v5211 = vpop.f32.mrf.mxu0
    %v5212 = vadd.f32 0.0, %v5211
    %v5213 = vpop.f32.mrf.mxu0
    %v5214 = vpop.f32.mrf.mxu0
    %v5215 = vadd.f32 0.0, %v5214
    %v5216 = vpop.f32.mrf.mxu0
    %5217 = vmatprep.mubr.bf16.mxu0 0
    %5218 = vmatmul.mubr.bf16.gmra.mxu0 %v5124
    %v5219 = vpop.f32.mrf.mxu0
    %v5220 = vadd.f32 0.0, %v5219
    %v5221 = vpop.f32.mrf.mxu0
    %v5222 = vpop.f32.mrf.mxu0
    %v5223 = vadd.f32 0.0, %v5222
    %v5224 = vpop.f32.mrf.mxu0
    %5225 = vdwg.mxu0
    %v5226 = vadd.f32 %v5084, %v5164
    %v5227 = vadd.f32 %v5085, %v5167
    %v5228 = vadd.f32 %v5086, %v5172
    %v5229 = vadd.f32 %v5087, %v5175
    %v5230 = vadd.f32 %v5088, %v5180
    %v5231 = vadd.f32 %v5089, %v5183
    %v5232 = vadd.f32 %v5090, %v5188
    %v5233 = vadd.f32 %v5091, %v5191
    %v5234 = vadd.f32 %v5092, %v5196
    %v5235 = vadd.f32 %v5093, %v5199
    %v5236 = vadd.f32 %v5094, %v5204
    %v5237 = vadd.f32 %v5095, %v5207
    %v5238 = vadd.f32 %v5096, %v5212
    %v5239 = vadd.f32 %v5097, %v5215
    %v5240 = vadd.f32 %v5098, %v5220
    %v5241 = vadd.f32 %v5099, %v5223
    %s5242 = scalar_lea.vmem %s5, 24
    %v5243 = vld [vmem:[%s5242] sm:$0xf]
    %v5245 = vsel %vm702, %v4399, 0
    %v5248 = vsel %vm702, %v4400, 0
    %v5251 = vsel %vm702, %v4401, 0
    %v5254 = vsel %vm702, %v4402, 0
    %v5257 = vsel %vm702, %v4403, 0
    %v5260 = vsel %vm702, %v4404, 0
    %v5263 = vsel %vm702, %v4405, 0
    %v5266 = vsel %vm702, %v4406, 0
    %v5269 = vsel %vm404, %v5243, 0
    %5271 = vmatprep.subr.bf16.mxu0 0
    %5272 = vmatpush1.bf16.msra.mxu0 0
    %5273 = vmatprep.subr.bf16.mxu0 0
    %5274 = vmatpush1.bf16.msra.mxu0 0
    %5275 = vmatprep.subr.bf16.mxu0 0
    %5276 = vmatpush1.bf16.msra.mxu0 0
    %5277 = vmatprep.subr.bf16.mxu0 0
    %5278 = vmatpush1.bf16.msra.mxu0 0
    %5279 = vmatprep.subr.bf16.mxu0 0
    %5280 = vmatpush1.bf16.msra.mxu0 0
    %5281 = vmatprep.subr.bf16.mxu0 0
    %5282 = vmatpush1.bf16.msra.mxu0 0
    %5283 = vmatprep.subr.bf16.mxu0 0
    %5284 = vmatpush1.bf16.msra.mxu0 0
    %5285 = vmatprep.subr.bf16.mxu0 0
    %5286 = vmatpush1.bf16.msra.mxu0 %v5269
    %5287 = vmatprep.subr.bf16.mxu0 0
    %5288 = vmatpush2.bf16.msra.mxu0 0
    %5289 = vmatprep.subr.bf16.mxu0 0
    %5290 = vmatpush2.bf16.msra.mxu0 0
    %5291 = vmatprep.subr.bf16.mxu0 0
    %5292 = vmatpush2.bf16.msra.mxu0 0
    %5293 = vmatprep.subr.bf16.mxu0 0
    %5294 = vmatpush2.bf16.msra.mxu0 0
    %5295 = vmatprep.subr.bf16.mxu0 0
    %5296 = vmatpush2.bf16.msra.mxu0 0
    %5297 = vmatprep.subr.bf16.mxu0 0
    %5298 = vmatpush2.bf16.msra.mxu0 0
    %5299 = vmatprep.subr.bf16.mxu0 0
    %5300 = vmatpush2.bf16.msra.mxu0 0
    %5301 = vmatprep.subr.bf16.mxu0 0
    %5302 = vmatpush2.bf16.msra.mxu0 0
    %5303 = vmatprep.mubr.bf16.mxu0 0
    %5304 = vmatmul.mubr.bf16.gmra.mxu0 %v5245
    %v5305 = vpop.f32.mrf.mxu0
    %v5306 = vadd.f32 0.0, %v5305
    %v5307 = vpop.f32.mrf.mxu0
    %v5308 = vpop.f32.mrf.mxu0
    %v5309 = vadd.f32 0.0, %v5308
    %v5310 = vpop.f32.mrf.mxu0
    %5311 = vmatprep.mubr.bf16.mxu0 0
    %5312 = vmatmul.mubr.bf16.gmra.mxu0 %v5248
    %v5313 = vpop.f32.mrf.mxu0
    %v5314 = vadd.f32 0.0, %v5313
    %v5315 = vpop.f32.mrf.mxu0
    %v5316 = vpop.f32.mrf.mxu0
    %v5317 = vadd.f32 0.0, %v5316
    %v5318 = vpop.f32.mrf.mxu0
    %5319 = vmatprep.mubr.bf16.mxu0 0
    %5320 = vmatmul.mubr.bf16.gmra.mxu0 %v5251
    %v5321 = vpop.f32.mrf.mxu0
    %v5322 = vadd.f32 0.0, %v5321
    %v5323 = vpop.f32.mrf.mxu0
    %v5324 = vpop.f32.mrf.mxu0
    %v5325 = vadd.f32 0.0, %v5324
    %v5326 = vpop.f32.mrf.mxu0
    %5327 = vmatprep.mubr.bf16.mxu0 0
    %5328 = vmatmul.mubr.bf16.gmra.mxu0 %v5254
    %v5329 = vpop.f32.mrf.mxu0
    %v5330 = vadd.f32 0.0, %v5329
    %v5331 = vpop.f32.mrf.mxu0
    %v5332 = vpop.f32.mrf.mxu0
    %v5333 = vadd.f32 0.0, %v5332
    %v5334 = vpop.f32.mrf.mxu0
    %5335 = vmatprep.mubr.bf16.mxu0 0
    %5336 = vmatmul.mubr.bf16.gmra.mxu0 %v5257
    %v5337 = vpop.f32.mrf.mxu0
    %v5338 = vadd.f32 0.0, %v5337
    %v5339 = vpop.f32.mrf.mxu0
    %v5340 = vpop.f32.mrf.mxu0
    %v5341 = vadd.f32 0.0, %v5340
    %v5342 = vpop.f32.mrf.mxu0
    %5343 = vmatprep.mubr.bf16.mxu0 0
    %5344 = vmatmul.mubr.bf16.gmra.mxu0 %v5260
    %v5345 = vpop.f32.mrf.mxu0
    %v5346 = vadd.f32 0.0, %v5345
    %v5347 = vpop.f32.mrf.mxu0
    %v5348 = vpop.f32.mrf.mxu0
    %v5349 = vadd.f32 0.0, %v5348
    %v5350 = vpop.f32.mrf.mxu0
    %5351 = vmatprep.mubr.bf16.mxu0 0
    %5352 = vmatmul.mubr.bf16.gmra.mxu0 %v5263
    %v5353 = vpop.f32.mrf.mxu0
    %v5354 = vadd.f32 0.0, %v5353
    %v5355 = vpop.f32.mrf.mxu0
    %v5356 = vpop.f32.mrf.mxu0
    %v5357 = vadd.f32 0.0, %v5356
    %v5358 = vpop.f32.mrf.mxu0
    %5359 = vmatprep.mubr.bf16.mxu0 0
    %5360 = vmatmul.mubr.bf16.gmra.mxu0 %v5266
    %v5361 = vpop.f32.mrf.mxu0
    %v5362 = vadd.f32 0.0, %v5361
    %v5363 = vpop.f32.mrf.mxu0
    %v5364 = vpop.f32.mrf.mxu0
    %v5365 = vadd.f32 0.0, %v5364
    %v5366 = vpop.f32.mrf.mxu0
    %5367 = vdwg.mxu0
    %v5368 = vadd.f32 %v5226, %v5306
    %v5369 = vadd.f32 %v5227, %v5309
    %v5370 = vadd.f32 %v5228, %v5314
    %v5371 = vadd.f32 %v5229, %v5317
    %v5372 = vadd.f32 %v5230, %v5322
    %v5373 = vadd.f32 %v5231, %v5325
    %v5374 = vadd.f32 %v5232, %v5330
    %v5375 = vadd.f32 %v5233, %v5333
    %v5376 = vadd.f32 %v5234, %v5338
    %v5377 = vadd.f32 %v5235, %v5341
    %v5378 = vadd.f32 %v5236, %v5346
    %v5379 = vadd.f32 %v5237, %v5349
    %v5380 = vadd.f32 %v5238, %v5354
    %v5381 = vadd.f32 %v5239, %v5357
    %v5382 = vadd.f32 %v5240, %v5362
    %v5383 = vadd.f32 %v5241, %v5365
    %s5384 = scalar_lea.vmem %s5, 28
    %v5385 = vld [vmem:[%s5384] sm:$0xf]
    %v5387 = vsel %vm702, %v4407, 0
    %v5390 = vsel %vm702, %v4408, 0
    %v5393 = vsel %vm702, %v4409, 0
    %v5396 = vsel %vm702, %v4410, 0
    %v5399 = vsel %vm702, %v4411, 0
    %v5402 = vsel %vm702, %v4412, 0
    %v5405 = vsel %vm702, %v4413, 0
    %v5408 = vsel %vm702, %v4414, 0
    %v5411 = vsel %vm404, %v5385, 0
    %5413 = vmatprep.subr.bf16.mxu0 0
    %5414 = vmatpush1.bf16.msra.mxu0 0
    %5415 = vmatprep.subr.bf16.mxu0 0
    %5416 = vmatpush1.bf16.msra.mxu0 0
    %5417 = vmatprep.subr.bf16.mxu0 0
    %5418 = vmatpush1.bf16.msra.mxu0 0
    %5419 = vmatprep.subr.bf16.mxu0 0
    %5420 = vmatpush1.bf16.msra.mxu0 0
    %5421 = vmatprep.subr.bf16.mxu0 0
    %5422 = vmatpush1.bf16.msra.mxu0 0
    %5423 = vmatprep.subr.bf16.mxu0 0
    %5424 = vmatpush1.bf16.msra.mxu0 0
    %5425 = vmatprep.subr.bf16.mxu0 0
    %5426 = vmatpush1.bf16.msra.mxu0 0
    %5427 = vmatprep.subr.bf16.mxu0 0
    %5428 = vmatpush1.bf16.msra.mxu0 %v5411
    %5429 = vmatprep.subr.bf16.mxu0 0
    %5430 = vmatpush2.bf16.msra.mxu0 0
    %5431 = vmatprep.subr.bf16.mxu0 0
    %5432 = vmatpush2.bf16.msra.mxu0 0
    %5433 = vmatprep.subr.bf16.mxu0 0
    %5434 = vmatpush2.bf16.msra.mxu0 0
    %5435 = vmatprep.subr.bf16.mxu0 0
    %5436 = vmatpush2.bf16.msra.mxu0 0
    %5437 = vmatprep.subr.bf16.mxu0 0
    %5438 = vmatpush2.bf16.msra.mxu0 0
    %5439 = vmatprep.subr.bf16.mxu0 0
    %5440 = vmatpush2.bf16.msra.mxu0 0
    %5441 = vmatprep.subr.bf16.mxu0 0
    %5442 = vmatpush2.bf16.msra.mxu0 0
    %5443 = vmatprep.subr.bf16.mxu0 0
    %5444 = vmatpush2.bf16.msra.mxu0 0
    %5445 = vmatprep.mubr.bf16.mxu0 0
    %5446 = vmatmul.mubr.bf16.gmra.mxu0 %v5387
    %v5447 = vpop.f32.mrf.mxu0
    %v5448 = vadd.f32 0.0, %v5447
    %v5449 = vpop.f32.mrf.mxu0
    %v5450 = vpop.f32.mrf.mxu0
    %v5451 = vadd.f32 0.0, %v5450
    %v5452 = vpop.f32.mrf.mxu0
    %5453 = vmatprep.mubr.bf16.mxu0 0
    %5454 = vmatmul.mubr.bf16.gmra.mxu0 %v5390
    %v5455 = vpop.f32.mrf.mxu0
    %v5456 = vadd.f32 0.0, %v5455
    %v5457 = vpop.f32.mrf.mxu0
    %v5458 = vpop.f32.mrf.mxu0
    %v5459 = vadd.f32 0.0, %v5458
    %v5460 = vpop.f32.mrf.mxu0
    %5461 = vmatprep.mubr.bf16.mxu0 0
    %5462 = vmatmul.mubr.bf16.gmra.mxu0 %v5393
    %v5463 = vpop.f32.mrf.mxu0
    %v5464 = vadd.f32 0.0, %v5463
    %v5465 = vpop.f32.mrf.mxu0
    %v5466 = vpop.f32.mrf.mxu0
    %v5467 = vadd.f32 0.0, %v5466
    %v5468 = vpop.f32.mrf.mxu0
    %5469 = vmatprep.mubr.bf16.mxu0 0
    %5470 = vmatmul.mubr.bf16.gmra.mxu0 %v5396
    %v5471 = vpop.f32.mrf.mxu0
    %v5472 = vadd.f32 0.0, %v5471
    %v5473 = vpop.f32.mrf.mxu0
    %v5474 = vpop.f32.mrf.mxu0
    %v5475 = vadd.f32 0.0, %v5474
    %v5476 = vpop.f32.mrf.mxu0
    %5477 = vmatprep.mubr.bf16.mxu0 0
    %5478 = vmatmul.mubr.bf16.gmra.mxu0 %v5399
    %v5479 = vpop.f32.mrf.mxu0
    %v5480 = vadd.f32 0.0, %v5479
    %v5481 = vpop.f32.mrf.mxu0
    %v5482 = vpop.f32.mrf.mxu0
    %v5483 = vadd.f32 0.0, %v5482
    %v5484 = vpop.f32.mrf.mxu0
    %5485 = vmatprep.mubr.bf16.mxu0 0
    %5486 = vmatmul.mubr.bf16.gmra.mxu0 %v5402
    %v5487 = vpop.f32.mrf.mxu0
    %v5488 = vadd.f32 0.0, %v5487
    %v5489 = vpop.f32.mrf.mxu0
    %v5490 = vpop.f32.mrf.mxu0
    %v5491 = vadd.f32 0.0, %v5490
    %v5492 = vpop.f32.mrf.mxu0
    %5493 = vmatprep.mubr.bf16.mxu0 0
    %5494 = vmatmul.mubr.bf16.gmra.mxu0 %v5405
    %v5495 = vpop.f32.mrf.mxu0
    %v5496 = vadd.f32 0.0, %v5495
    %v5497 = vpop.f32.mrf.mxu0
    %v5498 = vpop.f32.mrf.mxu0
    %v5499 = vadd.f32 0.0, %v5498
    %v5500 = vpop.f32.mrf.mxu0
    %5501 = vmatprep.mubr.bf16.mxu0 0
    %5502 = vmatmul.mubr.bf16.gmra.mxu0 %v5408
    %v5503 = vpop.f32.mrf.mxu0
    %v5504 = vadd.f32 0.0, %v5503
    %v5505 = vpop.f32.mrf.mxu0
    %v5506 = vpop.f32.mrf.mxu0
    %v5507 = vadd.f32 0.0, %v5506
    %v5508 = vpop.f32.mrf.mxu0
    %5509 = vdwg.mxu0
    %v5510 = vadd.f32 %v5368, %v5448
    %v5511 = vadd.f32 %v5369, %v5451
    %v5512 = vadd.f32 %v5370, %v5456
    %v5513 = vadd.f32 %v5371, %v5459
    %v5514 = vadd.f32 %v5372, %v5464
    %v5515 = vadd.f32 %v5373, %v5467
    %v5516 = vadd.f32 %v5374, %v5472
    %v5517 = vadd.f32 %v5375, %v5475
    %v5518 = vadd.f32 %v5376, %v5480
    %v5519 = vadd.f32 %v5377, %v5483
    %v5520 = vadd.f32 %v5378, %v5488
    %v5521 = vadd.f32 %v5379, %v5491
    %v5522 = vadd.f32 %v5380, %v5496
    %v5523 = vadd.f32 %v5381, %v5499
    %v5524 = vadd.f32 %v5382, %v5504
    %v5525 = vadd.f32 %v5383, %v5507
    %s5526 = scalar_lea.vmem %s5, 32
    %v5527 = vld [vmem:[%s5526] sm:$0xf]
    %v5529 = vsel %vm702, %v4415, 0
    %v5532 = vsel %vm702, %v4416, 0
    %v5535 = vsel %vm702, %v4417, 0
    %v5538 = vsel %vm702, %v4418, 0
    %v5541 = vsel %vm702, %v4419, 0
    %v5544 = vsel %vm702, %v4420, 0
    %v5547 = vsel %vm702, %v4421, 0
    %v5550 = vsel %vm702, %v4422, 0
    %v5553 = vsel %vm404, %v5527, 0
    %5555 = vmatprep.subr.bf16.mxu0 0
    %5556 = vmatpush1.bf16.msra.mxu0 0
    %5557 = vmatprep.subr.bf16.mxu0 0
    %5558 = vmatpush1.bf16.msra.mxu0 0
    %5559 = vmatprep.subr.bf16.mxu0 0
    %5560 = vmatpush1.bf16.msra.mxu0 0
    %5561 = vmatprep.subr.bf16.mxu0 0
    %5562 = vmatpush1.bf16.msra.mxu0 0
    %5563 = vmatprep.subr.bf16.mxu0 0
    %5564 = vmatpush1.bf16.msra.mxu0 0
    %5565 = vmatprep.subr.bf16.mxu0 0
    %5566 = vmatpush1.bf16.msra.mxu0 0
    %5567 = vmatprep.subr.bf16.mxu0 0
    %5568 = vmatpush1.bf16.msra.mxu0 0
    %5569 = vmatprep.subr.bf16.mxu0 0
    %5570 = vmatpush1.bf16.msra.mxu0 %v5553
    %5571 = vmatprep.subr.bf16.mxu0 0
    %5572 = vmatpush2.bf16.msra.mxu0 0
    %5573 = vmatprep.subr.bf16.mxu0 0
    %5574 = vmatpush2.bf16.msra.mxu0 0
    %5575 = vmatprep.subr.bf16.mxu0 0
    %5576 = vmatpush2.bf16.msra.mxu0 0
    %5577 = vmatprep.subr.bf16.mxu0 0
    %5578 = vmatpush2.bf16.msra.mxu0 0
    %5579 = vmatprep.subr.bf16.mxu0 0
    %5580 = vmatpush2.bf16.msra.mxu0 0
    %5581 = vmatprep.subr.bf16.mxu0 0
    %5582 = vmatpush2.bf16.msra.mxu0 0
    %5583 = vmatprep.subr.bf16.mxu0 0
    %5584 = vmatpush2.bf16.msra.mxu0 0
    %5585 = vmatprep.subr.bf16.mxu0 0
    %5586 = vmatpush2.bf16.msra.mxu0 0
    %5587 = vmatprep.mubr.bf16.mxu0 0
    %5588 = vmatmul.mubr.bf16.gmra.mxu0 %v5529
    %v5589 = vpop.f32.mrf.mxu0
    %v5590 = vadd.f32 0.0, %v5589
    %v5591 = vpop.f32.mrf.mxu0
    %v5592 = vpop.f32.mrf.mxu0
    %v5593 = vadd.f32 0.0, %v5592
    %v5594 = vpop.f32.mrf.mxu0
    %5595 = vmatprep.mubr.bf16.mxu0 0
    %5596 = vmatmul.mubr.bf16.gmra.mxu0 %v5532
    %v5597 = vpop.f32.mrf.mxu0
    %v5598 = vadd.f32 0.0, %v5597
    %v5599 = vpop.f32.mrf.mxu0
    %v5600 = vpop.f32.mrf.mxu0
    %v5601 = vadd.f32 0.0, %v5600
    %v5602 = vpop.f32.mrf.mxu0
    %5603 = vmatprep.mubr.bf16.mxu0 0
    %5604 = vmatmul.mubr.bf16.gmra.mxu0 %v5535
    %v5605 = vpop.f32.mrf.mxu0
    %v5606 = vadd.f32 0.0, %v5605
    %v5607 = vpop.f32.mrf.mxu0
    %v5608 = vpop.f32.mrf.mxu0
    %v5609 = vadd.f32 0.0, %v5608
    %v5610 = vpop.f32.mrf.mxu0
    %5611 = vmatprep.mubr.bf16.mxu0 0
    %5612 = vmatmul.mubr.bf16.gmra.mxu0 %v5538
    %v5613 = vpop.f32.mrf.mxu0
    %v5614 = vadd.f32 0.0, %v5613
    %v5615 = vpop.f32.mrf.mxu0
    %v5616 = vpop.f32.mrf.mxu0
    %v5617 = vadd.f32 0.0, %v5616
    %v5618 = vpop.f32.mrf.mxu0
    %5619 = vmatprep.mubr.bf16.mxu0 0
    %5620 = vmatmul.mubr.bf16.gmra.mxu0 %v5541
    %v5621 = vpop.f32.mrf.mxu0
    %v5622 = vadd.f32 0.0, %v5621
    %v5623 = vpop.f32.mrf.mxu0
    %v5624 = vpop.f32.mrf.mxu0
    %v5625 = vadd.f32 0.0, %v5624
    %v5626 = vpop.f32.mrf.mxu0
    %5627 = vmatprep.mubr.bf16.mxu0 0
    %5628 = vmatmul.mubr.bf16.gmra.mxu0 %v5544
    %v5629 = vpop.f32.mrf.mxu0
    %v5630 = vadd.f32 0.0, %v5629
    %v5631 = vpop.f32.mrf.mxu0
    %v5632 = vpop.f32.mrf.mxu0
    %v5633 = vadd.f32 0.0, %v5632
    %v5634 = vpop.f32.mrf.mxu0
    %5635 = vmatprep.mubr.bf16.mxu0 0
    %5636 = vmatmul.mubr.bf16.gmra.mxu0 %v5547
    %v5637 = vpop.f32.mrf.mxu0
    %v5638 = vadd.f32 0.0, %v5637
    %v5639 = vpop.f32.mrf.mxu0
    %v5640 = vpop.f32.mrf.mxu0
    %v5641 = vadd.f32 0.0, %v5640
    %v5642 = vpop.f32.mrf.mxu0
    %5643 = vmatprep.mubr.bf16.mxu0 0
    %5644 = vmatmul.mubr.bf16.gmra.mxu0 %v5550
    %v5645 = vpop.f32.mrf.mxu0
    %v5646 = vadd.f32 0.0, %v5645
    %v5647 = vpop.f32.mrf.mxu0
    %v5648 = vpop.f32.mrf.mxu0
    %v5649 = vadd.f32 0.0, %v5648
    %v5650 = vpop.f32.mrf.mxu0
    %5651 = vdwg.mxu0
    %v5652 = vadd.f32 %v5510, %v5590
    %v5653 = vadd.f32 %v5511, %v5593
    %v5654 = vadd.f32 %v5512, %v5598
    %v5655 = vadd.f32 %v5513, %v5601
    %v5656 = vadd.f32 %v5514, %v5606
    %v5657 = vadd.f32 %v5515, %v5609
    %v5658 = vadd.f32 %v5516, %v5614
    %v5659 = vadd.f32 %v5517, %v5617
    %v5660 = vadd.f32 %v5518, %v5622
    %v5661 = vadd.f32 %v5519, %v5625
    %v5662 = vadd.f32 %v5520, %v5630
    %v5663 = vadd.f32 %v5521, %v5633
    %v5664 = vadd.f32 %v5522, %v5638
    %v5665 = vadd.f32 %v5523, %v5641
    %v5666 = vadd.f32 %v5524, %v5646
    %v5667 = vadd.f32 %v5525, %v5649
    %v5668 = vld [vmem:[%s6] sm:$0x1]
    %v5669 = vld [vmem:[%s7] sm:$0x1]
    %vm5670 = vcmask 130048
    %v5671 = vsel %vm5670, %v5652, 0.0
    %v5672 = vsel %vm5670, %v5653, 0.0
    %v5673 = vadd.f32 %v5671, %v5672
    %v5674 = vsel %vm5670, %v5654, 0.0
    %v5675 = vadd.f32 %v5673, %v5674
    %v5676 = vsel %vm5670, %v5655, 0.0
    %v5677 = vadd.f32 %v5675, %v5676
    %v5678 = vsel %vm5670, %v5656, 0.0
    %v5679 = vadd.f32 %v5677, %v5678
    %v5680 = vsel %vm5670, %v5657, 0.0
    %v5681 = vadd.f32 %v5679, %v5680
    %v5682 = vsel %vm5670, %v5658, 0.0
    %v5683 = vadd.f32 %v5681, %v5682
    %v5684 = vsel %vm5670, %v5659, 0.0
    %v5685 = vadd.f32 %v5683, %v5684
    %v5686 = vsel %vm5670, %v5660, 0.0
    %v5687 = vadd.f32 %v5685, %v5686
    %v5688 = vsel %vm5670, %v5661, 0.0
    %v5689 = vadd.f32 %v5687, %v5688
    %v5690 = vsel %vm5670, %v5662, 0.0
    %v5691 = vadd.f32 %v5689, %v5690
    %v5692 = vsel %vm5670, %v5663, 0.0
    %v5693 = vadd.f32 %v5691, %v5692
    %v5694 = vsel %vm5670, %v5664, 0.0
    %v5695 = vadd.f32 %v5693, %v5694
    %v5696 = vsel %vm5670, %v5665, 0.0
    %v5697 = vadd.f32 %v5695, %v5696
    %v5698 = vsel %vm5670, %v5666, 0.0
    %v5699 = vadd.f32 %v5697, %v5698
    %v5700 = vsel %vm5670, %v5667, 0.0
    %v5701 = vadd.f32 %v5699, %v5700
    %v5702 = vrot.slane %v5701, 4
    %v5703 = vadd.f32 %v5701, %v5702
    %v5704 = vrot.slane %v5703, 2
    %v5705 = vadd.f32 %v5703, %v5704
    %v5706 = vrot.slane %v5705, 1
    %v5707 = vadd.f32 %v5705, %v5706
    %v5708 = vrcp.pop 128.0
    %v5709 = vmul.f32 %v5707, %v5708
    %v5710 = vsub.f32 %v5652, %v5709
    %v5711 = vsub.f32 %v5653, %v5709
    %v5712 = vsub.f32 %v5654, %v5709
    %v5713 = vsub.f32 %v5655, %v5709
    %v5714 = vsub.f32 %v5656, %v5709
    %v5715 = vsub.f32 %v5657, %v5709
    %v5716 = vsub.f32 %v5658, %v5709
    %v5717 = vsub.f32 %v5659, %v5709
    %v5718 = vsub.f32 %v5660, %v5709
    %v5719 = vsub.f32 %v5661, %v5709
    %v5720 = vsub.f32 %v5662, %v5709
    %v5721 = vsub.f32 %v5663, %v5709
    %v5722 = vsub.f32 %v5664, %v5709
    %v5723 = vsub.f32 %v5665, %v5709
    %v5724 = vsub.f32 %v5666, %v5709
    %v5725 = vsub.f32 %v5667, %v5709
    %v5726 = vmul.f32 %v5710, %v5710
    %v5727 = vmul.f32 %v5711, %v5711
    %v5728 = vmul.f32 %v5712, %v5712
    %v5729 = vmul.f32 %v5713, %v5713
    %v5730 = vmul.f32 %v5714, %v5714
    %v5731 = vmul.f32 %v5715, %v5715
    %v5732 = vmul.f32 %v5716, %v5716
    %v5733 = vmul.f32 %v5717, %v5717
    %v5734 = vmul.f32 %v5718, %v5718
    %v5735 = vmul.f32 %v5719, %v5719
    %v5736 = vmul.f32 %v5720, %v5720
    %v5737 = vmul.f32 %v5721, %v5721
    %v5738 = vmul.f32 %v5722, %v5722
    %v5739 = vmul.f32 %v5723, %v5723
    %v5740 = vmul.f32 %v5724, %v5724
    %v5741 = vmul.f32 %v5725, %v5725
    %v5742 = vsel %vm5670, %v5726, 0.0
    %v5743 = vsel %vm5670, %v5727, 0.0
    %v5744 = vadd.f32 %v5742, %v5743
    %v5745 = vsel %vm5670, %v5728, 0.0
    %v5746 = vadd.f32 %v5744, %v5745
    %v5747 = vsel %vm5670, %v5729, 0.0
    %v5748 = vadd.f32 %v5746, %v5747
    %v5749 = vsel %vm5670, %v5730, 0.0
    %v5750 = vadd.f32 %v5748, %v5749
    %v5751 = vsel %vm5670, %v5731, 0.0
    %v5752 = vadd.f32 %v5750, %v5751
    %v5753 = vsel %vm5670, %v5732, 0.0
    %v5754 = vadd.f32 %v5752, %v5753
    %v5755 = vsel %vm5670, %v5733, 0.0
    %v5756 = vadd.f32 %v5754, %v5755
    %v5757 = vsel %vm5670, %v5734, 0.0
    %v5758 = vadd.f32 %v5756, %v5757
    %v5759 = vsel %vm5670, %v5735, 0.0
    %v5760 = vadd.f32 %v5758, %v5759
    %v5761 = vsel %vm5670, %v5736, 0.0
    %v5762 = vadd.f32 %v5760, %v5761
    %v5763 = vsel %vm5670, %v5737, 0.0
    %v5764 = vadd.f32 %v5762, %v5763
    %v5765 = vsel %vm5670, %v5738, 0.0
    %v5766 = vadd.f32 %v5764, %v5765
    %v5767 = vsel %vm5670, %v5739, 0.0
    %v5768 = vadd.f32 %v5766, %v5767
    %v5769 = vsel %vm5670, %v5740, 0.0
    %v5770 = vadd.f32 %v5768, %v5769
    %v5771 = vsel %vm5670, %v5741, 0.0
    %v5772 = vadd.f32 %v5770, %v5771
    %v5773 = vrot.slane %v5772, 4
    %v5774 = vadd.f32 %v5772, %v5773
    %v5775 = vrot.slane %v5774, 2
    %v5776 = vadd.f32 %v5774, %v5775
    %v5777 = vrot.slane %v5776, 1
    %v5778 = vadd.f32 %v5776, %v5777
    %v5779 = vmul.f32 %v5778, %v5708
    %v5780 = vadd.f32 %v5779, 1e-05
    %v5781 = vrsqrt.pop %v5780
    %v5782 = vmul.f32 %v5668, %v5781
    %v5783 = vmul.f32 %v5782, %v5709
    %v5784 = vsub.f32 %v5669, %v5783
    %v5786 = vlaneseq
    %v5787 = vshrl.u32 %v5786, 7
    %v5788 = vsub.s32 0, %v5787
    %v5789 = vrot.slane %v5782, %v5788
    %v5791 = vmul.f32 %v5652, %v5789
    %v5792 = vmul.f32 %v5653, %v5789
    %v5793 = vmul.f32 %v5654, %v5789
    %v5794 = vmul.f32 %v5655, %v5789
    %v5795 = vmul.f32 %v5656, %v5789
    %v5796 = vmul.f32 %v5657, %v5789
    %v5797 = vmul.f32 %v5658, %v5789
    %v5798 = vmul.f32 %v5659, %v5789
    %v5799 = vmul.f32 %v5660, %v5789
    %v5800 = vmul.f32 %v5661, %v5789
    %v5801 = vmul.f32 %v5662, %v5789
    %v5802 = vmul.f32 %v5663, %v5789
    %v5803 = vmul.f32 %v5664, %v5789
    %v5804 = vmul.f32 %v5665, %v5789
    %v5805 = vmul.f32 %v5666, %v5789
    %v5806 = vmul.f32 %v5667, %v5789
    %v5808 = vlaneseq
    %v5809 = vshrl.u32 %v5808, 7
    %v5810 = vsub.s32 0, %v5809
    %v5811 = vrot.slane %v5784, %v5810
    %v5813 = vadd.f32 %v5791, %v5811
    %v5814 = vadd.f32 %v5792, %v5811
    %v5815 = vadd.f32 %v5793, %v5811
    %v5816 = vadd.f32 %v5794, %v5811
    %v5817 = vadd.f32 %v5795, %v5811
    %v5818 = vadd.f32 %v5796, %v5811
    %v5819 = vadd.f32 %v5797, %v5811
    %v5820 = vadd.f32 %v5798, %v5811
    %v5821 = vadd.f32 %v5799, %v5811
    %v5822 = vadd.f32 %v5800, %v5811
    %v5823 = vadd.f32 %v5801, %v5811
    %v5824 = vadd.f32 %v5802, %v5811
    %v5825 = vadd.f32 %v5803, %v5811
    %v5826 = vadd.f32 %v5804, %v5811
    %v5827 = vadd.f32 %v5805, %v5811
    %v5828 = vadd.f32 %v5806, %v5811
    %v5829 = vmul.f32 %v5813, 0.01
    %v5830 = vmul.f32 %v5814, 0.01
    %v5831 = vmul.f32 %v5815, 0.01
    %v5832 = vmul.f32 %v5816, 0.01
    %v5833 = vmul.f32 %v5817, 0.01
    %v5834 = vmul.f32 %v5818, 0.01
    %v5835 = vmul.f32 %v5819, 0.01
    %v5836 = vmul.f32 %v5820, 0.01
    %v5837 = vmul.f32 %v5821, 0.01
    %v5838 = vmul.f32 %v5822, 0.01
    %v5839 = vmul.f32 %v5823, 0.01
    %v5840 = vmul.f32 %v5824, 0.01
    %v5841 = vmul.f32 %v5825, 0.01
    %v5842 = vmul.f32 %v5826, 0.01
    %v5843 = vmul.f32 %v5827, 0.01
    %v5844 = vmul.f32 %v5828, 0.01
    %v5845 = vmax.f32 %v5813, %v5829
    %v5846 = vmax.f32 %v5814, %v5830
    %v5847 = vmax.f32 %v5815, %v5831
    %v5848 = vmax.f32 %v5816, %v5832
    %v5849 = vmax.f32 %v5817, %v5833
    %v5850 = vmax.f32 %v5818, %v5834
    %v5851 = vmax.f32 %v5819, %v5835
    %v5852 = vmax.f32 %v5820, %v5836
    %v5853 = vmax.f32 %v5821, %v5837
    %v5854 = vmax.f32 %v5822, %v5838
    %v5855 = vmax.f32 %v5823, %v5839
    %v5856 = vmax.f32 %v5824, %v5840
    %v5857 = vmax.f32 %v5825, %v5841
    %v5858 = vmax.f32 %v5826, %v5842
    %v5859 = vmax.f32 %v5827, %v5843
    %v5860 = vmax.f32 %v5828, %v5844
    %v5861 = vpack.c.bf16 %v5846, %v5845
    %v5862 = vpack.c.bf16 %v5848, %v5847
    %v5863 = vpack.c.bf16 %v5850, %v5849
    %v5864 = vpack.c.bf16 %v5852, %v5851
    %v5865 = vpack.c.bf16 %v5854, %v5853
    %v5866 = vpack.c.bf16 %v5856, %v5855
    %v5867 = vpack.c.bf16 %v5858, %v5857
    %v5868 = vpack.c.bf16 %v5860, %v5859
    %v5869 = vld [vmem:[%s8] sm:$0xf]
    %v5870 = vld [vmem:[%s8 + $0x4] sm:$0xf]
    %v5871 = vld [vmem:[%s8 + $0x8] sm:$0xf]
    %v5872 = vld [vmem:[%s8 + $0xc] sm:$0xf]
    %v5873 = vld [vmem:[%s8 + $0x10] sm:$0xf]
    %v5874 = vld [vmem:[%s8 + $0x14] sm:$0xf]
    %v5875 = vld [vmem:[%s8 + $0x18] sm:$0xf]
    %v5876 = vld [vmem:[%s8 + $0x1c] sm:$0xf]
    %v5877 = vld [vmem:[%s8 + $0x20] sm:$0xf]
    %v5878 = vld [vmem:[%s8 + $0x24] sm:$0xf]
    %v5879 = vld [vmem:[%s8 + $0x28] sm:$0xf]
    %v5880 = vld [vmem:[%s8 + $0x2c] sm:$0xf]
    %v5881 = vld [vmem:[%s8 + $0x30] sm:$0xf]
    %v5882 = vld [vmem:[%s8 + $0x34] sm:$0xf]
    %v5883 = vld [vmem:[%s8 + $0x38] sm:$0xf]
    %v5884 = vld [vmem:[%s8 + $0x3c] sm:$0xf]
    %v5885 = vld [vmem:[%s8 + $0x40] sm:$0xf]
    %v5886 = vld [vmem:[%s8 + $0x44] sm:$0xf]
    %v5887 = vld [vmem:[%s8 + $0x48] sm:$0xf]
    %v5888 = vld [vmem:[%s8 + $0x4c] sm:$0xf]
    %v5889 = vld [vmem:[%s8 + $0x50] sm:$0xf]
    %v5890 = vld [vmem:[%s8 + $0x54] sm:$0xf]
    %v5891 = vld [vmem:[%s8 + $0x58] sm:$0xf]
    %v5892 = vld [vmem:[%s8 + $0x5c] sm:$0xf]
    %v5893 = vld [vmem:[%s8 + $0x60] sm:$0xf]
    %v5894 = vld [vmem:[%s8 + $0x64] sm:$0xf]
    %v5895 = vld [vmem:[%s8 + $0x68] sm:$0xf]
    %v5896 = vld [vmem:[%s8 + $0x6c] sm:$0xf]
    %v5897 = vld [vmem:[%s8 + $0x70] sm:$0xf]
    %v5898 = vld [vmem:[%s8 + $0x74] sm:$0xf]
    %v5899 = vld [vmem:[%s8 + $0x78] sm:$0xf]
    %v5900 = vld [vmem:[%s8 + $0x7c] sm:$0xf]
    %v5901 = vld [vmem:[%s8 + $0x80] sm:$0xf]
    %v5902 = vld [vmem:[%s8 + $0x84] sm:$0xf]
    %v5903 = vld [vmem:[%s8 + $0x88] sm:$0xf]
    %v5904 = vld [vmem:[%s8 + $0x8c] sm:$0xf]
    %v5941 = vunpack.c.l.b16 %v5869
    %v5942 = vunpack.c.l.b16 %v5870
    %v5943 = vunpack.c.l.b16 %v5871
    %v5944 = vunpack.c.l.b16 %v5872
    %v5945 = vunpack.c.l.b16 %v5873
    %v5946 = vunpack.c.l.b16 %v5874
    %v5947 = vunpack.c.l.b16 %v5875
    %v5948 = vunpack.c.l.b16 %v5876
    %v5949 = vunpack.c.l.b16 %v5877
    %v5950 = vunpack.c.l.b16 %v5878
    %v5951 = vunpack.c.l.b16 %v5879
    %v5952 = vunpack.c.l.b16 %v5880
    %v5953 = vunpack.c.l.b16 %v5881
    %v5954 = vunpack.c.l.b16 %v5882
    %v5955 = vunpack.c.l.b16 %v5883
    %v5956 = vunpack.c.l.b16 %v5884
    %v5957 = vunpack.c.l.b16 %v5885
    %v5958 = vunpack.c.l.b16 %v5886
    %v5959 = vunpack.c.l.b16 %v5887
    %v5960 = vunpack.c.l.b16 %v5888
    %v5961 = vunpack.c.l.b16 %v5889
    %v5962 = vunpack.c.l.b16 %v5890
    %v5963 = vunpack.c.l.b16 %v5891
    %v5964 = vunpack.c.l.b16 %v5892
    %v5965 = vunpack.c.l.b16 %v5893
    %v5966 = vunpack.c.l.b16 %v5894
    %v5967 = vunpack.c.l.b16 %v5895
    %v5968 = vunpack.c.l.b16 %v5896
    %v5969 = vunpack.c.l.b16 %v5897
    %v5970 = vunpack.c.l.b16 %v5898
    %v5971 = vunpack.c.l.b16 %v5899
    %v5972 = vunpack.c.l.b16 %v5900
    %v5973 = vunpack.c.l.b16 %v5901
    %v5974 = vunpack.c.l.b16 %v5902
    %v5975 = vunpack.c.l.b16 %v5903
    %v5976 = vunpack.c.l.b16 %v5904
    %v5977 = vpack.c.b16 %v5942, %v5941
    %v5978 = vpack.c.b16 %v5944, %v5943
    %v5979 = vpack.c.b16 %v5946, %v5945
    %v5980 = vpack.c.b16 %v5948, %v5947
    %v5981 = vpack.c.b16 %v5950, %v5949
    %v5982 = vpack.c.b16 %v5952, %v5951
    %v5983 = vpack.c.b16 %v5954, %v5953
    %v5984 = vpack.c.b16 %v5956, %v5955
    %v5985 = vpack.c.b16 %v5958, %v5957
    %v5986 = vpack.c.b16 %v5960, %v5959
    %v5987 = vpack.c.b16 %v5962, %v5961
    %v5988 = vpack.c.b16 %v5964, %v5963
    %v5989 = vpack.c.b16 %v5966, %v5965
    %v5990 = vpack.c.b16 %v5968, %v5967
    %v5991 = vpack.c.b16 %v5970, %v5969
    %v5992 = vpack.c.b16 %v5972, %v5971
    %v5993 = vpack.c.b16 %v5974, %v5973
    %v5994 = vpack.c.b16 %v5976, %v5975
    %6013 = vmatprep.subr.bf16.mxu0 0
    %6014 = vmatpush1.bf16.msra.mxu0 %v5868
    %6015 = vmatprep.subr.bf16.mxu0 0
    %6016 = vmatpush1.bf16.msra.mxu0 %v5867
    %6017 = vmatprep.subr.bf16.mxu0 0
    %6018 = vmatpush1.bf16.msra.mxu0 %v5866
    %6019 = vmatprep.subr.bf16.mxu0 0
    %6020 = vmatpush1.bf16.msra.mxu0 %v5865
    %6021 = vmatprep.subr.bf16.mxu0 0
    %6022 = vmatpush1.bf16.msra.mxu0 %v5864
    %6023 = vmatprep.subr.bf16.mxu0 0
    %6024 = vmatpush1.bf16.msra.mxu0 %v5863
    %6025 = vmatprep.subr.bf16.mxu0 0
    %6026 = vmatpush1.bf16.msra.mxu0 %v5862
    %6027 = vmatprep.subr.bf16.mxu0 0
    %6028 = vmatpush1.bf16.msra.mxu0 %v5861
    %6029 = vmatprep.subr.bf16.mxu0 0
    %6030 = vmatpush2.bf16.msra.mxu0 0
    %6031 = vmatprep.subr.bf16.mxu0 0
    %6032 = vmatpush2.bf16.msra.mxu0 0
    %6033 = vmatprep.subr.bf16.mxu0 0
    %6034 = vmatpush2.bf16.msra.mxu0 0
    %6035 = vmatprep.subr.bf16.mxu0 0
    %6036 = vmatpush2.bf16.msra.mxu0 0
    %6037 = vmatprep.subr.bf16.mxu0 0
    %6038 = vmatpush2.bf16.msra.mxu0 0
    %6039 = vmatprep.subr.bf16.mxu0 0
    %6040 = vmatpush2.bf16.msra.mxu0 0
    %6041 = vmatprep.subr.bf16.mxu0 0
    %6042 = vmatpush2.bf16.msra.mxu0 0
    %6043 = vmatprep.subr.bf16.mxu0 0
    %6044 = vmatpush2.bf16.msra.mxu0 0
    %6045 = vmatprep.mubr.bf16.mxu0 0
    %6046 = vmatmul.mubr.bf16.gmra.mxu0 %v5977
    %v6047 = vpop.f32.mrf.mxu0
    %v6048 = vadd.f32 0.0, %v6047
    %v6049 = vpop.f32.mrf.mxu0
    %v6050 = vpop.f32.mrf.mxu0
    %v6051 = vadd.f32 0.0, %v6050
    %v6052 = vpop.f32.mrf.mxu0
    %6053 = vmatprep.mubr.bf16.mxu0 0
    %6054 = vmatmul.mubr.bf16.gmra.mxu0 %v5978
    %v6055 = vpop.f32.mrf.mxu0
    %v6056 = vadd.f32 0.0, %v6055
    %v6057 = vpop.f32.mrf.mxu0
    %v6058 = vpop.f32.mrf.mxu0
    %v6059 = vadd.f32 0.0, %v6058
    %v6060 = vpop.f32.mrf.mxu0
    %6061 = vmatprep.mubr.bf16.mxu0 0
    %6062 = vmatmul.mubr.bf16.gmra.mxu0 %v5979
    %v6063 = vpop.f32.mrf.mxu0
    %v6064 = vadd.f32 0.0, %v6063
    %v6065 = vpop.f32.mrf.mxu0
    %v6066 = vpop.f32.mrf.mxu0
    %v6067 = vadd.f32 0.0, %v6066
    %v6068 = vpop.f32.mrf.mxu0
    %6069 = vmatprep.mubr.bf16.mxu0 0
    %6070 = vmatmul.mubr.bf16.gmra.mxu0 %v5980
    %v6071 = vpop.f32.mrf.mxu0
    %v6072 = vadd.f32 0.0, %v6071
    %v6073 = vpop.f32.mrf.mxu0
    %v6074 = vpop.f32.mrf.mxu0
    %v6075 = vadd.f32 0.0, %v6074
    %v6076 = vpop.f32.mrf.mxu0
    %6077 = vmatprep.mubr.bf16.mxu0 0
    %6078 = vmatmul.mubr.bf16.gmra.mxu0 %v5981
    %v6079 = vpop.f32.mrf.mxu0
    %v6080 = vadd.f32 0.0, %v6079
    %v6081 = vpop.f32.mrf.mxu0
    %v6082 = vpop.f32.mrf.mxu0
    %v6083 = vadd.f32 0.0, %v6082
    %v6084 = vpop.f32.mrf.mxu0
    %6085 = vmatprep.mubr.bf16.mxu0 0
    %6086 = vmatmul.mubr.bf16.gmra.mxu0 %v5982
    %v6087 = vpop.f32.mrf.mxu0
    %v6088 = vadd.f32 0.0, %v6087
    %v6089 = vpop.f32.mrf.mxu0
    %v6090 = vpop.f32.mrf.mxu0
    %v6091 = vadd.f32 0.0, %v6090
    %v6092 = vpop.f32.mrf.mxu0
    %6093 = vmatprep.mubr.bf16.mxu0 0
    %6094 = vmatmul.mubr.bf16.gmra.mxu0 %v5983
    %v6095 = vpop.f32.mrf.mxu0
    %v6096 = vadd.f32 0.0, %v6095
    %v6097 = vpop.f32.mrf.mxu0
    %v6098 = vpop.f32.mrf.mxu0
    %v6099 = vadd.f32 0.0, %v6098
    %v6100 = vpop.f32.mrf.mxu0
    %6101 = vmatprep.mubr.bf16.mxu0 0
    %6102 = vmatmul.mubr.bf16.gmra.mxu0 %v5984
    %v6103 = vpop.f32.mrf.mxu0
    %v6104 = vadd.f32 0.0, %v6103
    %v6105 = vpop.f32.mrf.mxu0
    %v6106 = vpop.f32.mrf.mxu0
    %v6107 = vadd.f32 0.0, %v6106
    %v6108 = vpop.f32.mrf.mxu0
    %6109 = vmatprep.mubr.bf16.mxu0 0
    %6110 = vmatmul.mubr.bf16.gmra.mxu0 %v5985
    %v6111 = vpop.f32.mrf.mxu0
    %v6112 = vadd.f32 0.0, %v6111
    %v6113 = vpop.f32.mrf.mxu0
    %v6114 = vpop.f32.mrf.mxu0
    %v6115 = vadd.f32 0.0, %v6114
    %v6116 = vpop.f32.mrf.mxu0
    %6117 = vmatprep.mubr.bf16.mxu0 0
    %6118 = vmatmul.mubr.bf16.gmra.mxu0 %v5986
    %v6119 = vpop.f32.mrf.mxu0
    %v6120 = vadd.f32 0.0, %v6119
    %v6121 = vpop.f32.mrf.mxu0
    %v6122 = vpop.f32.mrf.mxu0
    %v6123 = vadd.f32 0.0, %v6122
    %v6124 = vpop.f32.mrf.mxu0
    %6125 = vmatprep.mubr.bf16.mxu0 0
    %6126 = vmatmul.mubr.bf16.gmra.mxu0 %v5987
    %v6127 = vpop.f32.mrf.mxu0
    %v6128 = vadd.f32 0.0, %v6127
    %v6129 = vpop.f32.mrf.mxu0
    %v6130 = vpop.f32.mrf.mxu0
    %v6131 = vadd.f32 0.0, %v6130
    %v6132 = vpop.f32.mrf.mxu0
    %6133 = vmatprep.mubr.bf16.mxu0 0
    %6134 = vmatmul.mubr.bf16.gmra.mxu0 %v5988
    %v6135 = vpop.f32.mrf.mxu0
    %v6136 = vadd.f32 0.0, %v6135
    %v6137 = vpop.f32.mrf.mxu0
    %v6138 = vpop.f32.mrf.mxu0
    %v6139 = vadd.f32 0.0, %v6138
    %v6140 = vpop.f32.mrf.mxu0
    %6141 = vmatprep.mubr.bf16.mxu0 0
    %6142 = vmatmul.mubr.bf16.gmra.mxu0 %v5989
    %v6143 = vpop.f32.mrf.mxu0
    %v6144 = vadd.f32 0.0, %v6143
    %v6145 = vpop.f32.mrf.mxu0
    %v6146 = vpop.f32.mrf.mxu0
    %v6147 = vadd.f32 0.0, %v6146
    %v6148 = vpop.f32.mrf.mxu0
    %6149 = vmatprep.mubr.bf16.mxu0 0
    %6150 = vmatmul.mubr.bf16.gmra.mxu0 %v5990
    %v6151 = vpop.f32.mrf.mxu0
    %v6152 = vadd.f32 0.0, %v6151
    %v6153 = vpop.f32.mrf.mxu0
    %v6154 = vpop.f32.mrf.mxu0
    %v6155 = vadd.f32 0.0, %v6154
    %v6156 = vpop.f32.mrf.mxu0
    %6157 = vmatprep.mubr.bf16.mxu0 0
    %6158 = vmatmul.mubr.bf16.gmra.mxu0 %v5991
    %v6159 = vpop.f32.mrf.mxu0
    %v6160 = vadd.f32 0.0, %v6159
    %v6161 = vpop.f32.mrf.mxu0
    %v6162 = vpop.f32.mrf.mxu0
    %v6163 = vadd.f32 0.0, %v6162
    %v6164 = vpop.f32.mrf.mxu0
    %6165 = vmatprep.mubr.bf16.mxu0 0
    %6166 = vmatmul.mubr.bf16.gmra.mxu0 %v5992
    %v6167 = vpop.f32.mrf.mxu0
    %v6168 = vadd.f32 0.0, %v6167
    %v6169 = vpop.f32.mrf.mxu0
    %v6170 = vpop.f32.mrf.mxu0
    %v6171 = vadd.f32 0.0, %v6170
    %v6172 = vpop.f32.mrf.mxu0
    %6173 = vmatprep.mubr.bf16.mxu0 0
    %6174 = vmatmul.mubr.bf16.gmra.mxu0 %v5993
    %v6175 = vpop.f32.mrf.mxu0
    %v6176 = vadd.f32 0.0, %v6175
    %v6177 = vpop.f32.mrf.mxu0
    %v6178 = vpop.f32.mrf.mxu0
    %v6179 = vadd.f32 0.0, %v6178
    %v6180 = vpop.f32.mrf.mxu0
    %6181 = vmatprep.mubr.bf16.mxu0 0
    %6182 = vmatmul.mubr.bf16.gmra.mxu0 %v5994
    %v6183 = vpop.f32.mrf.mxu0
    %v6184 = vadd.f32 0.0, %v6183
    %v6185 = vpop.f32.mrf.mxu0
    %v6186 = vpop.f32.mrf.mxu0
    %v6187 = vadd.f32 0.0, %v6186
    %v6188 = vpop.f32.mrf.mxu0
    %6189 = vdwg.mxu0
    %v6190 = vpack.c.bf16 %v6051, %v6048
    %v6191 = vpack.c.bf16 %v6059, %v6056
    %v6192 = vpack.c.bf16 %v6067, %v6064
    %v6193 = vpack.c.bf16 %v6075, %v6072
    %v6194 = vpack.c.bf16 %v6083, %v6080
    %v6195 = vpack.c.bf16 %v6091, %v6088
    %v6196 = vpack.c.bf16 %v6099, %v6096
    %v6197 = vpack.c.bf16 %v6107, %v6104
    %v6198 = vpack.c.bf16 %v6115, %v6112
    %v6199 = vpack.c.bf16 %v6123, %v6120
    %v6200 = vpack.c.bf16 %v6131, %v6128
    %v6201 = vpack.c.bf16 %v6139, %v6136
    %v6202 = vpack.c.bf16 %v6147, %v6144
    %v6203 = vpack.c.bf16 %v6155, %v6152
    %v6204 = vpack.c.bf16 %v6163, %v6160
    %v6205 = vpack.c.bf16 %v6171, %v6168
    %v6206 = vpack.c.bf16 %v6179, %v6176
    %v6207 = vpack.c.bf16 %v6187, %v6184
    %v6208 = vld [vmem:[%s9] sm:$0xf]
    %v6209 = vld [vmem:[%s9 + $0x4] sm:$0xf]
    %s6210 = scalar_lea.vmem %s9, 8
    %v6211 = vld [vmem:[%s6210] sm:$0xf]
    %v6212 = vld [vmem:[%s6210 + $0x4] sm:$0xf]
    %v6215 = vunpack.c.l.b16 %v6211
    %v6216 = vunpack.c.l.b16 %v6212
    %v6217 = vpack.c.b16 %v6216, %v6215
    %v6220 = vsel %vm5670, %v6192, 0
    %v6223 = vsel %vm5670, %v6193, 0
    %6225 = vmatprep.subr.bf16.mxu0 0
    %6226 = vmatpush1.bf16.msra.mxu0 0
    %6227 = vmatprep.subr.bf16.mxu0 0
    %6228 = vmatpush1.bf16.msra.mxu0 0
    %6229 = vmatprep.subr.bf16.mxu0 0
    %6230 = vmatpush1.bf16.msra.mxu0 0
    %6231 = vmatprep.subr.bf16.mxu0 0
    %6232 = vmatpush1.bf16.msra.mxu0 0
    %6233 = vmatprep.subr.bf16.mxu0 0
    %6234 = vmatpush1.bf16.msra.mxu0 0
    %6235 = vmatprep.subr.bf16.mxu0 0
    %6236 = vmatpush1.bf16.msra.mxu0 0
    %6237 = vmatprep.subr.bf16.mxu0 0
    %6238 = vmatpush1.bf16.msra.mxu0 0
    %6239 = vmatprep.subr.bf16.mxu0 0
    %6240 = vmatpush1.bf16.msra.mxu0 %v6217
    %6241 = vmatprep.subr.bf16.mxu0 0
    %6242 = vmatpush2.bf16.msra.mxu0 0
    %6243 = vmatprep.subr.bf16.mxu0 0
    %6244 = vmatpush2.bf16.msra.mxu0 0
    %6245 = vmatprep.subr.bf16.mxu0 0
    %6246 = vmatpush2.bf16.msra.mxu0 0
    %6247 = vmatprep.subr.bf16.mxu0 0
    %6248 = vmatpush2.bf16.msra.mxu0 0
    %6249 = vmatprep.subr.bf16.mxu0 0
    %6250 = vmatpush2.bf16.msra.mxu0 0
    %6251 = vmatprep.subr.bf16.mxu0 0
    %6252 = vmatpush2.bf16.msra.mxu0 0
    %6253 = vmatprep.subr.bf16.mxu0 0
    %6254 = vmatpush2.bf16.msra.mxu0 0
    %6255 = vmatprep.subr.bf16.mxu0 0
    %6256 = vmatpush2.bf16.msra.mxu0 0
    %6257 = vmatprep.mubr.bf16.mxu0 0
    %6258 = vmatmul.mubr.bf16.gmra.mxu0 %v6220
    %v6259 = vpop.f32.mrf.mxu0
    %v6260 = vadd.f32 0.0, %v6259
    %v6261 = vpop.f32.mrf.mxu0
    %v6262 = vpop.f32.mrf.mxu0
    %v6263 = vadd.f32 0.0, %v6262
    %v6264 = vpop.f32.mrf.mxu0
    %6265 = vmatprep.mubr.bf16.mxu0 0
    %6266 = vmatmul.mubr.bf16.gmra.mxu0 %v6223
    %v6267 = vpop.f32.mrf.mxu0
    %v6268 = vadd.f32 0.0, %v6267
    %v6269 = vpop.f32.mrf.mxu0
    %v6270 = vpop.f32.mrf.mxu0
    %v6271 = vadd.f32 0.0, %v6270
    %v6272 = vpop.f32.mrf.mxu0
    %6273 = vdwg.mxu0
    %v6276 = vunpack.c.l.b16 %v6208
    %v6277 = vunpack.c.l.b16 %v6209
    %v6278 = vpack.c.b16 %v6277, %v6276
    %v6281 = vsel %vm5670, %v6190, 0
    %v6284 = vsel %vm5670, %v6191, 0
    %6286 = vmatprep.subr.bf16.mxu0 0
    %6287 = vmatpush1.bf16.msra.mxu0 0
    %6288 = vmatprep.subr.bf16.mxu0 0
    %6289 = vmatpush1.bf16.msra.mxu0 0
    %6290 = vmatprep.subr.bf16.mxu0 0
    %6291 = vmatpush1.bf16.msra.mxu0 0
    %6292 = vmatprep.subr.bf16.mxu0 0
    %6293 = vmatpush1.bf16.msra.mxu0 0
    %6294 = vmatprep.subr.bf16.mxu0 0
    %6295 = vmatpush1.bf16.msra.mxu0 0
    %6296 = vmatprep.subr.bf16.mxu0 0
    %6297 = vmatpush1.bf16.msra.mxu0 0
    %6298 = vmatprep.subr.bf16.mxu0 0
    %6299 = vmatpush1.bf16.msra.mxu0 0
    %6300 = vmatprep.subr.bf16.mxu0 0
    %6301 = vmatpush1.bf16.msra.mxu0 %v6278
    %6302 = vmatprep.subr.bf16.mxu0 0
    %6303 = vmatpush2.bf16.msra.mxu0 0
    %6304 = vmatprep.subr.bf16.mxu0 0
    %6305 = vmatpush2.bf16.msra.mxu0 0
    %6306 = vmatprep.subr.bf16.mxu0 0
    %6307 = vmatpush2.bf16.msra.mxu0 0
    %6308 = vmatprep.subr.bf16.mxu0 0
    %6309 = vmatpush2.bf16.msra.mxu0 0
    %6310 = vmatprep.subr.bf16.mxu0 0
    %6311 = vmatpush2.bf16.msra.mxu0 0
    %6312 = vmatprep.subr.bf16.mxu0 0
    %6313 = vmatpush2.bf16.msra.mxu0 0
    %6314 = vmatprep.subr.bf16.mxu0 0
    %6315 = vmatpush2.bf16.msra.mxu0 0
    %6316 = vmatprep.subr.bf16.mxu0 0
    %6317 = vmatpush2.bf16.msra.mxu0 0
    %6318 = vmatprep.mubr.bf16.mxu0 0
    %6319 = vmatmul.mubr.bf16.gmra.mxu0 %v6281
    %v6320 = vpop.f32.mrf.mxu0
    %v6321 = vadd.f32 %v6260, %v6320
    %v6322 = vpop.f32.mrf.mxu0
    %v6323 = vpop.f32.mrf.mxu0
    %v6324 = vadd.f32 %v6263, %v6323
    %v6325 = vpop.f32.mrf.mxu0
    %6326 = vmatprep.mubr.bf16.mxu0 0
    %6327 = vmatmul.mubr.bf16.gmra.mxu0 %v6284
    %v6328 = vpop.f32.mrf.mxu0
    %v6329 = vadd.f32 %v6268, %v6328
    %v6330 = vpop.f32.mrf.mxu0
    %v6331 = vpop.f32.mrf.mxu0
    %v6332 = vadd.f32 %v6271, %v6331
    %v6333 = vpop.f32.mrf.mxu0
    %6334 = vdwg.mxu0
    %s6335 = scalar_lea.vmem %s9, 16
    %v6336 = vld [vmem:[%s6335] sm:$0xf]
    %v6337 = vld [vmem:[%s6335 + $0x4] sm:$0xf]
    %v6340 = vunpack.c.l.b16 %v6336
    %v6341 = vunpack.c.l.b16 %v6337
    %v6342 = vpack.c.b16 %v6341, %v6340
    %v6345 = vsel %vm5670, %v6194, 0
    %v6348 = vsel %vm5670, %v6195, 0
    %6350 = vmatprep.subr.bf16.mxu0 0
    %6351 = vmatpush1.bf16.msra.mxu0 0
    %6352 = vmatprep.subr.bf16.mxu0 0
    %6353 = vmatpush1.bf16.msra.mxu0 0
    %6354 = vmatprep.subr.bf16.mxu0 0
    %6355 = vmatpush1.bf16.msra.mxu0 0
    %6356 = vmatprep.subr.bf16.mxu0 0
    %6357 = vmatpush1.bf16.msra.mxu0 0
    %6358 = vmatprep.subr.bf16.mxu0 0
    %6359 = vmatpush1.bf16.msra.mxu0 0
    %6360 = vmatprep.subr.bf16.mxu0 0
    %6361 = vmatpush1.bf16.msra.mxu0 0
    %6362 = vmatprep.subr.bf16.mxu0 0
    %6363 = vmatpush1.bf16.msra.mxu0 0
    %6364 = vmatprep.subr.bf16.mxu0 0
    %6365 = vmatpush1.bf16.msra.mxu0 %v6342
    %6366 = vmatprep.subr.bf16.mxu0 0
    %6367 = vmatpush2.bf16.msra.mxu0 0
    %6368 = vmatprep.subr.bf16.mxu0 0
    %6369 = vmatpush2.bf16.msra.mxu0 0
    %6370 = vmatprep.subr.bf16.mxu0 0
    %6371 = vmatpush2.bf16.msra.mxu0 0
    %6372 = vmatprep.subr.bf16.mxu0 0
    %6373 = vmatpush2.bf16.msra.mxu0 0
    %6374 = vmatprep.subr.bf16.mxu0 0
    %6375 = vmatpush2.bf16.msra.mxu0 0
    %6376 = vmatprep.subr.bf16.mxu0 0
    %6377 = vmatpush2.bf16.msra.mxu0 0
    %6378 = vmatprep.subr.bf16.mxu0 0
    %6379 = vmatpush2.bf16.msra.mxu0 0
    %6380 = vmatprep.subr.bf16.mxu0 0
    %6381 = vmatpush2.bf16.msra.mxu0 0
    %6382 = vmatprep.mubr.bf16.mxu0 0
    %6383 = vmatmul.mubr.bf16.gmra.mxu0 %v6345
    %v6384 = vpop.f32.mrf.mxu0
    %v6385 = vadd.f32 0.0, %v6384
    %v6386 = vpop.f32.mrf.mxu0
    %v6387 = vpop.f32.mrf.mxu0
    %v6388 = vadd.f32 0.0, %v6387
    %v6389 = vpop.f32.mrf.mxu0
    %6390 = vmatprep.mubr.bf16.mxu0 0
    %6391 = vmatmul.mubr.bf16.gmra.mxu0 %v6348
    %v6392 = vpop.f32.mrf.mxu0
    %v6393 = vadd.f32 0.0, %v6392
    %v6394 = vpop.f32.mrf.mxu0
    %v6395 = vpop.f32.mrf.mxu0
    %v6396 = vadd.f32 0.0, %v6395
    %v6397 = vpop.f32.mrf.mxu0
    %6398 = vdwg.mxu0
    %v6399 = vadd.f32 %v6321, %v6385
    %v6400 = vadd.f32 %v6324, %v6388
    %v6401 = vadd.f32 %v6329, %v6393
    %v6402 = vadd.f32 %v6332, %v6396
    %s6403 = scalar_lea.vmem %s9, 24
    %v6404 = vld [vmem:[%s6403] sm:$0xf]
    %v6405 = vld [vmem:[%s6403 + $0x4] sm:$0xf]
    %v6408 = vunpack.c.l.b16 %v6404
    %v6409 = vunpack.c.l.b16 %v6405
    %v6410 = vpack.c.b16 %v6409, %v6408
    %v6413 = vsel %vm5670, %v6196, 0
    %v6416 = vsel %vm5670, %v6197, 0
    %6418 = vmatprep.subr.bf16.mxu0 0
    %6419 = vmatpush1.bf16.msra.mxu0 0
    %6420 = vmatprep.subr.bf16.mxu0 0
    %6421 = vmatpush1.bf16.msra.mxu0 0
    %6422 = vmatprep.subr.bf16.mxu0 0
    %6423 = vmatpush1.bf16.msra.mxu0 0
    %6424 = vmatprep.subr.bf16.mxu0 0
    %6425 = vmatpush1.bf16.msra.mxu0 0
    %6426 = vmatprep.subr.bf16.mxu0 0
    %6427 = vmatpush1.bf16.msra.mxu0 0
    %6428 = vmatprep.subr.bf16.mxu0 0
    %6429 = vmatpush1.bf16.msra.mxu0 0
    %6430 = vmatprep.subr.bf16.mxu0 0
    %6431 = vmatpush1.bf16.msra.mxu0 0
    %6432 = vmatprep.subr.bf16.mxu0 0
    %6433 = vmatpush1.bf16.msra.mxu0 %v6410
    %6434 = vmatprep.subr.bf16.mxu0 0
    %6435 = vmatpush2.bf16.msra.mxu0 0
    %6436 = vmatprep.subr.bf16.mxu0 0
    %6437 = vmatpush2.bf16.msra.mxu0 0
    %6438 = vmatprep.subr.bf16.mxu0 0
    %6439 = vmatpush2.bf16.msra.mxu0 0
    %6440 = vmatprep.subr.bf16.mxu0 0
    %6441 = vmatpush2.bf16.msra.mxu0 0
    %6442 = vmatprep.subr.bf16.mxu0 0
    %6443 = vmatpush2.bf16.msra.mxu0 0
    %6444 = vmatprep.subr.bf16.mxu0 0
    %6445 = vmatpush2.bf16.msra.mxu0 0
    %6446 = vmatprep.subr.bf16.mxu0 0
    %6447 = vmatpush2.bf16.msra.mxu0 0
    %6448 = vmatprep.subr.bf16.mxu0 0
    %6449 = vmatpush2.bf16.msra.mxu0 0
    %6450 = vmatprep.mubr.bf16.mxu0 0
    %6451 = vmatmul.mubr.bf16.gmra.mxu0 %v6413
    %v6452 = vpop.f32.mrf.mxu0
    %v6453 = vadd.f32 0.0, %v6452
    %v6454 = vpop.f32.mrf.mxu0
    %v6455 = vpop.f32.mrf.mxu0
    %v6456 = vadd.f32 0.0, %v6455
    %v6457 = vpop.f32.mrf.mxu0
    %6458 = vmatprep.mubr.bf16.mxu0 0
    %6459 = vmatmul.mubr.bf16.gmra.mxu0 %v6416
    %v6460 = vpop.f32.mrf.mxu0
    %v6461 = vadd.f32 0.0, %v6460
    %v6462 = vpop.f32.mrf.mxu0
    %v6463 = vpop.f32.mrf.mxu0
    %v6464 = vadd.f32 0.0, %v6463
    %v6465 = vpop.f32.mrf.mxu0
    %6466 = vdwg.mxu0
    %v6467 = vadd.f32 %v6399, %v6453
    %v6468 = vadd.f32 %v6400, %v6456
    %v6469 = vadd.f32 %v6401, %v6461
    %v6470 = vadd.f32 %v6402, %v6464
    %s6471 = scalar_lea.vmem %s9, 32
    %v6472 = vld [vmem:[%s6471] sm:$0xf]
    %v6473 = vld [vmem:[%s6471 + $0x4] sm:$0xf]
    %v6476 = vunpack.c.l.b16 %v6472
    %v6477 = vunpack.c.l.b16 %v6473
    %v6478 = vpack.c.b16 %v6477, %v6476
    %v6481 = vsel %vm5670, %v6198, 0
    %v6484 = vsel %vm5670, %v6199, 0
    %6486 = vmatprep.subr.bf16.mxu0 0
    %6487 = vmatpush1.bf16.msra.mxu0 0
    %6488 = vmatprep.subr.bf16.mxu0 0
    %6489 = vmatpush1.bf16.msra.mxu0 0
    %6490 = vmatprep.subr.bf16.mxu0 0
    %6491 = vmatpush1.bf16.msra.mxu0 0
    %6492 = vmatprep.subr.bf16.mxu0 0
    %6493 = vmatpush1.bf16.msra.mxu0 0
    %6494 = vmatprep.subr.bf16.mxu0 0
    %6495 = vmatpush1.bf16.msra.mxu0 0
    %6496 = vmatprep.subr.bf16.mxu0 0
    %6497 = vmatpush1.bf16.msra.mxu0 0
    %6498 = vmatprep.subr.bf16.mxu0 0
    %6499 = vmatpush1.bf16.msra.mxu0 0
    %6500 = vmatprep.subr.bf16.mxu0 0
    %6501 = vmatpush1.bf16.msra.mxu0 %v6478
    %6502 = vmatprep.subr.bf16.mxu0 0
    %6503 = vmatpush2.bf16.msra.mxu0 0
    %6504 = vmatprep.subr.bf16.mxu0 0
    %6505 = vmatpush2.bf16.msra.mxu0 0
    %6506 = vmatprep.subr.bf16.mxu0 0
    %6507 = vmatpush2.bf16.msra.mxu0 0
    %6508 = vmatprep.subr.bf16.mxu0 0
    %6509 = vmatpush2.bf16.msra.mxu0 0
    %6510 = vmatprep.subr.bf16.mxu0 0
    %6511 = vmatpush2.bf16.msra.mxu0 0
    %6512 = vmatprep.subr.bf16.mxu0 0
    %6513 = vmatpush2.bf16.msra.mxu0 0
    %6514 = vmatprep.subr.bf16.mxu0 0
    %6515 = vmatpush2.bf16.msra.mxu0 0
    %6516 = vmatprep.subr.bf16.mxu0 0
    %6517 = vmatpush2.bf16.msra.mxu0 0
    %6518 = vmatprep.mubr.bf16.mxu0 0
    %6519 = vmatmul.mubr.bf16.gmra.mxu0 %v6481
    %v6520 = vpop.f32.mrf.mxu0
    %v6521 = vadd.f32 0.0, %v6520
    %v6522 = vpop.f32.mrf.mxu0
    %v6523 = vpop.f32.mrf.mxu0
    %v6524 = vadd.f32 0.0, %v6523
    %v6525 = vpop.f32.mrf.mxu0
    %6526 = vmatprep.mubr.bf16.mxu0 0
    %6527 = vmatmul.mubr.bf16.gmra.mxu0 %v6484
    %v6528 = vpop.f32.mrf.mxu0
    %v6529 = vadd.f32 0.0, %v6528
    %v6530 = vpop.f32.mrf.mxu0
    %v6531 = vpop.f32.mrf.mxu0
    %v6532 = vadd.f32 0.0, %v6531
    %v6533 = vpop.f32.mrf.mxu0
    %6534 = vdwg.mxu0
    %v6535 = vadd.f32 %v6467, %v6521
    %v6536 = vadd.f32 %v6468, %v6524
    %v6537 = vadd.f32 %v6469, %v6529
    %v6538 = vadd.f32 %v6470, %v6532
    %s6539 = scalar_lea.vmem %s9, 40
    %v6540 = vld [vmem:[%s6539] sm:$0xf]
    %v6541 = vld [vmem:[%s6539 + $0x4] sm:$0xf]
    %v6544 = vunpack.c.l.b16 %v6540
    %v6545 = vunpack.c.l.b16 %v6541
    %v6546 = vpack.c.b16 %v6545, %v6544
    %v6549 = vsel %vm5670, %v6200, 0
    %v6552 = vsel %vm5670, %v6201, 0
    %6554 = vmatprep.subr.bf16.mxu0 0
    %6555 = vmatpush1.bf16.msra.mxu0 0
    %6556 = vmatprep.subr.bf16.mxu0 0
    %6557 = vmatpush1.bf16.msra.mxu0 0
    %6558 = vmatprep.subr.bf16.mxu0 0
    %6559 = vmatpush1.bf16.msra.mxu0 0
    %6560 = vmatprep.subr.bf16.mxu0 0
    %6561 = vmatpush1.bf16.msra.mxu0 0
    %6562 = vmatprep.subr.bf16.mxu0 0
    %6563 = vmatpush1.bf16.msra.mxu0 0
    %6564 = vmatprep.subr.bf16.mxu0 0
    %6565 = vmatpush1.bf16.msra.mxu0 0
    %6566 = vmatprep.subr.bf16.mxu0 0
    %6567 = vmatpush1.bf16.msra.mxu0 0
    %6568 = vmatprep.subr.bf16.mxu0 0
    %6569 = vmatpush1.bf16.msra.mxu0 %v6546
    %6570 = vmatprep.subr.bf16.mxu0 0
    %6571 = vmatpush2.bf16.msra.mxu0 0
    %6572 = vmatprep.subr.bf16.mxu0 0
    %6573 = vmatpush2.bf16.msra.mxu0 0
    %6574 = vmatprep.subr.bf16.mxu0 0
    %6575 = vmatpush2.bf16.msra.mxu0 0
    %6576 = vmatprep.subr.bf16.mxu0 0
    %6577 = vmatpush2.bf16.msra.mxu0 0
    %6578 = vmatprep.subr.bf16.mxu0 0
    %6579 = vmatpush2.bf16.msra.mxu0 0
    %6580 = vmatprep.subr.bf16.mxu0 0
    %6581 = vmatpush2.bf16.msra.mxu0 0
    %6582 = vmatprep.subr.bf16.mxu0 0
    %6583 = vmatpush2.bf16.msra.mxu0 0
    %6584 = vmatprep.subr.bf16.mxu0 0
    %6585 = vmatpush2.bf16.msra.mxu0 0
    %6586 = vmatprep.mubr.bf16.mxu0 0
    %6587 = vmatmul.mubr.bf16.gmra.mxu0 %v6549
    %v6588 = vpop.f32.mrf.mxu0
    %v6589 = vadd.f32 0.0, %v6588
    %v6590 = vpop.f32.mrf.mxu0
    %v6591 = vpop.f32.mrf.mxu0
    %v6592 = vadd.f32 0.0, %v6591
    %v6593 = vpop.f32.mrf.mxu0
    %6594 = vmatprep.mubr.bf16.mxu0 0
    %6595 = vmatmul.mubr.bf16.gmra.mxu0 %v6552
    %v6596 = vpop.f32.mrf.mxu0
    %v6597 = vadd.f32 0.0, %v6596
    %v6598 = vpop.f32.mrf.mxu0
    %v6599 = vpop.f32.mrf.mxu0
    %v6600 = vadd.f32 0.0, %v6599
    %v6601 = vpop.f32.mrf.mxu0
    %6602 = vdwg.mxu0
    %v6603 = vadd.f32 %v6535, %v6589
    %v6604 = vadd.f32 %v6536, %v6592
    %v6605 = vadd.f32 %v6537, %v6597
    %v6606 = vadd.f32 %v6538, %v6600
    %s6607 = scalar_lea.vmem %s9, 48
    %v6608 = vld [vmem:[%s6607] sm:$0xf]
    %v6609 = vld [vmem:[%s6607 + $0x4] sm:$0xf]
    %v6612 = vunpack.c.l.b16 %v6608
    %v6613 = vunpack.c.l.b16 %v6609
    %v6614 = vpack.c.b16 %v6613, %v6612
    %v6617 = vsel %vm5670, %v6202, 0
    %v6620 = vsel %vm5670, %v6203, 0
    %6622 = vmatprep.subr.bf16.mxu0 0
    %6623 = vmatpush1.bf16.msra.mxu0 0
    %6624 = vmatprep.subr.bf16.mxu0 0
    %6625 = vmatpush1.bf16.msra.mxu0 0
    %6626 = vmatprep.subr.bf16.mxu0 0
    %6627 = vmatpush1.bf16.msra.mxu0 0
    %6628 = vmatprep.subr.bf16.mxu0 0
    %6629 = vmatpush1.bf16.msra.mxu0 0
    %6630 = vmatprep.subr.bf16.mxu0 0
    %6631 = vmatpush1.bf16.msra.mxu0 0
    %6632 = vmatprep.subr.bf16.mxu0 0
    %6633 = vmatpush1.bf16.msra.mxu0 0
    %6634 = vmatprep.subr.bf16.mxu0 0
    %6635 = vmatpush1.bf16.msra.mxu0 0
    %6636 = vmatprep.subr.bf16.mxu0 0
    %6637 = vmatpush1.bf16.msra.mxu0 %v6614
    %6638 = vmatprep.subr.bf16.mxu0 0
    %6639 = vmatpush2.bf16.msra.mxu0 0
    %6640 = vmatprep.subr.bf16.mxu0 0
    %6641 = vmatpush2.bf16.msra.mxu0 0
    %6642 = vmatprep.subr.bf16.mxu0 0
    %6643 = vmatpush2.bf16.msra.mxu0 0
    %6644 = vmatprep.subr.bf16.mxu0 0
    %6645 = vmatpush2.bf16.msra.mxu0 0
    %6646 = vmatprep.subr.bf16.mxu0 0
    %6647 = vmatpush2.bf16.msra.mxu0 0
    %6648 = vmatprep.subr.bf16.mxu0 0
    %6649 = vmatpush2.bf16.msra.mxu0 0
    %6650 = vmatprep.subr.bf16.mxu0 0
    %6651 = vmatpush2.bf16.msra.mxu0 0
    %6652 = vmatprep.subr.bf16.mxu0 0
    %6653 = vmatpush2.bf16.msra.mxu0 0
    %6654 = vmatprep.mubr.bf16.mxu0 0
    %6655 = vmatmul.mubr.bf16.gmra.mxu0 %v6617
    %v6656 = vpop.f32.mrf.mxu0
    %v6657 = vadd.f32 0.0, %v6656
    %v6658 = vpop.f32.mrf.mxu0
    %v6659 = vpop.f32.mrf.mxu0
    %v6660 = vadd.f32 0.0, %v6659
    %v6661 = vpop.f32.mrf.mxu0
    %6662 = vmatprep.mubr.bf16.mxu0 0
    %6663 = vmatmul.mubr.bf16.gmra.mxu0 %v6620
    %v6664 = vpop.f32.mrf.mxu0
    %v6665 = vadd.f32 0.0, %v6664
    %v6666 = vpop.f32.mrf.mxu0
    %v6667 = vpop.f32.mrf.mxu0
    %v6668 = vadd.f32 0.0, %v6667
    %v6669 = vpop.f32.mrf.mxu0
    %6670 = vdwg.mxu0
    %v6671 = vadd.f32 %v6603, %v6657
    %v6672 = vadd.f32 %v6604, %v6660
    %v6673 = vadd.f32 %v6605, %v6665
    %v6674 = vadd.f32 %v6606, %v6668
    %s6675 = scalar_lea.vmem %s9, 56
    %v6676 = vld [vmem:[%s6675] sm:$0xf]
    %v6677 = vld [vmem:[%s6675 + $0x4] sm:$0xf]
    %v6680 = vunpack.c.l.b16 %v6676
    %v6681 = vunpack.c.l.b16 %v6677
    %v6682 = vpack.c.b16 %v6681, %v6680
    %v6685 = vsel %vm5670, %v6204, 0
    %v6688 = vsel %vm5670, %v6205, 0
    %6690 = vmatprep.subr.bf16.mxu0 0
    %6691 = vmatpush1.bf16.msra.mxu0 0
    %6692 = vmatprep.subr.bf16.mxu0 0
    %6693 = vmatpush1.bf16.msra.mxu0 0
    %6694 = vmatprep.subr.bf16.mxu0 0
    %6695 = vmatpush1.bf16.msra.mxu0 0
    %6696 = vmatprep.subr.bf16.mxu0 0
    %6697 = vmatpush1.bf16.msra.mxu0 0
    %6698 = vmatprep.subr.bf16.mxu0 0
    %6699 = vmatpush1.bf16.msra.mxu0 0
    %6700 = vmatprep.subr.bf16.mxu0 0
    %6701 = vmatpush1.bf16.msra.mxu0 0
    %6702 = vmatprep.subr.bf16.mxu0 0
    %6703 = vmatpush1.bf16.msra.mxu0 0
    %6704 = vmatprep.subr.bf16.mxu0 0
    %6705 = vmatpush1.bf16.msra.mxu0 %v6682
    %6706 = vmatprep.subr.bf16.mxu0 0
    %6707 = vmatpush2.bf16.msra.mxu0 0
    %6708 = vmatprep.subr.bf16.mxu0 0
    %6709 = vmatpush2.bf16.msra.mxu0 0
    %6710 = vmatprep.subr.bf16.mxu0 0
    %6711 = vmatpush2.bf16.msra.mxu0 0
    %6712 = vmatprep.subr.bf16.mxu0 0
    %6713 = vmatpush2.bf16.msra.mxu0 0
    %6714 = vmatprep.subr.bf16.mxu0 0
    %6715 = vmatpush2.bf16.msra.mxu0 0
    %6716 = vmatprep.subr.bf16.mxu0 0
    %6717 = vmatpush2.bf16.msra.mxu0 0
    %6718 = vmatprep.subr.bf16.mxu0 0
    %6719 = vmatpush2.bf16.msra.mxu0 0
    %6720 = vmatprep.subr.bf16.mxu0 0
    %6721 = vmatpush2.bf16.msra.mxu0 0
    %6722 = vmatprep.mubr.bf16.mxu0 0
    %6723 = vmatmul.mubr.bf16.gmra.mxu0 %v6685
    %v6724 = vpop.f32.mrf.mxu0
    %v6725 = vadd.f32 0.0, %v6724
    %v6726 = vpop.f32.mrf.mxu0
    %v6727 = vpop.f32.mrf.mxu0
    %v6728 = vadd.f32 0.0, %v6727
    %v6729 = vpop.f32.mrf.mxu0
    %6730 = vmatprep.mubr.bf16.mxu0 0
    %6731 = vmatmul.mubr.bf16.gmra.mxu0 %v6688
    %v6732 = vpop.f32.mrf.mxu0
    %v6733 = vadd.f32 0.0, %v6732
    %v6734 = vpop.f32.mrf.mxu0
    %v6735 = vpop.f32.mrf.mxu0
    %v6736 = vadd.f32 0.0, %v6735
    %v6737 = vpop.f32.mrf.mxu0
    %6738 = vdwg.mxu0
    %v6739 = vadd.f32 %v6671, %v6725
    %v6740 = vadd.f32 %v6672, %v6728
    %v6741 = vadd.f32 %v6673, %v6733
    %v6742 = vadd.f32 %v6674, %v6736
    %s6743 = scalar_lea.vmem %s9, 64
    %v6744 = vld [vmem:[%s6743] sm:$0xf]
    %v6745 = vld [vmem:[%s6743 + $0x4] sm:$0xf]
    %v6748 = vunpack.c.l.b16 %v6744
    %v6749 = vunpack.c.l.b16 %v6745
    %v6750 = vpack.c.b16 %v6749, %v6748
    %v6753 = vsel %vm5670, %v6206, 0
    %v6756 = vsel %vm5670, %v6207, 0
    %6758 = vmatprep.subr.bf16.mxu0 0
    %6759 = vmatpush1.bf16.msra.mxu0 0
    %6760 = vmatprep.subr.bf16.mxu0 0
    %6761 = vmatpush1.bf16.msra.mxu0 0
    %6762 = vmatprep.subr.bf16.mxu0 0
    %6763 = vmatpush1.bf16.msra.mxu0 0
    %6764 = vmatprep.subr.bf16.mxu0 0
    %6765 = vmatpush1.bf16.msra.mxu0 0
    %6766 = vmatprep.subr.bf16.mxu0 0
    %6767 = vmatpush1.bf16.msra.mxu0 0
    %6768 = vmatprep.subr.bf16.mxu0 0
    %6769 = vmatpush1.bf16.msra.mxu0 0
    %6770 = vmatprep.subr.bf16.mxu0 0
    %6771 = vmatpush1.bf16.msra.mxu0 0
    %6772 = vmatprep.subr.bf16.mxu0 0
    %6773 = vmatpush1.bf16.msra.mxu0 %v6750
    %6774 = vmatprep.subr.bf16.mxu0 0
    %6775 = vmatpush2.bf16.msra.mxu0 0
    %6776 = vmatprep.subr.bf16.mxu0 0
    %6777 = vmatpush2.bf16.msra.mxu0 0
    %6778 = vmatprep.subr.bf16.mxu0 0
    %6779 = vmatpush2.bf16.msra.mxu0 0
    %6780 = vmatprep.subr.bf16.mxu0 0
    %6781 = vmatpush2.bf16.msra.mxu0 0
    %6782 = vmatprep.subr.bf16.mxu0 0
    %6783 = vmatpush2.bf16.msra.mxu0 0
    %6784 = vmatprep.subr.bf16.mxu0 0
    %6785 = vmatpush2.bf16.msra.mxu0 0
    %6786 = vmatprep.subr.bf16.mxu0 0
    %6787 = vmatpush2.bf16.msra.mxu0 0
    %6788 = vmatprep.subr.bf16.mxu0 0
    %6789 = vmatpush2.bf16.msra.mxu0 0
    %6790 = vmatprep.mubr.bf16.mxu0 0
    %6791 = vmatmul.mubr.bf16.gmra.mxu0 %v6753
    %v6792 = vpop.f32.mrf.mxu0
    %v6793 = vadd.f32 0.0, %v6792
    %v6794 = vpop.f32.mrf.mxu0
    %v6795 = vpop.f32.mrf.mxu0
    %v6796 = vadd.f32 0.0, %v6795
    %v6797 = vpop.f32.mrf.mxu0
    %6798 = vmatprep.mubr.bf16.mxu0 0
    %6799 = vmatmul.mubr.bf16.gmra.mxu0 %v6756
    %v6800 = vpop.f32.mrf.mxu0
    %v6801 = vadd.f32 0.0, %v6800
    %v6802 = vpop.f32.mrf.mxu0
    %v6803 = vpop.f32.mrf.mxu0
    %v6804 = vadd.f32 0.0, %v6803
    %v6805 = vpop.f32.mrf.mxu0
    %6806 = vdwg.mxu0
    %v6807 = vadd.f32 %v6739, %v6793
    %v6808 = vadd.f32 %v6740, %v6796
    %v6809 = vadd.f32 %v6741, %v6801
    %v6810 = vadd.f32 %v6742, %v6804
    %v6811 = vld [vmem:[%s10] sm:$0x1]
    %v6812 = vld [vmem:[%s11] sm:$0x1]
    %vm6813 = vcmask 261120
    %v6814 = vsel %vm6813, %v6807, 0.0
    %v6815 = vsel %vm6813, %v6808, 0.0
    %v6816 = vadd.f32 %v6814, %v6815
    %v6817 = vsel %vm6813, %v6809, 0.0
    %v6818 = vadd.f32 %v6816, %v6817
    %v6819 = vsel %vm6813, %v6810, 0.0
    %v6820 = vadd.f32 %v6818, %v6819
    %v6821 = vrot.slane %v6820, 4
    %v6822 = vadd.f32 %v6820, %v6821
    %v6823 = vrot.slane %v6822, 2
    %v6824 = vadd.f32 %v6822, %v6823
    %v6825 = vrot.slane %v6824, 1
    %v6826 = vadd.f32 %v6824, %v6825
    %v6827 = vrcp.pop 32.0
    %v6828 = vmul.f32 %v6826, %v6827
    %v6829 = vsub.f32 %v6807, %v6828
    %v6830 = vsub.f32 %v6808, %v6828
    %v6831 = vsub.f32 %v6809, %v6828
    %v6832 = vsub.f32 %v6810, %v6828
    %v6833 = vmul.f32 %v6829, %v6829
    %v6834 = vmul.f32 %v6830, %v6830
    %v6835 = vmul.f32 %v6831, %v6831
    %v6836 = vmul.f32 %v6832, %v6832
    %v6837 = vsel %vm6813, %v6833, 0.0
    %v6838 = vsel %vm6813, %v6834, 0.0
    %v6839 = vadd.f32 %v6837, %v6838
    %v6840 = vsel %vm6813, %v6835, 0.0
    %v6841 = vadd.f32 %v6839, %v6840
    %v6842 = vsel %vm6813, %v6836, 0.0
    %v6843 = vadd.f32 %v6841, %v6842
    %v6844 = vrot.slane %v6843, 4
    %v6845 = vadd.f32 %v6843, %v6844
    %v6846 = vrot.slane %v6845, 2
    %v6847 = vadd.f32 %v6845, %v6846
    %v6848 = vrot.slane %v6847, 1
    %v6849 = vadd.f32 %v6847, %v6848
    %v6850 = vmul.f32 %v6849, %v6827
    %v6851 = vadd.f32 %v6850, 1e-05
    %v6852 = vrsqrt.pop %v6851
    %v6853 = vmul.f32 %v6811, %v6852
    %v6854 = vmul.f32 %v6853, %v6828
    %v6855 = vsub.f32 %v6812, %v6854
    %v6857 = vlaneseq
    %v6858 = vshrl.u32 %v6857, 7
    %v6859 = vsub.s32 0, %v6858
    %v6860 = vrot.slane %v6853, %v6859
    %v6862 = vmul.f32 %v6807, %v6860
    %v6863 = vmul.f32 %v6808, %v6860
    %v6864 = vmul.f32 %v6809, %v6860
    %v6865 = vmul.f32 %v6810, %v6860
    %v6867 = vlaneseq
    %v6868 = vshrl.u32 %v6867, 7
    %v6869 = vsub.s32 0, %v6868
    %v6870 = vrot.slane %v6855, %v6869
    %v6872 = vadd.f32 %v6862, %v6870
    %v6873 = vadd.f32 %v6863, %v6870
    %v6874 = vadd.f32 %v6864, %v6870
    %v6875 = vadd.f32 %v6865, %v6870
    %v6876 = vmul.f32 %v6872, 0.01
    %v6877 = vmul.f32 %v6873, 0.01
    %v6878 = vmul.f32 %v6874, 0.01
    %v6879 = vmul.f32 %v6875, 0.01
    %v6880 = vmax.f32 %v6872, %v6876
    %v6881 = vmax.f32 %v6873, %v6877
    %v6882 = vmax.f32 %v6874, %v6878
    %v6883 = vmax.f32 %v6875, %v6879
    %v6884 = vpack.c.bf16 %v6881, %v6880
    %v6885 = vpack.c.bf16 %v6883, %v6882
    %v6886 = vld [vmem:[%s12] sm:$0xf]
    %v6887 = vld [vmem:[%s12 + $0x4] sm:$0xf]
    %v6888 = vld [vmem:[%s12 + $0x8] sm:$0xf]
    %v6889 = vld [vmem:[%s12 + $0xc] sm:$0xf]
    %v6890 = vld [vmem:[%s12 + $0x10] sm:$0xf]
    %v6891 = vld [vmem:[%s12 + $0x14] sm:$0xf]
    %v6892 = vld [vmem:[%s12 + $0x18] sm:$0xf]
    %v6893 = vld [vmem:[%s12 + $0x1c] sm:$0xf]
    %v6894 = vld [vmem:[%s12 + $0x20] sm:$0xf]
    %v6904 = vunpack.c.l.b16 %v6886
    %v6905 = vunpack.c.l.b16 %v6887
    %v6906 = vunpack.c.l.b16 %v6888
    %v6907 = vunpack.c.l.b16 %v6889
    %v6908 = vunpack.c.l.b16 %v6890
    %v6909 = vunpack.c.l.b16 %v6891
    %v6910 = vunpack.c.l.b16 %v6892
    %v6911 = vunpack.c.l.b16 %v6893
    %v6912 = vunpack.c.l.b16 %v6894
    %v6913 = vpack.c.b16 %v6905, %v6904
    %v6914 = vpack.c.b16 %v6907, %v6906
    %v6915 = vpack.c.b16 %v6909, %v6908
    %v6916 = vpack.c.b16 %v6911, %v6910
    %v6917 = vpack.c.b16 %v6912, %v6912
    %v6919 = vsel %vm6813, %v6913, 0
    %v6922 = vsel %vm6813, %v6914, 0
    %v6925 = vsel %vm6813, %v6915, 0
    %v6928 = vsel %vm6813, %v6916, 0
    %v6931 = vsel %vm6813, %v6917, 0
    %6933 = vmatprep.subr.bf16.mxu0 0
    %6934 = vmatpush1.bf16.msra.mxu0 0
    %6935 = vmatprep.subr.bf16.mxu0 0
    %6936 = vmatpush1.bf16.msra.mxu0 0
    %6937 = vmatprep.subr.bf16.mxu0 0
    %6938 = vmatpush1.bf16.msra.mxu0 0
    %6939 = vmatprep.subr.bf16.mxu0 0
    %6940 = vmatpush1.bf16.msra.mxu0 0
    %6941 = vmatprep.subr.bf16.mxu0 0
    %6942 = vmatpush1.bf16.msra.mxu0 0
    %6943 = vmatprep.subr.bf16.mxu0 0
    %6944 = vmatpush1.bf16.msra.mxu0 0
    %6945 = vmatprep.subr.bf16.mxu0 0
    %6946 = vmatpush1.bf16.msra.mxu0 %v6885
    %6947 = vmatprep.subr.bf16.mxu0 0
    %6948 = vmatpush1.bf16.msra.mxu0 %v6884
    %6949 = vmatprep.subr.bf16.mxu0 0
    %6950 = vmatpush2.bf16.msra.mxu0 0
    %6951 = vmatprep.subr.bf16.mxu0 0
    %6952 = vmatpush2.bf16.msra.mxu0 0
    %6953 = vmatprep.subr.bf16.mxu0 0
    %6954 = vmatpush2.bf16.msra.mxu0 0
    %6955 = vmatprep.subr.bf16.mxu0 0
    %6956 = vmatpush2.bf16.msra.mxu0 0
    %6957 = vmatprep.subr.bf16.mxu0 0
    %6958 = vmatpush2.bf16.msra.mxu0 0
    %6959 = vmatprep.subr.bf16.mxu0 0
    %6960 = vmatpush2.bf16.msra.mxu0 0
    %6961 = vmatprep.subr.bf16.mxu0 0
    %6962 = vmatpush2.bf16.msra.mxu0 0
    %6963 = vmatprep.subr.bf16.mxu0 0
    %6964 = vmatpush2.bf16.msra.mxu0 0
    %6965 = vmatprep.mubr.bf16.mxu0 0
    %6966 = vmatmul.mubr.bf16.gmra.mxu0 %v6919
    %v6967 = vpop.f32.mrf.mxu0
    %v6968 = vadd.f32 0.0, %v6967
    %v6969 = vpop.f32.mrf.mxu0
    %v6970 = vpop.f32.mrf.mxu0
    %v6971 = vadd.f32 0.0, %v6970
    %v6972 = vpop.f32.mrf.mxu0
    %6973 = vmatprep.mubr.bf16.mxu0 0
    %6974 = vmatmul.mubr.bf16.gmra.mxu0 %v6922
    %v6975 = vpop.f32.mrf.mxu0
    %v6976 = vadd.f32 0.0, %v6975
    %v6977 = vpop.f32.mrf.mxu0
    %v6978 = vpop.f32.mrf.mxu0
    %v6979 = vadd.f32 0.0, %v6978
    %v6980 = vpop.f32.mrf.mxu0
    %6981 = vmatprep.mubr.bf16.mxu0 0
    %6982 = vmatmul.mubr.bf16.gmra.mxu0 %v6925
    %v6983 = vpop.f32.mrf.mxu0
    %v6984 = vadd.f32 0.0, %v6983
    %v6985 = vpop.f32.mrf.mxu0
    %v6986 = vpop.f32.mrf.mxu0
    %v6987 = vadd.f32 0.0, %v6986
    %v6988 = vpop.f32.mrf.mxu0
    %6989 = vmatprep.mubr.bf16.mxu0 0
    %6990 = vmatmul.mubr.bf16.gmra.mxu0 %v6928
    %v6991 = vpop.f32.mrf.mxu0
    %v6992 = vadd.f32 0.0, %v6991
    %v6993 = vpop.f32.mrf.mxu0
    %v6994 = vpop.f32.mrf.mxu0
    %v6995 = vadd.f32 0.0, %v6994
    %v6996 = vpop.f32.mrf.mxu0
    %6997 = vmatprep.mubr.bf16.mxu0 0
    %6998 = vmatmul.mubr.bf16.gmra.mxu0 %v6931
    %v6999 = vpop.f32.mrf.mxu0
    %v7000 = vadd.f32 0.0, %v6999
    %v7001 = vpop.f32.mrf.mxu0
    %v7002 = vpop.f32.mrf.mxu0
    %v7003 = vpop.f32.mrf.mxu0
    %7004 = vdwg.mxu0
    %v7005 = vpack.c.bf16 %v6971, %v6968
    %v7006 = vpack.c.bf16 %v6979, %v6976
    %v7007 = vpack.c.bf16 %v6987, %v6984
    %v7008 = vpack.c.bf16 %v6995, %v6992
    %v7009 = vpack.c.bf16 %v7000, %v7000
    %v7010 = vld [vmem:[%s13] sm:$0xf]
    %v7011 = vld [vmem:[%s13 + $0x4] sm:$0xf]
    %v7012 = vld [vmem:[%s13 + $0x8] sm:$0xf]
    %v7013 = vld [vmem:[%s13 + $0xc] sm:$0xf]
    %s7014 = scalar_lea.vmem %s13, 16
    %v7015 = vld [vmem:[%s7014] sm:$0xf]
    %v7016 = vld [vmem:[%s7014 + $0x4] sm:$0xf]
    %v7017 = vld [vmem:[%s7014 + $0x8] sm:$0xf]
    %v7018 = vld [vmem:[%s7014 + $0xc] sm:$0xf]
    %v7020 = vrot.slane %v7005, 4
    %v7025 = vunpack.c.l.b16 %v7015
    %v7026 = vunpack.c.l.b16 %v7016
    %v7027 = vunpack.c.l.b16 %v7017
    %v7028 = vunpack.c.l.b16 %v7018
    %v7029 = vpack.c.b16 %v7026, %v7025
    %v7030 = vpack.c.b16 %v7028, %v7027
    %v7034 = vsel %vm6813, %v7020, 0
    %7036 = vmatprep.subr.bf16.mxu0 0
    %7037 = vmatpush1.bf16.msra.mxu0 0
    %7038 = vmatprep.subr.bf16.mxu0 0
    %7039 = vmatpush1.bf16.msra.mxu0 0
    %7040 = vmatprep.subr.bf16.mxu0 0
    %7041 = vmatpush1.bf16.msra.mxu0 0
    %7042 = vmatprep.subr.bf16.mxu0 0
    %7043 = vmatpush1.bf16.msra.mxu0 0
    %7044 = vmatprep.subr.bf16.mxu0 0
    %7045 = vmatpush1.bf16.msra.mxu0 0
    %7046 = vmatprep.subr.bf16.mxu0 0
    %7047 = vmatpush1.bf16.msra.mxu0 0
    %7048 = vmatprep.subr.bf16.mxu0 0
    %7049 = vmatpush1.bf16.msra.mxu0 %v7030
    %7050 = vmatprep.subr.bf16.mxu0 0
    %7051 = vmatpush1.bf16.msra.mxu0 %v7029
    %7052 = vmatprep.subr.bf16.mxu0 0
    %7053 = vmatpush2.bf16.msra.mxu0 0
    %7054 = vmatprep.subr.bf16.mxu0 0
    %7055 = vmatpush2.bf16.msra.mxu0 0
    %7056 = vmatprep.subr.bf16.mxu0 0
    %7057 = vmatpush2.bf16.msra.mxu0 0
    %7058 = vmatprep.subr.bf16.mxu0 0
    %7059 = vmatpush2.bf16.msra.mxu0 0
    %7060 = vmatprep.subr.bf16.mxu0 0
    %7061 = vmatpush2.bf16.msra.mxu0 0
    %7062 = vmatprep.subr.bf16.mxu0 0
    %7063 = vmatpush2.bf16.msra.mxu0 0
    %7064 = vmatprep.subr.bf16.mxu0 0
    %7065 = vmatpush2.bf16.msra.mxu0 0
    %7066 = vmatprep.subr.bf16.mxu0 0
    %7067 = vmatpush2.bf16.msra.mxu0 0
    %7068 = vmatprep.mubr.bf16.mxu0 0
    %7069 = vmatmul.mubr.bf16.gmra.mxu0 %v7034
    %v7070 = vpop.f32.mrf.mxu0
    %v7071 = vadd.f32 0.0, %v7070
    %v7072 = vpop.f32.mrf.mxu0
    %v7073 = vpop.f32.mrf.mxu0
    %v7074 = vpop.f32.mrf.mxu0
    %7075 = vdwg.mxu0
    %v7080 = vunpack.c.l.b16 %v7010
    %v7081 = vunpack.c.l.b16 %v7011
    %v7082 = vunpack.c.l.b16 %v7012
    %v7083 = vunpack.c.l.b16 %v7013
    %v7084 = vpack.c.b16 %v7081, %v7080
    %v7085 = vpack.c.b16 %v7083, %v7082
    %v7089 = vsel %vm6813, %v7005, 0
    %7091 = vmatprep.subr.bf16.mxu0 0
    %7092 = vmatpush1.bf16.msra.mxu0 0
    %7093 = vmatprep.subr.bf16.mxu0 0
    %7094 = vmatpush1.bf16.msra.mxu0 0
    %7095 = vmatprep.subr.bf16.mxu0 0
    %7096 = vmatpush1.bf16.msra.mxu0 0
    %7097 = vmatprep.subr.bf16.mxu0 0
    %7098 = vmatpush1.bf16.msra.mxu0 0
    %7099 = vmatprep.subr.bf16.mxu0 0
    %7100 = vmatpush1.bf16.msra.mxu0 0
    %7101 = vmatprep.subr.bf16.mxu0 0
    %7102 = vmatpush1.bf16.msra.mxu0 0
    %7103 = vmatprep.subr.bf16.mxu0 0
    %7104 = vmatpush1.bf16.msra.mxu0 %v7085
    %7105 = vmatprep.subr.bf16.mxu0 0
    %7106 = vmatpush1.bf16.msra.mxu0 %v7084
    %7107 = vmatprep.subr.bf16.mxu0 0
    %7108 = vmatpush2.bf16.msra.mxu0 0
    %7109 = vmatprep.subr.bf16.mxu0 0
    %7110 = vmatpush2.bf16.msra.mxu0 0
    %7111 = vmatprep.subr.bf16.mxu0 0
    %7112 = vmatpush2.bf16.msra.mxu0 0
    %7113 = vmatprep.subr.bf16.mxu0 0
    %7114 = vmatpush2.bf16.msra.mxu0 0
    %7115 = vmatprep.subr.bf16.mxu0 0
    %7116 = vmatpush2.bf16.msra.mxu0 0
    %7117 = vmatprep.subr.bf16.mxu0 0
    %7118 = vmatpush2.bf16.msra.mxu0 0
    %7119 = vmatprep.subr.bf16.mxu0 0
    %7120 = vmatpush2.bf16.msra.mxu0 0
    %7121 = vmatprep.subr.bf16.mxu0 0
    %7122 = vmatpush2.bf16.msra.mxu0 0
    %7123 = vmatprep.mubr.bf16.mxu0 0
    %7124 = vmatmul.mubr.bf16.gmra.mxu0 %v7089
    %v7125 = vpop.f32.mrf.mxu0
    %v7126 = vadd.f32 %v7071, %v7125
    %v7127 = vpop.f32.mrf.mxu0
    %v7128 = vpop.f32.mrf.mxu0
    %v7129 = vpop.f32.mrf.mxu0
    %7130 = vdwg.mxu0
    %s7131 = scalar_lea.vmem %s13, 32
    %v7132 = vld [vmem:[%s7131] sm:$0xf]
    %v7133 = vld [vmem:[%s7131 + $0x4] sm:$0xf]
    %v7134 = vld [vmem:[%s7131 + $0x8] sm:$0xf]
    %v7135 = vld [vmem:[%s7131 + $0xc] sm:$0xf]
    %v7140 = vunpack.c.l.b16 %v7132
    %v7141 = vunpack.c.l.b16 %v7133
    %v7142 = vunpack.c.l.b16 %v7134
    %v7143 = vunpack.c.l.b16 %v7135
    %v7144 = vpack.c.b16 %v7141, %v7140
    %v7145 = vpack.c.b16 %v7143, %v7142
    %v7149 = vsel %vm6813, %v7006, 0
    %7151 = vmatprep.subr.bf16.mxu0 0
    %7152 = vmatpush1.bf16.msra.mxu0 0
    %7153 = vmatprep.subr.bf16.mxu0 0
    %7154 = vmatpush1.bf16.msra.mxu0 0
    %7155 = vmatprep.subr.bf16.mxu0 0
    %7156 = vmatpush1.bf16.msra.mxu0 0
    %7157 = vmatprep.subr.bf16.mxu0 0
    %7158 = vmatpush1.bf16.msra.mxu0 0
    %7159 = vmatprep.subr.bf16.mxu0 0
    %7160 = vmatpush1.bf16.msra.mxu0 0
    %7161 = vmatprep.subr.bf16.mxu0 0
    %7162 = vmatpush1.bf16.msra.mxu0 0
    %7163 = vmatprep.subr.bf16.mxu0 0
    %7164 = vmatpush1.bf16.msra.mxu0 %v7145
    %7165 = vmatprep.subr.bf16.mxu0 0
    %7166 = vmatpush1.bf16.msra.mxu0 %v7144
    %7167 = vmatprep.subr.bf16.mxu0 0
    %7168 = vmatpush2.bf16.msra.mxu0 0
    %7169 = vmatprep.subr.bf16.mxu0 0
    %7170 = vmatpush2.bf16.msra.mxu0 0
    %7171 = vmatprep.subr.bf16.mxu0 0
    %7172 = vmatpush2.bf16.msra.mxu0 0
    %7173 = vmatprep.subr.bf16.mxu0 0
    %7174 = vmatpush2.bf16.msra.mxu0 0
    %7175 = vmatprep.subr.bf16.mxu0 0
    %7176 = vmatpush2.bf16.msra.mxu0 0
    %7177 = vmatprep.subr.bf16.mxu0 0
    %7178 = vmatpush2.bf16.msra.mxu0 0
    %7179 = vmatprep.subr.bf16.mxu0 0
    %7180 = vmatpush2.bf16.msra.mxu0 0
    %7181 = vmatprep.subr.bf16.mxu0 0
    %7182 = vmatpush2.bf16.msra.mxu0 0
    %7183 = vmatprep.mubr.bf16.mxu0 0
    %7184 = vmatmul.mubr.bf16.gmra.mxu0 %v7149
    %v7185 = vpop.f32.mrf.mxu0
    %v7186 = vadd.f32 0.0, %v7185
    %v7187 = vpop.f32.mrf.mxu0
    %v7188 = vpop.f32.mrf.mxu0
    %v7189 = vpop.f32.mrf.mxu0
    %7190 = vdwg.mxu0
    %v7191 = vadd.f32 %v7126, %v7186
    %s7192 = scalar_lea.vmem %s13, 48
    %v7193 = vld [vmem:[%s7192] sm:$0xf]
    %v7194 = vld [vmem:[%s7192 + $0x4] sm:$0xf]
    %v7195 = vld [vmem:[%s7192 + $0x8] sm:$0xf]
    %v7196 = vld [vmem:[%s7192 + $0xc] sm:$0xf]
    %v7198 = vrot.slane %v7006, 4
    %v7203 = vunpack.c.l.b16 %v7193
    %v7204 = vunpack.c.l.b16 %v7194
    %v7205 = vunpack.c.l.b16 %v7195
    %v7206 = vunpack.c.l.b16 %v7196
    %v7207 = vpack.c.b16 %v7204, %v7203
    %v7208 = vpack.c.b16 %v7206, %v7205
    %v7212 = vsel %vm6813, %v7198, 0
    %7214 = vmatprep.subr.bf16.mxu0 0
    %7215 = vmatpush1.bf16.msra.mxu0 0
    %7216 = vmatprep.subr.bf16.mxu0 0
    %7217 = vmatpush1.bf16.msra.mxu0 0
    %7218 = vmatprep.subr.bf16.mxu0 0
    %7219 = vmatpush1.bf16.msra.mxu0 0
    %7220 = vmatprep.subr.bf16.mxu0 0
    %7221 = vmatpush1.bf16.msra.mxu0 0
    %7222 = vmatprep.subr.bf16.mxu0 0
    %7223 = vmatpush1.bf16.msra.mxu0 0
    %7224 = vmatprep.subr.bf16.mxu0 0
    %7225 = vmatpush1.bf16.msra.mxu0 0
    %7226 = vmatprep.subr.bf16.mxu0 0
    %7227 = vmatpush1.bf16.msra.mxu0 %v7208
    %7228 = vmatprep.subr.bf16.mxu0 0
    %7229 = vmatpush1.bf16.msra.mxu0 %v7207
    %7230 = vmatprep.subr.bf16.mxu0 0
    %7231 = vmatpush2.bf16.msra.mxu0 0
    %7232 = vmatprep.subr.bf16.mxu0 0
    %7233 = vmatpush2.bf16.msra.mxu0 0
    %7234 = vmatprep.subr.bf16.mxu0 0
    %7235 = vmatpush2.bf16.msra.mxu0 0
    %7236 = vmatprep.subr.bf16.mxu0 0
    %7237 = vmatpush2.bf16.msra.mxu0 0
    %7238 = vmatprep.subr.bf16.mxu0 0
    %7239 = vmatpush2.bf16.msra.mxu0 0
    %7240 = vmatprep.subr.bf16.mxu0 0
    %7241 = vmatpush2.bf16.msra.mxu0 0
    %7242 = vmatprep.subr.bf16.mxu0 0
    %7243 = vmatpush2.bf16.msra.mxu0 0
    %7244 = vmatprep.subr.bf16.mxu0 0
    %7245 = vmatpush2.bf16.msra.mxu0 0
    %7246 = vmatprep.mubr.bf16.mxu0 0
    %7247 = vmatmul.mubr.bf16.gmra.mxu0 %v7212
    %v7248 = vpop.f32.mrf.mxu0
    %v7249 = vadd.f32 0.0, %v7248
    %v7250 = vpop.f32.mrf.mxu0
    %v7251 = vpop.f32.mrf.mxu0
    %v7252 = vpop.f32.mrf.mxu0
    %7253 = vdwg.mxu0
    %v7254 = vadd.f32 %v7191, %v7249
    %s7255 = scalar_lea.vmem %s13, 64
    %v7256 = vld [vmem:[%s7255] sm:$0xf]
    %v7257 = vld [vmem:[%s7255 + $0x4] sm:$0xf]
    %v7258 = vld [vmem:[%s7255 + $0x8] sm:$0xf]
    %v7259 = vld [vmem:[%s7255 + $0xc] sm:$0xf]
    %v7264 = vunpack.c.l.b16 %v7256
    %v7265 = vunpack.c.l.b16 %v7257
    %v7266 = vunpack.c.l.b16 %v7258
    %v7267 = vunpack.c.l.b16 %v7259
    %v7268 = vpack.c.b16 %v7265, %v7264
    %v7269 = vpack.c.b16 %v7267, %v7266
    %v7273 = vsel %vm6813, %v7007, 0
    %7275 = vmatprep.subr.bf16.mxu0 0
    %7276 = vmatpush1.bf16.msra.mxu0 0
    %7277 = vmatprep.subr.bf16.mxu0 0
    %7278 = vmatpush1.bf16.msra.mxu0 0
    %7279 = vmatprep.subr.bf16.mxu0 0
    %7280 = vmatpush1.bf16.msra.mxu0 0
    %7281 = vmatprep.subr.bf16.mxu0 0
    %7282 = vmatpush1.bf16.msra.mxu0 0
    %7283 = vmatprep.subr.bf16.mxu0 0
    %7284 = vmatpush1.bf16.msra.mxu0 0
    %7285 = vmatprep.subr.bf16.mxu0 0
    %7286 = vmatpush1.bf16.msra.mxu0 0
    %7287 = vmatprep.subr.bf16.mxu0 0
    %7288 = vmatpush1.bf16.msra.mxu0 %v7269
    %7289 = vmatprep.subr.bf16.mxu0 0
    %7290 = vmatpush1.bf16.msra.mxu0 %v7268
    %7291 = vmatprep.subr.bf16.mxu0 0
    %7292 = vmatpush2.bf16.msra.mxu0 0
    %7293 = vmatprep.subr.bf16.mxu0 0
    %7294 = vmatpush2.bf16.msra.mxu0 0
    %7295 = vmatprep.subr.bf16.mxu0 0
    %7296 = vmatpush2.bf16.msra.mxu0 0
    %7297 = vmatprep.subr.bf16.mxu0 0
    %7298 = vmatpush2.bf16.msra.mxu0 0
    %7299 = vmatprep.subr.bf16.mxu0 0
    %7300 = vmatpush2.bf16.msra.mxu0 0
    %7301 = vmatprep.subr.bf16.mxu0 0
    %7302 = vmatpush2.bf16.msra.mxu0 0
    %7303 = vmatprep.subr.bf16.mxu0 0
    %7304 = vmatpush2.bf16.msra.mxu0 0
    %7305 = vmatprep.subr.bf16.mxu0 0
    %7306 = vmatpush2.bf16.msra.mxu0 0
    %7307 = vmatprep.mubr.bf16.mxu0 0
    %7308 = vmatmul.mubr.bf16.gmra.mxu0 %v7273
    %v7309 = vpop.f32.mrf.mxu0
    %v7310 = vadd.f32 0.0, %v7309
    %v7311 = vpop.f32.mrf.mxu0
    %v7312 = vpop.f32.mrf.mxu0
    %v7313 = vpop.f32.mrf.mxu0
    %7314 = vdwg.mxu0
    %v7315 = vadd.f32 %v7254, %v7310
    %s7316 = scalar_lea.vmem %s13, 80
    %v7317 = vld [vmem:[%s7316] sm:$0xf]
    %v7318 = vld [vmem:[%s7316 + $0x4] sm:$0xf]
    %v7319 = vld [vmem:[%s7316 + $0x8] sm:$0xf]
    %v7320 = vld [vmem:[%s7316 + $0xc] sm:$0xf]
    %v7322 = vrot.slane %v7007, 4
    %v7327 = vunpack.c.l.b16 %v7317
    %v7328 = vunpack.c.l.b16 %v7318
    %v7329 = vunpack.c.l.b16 %v7319
    %v7330 = vunpack.c.l.b16 %v7320
    %v7331 = vpack.c.b16 %v7328, %v7327
    %v7332 = vpack.c.b16 %v7330, %v7329
    %v7336 = vsel %vm6813, %v7322, 0
    %7338 = vmatprep.subr.bf16.mxu0 0
    %7339 = vmatpush1.bf16.msra.mxu0 0
    %7340 = vmatprep.subr.bf16.mxu0 0
    %7341 = vmatpush1.bf16.msra.mxu0 0
    %7342 = vmatprep.subr.bf16.mxu0 0
    %7343 = vmatpush1.bf16.msra.mxu0 0
    %7344 = vmatprep.subr.bf16.mxu0 0
    %7345 = vmatpush1.bf16.msra.mxu0 0
    %7346 = vmatprep.subr.bf16.mxu0 0
    %7347 = vmatpush1.bf16.msra.mxu0 0
    %7348 = vmatprep.subr.bf16.mxu0 0
    %7349 = vmatpush1.bf16.msra.mxu0 0
    %7350 = vmatprep.subr.bf16.mxu0 0
    %7351 = vmatpush1.bf16.msra.mxu0 %v7332
    %7352 = vmatprep.subr.bf16.mxu0 0
    %7353 = vmatpush1.bf16.msra.mxu0 %v7331
    %7354 = vmatprep.subr.bf16.mxu0 0
    %7355 = vmatpush2.bf16.msra.mxu0 0
    %7356 = vmatprep.subr.bf16.mxu0 0
    %7357 = vmatpush2.bf16.msra.mxu0 0
    %7358 = vmatprep.subr.bf16.mxu0 0
    %7359 = vmatpush2.bf16.msra.mxu0 0
    %7360 = vmatprep.subr.bf16.mxu0 0
    %7361 = vmatpush2.bf16.msra.mxu0 0
    %7362 = vmatprep.subr.bf16.mxu0 0
    %7363 = vmatpush2.bf16.msra.mxu0 0
    %7364 = vmatprep.subr.bf16.mxu0 0
    %7365 = vmatpush2.bf16.msra.mxu0 0
    %7366 = vmatprep.subr.bf16.mxu0 0
    %7367 = vmatpush2.bf16.msra.mxu0 0
    %7368 = vmatprep.subr.bf16.mxu0 0
    %7369 = vmatpush2.bf16.msra.mxu0 0
    %7370 = vmatprep.mubr.bf16.mxu0 0
    %7371 = vmatmul.mubr.bf16.gmra.mxu0 %v7336
    %v7372 = vpop.f32.mrf.mxu0
    %v7373 = vadd.f32 0.0, %v7372
    %v7374 = vpop.f32.mrf.mxu0
    %v7375 = vpop.f32.mrf.mxu0
    %v7376 = vpop.f32.mrf.mxu0
    %7377 = vdwg.mxu0
    %v7378 = vadd.f32 %v7315, %v7373
    %s7379 = scalar_lea.vmem %s13, 96
    %v7380 = vld [vmem:[%s7379] sm:$0xf]
    %v7381 = vld [vmem:[%s7379 + $0x4] sm:$0xf]
    %v7382 = vld [vmem:[%s7379 + $0x8] sm:$0xf]
    %v7383 = vld [vmem:[%s7379 + $0xc] sm:$0xf]
    %v7388 = vunpack.c.l.b16 %v7380
    %v7389 = vunpack.c.l.b16 %v7381
    %v7390 = vunpack.c.l.b16 %v7382
    %v7391 = vunpack.c.l.b16 %v7383
    %v7392 = vpack.c.b16 %v7389, %v7388
    %v7393 = vpack.c.b16 %v7391, %v7390
    %v7397 = vsel %vm6813, %v7008, 0
    %7399 = vmatprep.subr.bf16.mxu0 0
    %7400 = vmatpush1.bf16.msra.mxu0 0
    %7401 = vmatprep.subr.bf16.mxu0 0
    %7402 = vmatpush1.bf16.msra.mxu0 0
    %7403 = vmatprep.subr.bf16.mxu0 0
    %7404 = vmatpush1.bf16.msra.mxu0 0
    %7405 = vmatprep.subr.bf16.mxu0 0
    %7406 = vmatpush1.bf16.msra.mxu0 0
    %7407 = vmatprep.subr.bf16.mxu0 0
    %7408 = vmatpush1.bf16.msra.mxu0 0
    %7409 = vmatprep.subr.bf16.mxu0 0
    %7410 = vmatpush1.bf16.msra.mxu0 0
    %7411 = vmatprep.subr.bf16.mxu0 0
    %7412 = vmatpush1.bf16.msra.mxu0 %v7393
    %7413 = vmatprep.subr.bf16.mxu0 0
    %7414 = vmatpush1.bf16.msra.mxu0 %v7392
    %7415 = vmatprep.subr.bf16.mxu0 0
    %7416 = vmatpush2.bf16.msra.mxu0 0
    %7417 = vmatprep.subr.bf16.mxu0 0
    %7418 = vmatpush2.bf16.msra.mxu0 0
    %7419 = vmatprep.subr.bf16.mxu0 0
    %7420 = vmatpush2.bf16.msra.mxu0 0
    %7421 = vmatprep.subr.bf16.mxu0 0
    %7422 = vmatpush2.bf16.msra.mxu0 0
    %7423 = vmatprep.subr.bf16.mxu0 0
    %7424 = vmatpush2.bf16.msra.mxu0 0
    %7425 = vmatprep.subr.bf16.mxu0 0
    %7426 = vmatpush2.bf16.msra.mxu0 0
    %7427 = vmatprep.subr.bf16.mxu0 0
    %7428 = vmatpush2.bf16.msra.mxu0 0
    %7429 = vmatprep.subr.bf16.mxu0 0
    %7430 = vmatpush2.bf16.msra.mxu0 0
    %7431 = vmatprep.mubr.bf16.mxu0 0
    %7432 = vmatmul.mubr.bf16.gmra.mxu0 %v7397
    %v7433 = vpop.f32.mrf.mxu0
    %v7434 = vadd.f32 0.0, %v7433
    %v7435 = vpop.f32.mrf.mxu0
    %v7436 = vpop.f32.mrf.mxu0
    %v7437 = vpop.f32.mrf.mxu0
    %7438 = vdwg.mxu0
    %v7439 = vadd.f32 %v7378, %v7434
    %s7440 = scalar_lea.vmem %s13, 112
    %v7441 = vld [vmem:[%s7440] sm:$0xf]
    %v7442 = vld [vmem:[%s7440 + $0x4] sm:$0xf]
    %v7443 = vld [vmem:[%s7440 + $0x8] sm:$0xf]
    %v7444 = vld [vmem:[%s7440 + $0xc] sm:$0xf]
    %v7446 = vrot.slane %v7008, 4
    %v7451 = vunpack.c.l.b16 %v7441
    %v7452 = vunpack.c.l.b16 %v7442
    %v7453 = vunpack.c.l.b16 %v7443
    %v7454 = vunpack.c.l.b16 %v7444
    %v7455 = vpack.c.b16 %v7452, %v7451
    %v7456 = vpack.c.b16 %v7454, %v7453
    %v7460 = vsel %vm6813, %v7446, 0
    %7462 = vmatprep.subr.bf16.mxu0 0
    %7463 = vmatpush1.bf16.msra.mxu0 0
    %7464 = vmatprep.subr.bf16.mxu0 0
    %7465 = vmatpush1.bf16.msra.mxu0 0
    %7466 = vmatprep.subr.bf16.mxu0 0
    %7467 = vmatpush1.bf16.msra.mxu0 0
    %7468 = vmatprep.subr.bf16.mxu0 0
    %7469 = vmatpush1.bf16.msra.mxu0 0
    %7470 = vmatprep.subr.bf16.mxu0 0
    %7471 = vmatpush1.bf16.msra.mxu0 0
    %7472 = vmatprep.subr.bf16.mxu0 0
    %7473 = vmatpush1.bf16.msra.mxu0 0
    %7474 = vmatprep.subr.bf16.mxu0 0
    %7475 = vmatpush1.bf16.msra.mxu0 %v7456
    %7476 = vmatprep.subr.bf16.mxu0 0
    %7477 = vmatpush1.bf16.msra.mxu0 %v7455
    %7478 = vmatprep.subr.bf16.mxu0 0
    %7479 = vmatpush2.bf16.msra.mxu0 0
    %7480 = vmatprep.subr.bf16.mxu0 0
    %7481 = vmatpush2.bf16.msra.mxu0 0
    %7482 = vmatprep.subr.bf16.mxu0 0
    %7483 = vmatpush2.bf16.msra.mxu0 0
    %7484 = vmatprep.subr.bf16.mxu0 0
    %7485 = vmatpush2.bf16.msra.mxu0 0
    %7486 = vmatprep.subr.bf16.mxu0 0
    %7487 = vmatpush2.bf16.msra.mxu0 0
    %7488 = vmatprep.subr.bf16.mxu0 0
    %7489 = vmatpush2.bf16.msra.mxu0 0
    %7490 = vmatprep.subr.bf16.mxu0 0
    %7491 = vmatpush2.bf16.msra.mxu0 0
    %7492 = vmatprep.subr.bf16.mxu0 0
    %7493 = vmatpush2.bf16.msra.mxu0 0
    %7494 = vmatprep.mubr.bf16.mxu0 0
    %7495 = vmatmul.mubr.bf16.gmra.mxu0 %v7460
    %v7496 = vpop.f32.mrf.mxu0
    %v7497 = vadd.f32 0.0, %v7496
    %v7498 = vpop.f32.mrf.mxu0
    %v7499 = vpop.f32.mrf.mxu0
    %v7500 = vpop.f32.mrf.mxu0
    %7501 = vdwg.mxu0
    %v7502 = vadd.f32 %v7439, %v7497
    %s7503 = scalar_lea.vmem %s13, 128
    %v7504 = vld [vmem:[%s7503] sm:$0xf]
    %v7505 = vld [vmem:[%s7503 + $0x4] sm:$0xf]
    %v7506 = vld [vmem:[%s7503 + $0x8] sm:$0xf]
    %v7507 = vld [vmem:[%s7503 + $0xc] sm:$0xf]
    %v7512 = vunpack.c.l.b16 %v7504
    %v7513 = vunpack.c.l.b16 %v7505
    %v7514 = vunpack.c.l.b16 %v7506
    %v7515 = vunpack.c.l.b16 %v7507
    %v7516 = vpack.c.b16 %v7513, %v7512
    %v7517 = vpack.c.b16 %v7515, %v7514
    %v7521 = vsel %vm6813, %v7009, 0
    %7523 = vmatprep.subr.bf16.mxu0 0
    %7524 = vmatpush1.bf16.msra.mxu0 0
    %7525 = vmatprep.subr.bf16.mxu0 0
    %7526 = vmatpush1.bf16.msra.mxu0 0
    %7527 = vmatprep.subr.bf16.mxu0 0
    %7528 = vmatpush1.bf16.msra.mxu0 0
    %7529 = vmatprep.subr.bf16.mxu0 0
    %7530 = vmatpush1.bf16.msra.mxu0 0
    %7531 = vmatprep.subr.bf16.mxu0 0
    %7532 = vmatpush1.bf16.msra.mxu0 0
    %7533 = vmatprep.subr.bf16.mxu0 0
    %7534 = vmatpush1.bf16.msra.mxu0 0
    %7535 = vmatprep.subr.bf16.mxu0 0
    %7536 = vmatpush1.bf16.msra.mxu0 %v7517
    %7537 = vmatprep.subr.bf16.mxu0 0
    %7538 = vmatpush1.bf16.msra.mxu0 %v7516
    %7539 = vmatprep.subr.bf16.mxu0 0
    %7540 = vmatpush2.bf16.msra.mxu0 0
    %7541 = vmatprep.subr.bf16.mxu0 0
    %7542 = vmatpush2.bf16.msra.mxu0 0
    %7543 = vmatprep.subr.bf16.mxu0 0
    %7544 = vmatpush2.bf16.msra.mxu0 0
    %7545 = vmatprep.subr.bf16.mxu0 0
    %7546 = vmatpush2.bf16.msra.mxu0 0
    %7547 = vmatprep.subr.bf16.mxu0 0
    %7548 = vmatpush2.bf16.msra.mxu0 0
    %7549 = vmatprep.subr.bf16.mxu0 0
    %7550 = vmatpush2.bf16.msra.mxu0 0
    %7551 = vmatprep.subr.bf16.mxu0 0
    %7552 = vmatpush2.bf16.msra.mxu0 0
    %7553 = vmatprep.subr.bf16.mxu0 0
    %7554 = vmatpush2.bf16.msra.mxu0 0
    %7555 = vmatprep.mubr.bf16.mxu0 0
    %7556 = vmatmul.mubr.bf16.gmra.mxu0 %v7521
    %v7557 = vpop.f32.mrf.mxu0
    %v7558 = vadd.f32 0.0, %v7557
    %v7559 = vpop.f32.mrf.mxu0
    %v7560 = vpop.f32.mrf.mxu0
    %v7561 = vpop.f32.mrf.mxu0
    %7562 = vdwg.mxu0
    %v7563 = vadd.f32 %v7502, %v7558
    %v7564 = vld [vmem:[%s14] sm:$0x1]
    %v7565 = vld [vmem:[%s15] sm:$0x1]
    %vm7566 = vcmask 523264
    %v7567 = vsel %vm7566, %v7563, 0.0
    %v7568 = vrot.slane %v7567, 4
    %v7569 = vadd.f32 %v7567, %v7568
    %v7570 = vrot.slane %v7569, 2
    %v7571 = vadd.f32 %v7569, %v7570
    %v7572 = vrot.slane %v7571, 1
    %v7573 = vadd.f32 %v7571, %v7572
    %v7574 = vrcp.pop 8.0
    %v7575 = vmul.f32 %v7573, %v7574
    %v7576 = vsub.f32 %v7563, %v7575
    %v7577 = vmul.f32 %v7576, %v7576
    %v7578 = vsel %vm7566, %v7577, 0.0
    %v7579 = vrot.slane %v7578, 4
    %v7580 = vadd.f32 %v7578, %v7579
    %v7581 = vrot.slane %v7580, 2
    %v7582 = vadd.f32 %v7580, %v7581
    %v7583 = vrot.slane %v7582, 1
    %v7584 = vadd.f32 %v7582, %v7583
    %v7585 = vmul.f32 %v7584, %v7574
    %v7586 = vadd.f32 %v7585, 1e-05
    %v7587 = vrsqrt.pop %v7586
    %v7588 = vmul.f32 %v7564, %v7587
    %v7589 = vmul.f32 %v7588, %v7575
    %v7590 = vsub.f32 %v7565, %v7589
    %v7592 = vlaneseq
    %v7593 = vshrl.u32 %v7592, 7
    %v7594 = vsub.s32 0, %v7593
    %v7595 = vrot.slane %v7588, %v7594
    %v7597 = vmul.f32 %v7563, %v7595
    %v7599 = vlaneseq
    %v7600 = vshrl.u32 %v7599, 7
    %v7601 = vsub.s32 0, %v7600
    %v7602 = vrot.slane %v7590, %v7601
    %v7604 = vadd.f32 %v7597, %v7602
    %v7605 = vmul.f32 %v7604, 0.01
    %v7606 = vmax.f32 %v7604, %v7605
    %v7607 = vpack.c.bf16 %v7606, %v7606
    %v7608 = vld [vmem:[%s16] sm:$0xf]
    %v7609 = vld [vmem:[%s16 + $0x4] sm:$0xf]
    %v7610 = vld [vmem:[%s16 + $0x8] sm:$0xf]
    %v7611 = vld [vmem:[%s16 + $0xc] sm:$0xf]
    %v7612 = vld [vmem:[%s16 + $0x10] sm:$0xf]
    %v7613 = vld [vmem:[%s16 + $0x14] sm:$0xf]
    %v7614 = vld [vmem:[%s16 + $0x18] sm:$0xf]
    %v7615 = vld [vmem:[%s16 + $0x1c] sm:$0xf]
    %v7616 = vld [vmem:[%s16 + $0x20] sm:$0xf]
    %v7626 = vunpack.c.l.b16 %v7608
    %v7627 = vunpack.c.l.b16 %v7609
    %v7628 = vunpack.c.l.b16 %v7610
    %v7629 = vunpack.c.l.b16 %v7611
    %v7630 = vunpack.c.l.b16 %v7612
    %v7631 = vunpack.c.l.b16 %v7613
    %v7632 = vunpack.c.l.b16 %v7614
    %v7633 = vunpack.c.l.b16 %v7615
    %v7634 = vunpack.c.l.b16 %v7616
    %v7635 = vpack.c.b16 %v7627, %v7626
    %v7636 = vpack.c.b16 %v7629, %v7628
    %v7637 = vpack.c.b16 %v7631, %v7630
    %v7638 = vpack.c.b16 %v7633, %v7632
    %v7639 = vpack.c.b16 %v7634, %v7634
    %v7641 = vsel %vm702, %v7635, 0
    %v7644 = vsel %vm702, %v7636, 0
    %v7647 = vsel %vm702, %v7637, 0
    %v7650 = vsel %vm702, %v7638, 0
    %v7653 = vsel %vm702, %v7639, 0
    %v7656 = vsel %vm404, %v7607, 0
    %7658 = vmatprep.subr.bf16.mxu0 0
    %7659 = vmatpush1.bf16.msra.mxu0 0
    %7660 = vmatprep.subr.bf16.mxu0 0
    %7661 = vmatpush1.bf16.msra.mxu0 0
    %7662 = vmatprep.subr.bf16.mxu0 0
    %7663 = vmatpush1.bf16.msra.mxu0 0
    %7664 = vmatprep.subr.bf16.mxu0 0
    %7665 = vmatpush1.bf16.msra.mxu0 0
    %7666 = vmatprep.subr.bf16.mxu0 0
    %7667 = vmatpush1.bf16.msra.mxu0 0
    %7668 = vmatprep.subr.bf16.mxu0 0
    %7669 = vmatpush1.bf16.msra.mxu0 0
    %7670 = vmatprep.subr.bf16.mxu0 0
    %7671 = vmatpush1.bf16.msra.mxu0 0
    %7672 = vmatprep.subr.bf16.mxu0 0
    %7673 = vmatpush1.bf16.msra.mxu0 %v7656
    %7674 = vmatprep.subr.bf16.mxu0 0
    %7675 = vmatpush2.bf16.msra.mxu0 0
    %7676 = vmatprep.subr.bf16.mxu0 0
    %7677 = vmatpush2.bf16.msra.mxu0 0
    %7678 = vmatprep.subr.bf16.mxu0 0
    %7679 = vmatpush2.bf16.msra.mxu0 0
    %7680 = vmatprep.subr.bf16.mxu0 0
    %7681 = vmatpush2.bf16.msra.mxu0 0
    %7682 = vmatprep.subr.bf16.mxu0 0
    %7683 = vmatpush2.bf16.msra.mxu0 0
    %7684 = vmatprep.subr.bf16.mxu0 0
    %7685 = vmatpush2.bf16.msra.mxu0 0
    %7686 = vmatprep.subr.bf16.mxu0 0
    %7687 = vmatpush2.bf16.msra.mxu0 0
    %7688 = vmatprep.subr.bf16.mxu0 0
    %7689 = vmatpush2.bf16.msra.mxu0 0
    %7690 = vmatprep.mubr.bf16.mxu0 0
    %7691 = vmatmul.mubr.bf16.gmra.mxu0 %v7641
    %v7692 = vpop.f32.mrf.mxu0
    %v7693 = vadd.f32 0.0, %v7692
    %v7694 = vpop.f32.mrf.mxu0
    %v7695 = vpop.f32.mrf.mxu0
    %v7696 = vadd.f32 0.0, %v7695
    %v7697 = vpop.f32.mrf.mxu0
    %7698 = vmatprep.mubr.bf16.mxu0 0
    %7699 = vmatmul.mubr.bf16.gmra.mxu0 %v7644
    %v7700 = vpop.f32.mrf.mxu0
    %v7701 = vadd.f32 0.0, %v7700
    %v7702 = vpop.f32.mrf.mxu0
    %v7703 = vpop.f32.mrf.mxu0
    %v7704 = vadd.f32 0.0, %v7703
    %v7705 = vpop.f32.mrf.mxu0
    %7706 = vmatprep.mubr.bf16.mxu0 0
    %7707 = vmatmul.mubr.bf16.gmra.mxu0 %v7647
    %v7708 = vpop.f32.mrf.mxu0
    %v7709 = vadd.f32 0.0, %v7708
    %v7710 = vpop.f32.mrf.mxu0
    %v7711 = vpop.f32.mrf.mxu0
    %v7712 = vadd.f32 0.0, %v7711
    %v7713 = vpop.f32.mrf.mxu0
    %7714 = vmatprep.mubr.bf16.mxu0 0
    %7715 = vmatmul.mubr.bf16.gmra.mxu0 %v7650
    %v7716 = vpop.f32.mrf.mxu0
    %v7717 = vadd.f32 0.0, %v7716
    %v7718 = vpop.f32.mrf.mxu0
    %v7719 = vpop.f32.mrf.mxu0
    %v7720 = vadd.f32 0.0, %v7719
    %v7721 = vpop.f32.mrf.mxu0
    %7722 = vmatprep.mubr.bf16.mxu0 0
    %7723 = vmatmul.mubr.bf16.gmra.mxu0 %v7653
    %v7724 = vpop.f32.mrf.mxu0
    %v7725 = vadd.f32 0.0, %v7724
    %v7726 = vpop.f32.mrf.mxu0
    %v7727 = vpop.f32.mrf.mxu0
    %v7728 = vpop.f32.mrf.mxu0
    %7729 = vdwg.mxu0
    %v7730 = vpack.c.bf16 %v7696, %v7693
    %v7731 = vpack.c.bf16 %v7704, %v7701
    %v7732 = vpack.c.bf16 %v7712, %v7709
    %v7733 = vpack.c.bf16 %v7720, %v7717
    %v7734 = vpack.c.bf16 %v7725, %v7725
    %v7735 = vld [vmem:[%s17] sm:$0xf]
    %v7736 = vld [vmem:[%s17 + $0x4] sm:$0xf]
    %v7737 = vld [vmem:[%s17 + $0x8] sm:$0xf]
    %v7738 = vld [vmem:[%s17 + $0xc] sm:$0xf]
    %v7739 = vld [vmem:[%s17 + $0x10] sm:$0xf]
    %v7740 = vld [vmem:[%s17 + $0x14] sm:$0xf]
    %v7741 = vld [vmem:[%s17 + $0x18] sm:$0xf]
    %v7742 = vld [vmem:[%s17 + $0x1c] sm:$0xf]
    %s7743 = scalar_lea.vmem %s17, 32
    %v7744 = vld [vmem:[%s7743] sm:$0xf]
    %v7745 = vld [vmem:[%s7743 + $0x4] sm:$0xf]
    %v7746 = vld [vmem:[%s7743 + $0x8] sm:$0xf]
    %v7747 = vld [vmem:[%s7743 + $0xc] sm:$0xf]
    %v7748 = vld [vmem:[%s7743 + $0x10] sm:$0xf]
    %v7749 = vld [vmem:[%s7743 + $0x14] sm:$0xf]
    %v7750 = vld [vmem:[%s7743 + $0x18] sm:$0xf]
    %v7751 = vld [vmem:[%s7743 + $0x1c] sm:$0xf]
    %v7753 = vrot.slane %v7730, 4
    %v7762 = vunpack.c.l.b16 %v7744
    %v7763 = vunpack.c.l.b16 %v7745
    %v7764 = vunpack.c.l.b16 %v7746
    %v7765 = vunpack.c.l.b16 %v7747
    %v7766 = vunpack.c.l.b16 %v7748
    %v7767 = vunpack.c.l.b16 %v7749
    %v7768 = vunpack.c.l.b16 %v7750
    %v7769 = vunpack.c.l.b16 %v7751
    %v7770 = vpack.c.b16 %v7763, %v7762
    %v7771 = vpack.c.b16 %v7765, %v7764
    %v7772 = vpack.c.b16 %v7767, %v7766
    %v7773 = vpack.c.b16 %v7769, %v7768
    %v7779 = vsel %vm7566, %v7753, 0
    %7781 = vmatprep.subr.bf16.mxu0 0
    %7782 = vmatpush1.bf16.msra.mxu0 0
    %7783 = vmatprep.subr.bf16.mxu0 0
    %7784 = vmatpush1.bf16.msra.mxu0 0
    %7785 = vmatprep.subr.bf16.mxu0 0
    %7786 = vmatpush1.bf16.msra.mxu0 0
    %7787 = vmatprep.subr.bf16.mxu0 0
    %7788 = vmatpush1.bf16.msra.mxu0 0
    %7789 = vmatprep.subr.bf16.mxu0 0
    %7790 = vmatpush1.bf16.msra.mxu0 %v7773
    %7791 = vmatprep.subr.bf16.mxu0 0
    %7792 = vmatpush1.bf16.msra.mxu0 %v7772
    %7793 = vmatprep.subr.bf16.mxu0 0
    %7794 = vmatpush1.bf16.msra.mxu0 %v7771
    %7795 = vmatprep.subr.bf16.mxu0 0
    %7796 = vmatpush1.bf16.msra.mxu0 %v7770
    %7797 = vmatprep.subr.bf16.mxu0 0
    %7798 = vmatpush2.bf16.msra.mxu0 0
    %7799 = vmatprep.subr.bf16.mxu0 0
    %7800 = vmatpush2.bf16.msra.mxu0 0
    %7801 = vmatprep.subr.bf16.mxu0 0
    %7802 = vmatpush2.bf16.msra.mxu0 0
    %7803 = vmatprep.subr.bf16.mxu0 0
    %7804 = vmatpush2.bf16.msra.mxu0 0
    %7805 = vmatprep.subr.bf16.mxu0 0
    %7806 = vmatpush2.bf16.msra.mxu0 0
    %7807 = vmatprep.subr.bf16.mxu0 0
    %7808 = vmatpush2.bf16.msra.mxu0 0
    %7809 = vmatprep.subr.bf16.mxu0 0
    %7810 = vmatpush2.bf16.msra.mxu0 0
    %7811 = vmatprep.subr.bf16.mxu0 0
    %7812 = vmatpush2.bf16.msra.mxu0 0
    %7813 = vmatprep.mubr.bf16.mxu0 0
    %7814 = vmatmul.mubr.bf16.gmra.mxu0 %v7779
    %v7815 = vpop.f32.mrf.mxu0
    %v7816 = vadd.f32 0.0, %v7815
    %v7817 = vpop.f32.mrf.mxu0
    %v7818 = vpop.f32.mrf.mxu0
    %v7819 = vpop.f32.mrf.mxu0
    %7820 = vdwg.mxu0
    %v7829 = vunpack.c.l.b16 %v7735
    %v7830 = vunpack.c.l.b16 %v7736
    %v7831 = vunpack.c.l.b16 %v7737
    %v7832 = vunpack.c.l.b16 %v7738
    %v7833 = vunpack.c.l.b16 %v7739
    %v7834 = vunpack.c.l.b16 %v7740
    %v7835 = vunpack.c.l.b16 %v7741
    %v7836 = vunpack.c.l.b16 %v7742
    %v7837 = vpack.c.b16 %v7830, %v7829
    %v7838 = vpack.c.b16 %v7832, %v7831
    %v7839 = vpack.c.b16 %v7834, %v7833
    %v7840 = vpack.c.b16 %v7836, %v7835
    %v7846 = vsel %vm7566, %v7730, 0
    %7848 = vmatprep.subr.bf16.mxu0 0
    %7849 = vmatpush1.bf16.msra.mxu0 0
    %7850 = vmatprep.subr.bf16.mxu0 0
    %7851 = vmatpush1.bf16.msra.mxu0 0
    %7852 = vmatprep.subr.bf16.mxu0 0
    %7853 = vmatpush1.bf16.msra.mxu0 0
    %7854 = vmatprep.subr.bf16.mxu0 0
    %7855 = vmatpush1.bf16.msra.mxu0 0
    %7856 = vmatprep.subr.bf16.mxu0 0
    %7857 = vmatpush1.bf16.msra.mxu0 %v7840
    %7858 = vmatprep.subr.bf16.mxu0 0
    %7859 = vmatpush1.bf16.msra.mxu0 %v7839
    %7860 = vmatprep.subr.bf16.mxu0 0
    %7861 = vmatpush1.bf16.msra.mxu0 %v7838
    %7862 = vmatprep.subr.bf16.mxu0 0
    %7863 = vmatpush1.bf16.msra.mxu0 %v7837
    %7864 = vmatprep.subr.bf16.mxu0 0
    %7865 = vmatpush2.bf16.msra.mxu0 0
    %7866 = vmatprep.subr.bf16.mxu0 0
    %7867 = vmatpush2.bf16.msra.mxu0 0
    %7868 = vmatprep.subr.bf16.mxu0 0
    %7869 = vmatpush2.bf16.msra.mxu0 0
    %7870 = vmatprep.subr.bf16.mxu0 0
    %7871 = vmatpush2.bf16.msra.mxu0 0
    %7872 = vmatprep.subr.bf16.mxu0 0
    %7873 = vmatpush2.bf16.msra.mxu0 0
    %7874 = vmatprep.subr.bf16.mxu0 0
    %7875 = vmatpush2.bf16.msra.mxu0 0
    %7876 = vmatprep.subr.bf16.mxu0 0
    %7877 = vmatpush2.bf16.msra.mxu0 0
    %7878 = vmatprep.subr.bf16.mxu0 0
    %7879 = vmatpush2.bf16.msra.mxu0 0
    %7880 = vmatprep.mubr.bf16.mxu0 0
    %7881 = vmatmul.mubr.bf16.gmra.mxu0 %v7846
    %v7882 = vpop.f32.mrf.mxu0
    %v7883 = vadd.f32 %v7816, %v7882
    %v7884 = vpop.f32.mrf.mxu0
    %v7885 = vpop.f32.mrf.mxu0
    %v7886 = vpop.f32.mrf.mxu0
    %7887 = vdwg.mxu0
    %s7888 = scalar_lea.vmem %s17, 64
    %v7889 = vld [vmem:[%s7888] sm:$0xf]
    %v7890 = vld [vmem:[%s7888 + $0x4] sm:$0xf]
    %v7891 = vld [vmem:[%s7888 + $0x8] sm:$0xf]
    %v7892 = vld [vmem:[%s7888 + $0xc] sm:$0xf]
    %v7893 = vld [vmem:[%s7888 + $0x10] sm:$0xf]
    %v7894 = vld [vmem:[%s7888 + $0x14] sm:$0xf]
    %v7895 = vld [vmem:[%s7888 + $0x18] sm:$0xf]
    %v7896 = vld [vmem:[%s7888 + $0x1c] sm:$0xf]
    %v7905 = vunpack.c.l.b16 %v7889
    %v7906 = vunpack.c.l.b16 %v7890
    %v7907 = vunpack.c.l.b16 %v7891
    %v7908 = vunpack.c.l.b16 %v7892
    %v7909 = vunpack.c.l.b16 %v7893
    %v7910 = vunpack.c.l.b16 %v7894
    %v7911 = vunpack.c.l.b16 %v7895
    %v7912 = vunpack.c.l.b16 %v7896
    %v7913 = vpack.c.b16 %v7906, %v7905
    %v7914 = vpack.c.b16 %v7908, %v7907
    %v7915 = vpack.c.b16 %v7910, %v7909
    %v7916 = vpack.c.b16 %v7912, %v7911
    %v7922 = vsel %vm7566, %v7731, 0
    %7924 = vmatprep.subr.bf16.mxu0 0
    %7925 = vmatpush1.bf16.msra.mxu0 0
    %7926 = vmatprep.subr.bf16.mxu0 0
    %7927 = vmatpush1.bf16.msra.mxu0 0
    %7928 = vmatprep.subr.bf16.mxu0 0
    %7929 = vmatpush1.bf16.msra.mxu0 0
    %7930 = vmatprep.subr.bf16.mxu0 0
    %7931 = vmatpush1.bf16.msra.mxu0 0
    %7932 = vmatprep.subr.bf16.mxu0 0
    %7933 = vmatpush1.bf16.msra.mxu0 %v7916
    %7934 = vmatprep.subr.bf16.mxu0 0
    %7935 = vmatpush1.bf16.msra.mxu0 %v7915
    %7936 = vmatprep.subr.bf16.mxu0 0
    %7937 = vmatpush1.bf16.msra.mxu0 %v7914
    %7938 = vmatprep.subr.bf16.mxu0 0
    %7939 = vmatpush1.bf16.msra.mxu0 %v7913
    %7940 = vmatprep.subr.bf16.mxu0 0
    %7941 = vmatpush2.bf16.msra.mxu0 0
    %7942 = vmatprep.subr.bf16.mxu0 0
    %7943 = vmatpush2.bf16.msra.mxu0 0
    %7944 = vmatprep.subr.bf16.mxu0 0
    %7945 = vmatpush2.bf16.msra.mxu0 0
    %7946 = vmatprep.subr.bf16.mxu0 0
    %7947 = vmatpush2.bf16.msra.mxu0 0
    %7948 = vmatprep.subr.bf16.mxu0 0
    %7949 = vmatpush2.bf16.msra.mxu0 0
    %7950 = vmatprep.subr.bf16.mxu0 0
    %7951 = vmatpush2.bf16.msra.mxu0 0
    %7952 = vmatprep.subr.bf16.mxu0 0
    %7953 = vmatpush2.bf16.msra.mxu0 0
    %7954 = vmatprep.subr.bf16.mxu0 0
    %7955 = vmatpush2.bf16.msra.mxu0 0
    %7956 = vmatprep.mubr.bf16.mxu0 0
    %7957 = vmatmul.mubr.bf16.gmra.mxu0 %v7922
    %v7958 = vpop.f32.mrf.mxu0
    %v7959 = vadd.f32 0.0, %v7958
    %v7960 = vpop.f32.mrf.mxu0
    %v7961 = vpop.f32.mrf.mxu0
    %v7962 = vpop.f32.mrf.mxu0
    %7963 = vdwg.mxu0
    %v7964 = vadd.f32 %v7883, %v7959
    %s7965 = scalar_lea.vmem %s17, 96
    %v7966 = vld [vmem:[%s7965] sm:$0xf]
    %v7967 = vld [vmem:[%s7965 + $0x4] sm:$0xf]
    %v7968 = vld [vmem:[%s7965 + $0x8] sm:$0xf]
    %v7969 = vld [vmem:[%s7965 + $0xc] sm:$0xf]
    %v7970 = vld [vmem:[%s7965 + $0x10] sm:$0xf]
    %v7971 = vld [vmem:[%s7965 + $0x14] sm:$0xf]
    %v7972 = vld [vmem:[%s7965 + $0x18] sm:$0xf]
    %v7973 = vld [vmem:[%s7965 + $0x1c] sm:$0xf]
    %v7975 = vrot.slane %v7731, 4
    %v7984 = vunpack.c.l.b16 %v7966
    %v7985 = vunpack.c.l.b16 %v7967
    %v7986 = vunpack.c.l.b16 %v7968
    %v7987 = vunpack.c.l.b16 %v7969
    %v7988 = vunpack.c.l.b16 %v7970
    %v7989 = vunpack.c.l.b16 %v7971
    %v7990 = vunpack.c.l.b16 %v7972
    %v7991 = vunpack.c.l.b16 %v7973
    %v7992 = vpack.c.b16 %v7985, %v7984
    %v7993 = vpack.c.b16 %v7987, %v7986
    %v7994 = vpack.c.b16 %v7989, %v7988
    %v7995 = vpack.c.b16 %v7991, %v7990
    %v8001 = vsel %vm7566, %v7975, 0
    %8003 = vmatprep.subr.bf16.mxu0 0
    %8004 = vmatpush1.bf16.msra.mxu0 0
    %8005 = vmatprep.subr.bf16.mxu0 0
    %8006 = vmatpush1.bf16.msra.mxu0 0
    %8007 = vmatprep.subr.bf16.mxu0 0
    %8008 = vmatpush1.bf16.msra.mxu0 0
    %8009 = vmatprep.subr.bf16.mxu0 0
    %8010 = vmatpush1.bf16.msra.mxu0 0
    %8011 = vmatprep.subr.bf16.mxu0 0
    %8012 = vmatpush1.bf16.msra.mxu0 %v7995
    %8013 = vmatprep.subr.bf16.mxu0 0
    %8014 = vmatpush1.bf16.msra.mxu0 %v7994
    %8015 = vmatprep.subr.bf16.mxu0 0
    %8016 = vmatpush1.bf16.msra.mxu0 %v7993
    %8017 = vmatprep.subr.bf16.mxu0 0
    %8018 = vmatpush1.bf16.msra.mxu0 %v7992
    %8019 = vmatprep.subr.bf16.mxu0 0
    %8020 = vmatpush2.bf16.msra.mxu0 0
    %8021 = vmatprep.subr.bf16.mxu0 0
    %8022 = vmatpush2.bf16.msra.mxu0 0
    %8023 = vmatprep.subr.bf16.mxu0 0
    %8024 = vmatpush2.bf16.msra.mxu0 0
    %8025 = vmatprep.subr.bf16.mxu0 0
    %8026 = vmatpush2.bf16.msra.mxu0 0
    %8027 = vmatprep.subr.bf16.mxu0 0
    %8028 = vmatpush2.bf16.msra.mxu0 0
    %8029 = vmatprep.subr.bf16.mxu0 0
    %8030 = vmatpush2.bf16.msra.mxu0 0
    %8031 = vmatprep.subr.bf16.mxu0 0
    %8032 = vmatpush2.bf16.msra.mxu0 0
    %8033 = vmatprep.subr.bf16.mxu0 0
    %8034 = vmatpush2.bf16.msra.mxu0 0
    %8035 = vmatprep.mubr.bf16.mxu0 0
    %8036 = vmatmul.mubr.bf16.gmra.mxu0 %v8001
    %v8037 = vpop.f32.mrf.mxu0
    %v8038 = vadd.f32 0.0, %v8037
    %v8039 = vpop.f32.mrf.mxu0
    %v8040 = vpop.f32.mrf.mxu0
    %v8041 = vpop.f32.mrf.mxu0
    %8042 = vdwg.mxu0
    %v8043 = vadd.f32 %v7964, %v8038
    %s8044 = scalar_lea.vmem %s17, 128
    %v8045 = vld [vmem:[%s8044] sm:$0xf]
    %v8046 = vld [vmem:[%s8044 + $0x4] sm:$0xf]
    %v8047 = vld [vmem:[%s8044 + $0x8] sm:$0xf]
    %v8048 = vld [vmem:[%s8044 + $0xc] sm:$0xf]
    %v8049 = vld [vmem:[%s8044 + $0x10] sm:$0xf]
    %v8050 = vld [vmem:[%s8044 + $0x14] sm:$0xf]
    %v8051 = vld [vmem:[%s8044 + $0x18] sm:$0xf]
    %v8052 = vld [vmem:[%s8044 + $0x1c] sm:$0xf]
    %v8061 = vunpack.c.l.b16 %v8045
    %v8062 = vunpack.c.l.b16 %v8046
    %v8063 = vunpack.c.l.b16 %v8047
    %v8064 = vunpack.c.l.b16 %v8048
    %v8065 = vunpack.c.l.b16 %v8049
    %v8066 = vunpack.c.l.b16 %v8050
    %v8067 = vunpack.c.l.b16 %v8051
    %v8068 = vunpack.c.l.b16 %v8052
    %v8069 = vpack.c.b16 %v8062, %v8061
    %v8070 = vpack.c.b16 %v8064, %v8063
    %v8071 = vpack.c.b16 %v8066, %v8065
    %v8072 = vpack.c.b16 %v8068, %v8067
    %v8078 = vsel %vm7566, %v7732, 0
    %8080 = vmatprep.subr.bf16.mxu0 0
    %8081 = vmatpush1.bf16.msra.mxu0 0
    %8082 = vmatprep.subr.bf16.mxu0 0
    %8083 = vmatpush1.bf16.msra.mxu0 0
    %8084 = vmatprep.subr.bf16.mxu0 0
    %8085 = vmatpush1.bf16.msra.mxu0 0
    %8086 = vmatprep.subr.bf16.mxu0 0
    %8087 = vmatpush1.bf16.msra.mxu0 0
    %8088 = vmatprep.subr.bf16.mxu0 0
    %8089 = vmatpush1.bf16.msra.mxu0 %v8072
    %8090 = vmatprep.subr.bf16.mxu0 0
    %8091 = vmatpush1.bf16.msra.mxu0 %v8071
    %8092 = vmatprep.subr.bf16.mxu0 0
    %8093 = vmatpush1.bf16.msra.mxu0 %v8070
    %8094 = vmatprep.subr.bf16.mxu0 0
    %8095 = vmatpush1.bf16.msra.mxu0 %v8069
    %8096 = vmatprep.subr.bf16.mxu0 0
    %8097 = vmatpush2.bf16.msra.mxu0 0
    %8098 = vmatprep.subr.bf16.mxu0 0
    %8099 = vmatpush2.bf16.msra.mxu0 0
    %8100 = vmatprep.subr.bf16.mxu0 0
    %8101 = vmatpush2.bf16.msra.mxu0 0
    %8102 = vmatprep.subr.bf16.mxu0 0
    %8103 = vmatpush2.bf16.msra.mxu0 0
    %8104 = vmatprep.subr.bf16.mxu0 0
    %8105 = vmatpush2.bf16.msra.mxu0 0
    %8106 = vmatprep.subr.bf16.mxu0 0
    %8107 = vmatpush2.bf16.msra.mxu0 0
    %8108 = vmatprep.subr.bf16.mxu0 0
    %8109 = vmatpush2.bf16.msra.mxu0 0
    %8110 = vmatprep.subr.bf16.mxu0 0
    %8111 = vmatpush2.bf16.msra.mxu0 0
    %8112 = vmatprep.mubr.bf16.mxu0 0
    %8113 = vmatmul.mubr.bf16.gmra.mxu0 %v8078
    %v8114 = vpop.f32.mrf.mxu0
    %v8115 = vadd.f32 0.0, %v8114
    %v8116 = vpop.f32.mrf.mxu0
    %v8117 = vpop.f32.mrf.mxu0
    %v8118 = vpop.f32.mrf.mxu0
    %8119 = vdwg.mxu0
    %v8120 = vadd.f32 %v8043, %v8115
    %s8121 = scalar_lea.vmem %s17, 160
    %v8122 = vld [vmem:[%s8121] sm:$0xf]
    %v8123 = vld [vmem:[%s8121 + $0x4] sm:$0xf]
    %v8124 = vld [vmem:[%s8121 + $0x8] sm:$0xf]
    %v8125 = vld [vmem:[%s8121 + $0xc] sm:$0xf]
    %v8126 = vld [vmem:[%s8121 + $0x10] sm:$0xf]
    %v8127 = vld [vmem:[%s8121 + $0x14] sm:$0xf]
    %v8128 = vld [vmem:[%s8121 + $0x18] sm:$0xf]
    %v8129 = vld [vmem:[%s8121 + $0x1c] sm:$0xf]
    %v8131 = vrot.slane %v7732, 4
    %v8140 = vunpack.c.l.b16 %v8122
    %v8141 = vunpack.c.l.b16 %v8123
    %v8142 = vunpack.c.l.b16 %v8124
    %v8143 = vunpack.c.l.b16 %v8125
    %v8144 = vunpack.c.l.b16 %v8126
    %v8145 = vunpack.c.l.b16 %v8127
    %v8146 = vunpack.c.l.b16 %v8128
    %v8147 = vunpack.c.l.b16 %v8129
    %v8148 = vpack.c.b16 %v8141, %v8140
    %v8149 = vpack.c.b16 %v8143, %v8142
    %v8150 = vpack.c.b16 %v8145, %v8144
    %v8151 = vpack.c.b16 %v8147, %v8146
    %v8157 = vsel %vm7566, %v8131, 0
    %8159 = vmatprep.subr.bf16.mxu0 0
    %8160 = vmatpush1.bf16.msra.mxu0 0
    %8161 = vmatprep.subr.bf16.mxu0 0
    %8162 = vmatpush1.bf16.msra.mxu0 0
    %8163 = vmatprep.subr.bf16.mxu0 0
    %8164 = vmatpush1.bf16.msra.mxu0 0
    %8165 = vmatprep.subr.bf16.mxu0 0
    %8166 = vmatpush1.bf16.msra.mxu0 0
    %8167 = vmatprep.subr.bf16.mxu0 0
    %8168 = vmatpush1.bf16.msra.mxu0 %v8151
    %8169 = vmatprep.subr.bf16.mxu0 0
    %8170 = vmatpush1.bf16.msra.mxu0 %v8150
    %8171 = vmatprep.subr.bf16.mxu0 0
    %8172 = vmatpush1.bf16.msra.mxu0 %v8149
    %8173 = vmatprep.subr.bf16.mxu0 0
    %8174 = vmatpush1.bf16.msra.mxu0 %v8148
    %8175 = vmatprep.subr.bf16.mxu0 0
    %8176 = vmatpush2.bf16.msra.mxu0 0
    %8177 = vmatprep.subr.bf16.mxu0 0
    %8178 = vmatpush2.bf16.msra.mxu0 0
    %8179 = vmatprep.subr.bf16.mxu0 0
    %8180 = vmatpush2.bf16.msra.mxu0 0
    %8181 = vmatprep.subr.bf16.mxu0 0
    %8182 = vmatpush2.bf16.msra.mxu0 0
    %8183 = vmatprep.subr.bf16.mxu0 0
    %8184 = vmatpush2.bf16.msra.mxu0 0
    %8185 = vmatprep.subr.bf16.mxu0 0
    %8186 = vmatpush2.bf16.msra.mxu0 0
    %8187 = vmatprep.subr.bf16.mxu0 0
    %8188 = vmatpush2.bf16.msra.mxu0 0
    %8189 = vmatprep.subr.bf16.mxu0 0
    %8190 = vmatpush2.bf16.msra.mxu0 0
    %8191 = vmatprep.mubr.bf16.mxu0 0
    %8192 = vmatmul.mubr.bf16.gmra.mxu0 %v8157
    %v8193 = vpop.f32.mrf.mxu0
    %v8194 = vadd.f32 0.0, %v8193
    %v8195 = vpop.f32.mrf.mxu0
    %v8196 = vpop.f32.mrf.mxu0
    %v8197 = vpop.f32.mrf.mxu0
    %8198 = vdwg.mxu0
    %v8199 = vadd.f32 %v8120, %v8194
    %s8200 = scalar_lea.vmem %s17, 192
    %v8201 = vld [vmem:[%s8200] sm:$0xf]
    %v8202 = vld [vmem:[%s8200 + $0x4] sm:$0xf]
    %v8203 = vld [vmem:[%s8200 + $0x8] sm:$0xf]
    %v8204 = vld [vmem:[%s8200 + $0xc] sm:$0xf]
    %v8205 = vld [vmem:[%s8200 + $0x10] sm:$0xf]
    %v8206 = vld [vmem:[%s8200 + $0x14] sm:$0xf]
    %v8207 = vld [vmem:[%s8200 + $0x18] sm:$0xf]
    %v8208 = vld [vmem:[%s8200 + $0x1c] sm:$0xf]
    %v8217 = vunpack.c.l.b16 %v8201
    %v8218 = vunpack.c.l.b16 %v8202
    %v8219 = vunpack.c.l.b16 %v8203
    %v8220 = vunpack.c.l.b16 %v8204
    %v8221 = vunpack.c.l.b16 %v8205
    %v8222 = vunpack.c.l.b16 %v8206
    %v8223 = vunpack.c.l.b16 %v8207
    %v8224 = vunpack.c.l.b16 %v8208
    %v8225 = vpack.c.b16 %v8218, %v8217
    %v8226 = vpack.c.b16 %v8220, %v8219
    %v8227 = vpack.c.b16 %v8222, %v8221
    %v8228 = vpack.c.b16 %v8224, %v8223
    %v8234 = vsel %vm7566, %v7733, 0
    %8236 = vmatprep.subr.bf16.mxu0 0
    %8237 = vmatpush1.bf16.msra.mxu0 0
    %8238 = vmatprep.subr.bf16.mxu0 0
    %8239 = vmatpush1.bf16.msra.mxu0 0
    %8240 = vmatprep.subr.bf16.mxu0 0
    %8241 = vmatpush1.bf16.msra.mxu0 0
    %8242 = vmatprep.subr.bf16.mxu0 0
    %8243 = vmatpush1.bf16.msra.mxu0 0
    %8244 = vmatprep.subr.bf16.mxu0 0
    %8245 = vmatpush1.bf16.msra.mxu0 %v8228
    %8246 = vmatprep.subr.bf16.mxu0 0
    %8247 = vmatpush1.bf16.msra.mxu0 %v8227
    %8248 = vmatprep.subr.bf16.mxu0 0
    %8249 = vmatpush1.bf16.msra.mxu0 %v8226
    %8250 = vmatprep.subr.bf16.mxu0 0
    %8251 = vmatpush1.bf16.msra.mxu0 %v8225
    %8252 = vmatprep.subr.bf16.mxu0 0
    %8253 = vmatpush2.bf16.msra.mxu0 0
    %8254 = vmatprep.subr.bf16.mxu0 0
    %8255 = vmatpush2.bf16.msra.mxu0 0
    %8256 = vmatprep.subr.bf16.mxu0 0
    %8257 = vmatpush2.bf16.msra.mxu0 0
    %8258 = vmatprep.subr.bf16.mxu0 0
    %8259 = vmatpush2.bf16.msra.mxu0 0
    %8260 = vmatprep.subr.bf16.mxu0 0
    %8261 = vmatpush2.bf16.msra.mxu0 0
    %8262 = vmatprep.subr.bf16.mxu0 0
    %8263 = vmatpush2.bf16.msra.mxu0 0
    %8264 = vmatprep.subr.bf16.mxu0 0
    %8265 = vmatpush2.bf16.msra.mxu0 0
    %8266 = vmatprep.subr.bf16.mxu0 0
    %8267 = vmatpush2.bf16.msra.mxu0 0
    %8268 = vmatprep.mubr.bf16.mxu0 0
    %8269 = vmatmul.mubr.bf16.gmra.mxu0 %v8234
    %v8270 = vpop.f32.mrf.mxu0
    %v8271 = vadd.f32 0.0, %v8270
    %v8272 = vpop.f32.mrf.mxu0
    %v8273 = vpop.f32.mrf.mxu0
    %v8274 = vpop.f32.mrf.mxu0
    %8275 = vdwg.mxu0
    %v8276 = vadd.f32 %v8199, %v8271
    %s8277 = scalar_lea.vmem %s17, 224
    %v8278 = vld [vmem:[%s8277] sm:$0xf]
    %v8279 = vld [vmem:[%s8277 + $0x4] sm:$0xf]
    %v8280 = vld [vmem:[%s8277 + $0x8] sm:$0xf]
    %v8281 = vld [vmem:[%s8277 + $0xc] sm:$0xf]
    %v8282 = vld [vmem:[%s8277 + $0x10] sm:$0xf]
    %v8283 = vld [vmem:[%s8277 + $0x14] sm:$0xf]
    %v8284 = vld [vmem:[%s8277 + $0x18] sm:$0xf]
    %v8285 = vld [vmem:[%s8277 + $0x1c] sm:$0xf]
    %v8287 = vrot.slane %v7733, 4
    %v8296 = vunpack.c.l.b16 %v8278
    %v8297 = vunpack.c.l.b16 %v8279
    %v8298 = vunpack.c.l.b16 %v8280
    %v8299 = vunpack.c.l.b16 %v8281
    %v8300 = vunpack.c.l.b16 %v8282
    %v8301 = vunpack.c.l.b16 %v8283
    %v8302 = vunpack.c.l.b16 %v8284
    %v8303 = vunpack.c.l.b16 %v8285
    %v8304 = vpack.c.b16 %v8297, %v8296
    %v8305 = vpack.c.b16 %v8299, %v8298
    %v8306 = vpack.c.b16 %v8301, %v8300
    %v8307 = vpack.c.b16 %v8303, %v8302
    %v8313 = vsel %vm7566, %v8287, 0
    %8315 = vmatprep.subr.bf16.mxu0 0
    %8316 = vmatpush1.bf16.msra.mxu0 0
    %8317 = vmatprep.subr.bf16.mxu0 0
    %8318 = vmatpush1.bf16.msra.mxu0 0
    %8319 = vmatprep.subr.bf16.mxu0 0
    %8320 = vmatpush1.bf16.msra.mxu0 0
    %8321 = vmatprep.subr.bf16.mxu0 0
    %8322 = vmatpush1.bf16.msra.mxu0 0
    %8323 = vmatprep.subr.bf16.mxu0 0
    %8324 = vmatpush1.bf16.msra.mxu0 %v8307
    %8325 = vmatprep.subr.bf16.mxu0 0
    %8326 = vmatpush1.bf16.msra.mxu0 %v8306
    %8327 = vmatprep.subr.bf16.mxu0 0
    %8328 = vmatpush1.bf16.msra.mxu0 %v8305
    %8329 = vmatprep.subr.bf16.mxu0 0
    %8330 = vmatpush1.bf16.msra.mxu0 %v8304
    %8331 = vmatprep.subr.bf16.mxu0 0
    %8332 = vmatpush2.bf16.msra.mxu0 0
    %8333 = vmatprep.subr.bf16.mxu0 0
    %8334 = vmatpush2.bf16.msra.mxu0 0
    %8335 = vmatprep.subr.bf16.mxu0 0
    %8336 = vmatpush2.bf16.msra.mxu0 0
    %8337 = vmatprep.subr.bf16.mxu0 0
    %8338 = vmatpush2.bf16.msra.mxu0 0
    %8339 = vmatprep.subr.bf16.mxu0 0
    %8340 = vmatpush2.bf16.msra.mxu0 0
    %8341 = vmatprep.subr.bf16.mxu0 0
    %8342 = vmatpush2.bf16.msra.mxu0 0
    %8343 = vmatprep.subr.bf16.mxu0 0
    %8344 = vmatpush2.bf16.msra.mxu0 0
    %8345 = vmatprep.subr.bf16.mxu0 0
    %8346 = vmatpush2.bf16.msra.mxu0 0
    %8347 = vmatprep.mubr.bf16.mxu0 0
    %8348 = vmatmul.mubr.bf16.gmra.mxu0 %v8313
    %v8349 = vpop.f32.mrf.mxu0
    %v8350 = vadd.f32 0.0, %v8349
    %v8351 = vpop.f32.mrf.mxu0
    %v8352 = vpop.f32.mrf.mxu0
    %v8353 = vpop.f32.mrf.mxu0
    %8354 = vdwg.mxu0
    %v8355 = vadd.f32 %v8276, %v8350
    %s8356 = scalar_lea.vmem %s17, 256
    %v8357 = vld [vmem:[%s8356] sm:$0xf]
    %v8358 = vld [vmem:[%s8356 + $0x4] sm:$0xf]
    %v8359 = vld [vmem:[%s8356 + $0x8] sm:$0xf]
    %v8360 = vld [vmem:[%s8356 + $0xc] sm:$0xf]
    %v8361 = vld [vmem:[%s8356 + $0x10] sm:$0xf]
    %v8362 = vld [vmem:[%s8356 + $0x14] sm:$0xf]
    %v8363 = vld [vmem:[%s8356 + $0x18] sm:$0xf]
    %v8364 = vld [vmem:[%s8356 + $0x1c] sm:$0xf]
    %v8373 = vunpack.c.l.b16 %v8357
    %v8374 = vunpack.c.l.b16 %v8358
    %v8375 = vunpack.c.l.b16 %v8359
    %v8376 = vunpack.c.l.b16 %v8360
    %v8377 = vunpack.c.l.b16 %v8361
    %v8378 = vunpack.c.l.b16 %v8362
    %v8379 = vunpack.c.l.b16 %v8363
    %v8380 = vunpack.c.l.b16 %v8364
    %v8381 = vpack.c.b16 %v8374, %v8373
    %v8382 = vpack.c.b16 %v8376, %v8375
    %v8383 = vpack.c.b16 %v8378, %v8377
    %v8384 = vpack.c.b16 %v8380, %v8379
    %v8390 = vsel %vm7566, %v7734, 0
    %8392 = vmatprep.subr.bf16.mxu0 0
    %8393 = vmatpush1.bf16.msra.mxu0 0
    %8394 = vmatprep.subr.bf16.mxu0 0
    %8395 = vmatpush1.bf16.msra.mxu0 0
    %8396 = vmatprep.subr.bf16.mxu0 0
    %8397 = vmatpush1.bf16.msra.mxu0 0
    %8398 = vmatprep.subr.bf16.mxu0 0
    %8399 = vmatpush1.bf16.msra.mxu0 0
    %8400 = vmatprep.subr.bf16.mxu0 0
    %8401 = vmatpush1.bf16.msra.mxu0 %v8384
    %8402 = vmatprep.subr.bf16.mxu0 0
    %8403 = vmatpush1.bf16.msra.mxu0 %v8383
    %8404 = vmatprep.subr.bf16.mxu0 0
    %8405 = vmatpush1.bf16.msra.mxu0 %v8382
    %8406 = vmatprep.subr.bf16.mxu0 0
    %8407 = vmatpush1.bf16.msra.mxu0 %v8381
    %8408 = vmatprep.subr.bf16.mxu0 0
    %8409 = vmatpush2.bf16.msra.mxu0 0
    %8410 = vmatprep.subr.bf16.mxu0 0
    %8411 = vmatpush2.bf16.msra.mxu0 0
    %8412 = vmatprep.subr.bf16.mxu0 0
    %8413 = vmatpush2.bf16.msra.mxu0 0
    %8414 = vmatprep.subr.bf16.mxu0 0
    %8415 = vmatpush2.bf16.msra.mxu0 0
    %8416 = vmatprep.subr.bf16.mxu0 0
    %8417 = vmatpush2.bf16.msra.mxu0 0
    %8418 = vmatprep.subr.bf16.mxu0 0
    %8419 = vmatpush2.bf16.msra.mxu0 0
    %8420 = vmatprep.subr.bf16.mxu0 0
    %8421 = vmatpush2.bf16.msra.mxu0 0
    %8422 = vmatprep.subr.bf16.mxu0 0
    %8423 = vmatpush2.bf16.msra.mxu0 0
    %8424 = vmatprep.mubr.bf16.mxu0 0
    %8425 = vmatmul.mubr.bf16.gmra.mxu0 %v8390
    %v8426 = vpop.f32.mrf.mxu0
    %v8427 = vadd.f32 0.0, %v8426
    %v8428 = vpop.f32.mrf.mxu0
    %v8429 = vpop.f32.mrf.mxu0
    %v8430 = vpop.f32.mrf.mxu0
    %8431 = vdwg.mxu0
    %v8432 = vadd.f32 %v8355, %v8427
    %v8433 = vld [vmem:[%s18] sm:$0x1]
    %v8434 = vld [vmem:[%s19] sm:$0x1]
    %vm8435 = vcmask 1041408
    %v8436 = vsel %vm8435, %v8432, 0.0
    %v8437 = vrot.slane %v8436, 4
    %v8438 = vadd.f32 %v8436, %v8437
    %v8439 = vrot.slane %v8438, 2
    %v8440 = vadd.f32 %v8438, %v8439
    %v8441 = vrot.slane %v8440, 1
    %v8442 = vadd.f32 %v8440, %v8441
    %v8443 = vrcp.pop 2.0
    %v8444 = vmul.f32 %v8442, %v8443
    %v8445 = vsub.f32 %v8432, %v8444
    %v8446 = vmul.f32 %v8445, %v8445
    %v8447 = vsel %vm8435, %v8446, 0.0
    %v8448 = vrot.slane %v8447, 4
    %v8449 = vadd.f32 %v8447, %v8448
    %v8450 = vrot.slane %v8449, 2
    %v8451 = vadd.f32 %v8449, %v8450
    %v8452 = vrot.slane %v8451, 1
    %v8453 = vadd.f32 %v8451, %v8452
    %v8454 = vmul.f32 %v8453, %v8443
    %v8455 = vadd.f32 %v8454, 1e-05
    %v8456 = vrsqrt.pop %v8455
    %v8457 = vmul.f32 %v8433, %v8456
    %v8458 = vmul.f32 %v8457, %v8444
    %v8459 = vsub.f32 %v8434, %v8458
    %v8461 = vlaneseq
    %v8462 = vshrl.u32 %v8461, 7
    %v8463 = vsub.s32 0, %v8462
    %v8464 = vrot.slane %v8457, %v8463
    %v8466 = vmul.f32 %v8432, %v8464
    %v8468 = vlaneseq
    %v8469 = vshrl.u32 %v8468, 7
    %v8470 = vsub.s32 0, %v8469
    %v8471 = vrot.slane %v8459, %v8470
    %v8473 = vadd.f32 %v8466, %v8471
    %v8474 = vmul.f32 %v8473, 0.01
    %v8475 = vmax.f32 %v8473, %v8474
    %v8476 = vpack.c.bf16 %v8475, %v8475
    %v8477 = vld [vmem:[%s20] sm:$0xf]
    %v8478 = vld [vmem:[%s20 + $0x4] sm:$0xf]
    %v8479 = vld [vmem:[%s20 + $0x8] sm:$0xf]
    %v8480 = vld [vmem:[%s20 + $0xc] sm:$0xf]
    %v8481 = vld [vmem:[%s20 + $0x10] sm:$0xf]
    %v8482 = vld [vmem:[%s20 + $0x14] sm:$0xf]
    %v8483 = vld [vmem:[%s20 + $0x18] sm:$0xf]
    %v8484 = vld [vmem:[%s20 + $0x1c] sm:$0xf]
    %v8485 = vld [vmem:[%s20 + $0x20] sm:$0xf]
    %v8486 = vld [vmem:[%s20 + $0x24] sm:$0xf]
    %v8487 = vld [vmem:[%s20 + $0x28] sm:$0xf]
    %v8488 = vld [vmem:[%s20 + $0x2c] sm:$0xf]
    %v8489 = vld [vmem:[%s20 + $0x30] sm:$0xf]
    %v8490 = vld [vmem:[%s20 + $0x34] sm:$0xf]
    %v8491 = vld [vmem:[%s20 + $0x38] sm:$0xf]
    %v8492 = vld [vmem:[%s20 + $0x3c] sm:$0xf]
    %v8493 = vld [vmem:[%s21] sm:$0x1]
    %v8495 = vlaneseq
    %v8496 = vshrl.u32 %v8495, 7
    %v8497 = vsub.s32 0, %v8496
    %v8498 = vrot.slane %v8493, %v8497
    %v8516 = vunpack.c.l.b16 %v8477
    %v8517 = vunpack.c.l.b16 %v8478
    %v8518 = vunpack.c.l.b16 %v8479
    %v8519 = vunpack.c.l.b16 %v8480
    %v8520 = vunpack.c.l.b16 %v8481
    %v8521 = vunpack.c.l.b16 %v8482
    %v8522 = vunpack.c.l.b16 %v8483
    %v8523 = vunpack.c.l.b16 %v8484
    %v8524 = vunpack.c.l.b16 %v8485
    %v8525 = vunpack.c.l.b16 %v8486
    %v8526 = vunpack.c.l.b16 %v8487
    %v8527 = vunpack.c.l.b16 %v8488
    %v8528 = vunpack.c.l.b16 %v8489
    %v8529 = vunpack.c.l.b16 %v8490
    %v8530 = vunpack.c.l.b16 %v8491
    %v8531 = vunpack.c.l.b16 %v8492
    %v8532 = vpack.c.b16 %v8517, %v8516
    %v8533 = vpack.c.b16 %v8519, %v8518
    %v8534 = vpack.c.b16 %v8521, %v8520
    %v8535 = vpack.c.b16 %v8523, %v8522
    %v8536 = vpack.c.b16 %v8525, %v8524
    %v8537 = vpack.c.b16 %v8527, %v8526
    %v8538 = vpack.c.b16 %v8529, %v8528
    %v8539 = vpack.c.b16 %v8531, %v8530
    %8548 = vmatprep.subr.bf16.mxu0 0
    %8549 = vmatpush1.bf16.msra.mxu0 %v8539
    %8550 = vmatprep.subr.bf16.mxu0 0
    %8551 = vmatpush1.bf16.msra.mxu0 %v8538
    %8552 = vmatprep.subr.bf16.mxu0 0
    %8553 = vmatpush1.bf16.msra.mxu0 %v8537
    %8554 = vmatprep.subr.bf16.mxu0 0
    %8555 = vmatpush1.bf16.msra.mxu0 %v8536
    %8556 = vmatprep.subr.bf16.mxu0 0
    %8557 = vmatpush1.bf16.msra.mxu0 %v8535
    %8558 = vmatprep.subr.bf16.mxu0 0
    %8559 = vmatpush1.bf16.msra.mxu0 %v8534
    %8560 = vmatprep.subr.bf16.mxu0 0
    %8561 = vmatpush1.bf16.msra.mxu0 %v8533
    %8562 = vmatprep.subr.bf16.mxu0 0
    %8563 = vmatpush1.bf16.msra.mxu0 %v8532
    %8564 = vmatprep.subr.bf16.mxu0 0
    %8565 = vmatpush2.bf16.msra.mxu0 0
    %8566 = vmatprep.subr.bf16.mxu0 0
    %8567 = vmatpush2.bf16.msra.mxu0 0
    %8568 = vmatprep.subr.bf16.mxu0 0
    %8569 = vmatpush2.bf16.msra.mxu0 0
    %8570 = vmatprep.subr.bf16.mxu0 0
    %8571 = vmatpush2.bf16.msra.mxu0 0
    %8572 = vmatprep.subr.bf16.mxu0 0
    %8573 = vmatpush2.bf16.msra.mxu0 0
    %8574 = vmatprep.subr.bf16.mxu0 0
    %8575 = vmatpush2.bf16.msra.mxu0 0
    %8576 = vmatprep.subr.bf16.mxu0 0
    %8577 = vmatpush2.bf16.msra.mxu0 0
    %8578 = vmatprep.subr.bf16.mxu0 0
    %8579 = vmatpush2.bf16.msra.mxu0 0
    %8580 = vmatprep.mubr.bf16.mxu0 0
    %8581 = vmatmul.mubr.bf16.gmra.mxu0 %v8476
    %v8582 = vpop.f32.mrf.mxu0
    %v8583 = vadd.f32 %v8498, %v8582
    %v8584 = vpop.f32.mrf.mxu0
    %v8585 = vpop.f32.mrf.mxu0
    %v8586 = vpop.f32.mrf.mxu0
    %8587 = vdwg.mxu0
    %vm8588 = vcmask 254976
    %8589 = vst.msk [vmem:[#allocation2] sm:$0x3] %vm8588, %v8583
    %8591 = vrot.lane.b32.xlu0 %v8583, 96
    %v8592 = vpop.permute.xlu0 %8591
    %8594 = vst.msk [vmem:[#allocation4] sm:$0x3] %vm8588, %v8592
    // Predicated region
    $region90: #{encoder_forward.1} parent=1 // pred_check
      _
    $region91: #{encoder_forward.1} parent=1 // pred_check_branch
      %8596 = sbr.rel (0) target = $region93
    $region92: #{encoder_forward.1} parent=1 // pred_region
      %s8598 = ssub.s32 32, 32
      %8599 = vsyncadd [#allocation3], %s8598
      %s8601 = sshll.u32 [#allocation2], 4
      %s8602 = int_to_ptr.vmem [resolvable:$true] %s8601
      %8604 = dma.vmem_to_hbm [thread:$0]  %s8602, 32, %s22, [#allocation3]
    $region93: #{encoder_forward.1} parent=1 // pred_fallthru
      _
    // Predicated region
    $region94: #{encoder_forward.1} parent=1 // pred_check
      _
    $region95: #{encoder_forward.1} parent=1 // pred_check_branch
      %8606 = sbr.rel (0) target = $region97
    $region96: #{encoder_forward.1} parent=1 // pred_region
      %s8608 = ssub.s32 32, 32
      %8609 = vsyncadd [#allocation5], %s8608
      %s8611 = sshll.u32 [#allocation4], 4
      %s8612 = int_to_ptr.vmem [resolvable:$true] %s8611
      %8614 = dma.vmem_to_hbm [thread:$0]  %s8612, 32, %s23, [#allocation5]
    $region97: #{encoder_forward.1} parent=1 // pred_fallthru
      _
    // Predicated region
    $region98: #{encoder_forward.1} parent=1 // pred_check
      _
    $region99: #{encoder_forward.1} parent=1 // pred_check_branch
      %8616 = sbr.rel (0) target = $region101
    $region100: #{encoder_forward.1} parent=1 // pred_region
      %8617 = dma.done [#allocation3], 32
    $region101: #{encoder_forward.1} parent=1 // pred_fallthru
      _
    // Predicated region
    $region102: #{encoder_forward.1} parent=1 // pred_check
      _
    $region103: #{encoder_forward.1} parent=1 // pred_check_branch
      %8619 = sbr.rel (0) target = $region105
    $region104: #{encoder_forward.1} parent=1 // pred_region
      %8620 = dma.done [#allocation5], 32
    $region105: #{encoder_forward.1} parent=1 // pred_fallthru
      _
    %8621 = vsyncpa [#allocation3], 1
    %8622 = vsyncpa [#allocation5], 1

</llo_original>
